<compile_context>
chip_gen: v5e
topology: v5e:2x2
jax: 0.10.0
libtpu: 0.0.40
codegen_flags: <defaults>
</compile_context>

<pallas_src>
import functools

import numpy as np
import jax
import jax.numpy as jnp
from jax.experimental import pallas as pl
from jax.experimental.pallas import tpu as pltpu


# tap t = (dh+1)*3 + (dw+1)  ==  kh*3 + kw  (matches HWIO weight tap order)
_TAPS = tuple((dh, dw) for dh in (-1, 0, 1) for dw in (-1, 0, 1))

_WEIGHT_ORDER = ("w_e1", "b_e1", "w_e2", "b_e2", "w_m1", "b_m1", "w_d1", "b_d1",
                 "w_d2", "b_d2", "w_t1a", "w_t1b", "b_t1", "w_saa", "w_sab",
                 "w_t2", "b_t2")


# ---------------------------------------------------------------------------
# Host-side preparation (numpy / plain JAX; zero in-kernel risk)
# ---------------------------------------------------------------------------
def _tap_major(w_hwio):
    """(3,3,Cin,Cout) -> (9, Cout, Cin), tap index t = kh*3 + kw."""
    kh, kw, cin, cout = w_hwio.shape
    return jnp.transpose(w_hwio, (0, 1, 3, 2)).reshape(kh * kw, cout, cin)


def _tap_stacked(w_hwio):
    """(3,3,Cin,Cout) -> (Cout, 9*Cin), column index = t*Cin + ci."""
    kh, kw, cin, cout = w_hwio.shape
    return jnp.transpose(w_hwio, (3, 0, 1, 2)).reshape(cout, kh * kw * cin)


def _col(b):
    return b.reshape(-1, 1)


def prepare_params(p):
    """Matmul-ready weights; fold the [mm1]*4 concat into dec1 (exact: conv is linear in Cin)."""
    cb = p["dec1_w"].shape[2]                      # ch_blocks (64)
    dec1_folded = p["dec1_w"].reshape(3, 3, 4, cb // 4, p["dec1_w"].shape[3]).sum(axis=2)
    tg1 = _tap_major(p["tg1_w"])                   # (9, 16, 6)
    sa = _tap_major(p["sa_w"])                     # (9, 1, 2)
    return dict(
        w_e1=_tap_major(p["enc1_w"]), b_e1=_col(p["enc1_b"]),
        w_e2=_tap_stacked(p["enc2_w"]), b_e2=_col(p["enc2_b"]),
        w_m1=jnp.transpose(p["mm1_w"][0, 0], (1, 0)), b_m1=_col(p["mm1_b"]),
        w_d1=_tap_stacked(dec1_folded), b_d1=_col(p["dec1_b"]),
        w_d2=_tap_stacked(p["dec2_w"]), b_d2=_col(p["dec2_b"]),
        w_t1a=tg1[:, :, 0:3], w_t1b=tg1[:, :, 3:6], b_t1=_col(p["tg1_b"]),
        w_saa=sa[:, :, 0:1], w_sab=sa[:, :, 1:2],
        w_t2=_tap_stacked(p["tg2_w"]), b_t2=_col(p["tg2_b"]),
    )


def make_tap_masks(H, W, nb):
    """(9, 1, nb*H*W) f32: mask[t, 0, b*HW + i*W + j] = 1 iff (i+dh, j+dw) is inside
    the image.  Also zeroes lane-roll bleed across stacked-image boundaries."""
    HW = H * W
    ii, jj = np.meshgrid(np.arange(H), np.arange(W), indexing="ij")
    m = np.zeros((9, 1, nb * HW), np.float32)
    for t, (dh, dw) in enumerate(_TAPS):
        valid = ((ii + dh >= 0) & (ii + dh < H) &
                 (jj + dw >= 0) & (jj + dw < W)).astype(np.float32).reshape(HW)
        m[t, 0, :] = np.tile(valid, nb)
    return jnp.asarray(m)


def _pick_nb(N, HW, max_lanes=2048):
    """Images per grid step: keep the lane slab <= max_lanes and >= 2 grid steps when N >= 2."""
    nb = max(1, min(N, max(1, max_lanes // HW)))
    if N >= 2:
        nb = min(nb, max(1, N // 2))
    while N % nb:
        nb -= 1
    return nb


# ---------------------------------------------------------------------------
# Fused Trans_low kernel: NB images per grid step, everything resident in VMEM
# ---------------------------------------------------------------------------
def _trans_low_kernel(x_ref, m_ref,
                      w_e1, b_e1, w_e2, b_e2, w_m1, b_m1,
                      w_d1, b_d1, w_d2, b_d2,
                      w_t1a, w_t1b, b_t1, w_saa, w_sab, w_t2, b_t2,
                      out_ref, mask_ref, patch_ref, *, W, L):
    f32 = jnp.float32

    def shift_mask(a, t):
        # a: (Cin, L).  Returns a with every column p replaced by a[p + dh*W + dw]
        # (zero where the source pixel falls outside its image).
        dh, dw = _TAPS[t]
        s = dh * W + dw
        if s != 0:
            a = pltpu.roll(a, shift=(-s) % L, axis=1)      # XLU lane rotation
        if (dh, dw) != (0, 0):
            a = a * m_ref[t]                               # (1, L) border mask, VPU
        return a

    def conv_tap(a, w_ref):
        # Tiny-Cin conv: 9 small dots, accumulate on VPU.  w_ref: (9, Cout, Cin).
        acc = None
        for t in range(9):
            term = jnp.dot(w_ref[t], shift_mask(a, t), preferred_element_type=f32)
            acc = term if acc is None else acc + term
        return acc

    def conv_stk(a, w_ref, b_ref):
        # 16-channel-input conv: stack the 9 taps into the (144, L) scratch with
        # aligned static-slice stores, then ONE MXU dot with K = 144.
        cin = a.shape[0]                                   # always 16 here
        for t in range(9):
            patch_ref[t * cin:(t + 1) * cin, :] = shift_mask(a, t)
        return jnp.dot(w_ref[...], patch_ref[...], preferred_element_type=f32) + b_ref[...]

    def leaky(v):                                          # nn.LeakyReLU() slope 0.01
        return jnp.where(v >= 0.0, v, 0.01 * v)

    x = x_ref[...]                                                        # (3, L)

    # --- encoder -------------------------------------------------------------
    h = leaky(conv_tap(x, w_e1) + b_e1[...])                              # (16, L)
    h = leaky(conv_stk(h, w_e2, b_e2))                                    # (64, L)

    # --- mm1 (1x1 conv) once; the 4x channel tiling is folded into dec1 ------
    y = jnp.dot(w_m1[...], h, preferred_element_type=f32) + b_m1[...]     # (16, L)

    # --- decoder (dec1 weights pre-summed over the 4 tiled input groups) -----
    d = leaky(conv_stk(y, w_d1, b_d1))                                    # (16, L)
    d = conv_stk(d, w_d2, b_d2)                                           # (3, L)

    out = jnp.maximum(x + d, 0.0)                                         # (3, L)
    out_ref[...] = out

    # --- Trans_guide(cat([x, out])) : concat replaced by a weight split ------
    t1 = leaky(conv_tap(x, w_t1a) + conv_tap(out, w_t1b) + b_t1[...])     # (16, L)

    # SpatialAttention(kernel_size=3): pure XLU/VPU/EUP (no MXU)
    avg = jnp.mean(t1, axis=0, keepdims=True)                             # (1, L)
    mx = jnp.max(t1, axis=0, keepdims=True)                               # (1, L)
    att = None
    for t in range(9):
        term = w_saa[t] * shift_mask(avg, t) + w_sab[t] * shift_mask(mx, t)
        att = term if att is None else att + term
    gate = 1.0 / (1.0 + jnp.exp(-att))                                    # (1, L)

    mask_ref[...] = conv_stk(gate * t1, w_t2, b_t2)                       # (3, L)


# ---------------------------------------------------------------------------
# Public forward (NCHW in / NCHW out, like the PyTorch module)
# ---------------------------------------------------------------------------
def trans_low_forward(params, x_nchw, nb=None):
    N, C, H, W = x_nchw.shape
    assert C == 3
    HW = H * W
    if nb is None:
        nb = _pick_nb(N, HW)
    assert N % nb == 0
    L = nb * HW

    # NCHW -> (C, N*HW): channels on sublanes, batch*pixels on lanes (lane-dense).
    x_cl = jnp.transpose(x_nchw.reshape(N, C, HW).astype(jnp.float32),
                         (1, 0, 2)).reshape(C, N * HW)

    masks = make_tap_masks(H, W, nb)                       # (9, 1, L) constants
    pp = prepare_params(params)
    weights = [pp[k] for k in _WEIGHT_ORDER]

    def const_spec(a):
        nd = a.ndim
        return pl.BlockSpec(a.shape, lambda n, _nd=nd: (0,) * _nd)

    kernel = functools.partial(_trans_low_kernel, W=W, L=L)

    in_specs = ([pl.BlockSpec((C, L), lambda n: (0, n)), const_spec(masks)]
                + [const_spec(w) for w in weights])
    out_specs = (pl.BlockSpec((3, L), lambda n: (0, n)),
                 pl.BlockSpec((3, L), lambda n: (0, n)))
    out_shape = (jax.ShapeDtypeStruct((3, N * HW), jnp.float32),
                 jax.ShapeDtypeStruct((3, N * HW), jnp.float32))

    out_cl, mask_cl = pl.pallas_call(
        kernel,
        grid=(N // nb,),
        in_specs=in_specs,
        out_specs=out_specs,
        out_shape=out_shape,
        scratch_shapes=[pltpu.VMEM((9 * 16, L), jnp.float32)],   # tap-stacked patches
        compiler_params=pltpu.CompilerParams(
            dimension_semantics=("parallel",),
            vmem_limit_bytes=32 * 1024 * 1024),
    )(x_cl, masks, *weights)

    def back(a):
        return jnp.transpose(a.reshape(3, N, HW), (1, 0, 2)).reshape(N, 3, H, W)

    return back(out_cl), back(mask_cl)


# ---------------------------------------------------------------------------
# Deterministic synthetic parameters (HWIO weights)
# ---------------------------------------------------------------------------
def init_params(key, ch_blocks=64, ch_mask=16):
    def conv_p(k, kh, kw, cin, cout, bias=True, scale=0.1):
        kw_, kb_ = jax.random.split(k)
        w = scale * jax.random.normal(kw_, (kh, kw, cin, cout), jnp.float32)
        b = (scale * jax.random.normal(kb_, (cout,), jnp.float32)
             if bias else jnp.zeros((cout,), jnp.float32))
        return w, b

    keys = jax.random.split(key, 8)
    p = {}
    p["enc1_w"], p["enc1_b"] = conv_p(keys[0], 3, 3, 3, 16)
    p["enc2_w"], p["enc2_b"] = conv_p(keys[1], 3, 3, 16, ch_blocks)
    p["mm1_w"], p["mm1_b"] = conv_p(keys[2], 1, 1, ch_blocks, ch_blocks // 4)
    # mm2 / mm3 / mm4 exist in the PyTorch __init__ but are unused by forward -> omitted.
    p["dec1_w"], p["dec1_b"] = conv_p(keys[3], 3, 3, ch_blocks, 16)
    p["dec2_w"], p["dec2_b"] = conv_p(keys[4], 3, 3, 16, 3)
    p["tg1_w"], p["tg1_b"] = conv_p(keys[5], 3, 3, 6, ch_mask)
    p["sa_w"], _ = conv_p(keys[6], 3, 3, 2, 1, bias=False)
    p["tg2_w"], p["tg2_b"] = conv_p(keys[7], 3, 3, ch_mask, 3)
    return p


# ---------------------------------------------------------------------------
# Pure-JAX reference (mirrors the PyTorch forward) for validation
# ---------------------------------------------------------------------------
def _conv_ref(x, w_hwio, b=None, pad=1):
    out = jax.lax.conv_general_dilated(
        x, w_hwio, window_strides=(1, 1), padding=[(pad, pad), (pad, pad)],
        dimension_numbers=("NCHW", "HWIO", "NCHW"))
    if b is not None:
        out = out + b.reshape(1, -1, 1, 1)
    return out


def trans_low_reference(params, x):
    lrelu = lambda v: jnp.where(v >= 0.0, v, 0.01 * v)
    x1 = lrelu(_conv_ref(x, params["enc1_w"], params["enc1_b"]))
    x1 = lrelu(_conv_ref(x1, params["enc2_w"], params["enc2_b"]))
    y = _conv_ref(x1, params["mm1_w"], params["mm1_b"], pad=0)
    x1 = jnp.concatenate([y, y, y, y], axis=1)          # mm1 applied 4x, as in forward
    x1 = lrelu(_conv_ref(x1, params["dec1_w"], params["dec1_b"]))
    x1 = _conv_ref(x1, params["dec2_w"], params["dec2_b"])
    out = jnp.maximum(x + x1, 0.0)
    tg_in = jnp.concatenate([x, out], axis=1)
    t = lrelu(_conv_ref(tg_in, params["tg1_w"], params["tg1_b"]))
    avg = jnp.mean(t, axis=1, keepdims=True)
    mx = jnp.max(t, axis=1, keepdims=True)
    att = jnp.concatenate([avg, mx], axis=1)
    gate = jax.nn.sigmoid(_conv_ref(att, params["sa_w"], None))
    t = gate * t
    mask = _conv_ref(t, params["tg2_w"], params["tg2_b"])
    return out, mask


if __name__ == "__main__":
    key = jax.random.PRNGKey(0)
    k_param, k_x = jax.random.split(key)
    params = init_params(k_param, ch_blocks=64, ch_mask=16)

    # small input consistent with the module: N=2, C=3, H=W=16 (NCHW)
    x = jax.random.normal(k_x, (2, 3, 16, 16), jnp.float32)

    fwd = jax.jit(functools.partial(trans_low_forward, params))
    out, mask = fwd(x)
    jax.block_until_ready((out, mask))

    assert out.shape == (2, 3, 16, 16), out.shape
    assert mask.shape == (2, 3, 16, 16), mask.shape

    # validate the fused Pallas kernel against the pure-JAX mirror of the PyTorch forward
    out_r, mask_r = jax.jit(functools.partial(trans_low_reference, params))(x)
    jax.block_until_ready((out_r, mask_r))
    assert jnp.allclose(out, out_r, atol=2e-3, rtol=2e-3), \
        float(jnp.max(jnp.abs(out - out_r)))
    assert jnp.allclose(mask, mask_r, atol=2e-3, rtol=2e-3), \
        float(jnp.max(jnp.abs(mask - mask_r)))

    print("KERNEL_OK")
</pallas_src>

<mosaic_0001>
module attributes {stable_mosaic.version = 11 : i64} {
  func.func @_trans_low_kernel(%arg0: i32, %arg1: memref<3x256xf32, #tpu.memory_space<vmem>>, %arg2: memref<9x1x256xf32, #tpu.memory_space<vmem>>, %arg3: memref<9x16x3xf32, #tpu.memory_space<vmem>>, %arg4: memref<16x1xf32, #tpu.memory_space<vmem>>, %arg5: memref<64x144xf32, #tpu.memory_space<vmem>>, %arg6: memref<64x1xf32, #tpu.memory_space<vmem>>, %arg7: memref<16x64xf32, #tpu.memory_space<vmem>>, %arg8: memref<16x1xf32, #tpu.memory_space<vmem>>, %arg9: memref<16x144xf32, #tpu.memory_space<vmem>>, %arg10: memref<16x1xf32, #tpu.memory_space<vmem>>, %arg11: memref<3x144xf32, #tpu.memory_space<vmem>>, %arg12: memref<3x1xf32, #tpu.memory_space<vmem>>, %arg13: memref<9x16x3xf32, #tpu.memory_space<vmem>>, %arg14: memref<9x16x3xf32, #tpu.memory_space<vmem>>, %arg15: memref<16x1xf32, #tpu.memory_space<vmem>>, %arg16: memref<9x1x1xf32, #tpu.memory_space<vmem>>, %arg17: memref<9x1x1xf32, #tpu.memory_space<vmem>>, %arg18: memref<3x144xf32, #tpu.memory_space<vmem>>, %arg19: memref<3x1xf32, #tpu.memory_space<vmem>>, %arg20: memref<3x256xf32, #tpu.memory_space<vmem>>, %arg21: memref<3x256xf32, #tpu.memory_space<vmem>>, %arg22: memref<144x256xf32, #tpu.memory_space<vmem>>) attributes {dimension_semantics = [#tpu.dimension_semantics<parallel>], iteration_bounds = array<i64: 2>, scalar_prefetch = 0 : i64, scratch_operands = 1 : i64, tpu.core_type = #tpu.core_type<tc>, window_params = [{transform_indices = @transform_0, window_bounds = array<i64: 3, 256>}, {pipeline_mode = #tpu.pipeline_mode<synchronous>, transform_indices = @transform_1, window_bounds = array<i64: 9, 1, 256>}, {pipeline_mode = #tpu.pipeline_mode<synchronous>, transform_indices = @transform_2, window_bounds = array<i64: 9, 16, 3>}, {pipeline_mode = #tpu.pipeline_mode<synchronous>, transform_indices = @transform_3, window_bounds = array<i64: 16, 1>}, {pipeline_mode = #tpu.pipeline_mode<synchronous>, transform_indices = @transform_4, window_bounds = array<i64: 64, 144>}, {pipeline_mode = #tpu.pipeline_mode<synchronous>, transform_indices = @transform_5, window_bounds = array<i64: 64, 1>}, {pipeline_mode = #tpu.pipeline_mode<synchronous>, transform_indices = @transform_6, window_bounds = array<i64: 16, 64>}, {pipeline_mode = #tpu.pipeline_mode<synchronous>, transform_indices = @transform_7, window_bounds = array<i64: 16, 1>}, {pipeline_mode = #tpu.pipeline_mode<synchronous>, transform_indices = @transform_8, window_bounds = array<i64: 16, 144>}, {pipeline_mode = #tpu.pipeline_mode<synchronous>, transform_indices = @transform_9, window_bounds = array<i64: 16, 1>}, {pipeline_mode = #tpu.pipeline_mode<synchronous>, transform_indices = @transform_10, window_bounds = array<i64: 3, 144>}, {pipeline_mode = #tpu.pipeline_mode<synchronous>, transform_indices = @transform_11, window_bounds = array<i64: 3, 1>}, {pipeline_mode = #tpu.pipeline_mode<synchronous>, transform_indices = @transform_12, window_bounds = array<i64: 9, 16, 3>}, {pipeline_mode = #tpu.pipeline_mode<synchronous>, transform_indices = @transform_13, window_bounds = array<i64: 9, 16, 3>}, {pipeline_mode = #tpu.pipeline_mode<synchronous>, transform_indices = @transform_14, window_bounds = array<i64: 16, 1>}, {pipeline_mode = #tpu.pipeline_mode<synchronous>, transform_indices = @transform_15, window_bounds = array<i64: 9, 1, 1>}, {pipeline_mode = #tpu.pipeline_mode<synchronous>, transform_indices = @transform_16, window_bounds = array<i64: 9, 1, 1>}, {pipeline_mode = #tpu.pipeline_mode<synchronous>, transform_indices = @transform_17, window_bounds = array<i64: 3, 144>}, {pipeline_mode = #tpu.pipeline_mode<synchronous>, transform_indices = @transform_18, window_bounds = array<i64: 3, 1>}, {transform_indices = @transform_19, window_bounds = array<i64: 3, 256>}, {transform_indices = @transform_20, window_bounds = array<i64: 3, 256>}]} {
    %c0 = arith.constant 0 : index
    %c0_0 = arith.constant 0 : index
    %0 = vector.load %arg1[%c0, %c0_0] : memref<3x256xf32, #tpu.memory_space<vmem>>, vector<3x256xf32>
    %c0_1 = arith.constant 0 : index
    %c0_2 = arith.constant 0 : index
    %c0_3 = arith.constant 0 : index
    %1 = vector.load %arg3[%c0_1, %c0_2, %c0_3] : memref<9x16x3xf32, #tpu.memory_space<vmem>>, vector<1x16x3xf32>
    %2 = vector.shape_cast %1 : vector<1x16x3xf32> to vector<16x3xf32>
    %c17_i32 = arith.constant 17 : i32
    %3 = tpu.dynamic_rotate %0 by %c17_i32 dim 1 : vector<3x256xf32>, i32 -> vector<3x256xf32>
    %c0_4 = arith.constant 0 : index
    %c0_5 = arith.constant 0 : index
    %c0_6 = arith.constant 0 : index
    %4 = vector.load %arg2[%c0_4, %c0_5, %c0_6] : memref<9x1x256xf32, #tpu.memory_space<vmem>>, vector<1x1x256xf32>
    %5 = vector.shape_cast %4 : vector<1x1x256xf32> to vector<1x256xf32>
    %6 = vector.broadcast %5 : vector<1x256xf32> to vector<3x256xf32>
    %7 = arith.mulf %3, %6 : vector<3x256xf32>
    %cst = arith.constant dense<0.000000e+00> : vector<16x256xf32>
    %8 = tpu.matmul %2, %7, %cst {dimension_numbers = #tpu.dot_dimension_numbers<[1], [0], [0], [1], [0, 0, 1, 1], [], []>} : vector<16x3xf32>, vector<3x256xf32>, vector<16x256xf32> -> vector<16x256xf32>
    %c1 = arith.constant 1 : index
    %c0_7 = arith.constant 0 : index
    %c0_8 = arith.constant 0 : index
    %9 = vector.load %arg3[%c1, %c0_7, %c0_8] : memref<9x16x3xf32, #tpu.memory_space<vmem>>, vector<1x16x3xf32>
    %10 = vector.shape_cast %9 : vector<1x16x3xf32> to vector<16x3xf32>
    %c16_i32 = arith.constant 16 : i32
    %11 = tpu.dynamic_rotate %0 by %c16_i32 dim 1 : vector<3x256xf32>, i32 -> vector<3x256xf32>
    %c1_9 = arith.constant 1 : index
    %c0_10 = arith.constant 0 : index
    %c0_11 = arith.constant 0 : index
    %12 = vector.load %arg2[%c1_9, %c0_10, %c0_11] : memref<9x1x256xf32, #tpu.memory_space<vmem>>, vector<1x1x256xf32>
    %13 = vector.shape_cast %12 : vector<1x1x256xf32> to vector<1x256xf32>
    %14 = vector.broadcast %13 : vector<1x256xf32> to vector<3x256xf32>
    %15 = arith.mulf %11, %14 : vector<3x256xf32>
    %cst_12 = arith.constant dense<0.000000e+00> : vector<16x256xf32>
    %16 = tpu.matmul %10, %15, %cst_12 {dimension_numbers = #tpu.dot_dimension_numbers<[1], [0], [0], [1], [0, 0, 1, 1], [], []>} : vector<16x3xf32>, vector<3x256xf32>, vector<16x256xf32> -> vector<16x256xf32>
    %17 = arith.addf %8, %16 : vector<16x256xf32>
    %c2 = arith.constant 2 : index
    %c0_13 = arith.constant 0 : index
    %c0_14 = arith.constant 0 : index
    %18 = vector.load %arg3[%c2, %c0_13, %c0_14] : memref<9x16x3xf32, #tpu.memory_space<vmem>>, vector<1x16x3xf32>
    %19 = vector.shape_cast %18 : vector<1x16x3xf32> to vector<16x3xf32>
    %c15_i32 = arith.constant 15 : i32
    %20 = tpu.dynamic_rotate %0 by %c15_i32 dim 1 : vector<3x256xf32>, i32 -> vector<3x256xf32>
    %c2_15 = arith.constant 2 : index
    %c0_16 = arith.constant 0 : index
    %c0_17 = arith.constant 0 : index
    %21 = vector.load %arg2[%c2_15, %c0_16, %c0_17] : memref<9x1x256xf32, #tpu.memory_space<vmem>>, vector<1x1x256xf32>
    %22 = vector.shape_cast %21 : vector<1x1x256xf32> to vector<1x256xf32>
    %23 = vector.broadcast %22 : vector<1x256xf32> to vector<3x256xf32>
    %24 = arith.mulf %20, %23 : vector<3x256xf32>
    %cst_18 = arith.constant dense<0.000000e+00> : vector<16x256xf32>
    %25 = tpu.matmul %19, %24, %cst_18 {dimension_numbers = #tpu.dot_dimension_numbers<[1], [0], [0], [1], [0, 0, 1, 1], [], []>} : vector<16x3xf32>, vector<3x256xf32>, vector<16x256xf32> -> vector<16x256xf32>
    %26 = arith.addf %17, %25 : vector<16x256xf32>
    %c3 = arith.constant 3 : index
    %c0_19 = arith.constant 0 : index
    %c0_20 = arith.constant 0 : index
    %27 = vector.load %arg3[%c3, %c0_19, %c0_20] : memref<9x16x3xf32, #tpu.memory_space<vmem>>, vector<1x16x3xf32>
    %28 = vector.shape_cast %27 : vector<1x16x3xf32> to vector<16x3xf32>
    %c1_i32 = arith.constant 1 : i32
    %29 = tpu.dynamic_rotate %0 by %c1_i32 dim 1 : vector<3x256xf32>, i32 -> vector<3x256xf32>
    %c3_21 = arith.constant 3 : index
    %c0_22 = arith.constant 0 : index
    %c0_23 = arith.constant 0 : index
    %30 = vector.load %arg2[%c3_21, %c0_22, %c0_23] : memref<9x1x256xf32, #tpu.memory_space<vmem>>, vector<1x1x256xf32>
    %31 = vector.shape_cast %30 : vector<1x1x256xf32> to vector<1x256xf32>
    %32 = vector.broadcast %31 : vector<1x256xf32> to vector<3x256xf32>
    %33 = arith.mulf %29, %32 : vector<3x256xf32>
    %cst_24 = arith.constant dense<0.000000e+00> : vector<16x256xf32>
    %34 = tpu.matmul %28, %33, %cst_24 {dimension_numbers = #tpu.dot_dimension_numbers<[1], [0], [0], [1], [0, 0, 1, 1], [], []>} : vector<16x3xf32>, vector<3x256xf32>, vector<16x256xf32> -> vector<16x256xf32>
    %35 = arith.addf %26, %34 : vector<16x256xf32>
    %c4 = arith.constant 4 : index
    %c0_25 = arith.constant 0 : index
    %c0_26 = arith.constant 0 : index
    %36 = vector.load %arg3[%c4, %c0_25, %c0_26] : memref<9x16x3xf32, #tpu.memory_space<vmem>>, vector<1x16x3xf32>
    %37 = vector.shape_cast %36 : vector<1x16x3xf32> to vector<16x3xf32>
    %cst_27 = arith.constant dense<0.000000e+00> : vector<16x256xf32>
    %38 = tpu.matmul %37, %0, %cst_27 {dimension_numbers = #tpu.dot_dimension_numbers<[1], [0], [0], [1], [0, 0, 1, 1], [], []>} : vector<16x3xf32>, vector<3x256xf32>, vector<16x256xf32> -> vector<16x256xf32>
    %39 = arith.addf %35, %38 : vector<16x256xf32>
    %c5 = arith.constant 5 : index
    %c0_28 = arith.constant 0 : index
    %c0_29 = arith.constant 0 : index
    %40 = vector.load %arg3[%c5, %c0_28, %c0_29] : memref<9x16x3xf32, #tpu.memory_space<vmem>>, vector<1x16x3xf32>
    %41 = vector.shape_cast %40 : vector<1x16x3xf32> to vector<16x3xf32>
    %c255_i32 = arith.constant 255 : i32
    %42 = tpu.dynamic_rotate %0 by %c255_i32 dim 1 : vector<3x256xf32>, i32 -> vector<3x256xf32>
    %c5_30 = arith.constant 5 : index
    %c0_31 = arith.constant 0 : index
    %c0_32 = arith.constant 0 : index
    %43 = vector.load %arg2[%c5_30, %c0_31, %c0_32] : memref<9x1x256xf32, #tpu.memory_space<vmem>>, vector<1x1x256xf32>
    %44 = vector.shape_cast %43 : vector<1x1x256xf32> to vector<1x256xf32>
    %45 = vector.broadcast %44 : vector<1x256xf32> to vector<3x256xf32>
    %46 = arith.mulf %42, %45 : vector<3x256xf32>
    %cst_33 = arith.constant dense<0.000000e+00> : vector<16x256xf32>
    %47 = tpu.matmul %41, %46, %cst_33 {dimension_numbers = #tpu.dot_dimension_numbers<[1], [0], [0], [1], [0, 0, 1, 1], [], []>} : vector<16x3xf32>, vector<3x256xf32>, vector<16x256xf32> -> vector<16x256xf32>
    %48 = arith.addf %39, %47 : vector<16x256xf32>
    %c6 = arith.constant 6 : index
    %c0_34 = arith.constant 0 : index
    %c0_35 = arith.constant 0 : index
    %49 = vector.load %arg3[%c6, %c0_34, %c0_35] : memref<9x16x3xf32, #tpu.memory_space<vmem>>, vector<1x16x3xf32>
    %50 = vector.shape_cast %49 : vector<1x16x3xf32> to vector<16x3xf32>
    %c241_i32 = arith.constant 241 : i32
    %51 = tpu.dynamic_rotate %0 by %c241_i32 dim 1 : vector<3x256xf32>, i32 -> vector<3x256xf32>
    %c6_36 = arith.constant 6 : index
    %c0_37 = arith.constant 0 : index
    %c0_38 = arith.constant 0 : index
    %52 = vector.load %arg2[%c6_36, %c0_37, %c0_38] : memref<9x1x256xf32, #tpu.memory_space<vmem>>, vector<1x1x256xf32>
    %53 = vector.shape_cast %52 : vector<1x1x256xf32> to vector<1x256xf32>
    %54 = vector.broadcast %53 : vector<1x256xf32> to vector<3x256xf32>
    %55 = arith.mulf %51, %54 : vector<3x256xf32>
    %cst_39 = arith.constant dense<0.000000e+00> : vector<16x256xf32>
    %56 = tpu.matmul %50, %55, %cst_39 {dimension_numbers = #tpu.dot_dimension_numbers<[1], [0], [0], [1], [0, 0, 1, 1], [], []>} : vector<16x3xf32>, vector<3x256xf32>, vector<16x256xf32> -> vector<16x256xf32>
    %57 = arith.addf %48, %56 : vector<16x256xf32>
    %c7 = arith.constant 7 : index
    %c0_40 = arith.constant 0 : index
    %c0_41 = arith.constant 0 : index
    %58 = vector.load %arg3[%c7, %c0_40, %c0_41] : memref<9x16x3xf32, #tpu.memory_space<vmem>>, vector<1x16x3xf32>
    %59 = vector.shape_cast %58 : vector<1x16x3xf32> to vector<16x3xf32>
    %c240_i32 = arith.constant 240 : i32
    %60 = tpu.dynamic_rotate %0 by %c240_i32 dim 1 : vector<3x256xf32>, i32 -> vector<3x256xf32>
    %c7_42 = arith.constant 7 : index
    %c0_43 = arith.constant 0 : index
    %c0_44 = arith.constant 0 : index
    %61 = vector.load %arg2[%c7_42, %c0_43, %c0_44] : memref<9x1x256xf32, #tpu.memory_space<vmem>>, vector<1x1x256xf32>
    %62 = vector.shape_cast %61 : vector<1x1x256xf32> to vector<1x256xf32>
    %63 = vector.broadcast %62 : vector<1x256xf32> to vector<3x256xf32>
    %64 = arith.mulf %60, %63 : vector<3x256xf32>
    %cst_45 = arith.constant dense<0.000000e+00> : vector<16x256xf32>
    %65 = tpu.matmul %59, %64, %cst_45 {dimension_numbers = #tpu.dot_dimension_numbers<[1], [0], [0], [1], [0, 0, 1, 1], [], []>} : vector<16x3xf32>, vector<3x256xf32>, vector<16x256xf32> -> vector<16x256xf32>
    %66 = arith.addf %57, %65 : vector<16x256xf32>
    %c8 = arith.constant 8 : index
    %c0_46 = arith.constant 0 : index
    %c0_47 = arith.constant 0 : index
    %67 = vector.load %arg3[%c8, %c0_46, %c0_47] : memref<9x16x3xf32, #tpu.memory_space<vmem>>, vector<1x16x3xf32>
    %68 = vector.shape_cast %67 : vector<1x16x3xf32> to vector<16x3xf32>
    %c239_i32 = arith.constant 239 : i32
    %69 = tpu.dynamic_rotate %0 by %c239_i32 dim 1 : vector<3x256xf32>, i32 -> vector<3x256xf32>
    %c8_48 = arith.constant 8 : index
    %c0_49 = arith.constant 0 : index
    %c0_50 = arith.constant 0 : index
    %70 = vector.load %arg2[%c8_48, %c0_49, %c0_50] : memref<9x1x256xf32, #tpu.memory_space<vmem>>, vector<1x1x256xf32>
    %71 = vector.shape_cast %70 : vector<1x1x256xf32> to vector<1x256xf32>
    %72 = vector.broadcast %71 : vector<1x256xf32> to vector<3x256xf32>
    %73 = arith.mulf %69, %72 : vector<3x256xf32>
    %cst_51 = arith.constant dense<0.000000e+00> : vector<16x256xf32>
    %74 = tpu.matmul %68, %73, %cst_51 {dimension_numbers = #tpu.dot_dimension_numbers<[1], [0], [0], [1], [0, 0, 1, 1], [], []>} : vector<16x3xf32>, vector<3x256xf32>, vector<16x256xf32> -> vector<16x256xf32>
    %75 = arith.addf %66, %74 : vector<16x256xf32>
    %c0_52 = arith.constant 0 : index
    %c0_53 = arith.constant 0 : index
    %76 = vector.load %arg4[%c0_52, %c0_53] : memref<16x1xf32, #tpu.memory_space<vmem>>, vector<16x1xf32>
    %77 = vector.broadcast %76 : vector<16x1xf32> to vector<16x256xf32>
    %78 = arith.addf %75, %77 : vector<16x256xf32>
    %cst_54 = arith.constant 0.000000e+00 : f32
    %79 = vector.broadcast %cst_54 : f32 to vector<16x256xf32>
    %80 = arith.cmpf oge, %78, %79 : vector<16x256xf32>
    %cst_55 = arith.constant 0.00999999977 : f32
    %81 = vector.broadcast %cst_55 : f32 to vector<16x256xf32>
    %82 = arith.mulf %81, %78 : vector<16x256xf32>
    %83 = arith.select %80, %78, %82 : vector<16x256xi1>, vector<16x256xf32>
    %c17_i32_56 = arith.constant 17 : i32
    %84 = tpu.dynamic_rotate %83 by %c17_i32_56 dim 1 : vector<16x256xf32>, i32 -> vector<16x256xf32>
    %c0_57 = arith.constant 0 : index
    %c0_58 = arith.constant 0 : index
    %c0_59 = arith.constant 0 : index
    %85 = vector.load %arg2[%c0_57, %c0_58, %c0_59] : memref<9x1x256xf32, #tpu.memory_space<vmem>>, vector<1x1x256xf32>
    %86 = vector.shape_cast %85 : vector<1x1x256xf32> to vector<1x256xf32>
    %87 = vector.broadcast %86 : vector<1x256xf32> to vector<16x256xf32>
    %88 = arith.mulf %84, %87 : vector<16x256xf32>
    %c0_60 = arith.constant 0 : index
    %c0_61 = arith.constant 0 : index
    %89 = vector.load %arg22[%c0_60, %c0_61] : memref<144x256xf32, #tpu.memory_space<vmem>>, vector<16x256xf32>
    tpu.vector_store %arg22[%c0_60, %c0_61], %88 {strides = array<i32>} : memref<144x256xf32, #tpu.memory_space<vmem>>, vector<16x256xf32>,
    %c16_i32_62 = arith.constant 16 : i32
    %90 = tpu.dynamic_rotate %83 by %c16_i32_62 dim 1 : vector<16x256xf32>, i32 -> vector<16x256xf32>
    %c1_63 = arith.constant 1 : index
    %c0_64 = arith.constant 0 : index
    %c0_65 = arith.constant 0 : index
    %91 = vector.load %arg2[%c1_63, %c0_64, %c0_65] : memref<9x1x256xf32, #tpu.memory_space<vmem>>, vector<1x1x256xf32>
    %92 = vector.shape_cast %91 : vector<1x1x256xf32> to vector<1x256xf32>
    %93 = vector.broadcast %92 : vector<1x256xf32> to vector<16x256xf32>
    %94 = arith.mulf %90, %93 : vector<16x256xf32>
    %c16 = arith.constant 16 : index
    %c0_66 = arith.constant 0 : index
    %95 = vector.load %arg22[%c16, %c0_66] : memref<144x256xf32, #tpu.memory_space<vmem>>, vector<16x256xf32>
    tpu.vector_store %arg22[%c16, %c0_66], %94 {strides = array<i32>} : memref<144x256xf32, #tpu.memory_space<vmem>>, vector<16x256xf32>,
    %c15_i32_67 = arith.constant 15 : i32
    %96 = tpu.dynamic_rotate %83 by %c15_i32_67 dim 1 : vector<16x256xf32>, i32 -> vector<16x256xf32>
    %c2_68 = arith.constant 2 : index
    %c0_69 = arith.constant 0 : index
    %c0_70 = arith.constant 0 : index
    %97 = vector.load %arg2[%c2_68, %c0_69, %c0_70] : memref<9x1x256xf32, #tpu.memory_space<vmem>>, vector<1x1x256xf32>
    %98 = vector.shape_cast %97 : vector<1x1x256xf32> to vector<1x256xf32>
    %99 = vector.broadcast %98 : vector<1x256xf32> to vector<16x256xf32>
    %100 = arith.mulf %96, %99 : vector<16x256xf32>
    %c32 = arith.constant 32 : index
    %c0_71 = arith.constant 0 : index
    %101 = vector.load %arg22[%c32, %c0_71] : memref<144x256xf32, #tpu.memory_space<vmem>>, vector<16x256xf32>
    tpu.vector_store %arg22[%c32, %c0_71], %100 {strides = array<i32>} : memref<144x256xf32, #tpu.memory_space<vmem>>, vector<16x256xf32>,
    %c1_i32_72 = arith.constant 1 : i32
    %102 = tpu.dynamic_rotate %83 by %c1_i32_72 dim 1 : vector<16x256xf32>, i32 -> vector<16x256xf32>
    %c3_73 = arith.constant 3 : index
    %c0_74 = arith.constant 0 : index
    %c0_75 = arith.constant 0 : index
    %103 = vector.load %arg2[%c3_73, %c0_74, %c0_75] : memref<9x1x256xf32, #tpu.memory_space<vmem>>, vector<1x1x256xf32>
    %104 = vector.shape_cast %103 : vector<1x1x256xf32> to vector<1x256xf32>
    %105 = vector.broadcast %104 : vector<1x256xf32> to vector<16x256xf32>
    %106 = arith.mulf %102, %105 : vector<16x256xf32>
    %c48 = arith.constant 48 : index
    %c0_76 = arith.constant 0 : index
    %107 = vector.load %arg22[%c48, %c0_76] : memref<144x256xf32, #tpu.memory_space<vmem>>, vector<16x256xf32>
    tpu.vector_store %arg22[%c48, %c0_76], %106 {strides = array<i32>} : memref<144x256xf32, #tpu.memory_space<vmem>>, vector<16x256xf32>,
    %c64 = arith.constant 64 : index
    %c0_77 = arith.constant 0 : index
    %108 = vector.load %arg22[%c64, %c0_77] : memref<144x256xf32, #tpu.memory_space<vmem>>, vector<16x256xf32>
    tpu.vector_store %arg22[%c64, %c0_77], %83 {strides = array<i32>} : memref<144x256xf32, #tpu.memory_space<vmem>>, vector<16x256xf32>,
    %c255_i32_78 = arith.constant 255 : i32
    %109 = tpu.dynamic_rotate %83 by %c255_i32_78 dim 1 : vector<16x256xf32>, i32 -> vector<16x256xf32>
    %c5_79 = arith.constant 5 : index
    %c0_80 = arith.constant 0 : index
    %c0_81 = arith.constant 0 : index
    %110 = vector.load %arg2[%c5_79, %c0_80, %c0_81] : memref<9x1x256xf32, #tpu.memory_space<vmem>>, vector<1x1x256xf32>
    %111 = vector.shape_cast %110 : vector<1x1x256xf32> to vector<1x256xf32>
    %112 = vector.broadcast %111 : vector<1x256xf32> to vector<16x256xf32>
    %113 = arith.mulf %109, %112 : vector<16x256xf32>
    %c80 = arith.constant 80 : index
    %c0_82 = arith.constant 0 : index
    %114 = vector.load %arg22[%c80, %c0_82] : memref<144x256xf32, #tpu.memory_space<vmem>>, vector<16x256xf32>
    tpu.vector_store %arg22[%c80, %c0_82], %113 {strides = array<i32>} : memref<144x256xf32, #tpu.memory_space<vmem>>, vector<16x256xf32>,
    %c241_i32_83 = arith.constant 241 : i32
    %115 = tpu.dynamic_rotate %83 by %c241_i32_83 dim 1 : vector<16x256xf32>, i32 -> vector<16x256xf32>
    %c6_84 = arith.constant 6 : index
    %c0_85 = arith.constant 0 : index
    %c0_86 = arith.constant 0 : index
    %116 = vector.load %arg2[%c6_84, %c0_85, %c0_86] : memref<9x1x256xf32, #tpu.memory_space<vmem>>, vector<1x1x256xf32>
    %117 = vector.shape_cast %116 : vector<1x1x256xf32> to vector<1x256xf32>
    %118 = vector.broadcast %117 : vector<1x256xf32> to vector<16x256xf32>
    %119 = arith.mulf %115, %118 : vector<16x256xf32>
    %c96 = arith.constant 96 : index
    %c0_87 = arith.constant 0 : index
    %120 = vector.load %arg22[%c96, %c0_87] : memref<144x256xf32, #tpu.memory_space<vmem>>, vector<16x256xf32>
    tpu.vector_store %arg22[%c96, %c0_87], %119 {strides = array<i32>} : memref<144x256xf32, #tpu.memory_space<vmem>>, vector<16x256xf32>,
    %c240_i32_88 = arith.constant 240 : i32
    %121 = tpu.dynamic_rotate %83 by %c240_i32_88 dim 1 : vector<16x256xf32>, i32 -> vector<16x256xf32>
    %c7_89 = arith.constant 7 : index
    %c0_90 = arith.constant 0 : index
    %c0_91 = arith.constant 0 : index
    %122 = vector.load %arg2[%c7_89, %c0_90, %c0_91] : memref<9x1x256xf32, #tpu.memory_space<vmem>>, vector<1x1x256xf32>
    %123 = vector.shape_cast %122 : vector<1x1x256xf32> to vector<1x256xf32>
    %124 = vector.broadcast %123 : vector<1x256xf32> to vector<16x256xf32>
    %125 = arith.mulf %121, %124 : vector<16x256xf32>
    %c112 = arith.constant 112 : index
    %c0_92 = arith.constant 0 : index
    %126 = vector.load %arg22[%c112, %c0_92] : memref<144x256xf32, #tpu.memory_space<vmem>>, vector<16x256xf32>
    tpu.vector_store %arg22[%c112, %c0_92], %125 {strides = array<i32>} : memref<144x256xf32, #tpu.memory_space<vmem>>, vector<16x256xf32>,
    %c239_i32_93 = arith.constant 239 : i32
    %127 = tpu.dynamic_rotate %83 by %c239_i32_93 dim 1 : vector<16x256xf32>, i32 -> vector<16x256xf32>
    %c8_94 = arith.constant 8 : index
    %c0_95 = arith.constant 0 : index
    %c0_96 = arith.constant 0 : index
    %128 = vector.load %arg2[%c8_94, %c0_95, %c0_96] : memref<9x1x256xf32, #tpu.memory_space<vmem>>, vector<1x1x256xf32>
    %129 = vector.shape_cast %128 : vector<1x1x256xf32> to vector<1x256xf32>
    %130 = vector.broadcast %129 : vector<1x256xf32> to vector<16x256xf32>
    %131 = arith.mulf %127, %130 : vector<16x256xf32>
    %c128 = arith.constant 128 : index
    %c0_97 = arith.constant 0 : index
    %132 = vector.load %arg22[%c128, %c0_97] : memref<144x256xf32, #tpu.memory_space<vmem>>, vector<16x256xf32>
    tpu.vector_store %arg22[%c128, %c0_97], %131 {strides = array<i32>} : memref<144x256xf32, #tpu.memory_space<vmem>>, vector<16x256xf32>,
    %c0_98 = arith.constant 0 : index
    %c0_99 = arith.constant 0 : index
    %133 = vector.load %arg5[%c0_98, %c0_99] : memref<64x144xf32, #tpu.memory_space<vmem>>, vector<64x144xf32>
    %c0_100 = arith.constant 0 : index
    %c0_101 = arith.constant 0 : index
    %134 = vector.load %arg22[%c0_100, %c0_101] : memref<144x256xf32, #tpu.memory_space<vmem>>, vector<144x256xf32>
    %cst_102 = arith.constant dense<0.000000e+00> : vector<64x256xf32>
    %135 = tpu.matmul %133, %134, %cst_102 {dimension_numbers = #tpu.dot_dimension_numbers<[1], [0], [0], [1], [0, 0, 1, 1], [], []>} : vector<64x144xf32>, vector<144x256xf32>, vector<64x256xf32> -> vector<64x256xf32>
    %c0_103 = arith.constant 0 : index
    %c0_104 = arith.constant 0 : index
    %136 = vector.load %arg6[%c0_103, %c0_104] : memref<64x1xf32, #tpu.memory_space<vmem>>, vector<64x1xf32>
    %137 = vector.broadcast %136 : vector<64x1xf32> to vector<64x256xf32>
    %138 = arith.addf %135, %137 : vector<64x256xf32>
    %cst_105 = arith.constant 0.000000e+00 : f32
    %139 = vector.broadcast %cst_105 : f32 to vector<64x256xf32>
    %140 = arith.cmpf oge, %138, %139 : vector<64x256xf32>
    %cst_106 = arith.constant 0.00999999977 : f32
    %141 = vector.broadcast %cst_106 : f32 to vector<64x256xf32>
    %142 = arith.mulf %141, %138 : vector<64x256xf32>
    %143 = arith.select %140, %138, %142 : vector<64x256xi1>, vector<64x256xf32>
    %c0_107 = arith.constant 0 : index
    %c0_108 = arith.constant 0 : index
    %144 = vector.load %arg7[%c0_107, %c0_108] : memref<16x64xf32, #tpu.memory_space<vmem>>, vector<16x64xf32>
    %cst_109 = arith.constant dense<0.000000e+00> : vector<16x256xf32>
    %145 = tpu.matmul %144, %143, %cst_109 {dimension_numbers = #tpu.dot_dimension_numbers<[1], [0], [0], [1], [0, 0, 1, 1], [], []>} : vector<16x64xf32>, vector<64x256xf32>, vector<16x256xf32> -> vector<16x256xf32>
    %c0_110 = arith.constant 0 : index
    %c0_111 = arith.constant 0 : index
    %146 = vector.load %arg8[%c0_110, %c0_111] : memref<16x1xf32, #tpu.memory_space<vmem>>, vector<16x1xf32>
    %147 = vector.broadcast %146 : vector<16x1xf32> to vector<16x256xf32>
    %148 = arith.addf %145, %147 : vector<16x256xf32>
    %c17_i32_112 = arith.constant 17 : i32
    %149 = tpu.dynamic_rotate %148 by %c17_i32_112 dim 1 : vector<16x256xf32>, i32 -> vector<16x256xf32>
    %c0_113 = arith.constant 0 : index
    %c0_114 = arith.constant 0 : index
    %c0_115 = arith.constant 0 : index
    %150 = vector.load %arg2[%c0_113, %c0_114, %c0_115] : memref<9x1x256xf32, #tpu.memory_space<vmem>>, vector<1x1x256xf32>
    %151 = vector.shape_cast %150 : vector<1x1x256xf32> to vector<1x256xf32>
    %152 = vector.broadcast %151 : vector<1x256xf32> to vector<16x256xf32>
    %153 = arith.mulf %149, %152 : vector<16x256xf32>
    %c0_116 = arith.constant 0 : index
    %c0_117 = arith.constant 0 : index
    %154 = vector.load %arg22[%c0_116, %c0_117] : memref<144x256xf32, #tpu.memory_space<vmem>>, vector<16x256xf32>
    tpu.vector_store %arg22[%c0_116, %c0_117], %153 {strides = array<i32>} : memref<144x256xf32, #tpu.memory_space<vmem>>, vector<16x256xf32>,
    %c16_i32_118 = arith.constant 16 : i32
    %155 = tpu.dynamic_rotate %148 by %c16_i32_118 dim 1 : vector<16x256xf32>, i32 -> vector<16x256xf32>
    %c1_119 = arith.constant 1 : index
    %c0_120 = arith.constant 0 : index
    %c0_121 = arith.constant 0 : index
    %156 = vector.load %arg2[%c1_119, %c0_120, %c0_121] : memref<9x1x256xf32, #tpu.memory_space<vmem>>, vector<1x1x256xf32>
    %157 = vector.shape_cast %156 : vector<1x1x256xf32> to vector<1x256xf32>
    %158 = vector.broadcast %157 : vector<1x256xf32> to vector<16x256xf32>
    %159 = arith.mulf %155, %158 : vector<16x256xf32>
    %c16_122 = arith.constant 16 : index
    %c0_123 = arith.constant 0 : index
    %160 = vector.load %arg22[%c16_122, %c0_123] : memref<144x256xf32, #tpu.memory_space<vmem>>, vector<16x256xf32>
    tpu.vector_store %arg22[%c16_122, %c0_123], %159 {strides = array<i32>} : memref<144x256xf32, #tpu.memory_space<vmem>>, vector<16x256xf32>,
    %c15_i32_124 = arith.constant 15 : i32
    %161 = tpu.dynamic_rotate %148 by %c15_i32_124 dim 1 : vector<16x256xf32>, i32 -> vector<16x256xf32>
    %c2_125 = arith.constant 2 : index
    %c0_126 = arith.constant 0 : index
    %c0_127 = arith.constant 0 : index
    %162 = vector.load %arg2[%c2_125, %c0_126, %c0_127] : memref<9x1x256xf32, #tpu.memory_space<vmem>>, vector<1x1x256xf32>
    %163 = vector.shape_cast %162 : vector<1x1x256xf32> to vector<1x256xf32>
    %164 = vector.broadcast %163 : vector<1x256xf32> to vector<16x256xf32>
    %165 = arith.mulf %161, %164 : vector<16x256xf32>
    %c32_128 = arith.constant 32 : index
    %c0_129 = arith.constant 0 : index
    %166 = vector.load %arg22[%c32_128, %c0_129] : memref<144x256xf32, #tpu.memory_space<vmem>>, vector<16x256xf32>
    tpu.vector_store %arg22[%c32_128, %c0_129], %165 {strides = array<i32>} : memref<144x256xf32, #tpu.memory_space<vmem>>, vector<16x256xf32>,
    %c1_i32_130 = arith.constant 1 : i32
    %167 = tpu.dynamic_rotate %148 by %c1_i32_130 dim 1 : vector<16x256xf32>, i32 -> vector<16x256xf32>
    %c3_131 = arith.constant 3 : index
    %c0_132 = arith.constant 0 : index
    %c0_133 = arith.constant 0 : index
    %168 = vector.load %arg2[%c3_131, %c0_132, %c0_133] : memref<9x1x256xf32, #tpu.memory_space<vmem>>, vector<1x1x256xf32>
    %169 = vector.shape_cast %168 : vector<1x1x256xf32> to vector<1x256xf32>
    %170 = vector.broadcast %169 : vector<1x256xf32> to vector<16x256xf32>
    %171 = arith.mulf %167, %170 : vector<16x256xf32>
    %c48_134 = arith.constant 48 : index
    %c0_135 = arith.constant 0 : index
    %172 = vector.load %arg22[%c48_134, %c0_135] : memref<144x256xf32, #tpu.memory_space<vmem>>, vector<16x256xf32>
    tpu.vector_store %arg22[%c48_134, %c0_135], %171 {strides = array<i32>} : memref<144x256xf32, #tpu.memory_space<vmem>>, vector<16x256xf32>,
    %c64_136 = arith.constant 64 : index
    %c0_137 = arith.constant 0 : index
    %173 = vector.load %arg22[%c64_136, %c0_137] : memref<144x256xf32, #tpu.memory_space<vmem>>, vector<16x256xf32>
    tpu.vector_store %arg22[%c64_136, %c0_137], %148 {strides = array<i32>} : memref<144x256xf32, #tpu.memory_space<vmem>>, vector<16x256xf32>,
    %c255_i32_138 = arith.constant 255 : i32
    %174 = tpu.dynamic_rotate %148 by %c255_i32_138 dim 1 : vector<16x256xf32>, i32 -> vector<16x256xf32>
    %c5_139 = arith.constant 5 : index
    %c0_140 = arith.constant 0 : index
    %c0_141 = arith.constant 0 : index
    %175 = vector.load %arg2[%c5_139, %c0_140, %c0_141] : memref<9x1x256xf32, #tpu.memory_space<vmem>>, vector<1x1x256xf32>
    %176 = vector.shape_cast %175 : vector<1x1x256xf32> to vector<1x256xf32>
    %177 = vector.broadcast %176 : vector<1x256xf32> to vector<16x256xf32>
    %178 = arith.mulf %174, %177 : vector<16x256xf32>
    %c80_142 = arith.constant 80 : index
    %c0_143 = arith.constant 0 : index
    %179 = vector.load %arg22[%c80_142, %c0_143] : memref<144x256xf32, #tpu.memory_space<vmem>>, vector<16x256xf32>
    tpu.vector_store %arg22[%c80_142, %c0_143], %178 {strides = array<i32>} : memref<144x256xf32, #tpu.memory_space<vmem>>, vector<16x256xf32>,
    %c241_i32_144 = arith.constant 241 : i32
    %180 = tpu.dynamic_rotate %148 by %c241_i32_144 dim 1 : vector<16x256xf32>, i32 -> vector<16x256xf32>
    %c6_145 = arith.constant 6 : index
    %c0_146 = arith.constant 0 : index
    %c0_147 = arith.constant 0 : index
    %181 = vector.load %arg2[%c6_145, %c0_146, %c0_147] : memref<9x1x256xf32, #tpu.memory_space<vmem>>, vector<1x1x256xf32>
    %182 = vector.shape_cast %181 : vector<1x1x256xf32> to vector<1x256xf32>
    %183 = vector.broadcast %182 : vector<1x256xf32> to vector<16x256xf32>
    %184 = arith.mulf %180, %183 : vector<16x256xf32>
    %c96_148 = arith.constant 96 : index
    %c0_149 = arith.constant 0 : index
    %185 = vector.load %arg22[%c96_148, %c0_149] : memref<144x256xf32, #tpu.memory_space<vmem>>, vector<16x256xf32>
    tpu.vector_store %arg22[%c96_148, %c0_149], %184 {strides = array<i32>} : memref<144x256xf32, #tpu.memory_space<vmem>>, vector<16x256xf32>,
    %c240_i32_150 = arith.constant 240 : i32
    %186 = tpu.dynamic_rotate %148 by %c240_i32_150 dim 1 : vector<16x256xf32>, i32 -> vector<16x256xf32>
    %c7_151 = arith.constant 7 : index
    %c0_152 = arith.constant 0 : index
    %c0_153 = arith.constant 0 : index
    %187 = vector.load %arg2[%c7_151, %c0_152, %c0_153] : memref<9x1x256xf32, #tpu.memory_space<vmem>>, vector<1x1x256xf32>
    %188 = vector.shape_cast %187 : vector<1x1x256xf32> to vector<1x256xf32>
    %189 = vector.broadcast %188 : vector<1x256xf32> to vector<16x256xf32>
    %190 = arith.mulf %186, %189 : vector<16x256xf32>
    %c112_154 = arith.constant 112 : index
    %c0_155 = arith.constant 0 : index
    %191 = vector.load %arg22[%c112_154, %c0_155] : memref<144x256xf32, #tpu.memory_space<vmem>>, vector<16x256xf32>
    tpu.vector_store %arg22[%c112_154, %c0_155], %190 {strides = array<i32>} : memref<144x256xf32, #tpu.memory_space<vmem>>, vector<16x256xf32>,
    %c239_i32_156 = arith.constant 239 : i32
    %192 = tpu.dynamic_rotate %148 by %c239_i32_156 dim 1 : vector<16x256xf32>, i32 -> vector<16x256xf32>
    %c8_157 = arith.constant 8 : index
    %c0_158 = arith.constant 0 : index
    %c0_159 = arith.constant 0 : index
    %193 = vector.load %arg2[%c8_157, %c0_158, %c0_159] : memref<9x1x256xf32, #tpu.memory_space<vmem>>, vector<1x1x256xf32>
    %194 = vector.shape_cast %193 : vector<1x1x256xf32> to vector<1x256xf32>
    %195 = vector.broadcast %194 : vector<1x256xf32> to vector<16x256xf32>
    %196 = arith.mulf %192, %195 : vector<16x256xf32>
    %c128_160 = arith.constant 128 : index
    %c0_161 = arith.constant 0 : index
    %197 = vector.load %arg22[%c128_160, %c0_161] : memref<144x256xf32, #tpu.memory_space<vmem>>, vector<16x256xf32>
    tpu.vector_store %arg22[%c128_160, %c0_161], %196 {strides = array<i32>} : memref<144x256xf32, #tpu.memory_space<vmem>>, vector<16x256xf32>,
    %c0_162 = arith.constant 0 : index
    %c0_163 = arith.constant 0 : index
    %198 = vector.load %arg9[%c0_162, %c0_163] : memref<16x144xf32, #tpu.memory_space<vmem>>, vector<16x144xf32>
    %c0_164 = arith.constant 0 : index
    %c0_165 = arith.constant 0 : index
    %199 = vector.load %arg22[%c0_164, %c0_165] : memref<144x256xf32, #tpu.memory_space<vmem>>, vector<144x256xf32>
    %cst_166 = arith.constant dense<0.000000e+00> : vector<16x256xf32>
    %200 = tpu.matmul %198, %199, %cst_166 {dimension_numbers = #tpu.dot_dimension_numbers<[1], [0], [0], [1], [0, 0, 1, 1], [], []>} : vector<16x144xf32>, vector<144x256xf32>, vector<16x256xf32> -> vector<16x256xf32>
    %c0_167 = arith.constant 0 : index
    %c0_168 = arith.constant 0 : index
    %201 = vector.load %arg10[%c0_167, %c0_168] : memref<16x1xf32, #tpu.memory_space<vmem>>, vector<16x1xf32>
    %202 = vector.broadcast %201 : vector<16x1xf32> to vector<16x256xf32>
    %203 = arith.addf %200, %202 : vector<16x256xf32>
    %cst_169 = arith.constant 0.000000e+00 : f32
    %204 = vector.broadcast %cst_169 : f32 to vector<16x256xf32>
    %205 = arith.cmpf oge, %203, %204 : vector<16x256xf32>
    %cst_170 = arith.constant 0.00999999977 : f32
    %206 = vector.broadcast %cst_170 : f32 to vector<16x256xf32>
    %207 = arith.mulf %206, %203 : vector<16x256xf32>
    %208 = arith.select %205, %203, %207 : vector<16x256xi1>, vector<16x256xf32>
    %c17_i32_171 = arith.constant 17 : i32
    %209 = tpu.dynamic_rotate %208 by %c17_i32_171 dim 1 : vector<16x256xf32>, i32 -> vector<16x256xf32>
    %c0_172 = arith.constant 0 : index
    %c0_173 = arith.constant 0 : index
    %c0_174 = arith.constant 0 : index
    %210 = vector.load %arg2[%c0_172, %c0_173, %c0_174] : memref<9x1x256xf32, #tpu.memory_space<vmem>>, vector<1x1x256xf32>
    %211 = vector.shape_cast %210 : vector<1x1x256xf32> to vector<1x256xf32>
    %212 = vector.broadcast %211 : vector<1x256xf32> to vector<16x256xf32>
    %213 = arith.mulf %209, %212 : vector<16x256xf32>
    %c0_175 = arith.constant 0 : index
    %c0_176 = arith.constant 0 : index
    %214 = vector.load %arg22[%c0_175, %c0_176] : memref<144x256xf32, #tpu.memory_space<vmem>>, vector<16x256xf32>
    tpu.vector_store %arg22[%c0_175, %c0_176], %213 {strides = array<i32>} : memref<144x256xf32, #tpu.memory_space<vmem>>, vector<16x256xf32>,
    %c16_i32_177 = arith.constant 16 : i32
    %215 = tpu.dynamic_rotate %208 by %c16_i32_177 dim 1 : vector<16x256xf32>, i32 -> vector<16x256xf32>
    %c1_178 = arith.constant 1 : index
    %c0_179 = arith.constant 0 : index
    %c0_180 = arith.constant 0 : index
    %216 = vector.load %arg2[%c1_178, %c0_179, %c0_180] : memref<9x1x256xf32, #tpu.memory_space<vmem>>, vector<1x1x256xf32>
    %217 = vector.shape_cast %216 : vector<1x1x256xf32> to vector<1x256xf32>
    %218 = vector.broadcast %217 : vector<1x256xf32> to vector<16x256xf32>
    %219 = arith.mulf %215, %218 : vector<16x256xf32>
    %c16_181 = arith.constant 16 : index
    %c0_182 = arith.constant 0 : index
    %220 = vector.load %arg22[%c16_181, %c0_182] : memref<144x256xf32, #tpu.memory_space<vmem>>, vector<16x256xf32>
    tpu.vector_store %arg22[%c16_181, %c0_182], %219 {strides = array<i32>} : memref<144x256xf32, #tpu.memory_space<vmem>>, vector<16x256xf32>,
    %c15_i32_183 = arith.constant 15 : i32
    %221 = tpu.dynamic_rotate %208 by %c15_i32_183 dim 1 : vector<16x256xf32>, i32 -> vector<16x256xf32>
    %c2_184 = arith.constant 2 : index
    %c0_185 = arith.constant 0 : index
    %c0_186 = arith.constant 0 : index
    %222 = vector.load %arg2[%c2_184, %c0_185, %c0_186] : memref<9x1x256xf32, #tpu.memory_space<vmem>>, vector<1x1x256xf32>
    %223 = vector.shape_cast %222 : vector<1x1x256xf32> to vector<1x256xf32>
    %224 = vector.broadcast %223 : vector<1x256xf32> to vector<16x256xf32>
    %225 = arith.mulf %221, %224 : vector<16x256xf32>
    %c32_187 = arith.constant 32 : index
    %c0_188 = arith.constant 0 : index
    %226 = vector.load %arg22[%c32_187, %c0_188] : memref<144x256xf32, #tpu.memory_space<vmem>>, vector<16x256xf32>
    tpu.vector_store %arg22[%c32_187, %c0_188], %225 {strides = array<i32>} : memref<144x256xf32, #tpu.memory_space<vmem>>, vector<16x256xf32>,
    %c1_i32_189 = arith.constant 1 : i32
    %227 = tpu.dynamic_rotate %208 by %c1_i32_189 dim 1 : vector<16x256xf32>, i32 -> vector<16x256xf32>
    %c3_190 = arith.constant 3 : index
    %c0_191 = arith.constant 0 : index
    %c0_192 = arith.constant 0 : index
    %228 = vector.load %arg2[%c3_190, %c0_191, %c0_192] : memref<9x1x256xf32, #tpu.memory_space<vmem>>, vector<1x1x256xf32>
    %229 = vector.shape_cast %228 : vector<1x1x256xf32> to vector<1x256xf32>
    %230 = vector.broadcast %229 : vector<1x256xf32> to vector<16x256xf32>
    %231 = arith.mulf %227, %230 : vector<16x256xf32>
    %c48_193 = arith.constant 48 : index
    %c0_194 = arith.constant 0 : index
    %232 = vector.load %arg22[%c48_193, %c0_194] : memref<144x256xf32, #tpu.memory_space<vmem>>, vector<16x256xf32>
    tpu.vector_store %arg22[%c48_193, %c0_194], %231 {strides = array<i32>} : memref<144x256xf32, #tpu.memory_space<vmem>>, vector<16x256xf32>,
    %c64_195 = arith.constant 64 : index
    %c0_196 = arith.constant 0 : index
    %233 = vector.load %arg22[%c64_195, %c0_196] : memref<144x256xf32, #tpu.memory_space<vmem>>, vector<16x256xf32>
    tpu.vector_store %arg22[%c64_195, %c0_196], %208 {strides = array<i32>} : memref<144x256xf32, #tpu.memory_space<vmem>>, vector<16x256xf32>,
    %c255_i32_197 = arith.constant 255 : i32
    %234 = tpu.dynamic_rotate %208 by %c255_i32_197 dim 1 : vector<16x256xf32>, i32 -> vector<16x256xf32>
    %c5_198 = arith.constant 5 : index
    %c0_199 = arith.constant 0 : index
    %c0_200 = arith.constant 0 : index
    %235 = vector.load %arg2[%c5_198, %c0_199, %c0_200] : memref<9x1x256xf32, #tpu.memory_space<vmem>>, vector<1x1x256xf32>
    %236 = vector.shape_cast %235 : vector<1x1x256xf32> to vector<1x256xf32>
    %237 = vector.broadcast %236 : vector<1x256xf32> to vector<16x256xf32>
    %238 = arith.mulf %234, %237 : vector<16x256xf32>
    %c80_201 = arith.constant 80 : index
    %c0_202 = arith.constant 0 : index
    %239 = vector.load %arg22[%c80_201, %c0_202] : memref<144x256xf32, #tpu.memory_space<vmem>>, vector<16x256xf32>
    tpu.vector_store %arg22[%c80_201, %c0_202], %238 {strides = array<i32>} : memref<144x256xf32, #tpu.memory_space<vmem>>, vector<16x256xf32>,
    %c241_i32_203 = arith.constant 241 : i32
    %240 = tpu.dynamic_rotate %208 by %c241_i32_203 dim 1 : vector<16x256xf32>, i32 -> vector<16x256xf32>
    %c6_204 = arith.constant 6 : index
    %c0_205 = arith.constant 0 : index
    %c0_206 = arith.constant 0 : index
    %241 = vector.load %arg2[%c6_204, %c0_205, %c0_206] : memref<9x1x256xf32, #tpu.memory_space<vmem>>, vector<1x1x256xf32>
    %242 = vector.shape_cast %241 : vector<1x1x256xf32> to vector<1x256xf32>
    %243 = vector.broadcast %242 : vector<1x256xf32> to vector<16x256xf32>
    %244 = arith.mulf %240, %243 : vector<16x256xf32>
    %c96_207 = arith.constant 96 : index
    %c0_208 = arith.constant 0 : index
    %245 = vector.load %arg22[%c96_207, %c0_208] : memref<144x256xf32, #tpu.memory_space<vmem>>, vector<16x256xf32>
    tpu.vector_store %arg22[%c96_207, %c0_208], %244 {strides = array<i32>} : memref<144x256xf32, #tpu.memory_space<vmem>>, vector<16x256xf32>,
    %c240_i32_209 = arith.constant 240 : i32
    %246 = tpu.dynamic_rotate %208 by %c240_i32_209 dim 1 : vector<16x256xf32>, i32 -> vector<16x256xf32>
    %c7_210 = arith.constant 7 : index
    %c0_211 = arith.constant 0 : index
    %c0_212 = arith.constant 0 : index
    %247 = vector.load %arg2[%c7_210, %c0_211, %c0_212] : memref<9x1x256xf32, #tpu.memory_space<vmem>>, vector<1x1x256xf32>
    %248 = vector.shape_cast %247 : vector<1x1x256xf32> to vector<1x256xf32>
    %249 = vector.broadcast %248 : vector<1x256xf32> to vector<16x256xf32>
    %250 = arith.mulf %246, %249 : vector<16x256xf32>
    %c112_213 = arith.constant 112 : index
    %c0_214 = arith.constant 0 : index
    %251 = vector.load %arg22[%c112_213, %c0_214] : memref<144x256xf32, #tpu.memory_space<vmem>>, vector<16x256xf32>
    tpu.vector_store %arg22[%c112_213, %c0_214], %250 {strides = array<i32>} : memref<144x256xf32, #tpu.memory_space<vmem>>, vector<16x256xf32>,
    %c239_i32_215 = arith.constant 239 : i32
    %252 = tpu.dynamic_rotate %208 by %c239_i32_215 dim 1 : vector<16x256xf32>, i32 -> vector<16x256xf32>
    %c8_216 = arith.constant 8 : index
    %c0_217 = arith.constant 0 : index
    %c0_218 = arith.constant 0 : index
    %253 = vector.load %arg2[%c8_216, %c0_217, %c0_218] : memref<9x1x256xf32, #tpu.memory_space<vmem>>, vector<1x1x256xf32>
    %254 = vector.shape_cast %253 : vector<1x1x256xf32> to vector<1x256xf32>
    %255 = vector.broadcast %254 : vector<1x256xf32> to vector<16x256xf32>
    %256 = arith.mulf %252, %255 : vector<16x256xf32>
    %c128_219 = arith.constant 128 : index
    %c0_220 = arith.constant 0 : index
    %257 = vector.load %arg22[%c128_219, %c0_220] : memref<144x256xf32, #tpu.memory_space<vmem>>, vector<16x256xf32>
    tpu.vector_store %arg22[%c128_219, %c0_220], %256 {strides = array<i32>} : memref<144x256xf32, #tpu.memory_space<vmem>>, vector<16x256xf32>,
    %c0_221 = arith.constant 0 : index
    %c0_222 = arith.constant 0 : index
    %258 = vector.load %arg11[%c0_221, %c0_222] : memref<3x144xf32, #tpu.memory_space<vmem>>, vector<3x144xf32>
    %c0_223 = arith.constant 0 : index
    %c0_224 = arith.constant 0 : index
    %259 = vector.load %arg22[%c0_223, %c0_224] : memref<144x256xf32, #tpu.memory_space<vmem>>, vector<144x256xf32>
    %cst_225 = arith.constant dense<0.000000e+00> : vector<3x256xf32>
    %260 = tpu.matmul %258, %259, %cst_225 {dimension_numbers = #tpu.dot_dimension_numbers<[1], [0], [0], [1], [0, 0, 1, 1], [], []>} : vector<3x144xf32>, vector<144x256xf32>, vector<3x256xf32> -> vector<3x256xf32>
    %c0_226 = arith.constant 0 : index
    %c0_227 = arith.constant 0 : index
    %261 = vector.load %arg12[%c0_226, %c0_227] : memref<3x1xf32, #tpu.memory_space<vmem>>, vector<3x1xf32>
    %262 = vector.broadcast %261 : vector<3x1xf32> to vector<3x256xf32>
    %263 = arith.addf %260, %262 : vector<3x256xf32>
    %264 = arith.addf %0, %263 : vector<3x256xf32>
    %cst_228 = arith.constant 0.000000e+00 : f32
    %265 = vector.broadcast %cst_228 : f32 to vector<3x256xf32>
    %266 = arith.maximumf %264, %265 : vector<3x256xf32>
    %c0_229 = arith.constant 0 : index
    %c0_230 = arith.constant 0 : index
    %267 = vector.load %arg20[%c0_229, %c0_230] : memref<3x256xf32, #tpu.memory_space<vmem>>, vector<3x256xf32>
    tpu.vector_store %arg20[%c0_229, %c0_230], %266 {strides = array<i32>} : memref<3x256xf32, #tpu.memory_space<vmem>>, vector<3x256xf32>,
    %c0_231 = arith.constant 0 : index
    %c0_232 = arith.constant 0 : index
    %c0_233 = arith.constant 0 : index
    %268 = vector.load %arg13[%c0_231, %c0_232, %c0_233] : memref<9x16x3xf32, #tpu.memory_space<vmem>>, vector<1x16x3xf32>
    %269 = vector.shape_cast %268 : vector<1x16x3xf32> to vector<16x3xf32>
    %c17_i32_234 = arith.constant 17 : i32
    %270 = tpu.dynamic_rotate %0 by %c17_i32_234 dim 1 : vector<3x256xf32>, i32 -> vector<3x256xf32>
    %c0_235 = arith.constant 0 : index
    %c0_236 = arith.constant 0 : index
    %c0_237 = arith.constant 0 : index
    %271 = vector.load %arg2[%c0_235, %c0_236, %c0_237] : memref<9x1x256xf32, #tpu.memory_space<vmem>>, vector<1x1x256xf32>
    %272 = vector.shape_cast %271 : vector<1x1x256xf32> to vector<1x256xf32>
    %273 = vector.broadcast %272 : vector<1x256xf32> to vector<3x256xf32>
    %274 = arith.mulf %270, %273 : vector<3x256xf32>
    %cst_238 = arith.constant dense<0.000000e+00> : vector<16x256xf32>
    %275 = tpu.matmul %269, %274, %cst_238 {dimension_numbers = #tpu.dot_dimension_numbers<[1], [0], [0], [1], [0, 0, 1, 1], [], []>} : vector<16x3xf32>, vector<3x256xf32>, vector<16x256xf32> -> vector<16x256xf32>
    %c1_239 = arith.constant 1 : index
    %c0_240 = arith.constant 0 : index
    %c0_241 = arith.constant 0 : index
    %276 = vector.load %arg13[%c1_239, %c0_240, %c0_241] : memref<9x16x3xf32, #tpu.memory_space<vmem>>, vector<1x16x3xf32>
    %277 = vector.shape_cast %276 : vector<1x16x3xf32> to vector<16x3xf32>
    %c16_i32_242 = arith.constant 16 : i32
    %278 = tpu.dynamic_rotate %0 by %c16_i32_242 dim 1 : vector<3x256xf32>, i32 -> vector<3x256xf32>
    %c1_243 = arith.constant 1 : index
    %c0_244 = arith.constant 0 : index
    %c0_245 = arith.constant 0 : index
    %279 = vector.load %arg2[%c1_243, %c0_244, %c0_245] : memref<9x1x256xf32, #tpu.memory_space<vmem>>, vector<1x1x256xf32>
    %280 = vector.shape_cast %279 : vector<1x1x256xf32> to vector<1x256xf32>
    %281 = vector.broadcast %280 : vector<1x256xf32> to vector<3x256xf32>
    %282 = arith.mulf %278, %281 : vector<3x256xf32>
    %cst_246 = arith.constant dense<0.000000e+00> : vector<16x256xf32>
    %283 = tpu.matmul %277, %282, %cst_246 {dimension_numbers = #tpu.dot_dimension_numbers<[1], [0], [0], [1], [0, 0, 1, 1], [], []>} : vector<16x3xf32>, vector<3x256xf32>, vector<16x256xf32> -> vector<16x256xf32>
    %284 = arith.addf %275, %283 : vector<16x256xf32>
    %c2_247 = arith.constant 2 : index
    %c0_248 = arith.constant 0 : index
    %c0_249 = arith.constant 0 : index
    %285 = vector.load %arg13[%c2_247, %c0_248, %c0_249] : memref<9x16x3xf32, #tpu.memory_space<vmem>>, vector<1x16x3xf32>
    %286 = vector.shape_cast %285 : vector<1x16x3xf32> to vector<16x3xf32>
    %c15_i32_250 = arith.constant 15 : i32
    %287 = tpu.dynamic_rotate %0 by %c15_i32_250 dim 1 : vector<3x256xf32>, i32 -> vector<3x256xf32>
    %c2_251 = arith.constant 2 : index
    %c0_252 = arith.constant 0 : index
    %c0_253 = arith.constant 0 : index
    %288 = vector.load %arg2[%c2_251, %c0_252, %c0_253] : memref<9x1x256xf32, #tpu.memory_space<vmem>>, vector<1x1x256xf32>
    %289 = vector.shape_cast %288 : vector<1x1x256xf32> to vector<1x256xf32>
    %290 = vector.broadcast %289 : vector<1x256xf32> to vector<3x256xf32>
    %291 = arith.mulf %287, %290 : vector<3x256xf32>
    %cst_254 = arith.constant dense<0.000000e+00> : vector<16x256xf32>
    %292 = tpu.matmul %286, %291, %cst_254 {dimension_numbers = #tpu.dot_dimension_numbers<[1], [0], [0], [1], [0, 0, 1, 1], [], []>} : vector<16x3xf32>, vector<3x256xf32>, vector<16x256xf32> -> vector<16x256xf32>
    %293 = arith.addf %284, %292 : vector<16x256xf32>
    %c3_255 = arith.constant 3 : index
    %c0_256 = arith.constant 0 : index
    %c0_257 = arith.constant 0 : index
    %294 = vector.load %arg13[%c3_255, %c0_256, %c0_257] : memref<9x16x3xf32, #tpu.memory_space<vmem>>, vector<1x16x3xf32>
    %295 = vector.shape_cast %294 : vector<1x16x3xf32> to vector<16x3xf32>
    %c1_i32_258 = arith.constant 1 : i32
    %296 = tpu.dynamic_rotate %0 by %c1_i32_258 dim 1 : vector<3x256xf32>, i32 -> vector<3x256xf32>
    %c3_259 = arith.constant 3 : index
    %c0_260 = arith.constant 0 : index
    %c0_261 = arith.constant 0 : index
    %297 = vector.load %arg2[%c3_259, %c0_260, %c0_261] : memref<9x1x256xf32, #tpu.memory_space<vmem>>, vector<1x1x256xf32>
    %298 = vector.shape_cast %297 : vector<1x1x256xf32> to vector<1x256xf32>
    %299 = vector.broadcast %298 : vector<1x256xf32> to vector<3x256xf32>
    %300 = arith.mulf %296, %299 : vector<3x256xf32>
    %cst_262 = arith.constant dense<0.000000e+00> : vector<16x256xf32>
    %301 = tpu.matmul %295, %300, %cst_262 {dimension_numbers = #tpu.dot_dimension_numbers<[1], [0], [0], [1], [0, 0, 1, 1], [], []>} : vector<16x3xf32>, vector<3x256xf32>, vector<16x256xf32> -> vector<16x256xf32>
    %302 = arith.addf %293, %301 : vector<16x256xf32>
    %c4_263 = arith.constant 4 : index
    %c0_264 = arith.constant 0 : index
    %c0_265 = arith.constant 0 : index
    %303 = vector.load %arg13[%c4_263, %c0_264, %c0_265] : memref<9x16x3xf32, #tpu.memory_space<vmem>>, vector<1x16x3xf32>
    %304 = vector.shape_cast %303 : vector<1x16x3xf32> to vector<16x3xf32>
    %cst_266 = arith.constant dense<0.000000e+00> : vector<16x256xf32>
    %305 = tpu.matmul %304, %0, %cst_266 {dimension_numbers = #tpu.dot_dimension_numbers<[1], [0], [0], [1], [0, 0, 1, 1], [], []>} : vector<16x3xf32>, vector<3x256xf32>, vector<16x256xf32> -> vector<16x256xf32>
    %306 = arith.addf %302, %305 : vector<16x256xf32>
    %c5_267 = arith.constant 5 : index
    %c0_268 = arith.constant 0 : index
    %c0_269 = arith.constant 0 : index
    %307 = vector.load %arg13[%c5_267, %c0_268, %c0_269] : memref<9x16x3xf32, #tpu.memory_space<vmem>>, vector<1x16x3xf32>
    %308 = vector.shape_cast %307 : vector<1x16x3xf32> to vector<16x3xf32>
    %c255_i32_270 = arith.constant 255 : i32
    %309 = tpu.dynamic_rotate %0 by %c255_i32_270 dim 1 : vector<3x256xf32>, i32 -> vector<3x256xf32>
    %c5_271 = arith.constant 5 : index
    %c0_272 = arith.constant 0 : index
    %c0_273 = arith.constant 0 : index
    %310 = vector.load %arg2[%c5_271, %c0_272, %c0_273] : memref<9x1x256xf32, #tpu.memory_space<vmem>>, vector<1x1x256xf32>
    %311 = vector.shape_cast %310 : vector<1x1x256xf32> to vector<1x256xf32>
    %312 = vector.broadcast %311 : vector<1x256xf32> to vector<3x256xf32>
    %313 = arith.mulf %309, %312 : vector<3x256xf32>
    %cst_274 = arith.constant dense<0.000000e+00> : vector<16x256xf32>
    %314 = tpu.matmul %308, %313, %cst_274 {dimension_numbers = #tpu.dot_dimension_numbers<[1], [0], [0], [1], [0, 0, 1, 1], [], []>} : vector<16x3xf32>, vector<3x256xf32>, vector<16x256xf32> -> vector<16x256xf32>
    %315 = arith.addf %306, %314 : vector<16x256xf32>
    %c6_275 = arith.constant 6 : index
    %c0_276 = arith.constant 0 : index
    %c0_277 = arith.constant 0 : index
    %316 = vector.load %arg13[%c6_275, %c0_276, %c0_277] : memref<9x16x3xf32, #tpu.memory_space<vmem>>, vector<1x16x3xf32>
    %317 = vector.shape_cast %316 : vector<1x16x3xf32> to vector<16x3xf32>
    %c241_i32_278 = arith.constant 241 : i32
    %318 = tpu.dynamic_rotate %0 by %c241_i32_278 dim 1 : vector<3x256xf32>, i32 -> vector<3x256xf32>
    %c6_279 = arith.constant 6 : index
    %c0_280 = arith.constant 0 : index
    %c0_281 = arith.constant 0 : index
    %319 = vector.load %arg2[%c6_279, %c0_280, %c0_281] : memref<9x1x256xf32, #tpu.memory_space<vmem>>, vector<1x1x256xf32>
    %320 = vector.shape_cast %319 : vector<1x1x256xf32> to vector<1x256xf32>
    %321 = vector.broadcast %320 : vector<1x256xf32> to vector<3x256xf32>
    %322 = arith.mulf %318, %321 : vector<3x256xf32>
    %cst_282 = arith.constant dense<0.000000e+00> : vector<16x256xf32>
    %323 = tpu.matmul %317, %322, %cst_282 {dimension_numbers = #tpu.dot_dimension_numbers<[1], [0], [0], [1], [0, 0, 1, 1], [], []>} : vector<16x3xf32>, vector<3x256xf32>, vector<16x256xf32> -> vector<16x256xf32>
    %324 = arith.addf %315, %323 : vector<16x256xf32>
    %c7_283 = arith.constant 7 : index
    %c0_284 = arith.constant 0 : index
    %c0_285 = arith.constant 0 : index
    %325 = vector.load %arg13[%c7_283, %c0_284, %c0_285] : memref<9x16x3xf32, #tpu.memory_space<vmem>>, vector<1x16x3xf32>
    %326 = vector.shape_cast %325 : vector<1x16x3xf32> to vector<16x3xf32>
    %c240_i32_286 = arith.constant 240 : i32
    %327 = tpu.dynamic_rotate %0 by %c240_i32_286 dim 1 : vector<3x256xf32>, i32 -> vector<3x256xf32>
    %c7_287 = arith.constant 7 : index
    %c0_288 = arith.constant 0 : index
    %c0_289 = arith.constant 0 : index
    %328 = vector.load %arg2[%c7_287, %c0_288, %c0_289] : memref<9x1x256xf32, #tpu.memory_space<vmem>>, vector<1x1x256xf32>
    %329 = vector.shape_cast %328 : vector<1x1x256xf32> to vector<1x256xf32>
    %330 = vector.broadcast %329 : vector<1x256xf32> to vector<3x256xf32>
    %331 = arith.mulf %327, %330 : vector<3x256xf32>
    %cst_290 = arith.constant dense<0.000000e+00> : vector<16x256xf32>
    %332 = tpu.matmul %326, %331, %cst_290 {dimension_numbers = #tpu.dot_dimension_numbers<[1], [0], [0], [1], [0, 0, 1, 1], [], []>} : vector<16x3xf32>, vector<3x256xf32>, vector<16x256xf32> -> vector<16x256xf32>
    %333 = arith.addf %324, %332 : vector<16x256xf32>
    %c8_291 = arith.constant 8 : index
    %c0_292 = arith.constant 0 : index
    %c0_293 = arith.constant 0 : index
    %334 = vector.load %arg13[%c8_291, %c0_292, %c0_293] : memref<9x16x3xf32, #tpu.memory_space<vmem>>, vector<1x16x3xf32>
    %335 = vector.shape_cast %334 : vector<1x16x3xf32> to vector<16x3xf32>
    %c239_i32_294 = arith.constant 239 : i32
    %336 = tpu.dynamic_rotate %0 by %c239_i32_294 dim 1 : vector<3x256xf32>, i32 -> vector<3x256xf32>
    %c8_295 = arith.constant 8 : index
    %c0_296 = arith.constant 0 : index
    %c0_297 = arith.constant 0 : index
    %337 = vector.load %arg2[%c8_295, %c0_296, %c0_297] : memref<9x1x256xf32, #tpu.memory_space<vmem>>, vector<1x1x256xf32>
    %338 = vector.shape_cast %337 : vector<1x1x256xf32> to vector<1x256xf32>
    %339 = vector.broadcast %338 : vector<1x256xf32> to vector<3x256xf32>
    %340 = arith.mulf %336, %339 : vector<3x256xf32>
    %cst_298 = arith.constant dense<0.000000e+00> : vector<16x256xf32>
    %341 = tpu.matmul %335, %340, %cst_298 {dimension_numbers = #tpu.dot_dimension_numbers<[1], [0], [0], [1], [0, 0, 1, 1], [], []>} : vector<16x3xf32>, vector<3x256xf32>, vector<16x256xf32> -> vector<16x256xf32>
    %342 = arith.addf %333, %341 : vector<16x256xf32>
    %c0_299 = arith.constant 0 : index
    %c0_300 = arith.constant 0 : index
    %c0_301 = arith.constant 0 : index
    %343 = vector.load %arg14[%c0_299, %c0_300, %c0_301] : memref<9x16x3xf32, #tpu.memory_space<vmem>>, vector<1x16x3xf32>
    %344 = vector.shape_cast %343 : vector<1x16x3xf32> to vector<16x3xf32>
    %c17_i32_302 = arith.constant 17 : i32
    %345 = tpu.dynamic_rotate %266 by %c17_i32_302 dim 1 : vector<3x256xf32>, i32 -> vector<3x256xf32>
    %c0_303 = arith.constant 0 : index
    %c0_304 = arith.constant 0 : index
    %c0_305 = arith.constant 0 : index
    %346 = vector.load %arg2[%c0_303, %c0_304, %c0_305] : memref<9x1x256xf32, #tpu.memory_space<vmem>>, vector<1x1x256xf32>
    %347 = vector.shape_cast %346 : vector<1x1x256xf32> to vector<1x256xf32>
    %348 = vector.broadcast %347 : vector<1x256xf32> to vector<3x256xf32>
    %349 = arith.mulf %345, %348 : vector<3x256xf32>
    %cst_306 = arith.constant dense<0.000000e+00> : vector<16x256xf32>
    %350 = tpu.matmul %344, %349, %cst_306 {dimension_numbers = #tpu.dot_dimension_numbers<[1], [0], [0], [1], [0, 0, 1, 1], [], []>} : vector<16x3xf32>, vector<3x256xf32>, vector<16x256xf32> -> vector<16x256xf32>
    %c1_307 = arith.constant 1 : index
    %c0_308 = arith.constant 0 : index
    %c0_309 = arith.constant 0 : index
    %351 = vector.load %arg14[%c1_307, %c0_308, %c0_309] : memref<9x16x3xf32, #tpu.memory_space<vmem>>, vector<1x16x3xf32>
    %352 = vector.shape_cast %351 : vector<1x16x3xf32> to vector<16x3xf32>
    %c16_i32_310 = arith.constant 16 : i32
    %353 = tpu.dynamic_rotate %266 by %c16_i32_310 dim 1 : vector<3x256xf32>, i32 -> vector<3x256xf32>
    %c1_311 = arith.constant 1 : index
    %c0_312 = arith.constant 0 : index
    %c0_313 = arith.constant 0 : index
    %354 = vector.load %arg2[%c1_311, %c0_312, %c0_313] : memref<9x1x256xf32, #tpu.memory_space<vmem>>, vector<1x1x256xf32>
    %355 = vector.shape_cast %354 : vector<1x1x256xf32> to vector<1x256xf32>
    %356 = vector.broadcast %355 : vector<1x256xf32> to vector<3x256xf32>
    %357 = arith.mulf %353, %356 : vector<3x256xf32>
    %cst_314 = arith.constant dense<0.000000e+00> : vector<16x256xf32>
    %358 = tpu.matmul %352, %357, %cst_314 {dimension_numbers = #tpu.dot_dimension_numbers<[1], [0], [0], [1], [0, 0, 1, 1], [], []>} : vector<16x3xf32>, vector<3x256xf32>, vector<16x256xf32> -> vector<16x256xf32>
    %359 = arith.addf %350, %358 : vector<16x256xf32>
    %c2_315 = arith.constant 2 : index
    %c0_316 = arith.constant 0 : index
    %c0_317 = arith.constant 0 : index
    %360 = vector.load %arg14[%c2_315, %c0_316, %c0_317] : memref<9x16x3xf32, #tpu.memory_space<vmem>>, vector<1x16x3xf32>
    %361 = vector.shape_cast %360 : vector<1x16x3xf32> to vector<16x3xf32>
    %c15_i32_318 = arith.constant 15 : i32
    %362 = tpu.dynamic_rotate %266 by %c15_i32_318 dim 1 : vector<3x256xf32>, i32 -> vector<3x256xf32>
    %c2_319 = arith.constant 2 : index
    %c0_320 = arith.constant 0 : index
    %c0_321 = arith.constant 0 : index
    %363 = vector.load %arg2[%c2_319, %c0_320, %c0_321] : memref<9x1x256xf32, #tpu.memory_space<vmem>>, vector<1x1x256xf32>
    %364 = vector.shape_cast %363 : vector<1x1x256xf32> to vector<1x256xf32>
    %365 = vector.broadcast %364 : vector<1x256xf32> to vector<3x256xf32>
    %366 = arith.mulf %362, %365 : vector<3x256xf32>
    %cst_322 = arith.constant dense<0.000000e+00> : vector<16x256xf32>
    %367 = tpu.matmul %361, %366, %cst_322 {dimension_numbers = #tpu.dot_dimension_numbers<[1], [0], [0], [1], [0, 0, 1, 1], [], []>} : vector<16x3xf32>, vector<3x256xf32>, vector<16x256xf32> -> vector<16x256xf32>
    %368 = arith.addf %359, %367 : vector<16x256xf32>
    %c3_323 = arith.constant 3 : index
    %c0_324 = arith.constant 0 : index
    %c0_325 = arith.constant 0 : index
    %369 = vector.load %arg14[%c3_323, %c0_324, %c0_325] : memref<9x16x3xf32, #tpu.memory_space<vmem>>, vector<1x16x3xf32>
    %370 = vector.shape_cast %369 : vector<1x16x3xf32> to vector<16x3xf32>
    %c1_i32_326 = arith.constant 1 : i32
    %371 = tpu.dynamic_rotate %266 by %c1_i32_326 dim 1 : vector<3x256xf32>, i32 -> vector<3x256xf32>
    %c3_327 = arith.constant 3 : index
    %c0_328 = arith.constant 0 : index
    %c0_329 = arith.constant 0 : index
    %372 = vector.load %arg2[%c3_327, %c0_328, %c0_329] : memref<9x1x256xf32, #tpu.memory_space<vmem>>, vector<1x1x256xf32>
    %373 = vector.shape_cast %372 : vector<1x1x256xf32> to vector<1x256xf32>
    %374 = vector.broadcast %373 : vector<1x256xf32> to vector<3x256xf32>
    %375 = arith.mulf %371, %374 : vector<3x256xf32>
    %cst_330 = arith.constant dense<0.000000e+00> : vector<16x256xf32>
    %376 = tpu.matmul %370, %375, %cst_330 {dimension_numbers = #tpu.dot_dimension_numbers<[1], [0], [0], [1], [0, 0, 1, 1], [], []>} : vector<16x3xf32>, vector<3x256xf32>, vector<16x256xf32> -> vector<16x256xf32>
    %377 = arith.addf %368, %376 : vector<16x256xf32>
    %c4_331 = arith.constant 4 : index
    %c0_332 = arith.constant 0 : index
    %c0_333 = arith.constant 0 : index
    %378 = vector.load %arg14[%c4_331, %c0_332, %c0_333] : memref<9x16x3xf32, #tpu.memory_space<vmem>>, vector<1x16x3xf32>
    %379 = vector.shape_cast %378 : vector<1x16x3xf32> to vector<16x3xf32>
    %cst_334 = arith.constant dense<0.000000e+00> : vector<16x256xf32>
    %380 = tpu.matmul %379, %266, %cst_334 {dimension_numbers = #tpu.dot_dimension_numbers<[1], [0], [0], [1], [0, 0, 1, 1], [], []>} : vector<16x3xf32>, vector<3x256xf32>, vector<16x256xf32> -> vector<16x256xf32>
    %381 = arith.addf %377, %380 : vector<16x256xf32>
    %c5_335 = arith.constant 5 : index
    %c0_336 = arith.constant 0 : index
    %c0_337 = arith.constant 0 : index
    %382 = vector.load %arg14[%c5_335, %c0_336, %c0_337] : memref<9x16x3xf32, #tpu.memory_space<vmem>>, vector<1x16x3xf32>
    %383 = vector.shape_cast %382 : vector<1x16x3xf32> to vector<16x3xf32>
    %c255_i32_338 = arith.constant 255 : i32
    %384 = tpu.dynamic_rotate %266 by %c255_i32_338 dim 1 : vector<3x256xf32>, i32 -> vector<3x256xf32>
    %c5_339 = arith.constant 5 : index
    %c0_340 = arith.constant 0 : index
    %c0_341 = arith.constant 0 : index
    %385 = vector.load %arg2[%c5_339, %c0_340, %c0_341] : memref<9x1x256xf32, #tpu.memory_space<vmem>>, vector<1x1x256xf32>
    %386 = vector.shape_cast %385 : vector<1x1x256xf32> to vector<1x256xf32>
    %387 = vector.broadcast %386 : vector<1x256xf32> to vector<3x256xf32>
    %388 = arith.mulf %384, %387 : vector<3x256xf32>
    %cst_342 = arith.constant dense<0.000000e+00> : vector<16x256xf32>
    %389 = tpu.matmul %383, %388, %cst_342 {dimension_numbers = #tpu.dot_dimension_numbers<[1], [0], [0], [1], [0, 0, 1, 1], [], []>} : vector<16x3xf32>, vector<3x256xf32>, vector<16x256xf32> -> vector<16x256xf32>
    %390 = arith.addf %381, %389 : vector<16x256xf32>
    %c6_343 = arith.constant 6 : index
    %c0_344 = arith.constant 0 : index
    %c0_345 = arith.constant 0 : index
    %391 = vector.load %arg14[%c6_343, %c0_344, %c0_345] : memref<9x16x3xf32, #tpu.memory_space<vmem>>, vector<1x16x3xf32>
    %392 = vector.shape_cast %391 : vector<1x16x3xf32> to vector<16x3xf32>
    %c241_i32_346 = arith.constant 241 : i32
    %393 = tpu.dynamic_rotate %266 by %c241_i32_346 dim 1 : vector<3x256xf32>, i32 -> vector<3x256xf32>
    %c6_347 = arith.constant 6 : index
    %c0_348 = arith.constant 0 : index
    %c0_349 = arith.constant 0 : index
    %394 = vector.load %arg2[%c6_347, %c0_348, %c0_349] : memref<9x1x256xf32, #tpu.memory_space<vmem>>, vector<1x1x256xf32>
    %395 = vector.shape_cast %394 : vector<1x1x256xf32> to vector<1x256xf32>
    %396 = vector.broadcast %395 : vector<1x256xf32> to vector<3x256xf32>
    %397 = arith.mulf %393, %396 : vector<3x256xf32>
    %cst_350 = arith.constant dense<0.000000e+00> : vector<16x256xf32>
    %398 = tpu.matmul %392, %397, %cst_350 {dimension_numbers = #tpu.dot_dimension_numbers<[1], [0], [0], [1], [0, 0, 1, 1], [], []>} : vector<16x3xf32>, vector<3x256xf32>, vector<16x256xf32> -> vector<16x256xf32>
    %399 = arith.addf %390, %398 : vector<16x256xf32>
    %c7_351 = arith.constant 7 : index
    %c0_352 = arith.constant 0 : index
    %c0_353 = arith.constant 0 : index
    %400 = vector.load %arg14[%c7_351, %c0_352, %c0_353] : memref<9x16x3xf32, #tpu.memory_space<vmem>>, vector<1x16x3xf32>
    %401 = vector.shape_cast %400 : vector<1x16x3xf32> to vector<16x3xf32>
    %c240_i32_354 = arith.constant 240 : i32
    %402 = tpu.dynamic_rotate %266 by %c240_i32_354 dim 1 : vector<3x256xf32>, i32 -> vector<3x256xf32>
    %c7_355 = arith.constant 7 : index
    %c0_356 = arith.constant 0 : index
    %c0_357 = arith.constant 0 : index
    %403 = vector.load %arg2[%c7_355, %c0_356, %c0_357] : memref<9x1x256xf32, #tpu.memory_space<vmem>>, vector<1x1x256xf32>
    %404 = vector.shape_cast %403 : vector<1x1x256xf32> to vector<1x256xf32>
    %405 = vector.broadcast %404 : vector<1x256xf32> to vector<3x256xf32>
    %406 = arith.mulf %402, %405 : vector<3x256xf32>
    %cst_358 = arith.constant dense<0.000000e+00> : vector<16x256xf32>
    %407 = tpu.matmul %401, %406, %cst_358 {dimension_numbers = #tpu.dot_dimension_numbers<[1], [0], [0], [1], [0, 0, 1, 1], [], []>} : vector<16x3xf32>, vector<3x256xf32>, vector<16x256xf32> -> vector<16x256xf32>
    %408 = arith.addf %399, %407 : vector<16x256xf32>
    %c8_359 = arith.constant 8 : index
    %c0_360 = arith.constant 0 : index
    %c0_361 = arith.constant 0 : index
    %409 = vector.load %arg14[%c8_359, %c0_360, %c0_361] : memref<9x16x3xf32, #tpu.memory_space<vmem>>, vector<1x16x3xf32>
    %410 = vector.shape_cast %409 : vector<1x16x3xf32> to vector<16x3xf32>
    %c239_i32_362 = arith.constant 239 : i32
    %411 = tpu.dynamic_rotate %266 by %c239_i32_362 dim 1 : vector<3x256xf32>, i32 -> vector<3x256xf32>
    %c8_363 = arith.constant 8 : index
    %c0_364 = arith.constant 0 : index
    %c0_365 = arith.constant 0 : index
    %412 = vector.load %arg2[%c8_363, %c0_364, %c0_365] : memref<9x1x256xf32, #tpu.memory_space<vmem>>, vector<1x1x256xf32>
    %413 = vector.shape_cast %412 : vector<1x1x256xf32> to vector<1x256xf32>
    %414 = vector.broadcast %413 : vector<1x256xf32> to vector<3x256xf32>
    %415 = arith.mulf %411, %414 : vector<3x256xf32>
    %cst_366 = arith.constant dense<0.000000e+00> : vector<16x256xf32>
    %416 = tpu.matmul %410, %415, %cst_366 {dimension_numbers = #tpu.dot_dimension_numbers<[1], [0], [0], [1], [0, 0, 1, 1], [], []>} : vector<16x3xf32>, vector<3x256xf32>, vector<16x256xf32> -> vector<16x256xf32>
    %417 = arith.addf %408, %416 : vector<16x256xf32>
    %418 = arith.addf %342, %417 : vector<16x256xf32>
    %c0_367 = arith.constant 0 : index
    %c0_368 = arith.constant 0 : index
    %419 = vector.load %arg15[%c0_367, %c0_368] : memref<16x1xf32, #tpu.memory_space<vmem>>, vector<16x1xf32>
    %420 = vector.broadcast %419 : vector<16x1xf32> to vector<16x256xf32>
    %421 = arith.addf %418, %420 : vector<16x256xf32>
    %cst_369 = arith.constant 0.000000e+00 : f32
    %422 = vector.broadcast %cst_369 : f32 to vector<16x256xf32>
    %423 = arith.cmpf oge, %421, %422 : vector<16x256xf32>
    %cst_370 = arith.constant 0.00999999977 : f32
    %424 = vector.broadcast %cst_370 : f32 to vector<16x256xf32>
    %425 = arith.mulf %424, %421 : vector<16x256xf32>
    %426 = arith.select %423, %421, %425 : vector<16x256xi1>, vector<16x256xf32>
    %cst_371 = arith.constant dense<0.000000e+00> : vector<256xf32>
    %427 = vector.multi_reduction <add>, %426, %cst_371 [0] : vector<16x256xf32> to vector<256xf32>
    %428 = vector.shape_cast %427 : vector<256xf32> to vector<1x256xf32>
    %cst_372 = arith.constant 1.600000e+01 : f32
    %429 = vector.broadcast %cst_372 : f32 to vector<1x256xf32>
    %430 = arith.divf %428, %429 : vector<1x256xf32>
    %cst_373 = arith.constant dense<0xFF800000> : vector<256xf32>
    %431 = vector.multi_reduction <maximumf>, %426, %cst_373 [0] : vector<16x256xf32> to vector<256xf32>
    %432 = vector.shape_cast %431 : vector<256xf32> to vector<1x256xf32>
    %c0_374 = arith.constant 0 : index
    %c0_375 = arith.constant 0 : index
    %c0_376 = arith.constant 0 : index
    %433 = vector.load %arg16[%c0_374, %c0_375, %c0_376] : memref<9x1x1xf32, #tpu.memory_space<vmem>>, vector<1x1x1xf32>
    %434 = vector.shape_cast %433 : vector<1x1x1xf32> to vector<1x1xf32>
    %c17_i32_377 = arith.constant 17 : i32
    %435 = tpu.dynamic_rotate %430 by %c17_i32_377 dim 1 : vector<1x256xf32>, i32 -> vector<1x256xf32>
    %c0_378 = arith.constant 0 : index
    %c0_379 = arith.constant 0 : index
    %c0_380 = arith.constant 0 : index
    %436 = vector.load %arg2[%c0_378, %c0_379, %c0_380] : memref<9x1x256xf32, #tpu.memory_space<vmem>>, vector<1x1x256xf32>
    %437 = vector.shape_cast %436 : vector<1x1x256xf32> to vector<1x256xf32>
    %438 = arith.mulf %435, %437 : vector<1x256xf32>
    %439 = vector.broadcast %434 : vector<1x1xf32> to vector<1x256xf32>
    %440 = arith.mulf %439, %438 : vector<1x256xf32>
    %c0_381 = arith.constant 0 : index
    %c0_382 = arith.constant 0 : index
    %c0_383 = arith.constant 0 : index
    %441 = vector.load %arg17[%c0_381, %c0_382, %c0_383] : memref<9x1x1xf32, #tpu.memory_space<vmem>>, vector<1x1x1xf32>
    %442 = vector.shape_cast %441 : vector<1x1x1xf32> to vector<1x1xf32>
    %c17_i32_384 = arith.constant 17 : i32
    %443 = tpu.dynamic_rotate %432 by %c17_i32_384 dim 1 : vector<1x256xf32>, i32 -> vector<1x256xf32>
    %c0_385 = arith.constant 0 : index
    %c0_386 = arith.constant 0 : index
    %c0_387 = arith.constant 0 : index
    %444 = vector.load %arg2[%c0_385, %c0_386, %c0_387] : memref<9x1x256xf32, #tpu.memory_space<vmem>>, vector<1x1x256xf32>
    %445 = vector.shape_cast %444 : vector<1x1x256xf32> to vector<1x256xf32>
    %446 = arith.mulf %443, %445 : vector<1x256xf32>
    %447 = vector.broadcast %442 : vector<1x1xf32> to vector<1x256xf32>
    %448 = arith.mulf %447, %446 : vector<1x256xf32>
    %449 = arith.addf %440, %448 : vector<1x256xf32>
    %c1_388 = arith.constant 1 : index
    %c0_389 = arith.constant 0 : index
    %c0_390 = arith.constant 0 : index
    %450 = vector.load %arg16[%c1_388, %c0_389, %c0_390] : memref<9x1x1xf32, #tpu.memory_space<vmem>>, vector<1x1x1xf32>
    %451 = vector.shape_cast %450 : vector<1x1x1xf32> to vector<1x1xf32>
    %c16_i32_391 = arith.constant 16 : i32
    %452 = tpu.dynamic_rotate %430 by %c16_i32_391 dim 1 : vector<1x256xf32>, i32 -> vector<1x256xf32>
    %c1_392 = arith.constant 1 : index
    %c0_393 = arith.constant 0 : index
    %c0_394 = arith.constant 0 : index
    %453 = vector.load %arg2[%c1_392, %c0_393, %c0_394] : memref<9x1x256xf32, #tpu.memory_space<vmem>>, vector<1x1x256xf32>
    %454 = vector.shape_cast %453 : vector<1x1x256xf32> to vector<1x256xf32>
    %455 = arith.mulf %452, %454 : vector<1x256xf32>
    %456 = vector.broadcast %451 : vector<1x1xf32> to vector<1x256xf32>
    %457 = arith.mulf %456, %455 : vector<1x256xf32>
    %c1_395 = arith.constant 1 : index
    %c0_396 = arith.constant 0 : index
    %c0_397 = arith.constant 0 : index
    %458 = vector.load %arg17[%c1_395, %c0_396, %c0_397] : memref<9x1x1xf32, #tpu.memory_space<vmem>>, vector<1x1x1xf32>
    %459 = vector.shape_cast %458 : vector<1x1x1xf32> to vector<1x1xf32>
    %c16_i32_398 = arith.constant 16 : i32
    %460 = tpu.dynamic_rotate %432 by %c16_i32_398 dim 1 : vector<1x256xf32>, i32 -> vector<1x256xf32>
    %c1_399 = arith.constant 1 : index
    %c0_400 = arith.constant 0 : index
    %c0_401 = arith.constant 0 : index
    %461 = vector.load %arg2[%c1_399, %c0_400, %c0_401] : memref<9x1x256xf32, #tpu.memory_space<vmem>>, vector<1x1x256xf32>
    %462 = vector.shape_cast %461 : vector<1x1x256xf32> to vector<1x256xf32>
    %463 = arith.mulf %460, %462 : vector<1x256xf32>
    %464 = vector.broadcast %459 : vector<1x1xf32> to vector<1x256xf32>
    %465 = arith.mulf %464, %463 : vector<1x256xf32>
    %466 = arith.addf %457, %465 : vector<1x256xf32>
    %467 = arith.addf %449, %466 : vector<1x256xf32>
    %c2_402 = arith.constant 2 : index
    %c0_403 = arith.constant 0 : index
    %c0_404 = arith.constant 0 : index
    %468 = vector.load %arg16[%c2_402, %c0_403, %c0_404] : memref<9x1x1xf32, #tpu.memory_space<vmem>>, vector<1x1x1xf32>
    %469 = vector.shape_cast %468 : vector<1x1x1xf32> to vector<1x1xf32>
    %c15_i32_405 = arith.constant 15 : i32
    %470 = tpu.dynamic_rotate %430 by %c15_i32_405 dim 1 : vector<1x256xf32>, i32 -> vector<1x256xf32>
    %c2_406 = arith.constant 2 : index
    %c0_407 = arith.constant 0 : index
    %c0_408 = arith.constant 0 : index
    %471 = vector.load %arg2[%c2_406, %c0_407, %c0_408] : memref<9x1x256xf32, #tpu.memory_space<vmem>>, vector<1x1x256xf32>
    %472 = vector.shape_cast %471 : vector<1x1x256xf32> to vector<1x256xf32>
    %473 = arith.mulf %470, %472 : vector<1x256xf32>
    %474 = vector.broadcast %469 : vector<1x1xf32> to vector<1x256xf32>
    %475 = arith.mulf %474, %473 : vector<1x256xf32>
    %c2_409 = arith.constant 2 : index
    %c0_410 = arith.constant 0 : index
    %c0_411 = arith.constant 0 : index
    %476 = vector.load %arg17[%c2_409, %c0_410, %c0_411] : memref<9x1x1xf32, #tpu.memory_space<vmem>>, vector<1x1x1xf32>
    %477 = vector.shape_cast %476 : vector<1x1x1xf32> to vector<1x1xf32>
    %c15_i32_412 = arith.constant 15 : i32
    %478 = tpu.dynamic_rotate %432 by %c15_i32_412 dim 1 : vector<1x256xf32>, i32 -> vector<1x256xf32>
    %c2_413 = arith.constant 2 : index
    %c0_414 = arith.constant 0 : index
    %c0_415 = arith.constant 0 : index
    %479 = vector.load %arg2[%c2_413, %c0_414, %c0_415] : memref<9x1x256xf32, #tpu.memory_space<vmem>>, vector<1x1x256xf32>
    %480 = vector.shape_cast %479 : vector<1x1x256xf32> to vector<1x256xf32>
    %481 = arith.mulf %478, %480 : vector<1x256xf32>
    %482 = vector.broadcast %477 : vector<1x1xf32> to vector<1x256xf32>
    %483 = arith.mulf %482, %481 : vector<1x256xf32>
    %484 = arith.addf %475, %483 : vector<1x256xf32>
    %485 = arith.addf %467, %484 : vector<1x256xf32>
    %c3_416 = arith.constant 3 : index
    %c0_417 = arith.constant 0 : index
    %c0_418 = arith.constant 0 : index
    %486 = vector.load %arg16[%c3_416, %c0_417, %c0_418] : memref<9x1x1xf32, #tpu.memory_space<vmem>>, vector<1x1x1xf32>
    %487 = vector.shape_cast %486 : vector<1x1x1xf32> to vector<1x1xf32>
    %c1_i32_419 = arith.constant 1 : i32
    %488 = tpu.dynamic_rotate %430 by %c1_i32_419 dim 1 : vector<1x256xf32>, i32 -> vector<1x256xf32>
    %c3_420 = arith.constant 3 : index
    %c0_421 = arith.constant 0 : index
    %c0_422 = arith.constant 0 : index
    %489 = vector.load %arg2[%c3_420, %c0_421, %c0_422] : memref<9x1x256xf32, #tpu.memory_space<vmem>>, vector<1x1x256xf32>
    %490 = vector.shape_cast %489 : vector<1x1x256xf32> to vector<1x256xf32>
    %491 = arith.mulf %488, %490 : vector<1x256xf32>
    %492 = vector.broadcast %487 : vector<1x1xf32> to vector<1x256xf32>
    %493 = arith.mulf %492, %491 : vector<1x256xf32>
    %c3_423 = arith.constant 3 : index
    %c0_424 = arith.constant 0 : index
    %c0_425 = arith.constant 0 : index
    %494 = vector.load %arg17[%c3_423, %c0_424, %c0_425] : memref<9x1x1xf32, #tpu.memory_space<vmem>>, vector<1x1x1xf32>
    %495 = vector.shape_cast %494 : vector<1x1x1xf32> to vector<1x1xf32>
    %c1_i32_426 = arith.constant 1 : i32
    %496 = tpu.dynamic_rotate %432 by %c1_i32_426 dim 1 : vector<1x256xf32>, i32 -> vector<1x256xf32>
    %c3_427 = arith.constant 3 : index
    %c0_428 = arith.constant 0 : index
    %c0_429 = arith.constant 0 : index
    %497 = vector.load %arg2[%c3_427, %c0_428, %c0_429] : memref<9x1x256xf32, #tpu.memory_space<vmem>>, vector<1x1x256xf32>
    %498 = vector.shape_cast %497 : vector<1x1x256xf32> to vector<1x256xf32>
    %499 = arith.mulf %496, %498 : vector<1x256xf32>
    %500 = vector.broadcast %495 : vector<1x1xf32> to vector<1x256xf32>
    %501 = arith.mulf %500, %499 : vector<1x256xf32>
    %502 = arith.addf %493, %501 : vector<1x256xf32>
    %503 = arith.addf %485, %502 : vector<1x256xf32>
    %c4_430 = arith.constant 4 : index
    %c0_431 = arith.constant 0 : index
    %c0_432 = arith.constant 0 : index
    %504 = vector.load %arg16[%c4_430, %c0_431, %c0_432] : memref<9x1x1xf32, #tpu.memory_space<vmem>>, vector<1x1x1xf32>
    %505 = vector.shape_cast %504 : vector<1x1x1xf32> to vector<1x1xf32>
    %506 = vector.broadcast %505 : vector<1x1xf32> to vector<1x256xf32>
    %507 = arith.mulf %506, %430 : vector<1x256xf32>
    %c4_433 = arith.constant 4 : index
    %c0_434 = arith.constant 0 : index
    %c0_435 = arith.constant 0 : index
    %508 = vector.load %arg17[%c4_433, %c0_434, %c0_435] : memref<9x1x1xf32, #tpu.memory_space<vmem>>, vector<1x1x1xf32>
    %509 = vector.shape_cast %508 : vector<1x1x1xf32> to vector<1x1xf32>
    %510 = vector.broadcast %509 : vector<1x1xf32> to vector<1x256xf32>
    %511 = arith.mulf %510, %432 : vector<1x256xf32>
    %512 = arith.addf %507, %511 : vector<1x256xf32>
    %513 = arith.addf %503, %512 : vector<1x256xf32>
    %c5_436 = arith.constant 5 : index
    %c0_437 = arith.constant 0 : index
    %c0_438 = arith.constant 0 : index
    %514 = vector.load %arg16[%c5_436, %c0_437, %c0_438] : memref<9x1x1xf32, #tpu.memory_space<vmem>>, vector<1x1x1xf32>
    %515 = vector.shape_cast %514 : vector<1x1x1xf32> to vector<1x1xf32>
    %c255_i32_439 = arith.constant 255 : i32
    %516 = tpu.dynamic_rotate %430 by %c255_i32_439 dim 1 : vector<1x256xf32>, i32 -> vector<1x256xf32>
    %c5_440 = arith.constant 5 : index
    %c0_441 = arith.constant 0 : index
    %c0_442 = arith.constant 0 : index
    %517 = vector.load %arg2[%c5_440, %c0_441, %c0_442] : memref<9x1x256xf32, #tpu.memory_space<vmem>>, vector<1x1x256xf32>
    %518 = vector.shape_cast %517 : vector<1x1x256xf32> to vector<1x256xf32>
    %519 = arith.mulf %516, %518 : vector<1x256xf32>
    %520 = vector.broadcast %515 : vector<1x1xf32> to vector<1x256xf32>
    %521 = arith.mulf %520, %519 : vector<1x256xf32>
    %c5_443 = arith.constant 5 : index
    %c0_444 = arith.constant 0 : index
    %c0_445 = arith.constant 0 : index
    %522 = vector.load %arg17[%c5_443, %c0_444, %c0_445] : memref<9x1x1xf32, #tpu.memory_space<vmem>>, vector<1x1x1xf32>
    %523 = vector.shape_cast %522 : vector<1x1x1xf32> to vector<1x1xf32>
    %c255_i32_446 = arith.constant 255 : i32
    %524 = tpu.dynamic_rotate %432 by %c255_i32_446 dim 1 : vector<1x256xf32>, i32 -> vector<1x256xf32>
    %c5_447 = arith.constant 5 : index
    %c0_448 = arith.constant 0 : index
    %c0_449 = arith.constant 0 : index
    %525 = vector.load %arg2[%c5_447, %c0_448, %c0_449] : memref<9x1x256xf32, #tpu.memory_space<vmem>>, vector<1x1x256xf32>
    %526 = vector.shape_cast %525 : vector<1x1x256xf32> to vector<1x256xf32>
    %527 = arith.mulf %524, %526 : vector<1x256xf32>
    %528 = vector.broadcast %523 : vector<1x1xf32> to vector<1x256xf32>
    %529 = arith.mulf %528, %527 : vector<1x256xf32>
    %530 = arith.addf %521, %529 : vector<1x256xf32>
    %531 = arith.addf %513, %530 : vector<1x256xf32>
    %c6_450 = arith.constant 6 : index
    %c0_451 = arith.constant 0 : index
    %c0_452 = arith.constant 0 : index
    %532 = vector.load %arg16[%c6_450, %c0_451, %c0_452] : memref<9x1x1xf32, #tpu.memory_space<vmem>>, vector<1x1x1xf32>
    %533 = vector.shape_cast %532 : vector<1x1x1xf32> to vector<1x1xf32>
    %c241_i32_453 = arith.constant 241 : i32
    %534 = tpu.dynamic_rotate %430 by %c241_i32_453 dim 1 : vector<1x256xf32>, i32 -> vector<1x256xf32>
    %c6_454 = arith.constant 6 : index
    %c0_455 = arith.constant 0 : index
    %c0_456 = arith.constant 0 : index
    %535 = vector.load %arg2[%c6_454, %c0_455, %c0_456] : memref<9x1x256xf32, #tpu.memory_space<vmem>>, vector<1x1x256xf32>
    %536 = vector.shape_cast %535 : vector<1x1x256xf32> to vector<1x256xf32>
    %537 = arith.mulf %534, %536 : vector<1x256xf32>
    %538 = vector.broadcast %533 : vector<1x1xf32> to vector<1x256xf32>
    %539 = arith.mulf %538, %537 : vector<1x256xf32>
    %c6_457 = arith.constant 6 : index
    %c0_458 = arith.constant 0 : index
    %c0_459 = arith.constant 0 : index
    %540 = vector.load %arg17[%c6_457, %c0_458, %c0_459] : memref<9x1x1xf32, #tpu.memory_space<vmem>>, vector<1x1x1xf32>
    %541 = vector.shape_cast %540 : vector<1x1x1xf32> to vector<1x1xf32>
    %c241_i32_460 = arith.constant 241 : i32
    %542 = tpu.dynamic_rotate %432 by %c241_i32_460 dim 1 : vector<1x256xf32>, i32 -> vector<1x256xf32>
    %c6_461 = arith.constant 6 : index
    %c0_462 = arith.constant 0 : index
    %c0_463 = arith.constant 0 : index
    %543 = vector.load %arg2[%c6_461, %c0_462, %c0_463] : memref<9x1x256xf32, #tpu.memory_space<vmem>>, vector<1x1x256xf32>
    %544 = vector.shape_cast %543 : vector<1x1x256xf32> to vector<1x256xf32>
    %545 = arith.mulf %542, %544 : vector<1x256xf32>
    %546 = vector.broadcast %541 : vector<1x1xf32> to vector<1x256xf32>
    %547 = arith.mulf %546, %545 : vector<1x256xf32>
    %548 = arith.addf %539, %547 : vector<1x256xf32>
    %549 = arith.addf %531, %548 : vector<1x256xf32>
    %c7_464 = arith.constant 7 : index
    %c0_465 = arith.constant 0 : index
    %c0_466 = arith.constant 0 : index
    %550 = vector.load %arg16[%c7_464, %c0_465, %c0_466] : memref<9x1x1xf32, #tpu.memory_space<vmem>>, vector<1x1x1xf32>
    %551 = vector.shape_cast %550 : vector<1x1x1xf32> to vector<1x1xf32>
    %c240_i32_467 = arith.constant 240 : i32
    %552 = tpu.dynamic_rotate %430 by %c240_i32_467 dim 1 : vector<1x256xf32>, i32 -> vector<1x256xf32>
    %c7_468 = arith.constant 7 : index
    %c0_469 = arith.constant 0 : index
    %c0_470 = arith.constant 0 : index
    %553 = vector.load %arg2[%c7_468, %c0_469, %c0_470] : memref<9x1x256xf32, #tpu.memory_space<vmem>>, vector<1x1x256xf32>
    %554 = vector.shape_cast %553 : vector<1x1x256xf32> to vector<1x256xf32>
    %555 = arith.mulf %552, %554 : vector<1x256xf32>
    %556 = vector.broadcast %551 : vector<1x1xf32> to vector<1x256xf32>
    %557 = arith.mulf %556, %555 : vector<1x256xf32>
    %c7_471 = arith.constant 7 : index
    %c0_472 = arith.constant 0 : index
    %c0_473 = arith.constant 0 : index
    %558 = vector.load %arg17[%c7_471, %c0_472, %c0_473] : memref<9x1x1xf32, #tpu.memory_space<vmem>>, vector<1x1x1xf32>
    %559 = vector.shape_cast %558 : vector<1x1x1xf32> to vector<1x1xf32>
    %c240_i32_474 = arith.constant 240 : i32
    %560 = tpu.dynamic_rotate %432 by %c240_i32_474 dim 1 : vector<1x256xf32>, i32 -> vector<1x256xf32>
    %c7_475 = arith.constant 7 : index
    %c0_476 = arith.constant 0 : index
    %c0_477 = arith.constant 0 : index
    %561 = vector.load %arg2[%c7_475, %c0_476, %c0_477] : memref<9x1x256xf32, #tpu.memory_space<vmem>>, vector<1x1x256xf32>
    %562 = vector.shape_cast %561 : vector<1x1x256xf32> to vector<1x256xf32>
    %563 = arith.mulf %560, %562 : vector<1x256xf32>
    %564 = vector.broadcast %559 : vector<1x1xf32> to vector<1x256xf32>
    %565 = arith.mulf %564, %563 : vector<1x256xf32>
    %566 = arith.addf %557, %565 : vector<1x256xf32>
    %567 = arith.addf %549, %566 : vector<1x256xf32>
    %c8_478 = arith.constant 8 : index
    %c0_479 = arith.constant 0 : index
    %c0_480 = arith.constant 0 : index
    %568 = vector.load %arg16[%c8_478, %c0_479, %c0_480] : memref<9x1x1xf32, #tpu.memory_space<vmem>>, vector<1x1x1xf32>
    %569 = vector.shape_cast %568 : vector<1x1x1xf32> to vector<1x1xf32>
    %c239_i32_481 = arith.constant 239 : i32
    %570 = tpu.dynamic_rotate %430 by %c239_i32_481 dim 1 : vector<1x256xf32>, i32 -> vector<1x256xf32>
    %c8_482 = arith.constant 8 : index
    %c0_483 = arith.constant 0 : index
    %c0_484 = arith.constant 0 : index
    %571 = vector.load %arg2[%c8_482, %c0_483, %c0_484] : memref<9x1x256xf32, #tpu.memory_space<vmem>>, vector<1x1x256xf32>
    %572 = vector.shape_cast %571 : vector<1x1x256xf32> to vector<1x256xf32>
    %573 = arith.mulf %570, %572 : vector<1x256xf32>
    %574 = vector.broadcast %569 : vector<1x1xf32> to vector<1x256xf32>
    %575 = arith.mulf %574, %573 : vector<1x256xf32>
    %c8_485 = arith.constant 8 : index
    %c0_486 = arith.constant 0 : index
    %c0_487 = arith.constant 0 : index
    %576 = vector.load %arg17[%c8_485, %c0_486, %c0_487] : memref<9x1x1xf32, #tpu.memory_space<vmem>>, vector<1x1x1xf32>
    %577 = vector.shape_cast %576 : vector<1x1x1xf32> to vector<1x1xf32>
    %c239_i32_488 = arith.constant 239 : i32
    %578 = tpu.dynamic_rotate %432 by %c239_i32_488 dim 1 : vector<1x256xf32>, i32 -> vector<1x256xf32>
    %c8_489 = arith.constant 8 : index
    %c0_490 = arith.constant 0 : index
    %c0_491 = arith.constant 0 : index
    %579 = vector.load %arg2[%c8_489, %c0_490, %c0_491] : memref<9x1x256xf32, #tpu.memory_space<vmem>>, vector<1x1x256xf32>
    %580 = vector.shape_cast %579 : vector<1x1x256xf32> to vector<1x256xf32>
    %581 = arith.mulf %578, %580 : vector<1x256xf32>
    %582 = vector.broadcast %577 : vector<1x1xf32> to vector<1x256xf32>
    %583 = arith.mulf %582, %581 : vector<1x256xf32>
    %584 = arith.addf %575, %583 : vector<1x256xf32>
    %585 = arith.addf %567, %584 : vector<1x256xf32>
    %cst_492 = arith.constant 0.000000e+00 : f32
    %586 = vector.broadcast %cst_492 : f32 to vector<1x256xf32>
    %587 = arith.subf %586, %585 : vector<1x256xf32>
    %588 = math.exp %587 : vector<1x256xf32>
    %cst_493 = arith.constant 1.000000e+00 : f32
    %589 = vector.broadcast %cst_493 : f32 to vector<1x256xf32>
    %590 = arith.addf %589, %588 : vector<1x256xf32>
    %cst_494 = arith.constant 1.000000e+00 : f32
    %591 = vector.broadcast %cst_494 : f32 to vector<1x256xf32>
    %592 = arith.divf %591, %590 : vector<1x256xf32>
    %593 = vector.broadcast %592 : vector<1x256xf32> to vector<16x256xf32>
    %594 = arith.mulf %593, %426 : vector<16x256xf32>
    %c17_i32_495 = arith.constant 17 : i32
    %595 = tpu.dynamic_rotate %594 by %c17_i32_495 dim 1 : vector<16x256xf32>, i32 -> vector<16x256xf32>
    %c0_496 = arith.constant 0 : index
    %c0_497 = arith.constant 0 : index
    %c0_498 = arith.constant 0 : index
    %596 = vector.load %arg2[%c0_496, %c0_497, %c0_498] : memref<9x1x256xf32, #tpu.memory_space<vmem>>, vector<1x1x256xf32>
    %597 = vector.shape_cast %596 : vector<1x1x256xf32> to vector<1x256xf32>
    %598 = vector.broadcast %597 : vector<1x256xf32> to vector<16x256xf32>
    %599 = arith.mulf %595, %598 : vector<16x256xf32>
    %c0_499 = arith.constant 0 : index
    %c0_500 = arith.constant 0 : index
    %600 = vector.load %arg22[%c0_499, %c0_500] : memref<144x256xf32, #tpu.memory_space<vmem>>, vector<16x256xf32>
    tpu.vector_store %arg22[%c0_499, %c0_500], %599 {strides = array<i32>} : memref<144x256xf32, #tpu.memory_space<vmem>>, vector<16x256xf32>,
    %c16_i32_501 = arith.constant 16 : i32
    %601 = tpu.dynamic_rotate %594 by %c16_i32_501 dim 1 : vector<16x256xf32>, i32 -> vector<16x256xf32>
    %c1_502 = arith.constant 1 : index
    %c0_503 = arith.constant 0 : index
    %c0_504 = arith.constant 0 : index
    %602 = vector.load %arg2[%c1_502, %c0_503, %c0_504] : memref<9x1x256xf32, #tpu.memory_space<vmem>>, vector<1x1x256xf32>
    %603 = vector.shape_cast %602 : vector<1x1x256xf32> to vector<1x256xf32>
    %604 = vector.broadcast %603 : vector<1x256xf32> to vector<16x256xf32>
    %605 = arith.mulf %601, %604 : vector<16x256xf32>
    %c16_505 = arith.constant 16 : index
    %c0_506 = arith.constant 0 : index
    %606 = vector.load %arg22[%c16_505, %c0_506] : memref<144x256xf32, #tpu.memory_space<vmem>>, vector<16x256xf32>
    tpu.vector_store %arg22[%c16_505, %c0_506], %605 {strides = array<i32>} : memref<144x256xf32, #tpu.memory_space<vmem>>, vector<16x256xf32>,
    %c15_i32_507 = arith.constant 15 : i32
    %607 = tpu.dynamic_rotate %594 by %c15_i32_507 dim 1 : vector<16x256xf32>, i32 -> vector<16x256xf32>
    %c2_508 = arith.constant 2 : index
    %c0_509 = arith.constant 0 : index
    %c0_510 = arith.constant 0 : index
    %608 = vector.load %arg2[%c2_508, %c0_509, %c0_510] : memref<9x1x256xf32, #tpu.memory_space<vmem>>, vector<1x1x256xf32>
    %609 = vector.shape_cast %608 : vector<1x1x256xf32> to vector<1x256xf32>
    %610 = vector.broadcast %609 : vector<1x256xf32> to vector<16x256xf32>
    %611 = arith.mulf %607, %610 : vector<16x256xf32>
    %c32_511 = arith.constant 32 : index
    %c0_512 = arith.constant 0 : index
    %612 = vector.load %arg22[%c32_511, %c0_512] : memref<144x256xf32, #tpu.memory_space<vmem>>, vector<16x256xf32>
    tpu.vector_store %arg22[%c32_511, %c0_512], %611 {strides = array<i32>} : memref<144x256xf32, #tpu.memory_space<vmem>>, vector<16x256xf32>,
    %c1_i32_513 = arith.constant 1 : i32
    %613 = tpu.dynamic_rotate %594 by %c1_i32_513 dim 1 : vector<16x256xf32>, i32 -> vector<16x256xf32>
    %c3_514 = arith.constant 3 : index
    %c0_515 = arith.constant 0 : index
    %c0_516 = arith.constant 0 : index
    %614 = vector.load %arg2[%c3_514, %c0_515, %c0_516] : memref<9x1x256xf32, #tpu.memory_space<vmem>>, vector<1x1x256xf32>
    %615 = vector.shape_cast %614 : vector<1x1x256xf32> to vector<1x256xf32>
    %616 = vector.broadcast %615 : vector<1x256xf32> to vector<16x256xf32>
    %617 = arith.mulf %613, %616 : vector<16x256xf32>
    %c48_517 = arith.constant 48 : index
    %c0_518 = arith.constant 0 : index
    %618 = vector.load %arg22[%c48_517, %c0_518] : memref<144x256xf32, #tpu.memory_space<vmem>>, vector<16x256xf32>
    tpu.vector_store %arg22[%c48_517, %c0_518], %617 {strides = array<i32>} : memref<144x256xf32, #tpu.memory_space<vmem>>, vector<16x256xf32>,
    %c64_519 = arith.constant 64 : index
    %c0_520 = arith.constant 0 : index
    %619 = vector.load %arg22[%c64_519, %c0_520] : memref<144x256xf32, #tpu.memory_space<vmem>>, vector<16x256xf32>
    tpu.vector_store %arg22[%c64_519, %c0_520], %594 {strides = array<i32>} : memref<144x256xf32, #tpu.memory_space<vmem>>, vector<16x256xf32>,
    %c255_i32_521 = arith.constant 255 : i32
    %620 = tpu.dynamic_rotate %594 by %c255_i32_521 dim 1 : vector<16x256xf32>, i32 -> vector<16x256xf32>
    %c5_522 = arith.constant 5 : index
    %c0_523 = arith.constant 0 : index
    %c0_524 = arith.constant 0 : index
    %621 = vector.load %arg2[%c5_522, %c0_523, %c0_524] : memref<9x1x256xf32, #tpu.memory_space<vmem>>, vector<1x1x256xf32>
    %622 = vector.shape_cast %621 : vector<1x1x256xf32> to vector<1x256xf32>
    %623 = vector.broadcast %622 : vector<1x256xf32> to vector<16x256xf32>
    %624 = arith.mulf %620, %623 : vector<16x256xf32>
    %c80_525 = arith.constant 80 : index
    %c0_526 = arith.constant 0 : index
    %625 = vector.load %arg22[%c80_525, %c0_526] : memref<144x256xf32, #tpu.memory_space<vmem>>, vector<16x256xf32>
    tpu.vector_store %arg22[%c80_525, %c0_526], %624 {strides = array<i32>} : memref<144x256xf32, #tpu.memory_space<vmem>>, vector<16x256xf32>,
    %c241_i32_527 = arith.constant 241 : i32
    %626 = tpu.dynamic_rotate %594 by %c241_i32_527 dim 1 : vector<16x256xf32>, i32 -> vector<16x256xf32>
    %c6_528 = arith.constant 6 : index
    %c0_529 = arith.constant 0 : index
    %c0_530 = arith.constant 0 : index
    %627 = vector.load %arg2[%c6_528, %c0_529, %c0_530] : memref<9x1x256xf32, #tpu.memory_space<vmem>>, vector<1x1x256xf32>
    %628 = vector.shape_cast %627 : vector<1x1x256xf32> to vector<1x256xf32>
    %629 = vector.broadcast %628 : vector<1x256xf32> to vector<16x256xf32>
    %630 = arith.mulf %626, %629 : vector<16x256xf32>
    %c96_531 = arith.constant 96 : index
    %c0_532 = arith.constant 0 : index
    %631 = vector.load %arg22[%c96_531, %c0_532] : memref<144x256xf32, #tpu.memory_space<vmem>>, vector<16x256xf32>
    tpu.vector_store %arg22[%c96_531, %c0_532], %630 {strides = array<i32>} : memref<144x256xf32, #tpu.memory_space<vmem>>, vector<16x256xf32>,
    %c240_i32_533 = arith.constant 240 : i32
    %632 = tpu.dynamic_rotate %594 by %c240_i32_533 dim 1 : vector<16x256xf32>, i32 -> vector<16x256xf32>
    %c7_534 = arith.constant 7 : index
    %c0_535 = arith.constant 0 : index
    %c0_536 = arith.constant 0 : index
    %633 = vector.load %arg2[%c7_534, %c0_535, %c0_536] : memref<9x1x256xf32, #tpu.memory_space<vmem>>, vector<1x1x256xf32>
    %634 = vector.shape_cast %633 : vector<1x1x256xf32> to vector<1x256xf32>
    %635 = vector.broadcast %634 : vector<1x256xf32> to vector<16x256xf32>
    %636 = arith.mulf %632, %635 : vector<16x256xf32>
    %c112_537 = arith.constant 112 : index
    %c0_538 = arith.constant 0 : index
    %637 = vector.load %arg22[%c112_537, %c0_538] : memref<144x256xf32, #tpu.memory_space<vmem>>, vector<16x256xf32>
    tpu.vector_store %arg22[%c112_537, %c0_538], %636 {strides = array<i32>} : memref<144x256xf32, #tpu.memory_space<vmem>>, vector<16x256xf32>,
    %c239_i32_539 = arith.constant 239 : i32
    %638 = tpu.dynamic_rotate %594 by %c239_i32_539 dim 1 : vector<16x256xf32>, i32 -> vector<16x256xf32>
    %c8_540 = arith.constant 8 : index
    %c0_541 = arith.constant 0 : index
    %c0_542 = arith.constant 0 : index
    %639 = vector.load %arg2[%c8_540, %c0_541, %c0_542] : memref<9x1x256xf32, #tpu.memory_space<vmem>>, vector<1x1x256xf32>
    %640 = vector.shape_cast %639 : vector<1x1x256xf32> to vector<1x256xf32>
    %641 = vector.broadcast %640 : vector<1x256xf32> to vector<16x256xf32>
    %642 = arith.mulf %638, %641 : vector<16x256xf32>
    %c128_543 = arith.constant 128 : index
    %c0_544 = arith.constant 0 : index
    %643 = vector.load %arg22[%c128_543, %c0_544] : memref<144x256xf32, #tpu.memory_space<vmem>>, vector<16x256xf32>
    tpu.vector_store %arg22[%c128_543, %c0_544], %642 {strides = array<i32>} : memref<144x256xf32, #tpu.memory_space<vmem>>, vector<16x256xf32>,
    %c0_545 = arith.constant 0 : index
    %c0_546 = arith.constant 0 : index
    %644 = vector.load %arg18[%c0_545, %c0_546] : memref<3x144xf32, #tpu.memory_space<vmem>>, vector<3x144xf32>
    %c0_547 = arith.constant 0 : index
    %c0_548 = arith.constant 0 : index
    %645 = vector.load %arg22[%c0_547, %c0_548] : memref<144x256xf32, #tpu.memory_space<vmem>>, vector<144x256xf32>
    %cst_549 = arith.constant dense<0.000000e+00> : vector<3x256xf32>
    %646 = tpu.matmul %644, %645, %cst_549 {dimension_numbers = #tpu.dot_dimension_numbers<[1], [0], [0], [1], [0, 0, 1, 1], [], []>} : vector<3x144xf32>, vector<144x256xf32>, vector<3x256xf32> -> vector<3x256xf32>
    %c0_550 = arith.constant 0 : index
    %c0_551 = arith.constant 0 : index
    %647 = vector.load %arg19[%c0_550, %c0_551] : memref<3x1xf32, #tpu.memory_space<vmem>>, vector<3x1xf32>
    %648 = vector.broadcast %647 : vector<3x1xf32> to vector<3x256xf32>
    %649 = arith.addf %646, %648 : vector<3x256xf32>
    %c0_552 = arith.constant 0 : index
    %c0_553 = arith.constant 0 : index
    %650 = vector.load %arg21[%c0_552, %c0_553] : memref<3x256xf32, #tpu.memory_space<vmem>>, vector<3x256xf32>
    tpu.vector_store %arg21[%c0_552, %c0_553], %649 {strides = array<i32>} : memref<3x256xf32, #tpu.memory_space<vmem>>, vector<3x256xf32>,
    return
  }
  func.func @transform_0(%arg0: i32) -> (i32, i32) {
    %c0_i32 = arith.constant 0 : i32
    %c0_i32_0 = arith.constant 0 : i32
    return %c0_i32, %arg0 : i32, i32
  }
  func.func @transform_1(%arg0: i32) -> (i32, i32, i32) {
    %c0_i32 = arith.constant 0 : i32
    %c0_i32_0 = arith.constant 0 : i32
    %c0_i32_1 = arith.constant 0 : i32
    %c0_i32_2 = arith.constant 0 : i32
    return %c0_i32, %c0_i32_0, %c0_i32_1 : i32, i32, i32
  }
  func.func @transform_2(%arg0: i32) -> (i32, i32, i32) {
    %c0_i32 = arith.constant 0 : i32
    %c0_i32_0 = arith.constant 0 : i32
    %c0_i32_1 = arith.constant 0 : i32
    %c0_i32_2 = arith.constant 0 : i32
    return %c0_i32, %c0_i32_0, %c0_i32_1 : i32, i32, i32
  }
  func.func @transform_3(%arg0: i32) -> (i32, i32) {
    %c0_i32 = arith.constant 0 : i32
    %c0_i32_0 = arith.constant 0 : i32
    %c0_i32_1 = arith.constant 0 : i32
    return %c0_i32, %c0_i32_0 : i32, i32
  }
  func.func @transform_4(%arg0: i32) -> (i32, i32) {
    %c0_i32 = arith.constant 0 : i32
    %c0_i32_0 = arith.constant 0 : i32
    %c0_i32_1 = arith.constant 0 : i32
    return %c0_i32, %c0_i32_0 : i32, i32
  }
  func.func @transform_5(%arg0: i32) -> (i32, i32) {
    %c0_i32 = arith.constant 0 : i32
    %c0_i32_0 = arith.constant 0 : i32
    %c0_i32_1 = arith.constant 0 : i32
    return %c0_i32, %c0_i32_0 : i32, i32
  }
  func.func @transform_6(%arg0: i32) -> (i32, i32) {
    %c0_i32 = arith.constant 0 : i32
    %c0_i32_0 = arith.constant 0 : i32
    %c0_i32_1 = arith.constant 0 : i32
    return %c0_i32, %c0_i32_0 : i32, i32
  }
  func.func @transform_7(%arg0: i32) -> (i32, i32) {
    %c0_i32 = arith.constant 0 : i32
    %c0_i32_0 = arith.constant 0 : i32
    %c0_i32_1 = arith.constant 0 : i32
    return %c0_i32, %c0_i32_0 : i32, i32
  }
  func.func @transform_8(%arg0: i32) -> (i32, i32) {
    %c0_i32 = arith.constant 0 : i32
    %c0_i32_0 = arith.constant 0 : i32
    %c0_i32_1 = arith.constant 0 : i32
    return %c0_i32, %c0_i32_0 : i32, i32
  }
  func.func @transform_9(%arg0: i32) -> (i32, i32) {
    %c0_i32 = arith.constant 0 : i32
    %c0_i32_0 = arith.constant 0 : i32
    %c0_i32_1 = arith.constant 0 : i32
    return %c0_i32, %c0_i32_0 : i32, i32
  }
  func.func @transform_10(%arg0: i32) -> (i32, i32) {
    %c0_i32 = arith.constant 0 : i32
    %c0_i32_0 = arith.constant 0 : i32
    %c0_i32_1 = arith.constant 0 : i32
    return %c0_i32, %c0_i32_0 : i32, i32
  }
  func.func @transform_11(%arg0: i32) -> (i32, i32) {
    %c0_i32 = arith.constant 0 : i32
    %c0_i32_0 = arith.constant 0 : i32
    %c0_i32_1 = arith.constant 0 : i32
    return %c0_i32, %c0_i32_0 : i32, i32
  }
  func.func @transform_12(%arg0: i32) -> (i32, i32, i32) {
    %c0_i32 = arith.constant 0 : i32
    %c0_i32_0 = arith.constant 0 : i32
    %c0_i32_1 = arith.constant 0 : i32
    %c0_i32_2 = arith.constant 0 : i32
    return %c0_i32, %c0_i32_0, %c0_i32_1 : i32, i32, i32
  }
  func.func @transform_13(%arg0: i32) -> (i32, i32, i32) {
    %c0_i32 = arith.constant 0 : i32
    %c0_i32_0 = arith.constant 0 : i32
    %c0_i32_1 = arith.constant 0 : i32
    %c0_i32_2 = arith.constant 0 : i32
    return %c0_i32, %c0_i32_0, %c0_i32_1 : i32, i32, i32
  }
  func.func @transform_14(%arg0: i32) -> (i32, i32) {
    %c0_i32 = arith.constant 0 : i32
    %c0_i32_0 = arith.constant 0 : i32
    %c0_i32_1 = arith.constant 0 : i32
    return %c0_i32, %c0_i32_0 : i32, i32
  }
  func.func @transform_15(%arg0: i32) -> (i32, i32, i32) {
    %c0_i32 = arith.constant 0 : i32
    %c0_i32_0 = arith.constant 0 : i32
    %c0_i32_1 = arith.constant 0 : i32
    %c0_i32_2 = arith.constant 0 : i32
    return %c0_i32, %c0_i32_0, %c0_i32_1 : i32, i32, i32
  }
  func.func @transform_16(%arg0: i32) -> (i32, i32, i32) {
    %c0_i32 = arith.constant 0 : i32
    %c0_i32_0 = arith.constant 0 : i32
    %c0_i32_1 = arith.constant 0 : i32
    %c0_i32_2 = arith.constant 0 : i32
    return %c0_i32, %c0_i32_0, %c0_i32_1 : i32, i32, i32
  }
  func.func @transform_17(%arg0: i32) -> (i32, i32) {
    %c0_i32 = arith.constant 0 : i32
    %c0_i32_0 = arith.constant 0 : i32
    %c0_i32_1 = arith.constant 0 : i32
    return %c0_i32, %c0_i32_0 : i32, i32
  }
  func.func @transform_18(%arg0: i32) -> (i32, i32) {
    %c0_i32 = arith.constant 0 : i32
    %c0_i32_0 = arith.constant 0 : i32
    %c0_i32_1 = arith.constant 0 : i32
    return %c0_i32, %c0_i32_0 : i32, i32
  }
  func.func @transform_19(%arg0: i32) -> (i32, i32) {
    %c0_i32 = arith.constant 0 : i32
    %c0_i32_0 = arith.constant 0 : i32
    return %c0_i32, %arg0 : i32, i32
  }
  func.func @transform_20(%arg0: i32) -> (i32, i32) {
    %c0_i32 = arith.constant 0 : i32
    %c0_i32_0 = arith.constant 0 : i32
    return %c0_i32, %arg0 : i32, i32
  }
}

</mosaic_0001>

<llo_original>
// kernel: trans_low_forward.1
$region0: #{trans_low_forward.1}
  #allocation0 [shape = 'u32[]', space=smem, size = 0x4, offset = 0x4, fixed_abs, tag = 'smem constant byte address 0x4 - core index']
  #allocation1 [shape = 'u32[72,128]{1,0:T(1,128)}', space=vmem, size = 0x9000, scoped, tag = 'internal scratch']
  #allocation2 [shape = 'f32[144,256]{1,0:T(8,128)}', space=vmem, size = 0x24000, scoped, tag = 'scratch operand']
  %s0 = inlined_call_operand.vmem [shape: f32[3,512], index: 0, kind: input, shape index: {}]
  %s1 = inlined_call_operand.hbm [shape: f32[9,1,256], index: 1, kind: input, shape index: {}]
  %s2 = inlined_call_operand.vmem [shape: f32[9,16,3], index: 2, kind: input, shape index: {}]
  %s3 = inlined_call_operand.hbm [shape: f32[16,1], index: 3, kind: input, shape index: {}]
  %s4 = inlined_call_operand.hbm [shape: f32[64,144], index: 4, kind: input, shape index: {}]
  %s5 = inlined_call_operand.hbm [shape: f32[64,1], index: 5, kind: input, shape index: {}]
  %s6 = inlined_call_operand.hbm [shape: f32[16,64], index: 6, kind: input, shape index: {}]
  %s7 = inlined_call_operand.hbm [shape: f32[16,1], index: 7, kind: input, shape index: {}]
  %s8 = inlined_call_operand.vmem [shape: f32[16,144], index: 8, kind: input, shape index: {}]
  %s9 = inlined_call_operand.hbm [shape: f32[16,1], index: 9, kind: input, shape index: {}]
  %s10 = inlined_call_operand.vmem [shape: f32[3,144], index: 10, kind: input, shape index: {}]
  %s11 = inlined_call_operand.hbm [shape: f32[3,1], index: 11, kind: input, shape index: {}]
  %s12 = inlined_call_operand.hbm [shape: f32[9,16,3], index: 12, kind: input, shape index: {}]
  %s13 = inlined_call_operand.hbm [shape: f32[9,16,3], index: 13, kind: input, shape index: {}]
  %s14 = inlined_call_operand.hbm [shape: f32[16,1], index: 14, kind: input, shape index: {}]
  %s15 = inlined_call_operand.hbm [shape: f32[9,1,1], index: 15, kind: input, shape index: {}]
  %s16 = inlined_call_operand.hbm [shape: f32[9,1,1], index: 16, kind: input, shape index: {}]
  %s17 = inlined_call_operand.hbm [shape: f32[3,144], index: 17, kind: input, shape index: {}]
  %s18 = inlined_call_operand.hbm [shape: f32[3,1], index: 18, kind: input, shape index: {}]
  %s19 = inlined_call_operand.vmem [shape: f32[3,512], index: 19, kind: output, shape index: {0}]
  %s20 = inlined_call_operand.vmem [shape: f32[3,512], index: 20, kind: output, shape index: {1}]
  %21 = xla_tuple %s19, %s20
  %s22 = sld [smem:[#allocation0]]
  $region177: #{trans_low_forward.1} parent=0
    _
  %s24 = ssub.s32 1, %s22
  %s25 = scalar_select 0, %s24, %s22
  $region1: #{trans_low_forward.1} parent=0
    #allocation3 [shape = 'u8[9216]{0}', space=vmem, size = 0x2400, scoped, tag = 'input window, operand 1, single buffered']
    #allocation4 [shape = 's32[2]{0}', space=sflag, size = 0x8, scoped, tag = 'scoped memory for trans_low_forward.1']
    #allocation5 [shape = 'u8[8192]{0}', space=vmem, size = 0x2000, scoped, tag = 'input window, operand 3, single buffered']
    #allocation6 [shape = 's32[1]{0}', space=sflag, size = 0x4, scoped, tag = 'scoped memory for trans_low_forward.1']
    #allocation7 [shape = 'u8[65536]{0}', space=vmem, size = 0x10000, scoped, tag = 'input window, operand 4, single buffered']
    #allocation8 [shape = 'u8[32768]{0}', space=vmem, size = 0x8000, scoped, tag = 'input window, operand 5, single buffered']
    #allocation9 [shape = 's32[1]{0}', space=sflag, size = 0x4, scoped, tag = 'scoped memory for trans_low_forward.1']
    #allocation10 [shape = 'u8[8192]{0}', space=vmem, size = 0x2000, scoped, tag = 'input window, operand 6, single buffered']
    #allocation11 [shape = 'u8[8192]{0}', space=vmem, size = 0x2000, scoped, tag = 'input window, operand 7, single buffered']
    #allocation12 [shape = 's32[1]{0}', space=sflag, size = 0x4, scoped, tag = 'scoped memory for trans_low_forward.1']
    #allocation13 [shape = 'u8[8192]{0}', space=vmem, size = 0x2000, scoped, tag = 'input window, operand 9, single buffered']
    #allocation14 [shape = 'u8[2048]{0}', space=vmem, size = 0x800, scoped, tag = 'input window, operand 11, single buffered']
    #allocation15 [shape = 's32[1]{0}', space=sflag, size = 0x4, scoped, tag = 'scoped memory for trans_low_forward.1']
    #allocation16 [shape = 'u8[73728]{0}', space=vmem, size = 0x12000, scoped, tag = 'input window, operand 12, single buffered']
    #allocation17 [shape = 'u8[73728]{0}', space=vmem, size = 0x12000, scoped, tag = 'input window, operand 13, single buffered']
    #allocation18 [shape = 's32[1]{0}', space=sflag, size = 0x4, scoped, tag = 'scoped memory for trans_low_forward.1']
    #allocation19 [shape = 'u8[8192]{0}', space=vmem, size = 0x2000, scoped, tag = 'input window, operand 14, single buffered']
    #allocation20 [shape = 'u8[4608]{0}', space=vmem, size = 0x1400, scoped, tag = 'input window, operand 15, single buffered']
    #allocation21 [shape = 's32[1]{0}', space=sflag, size = 0x4, scoped, tag = 'scoped memory for trans_low_forward.1']
    #allocation22 [shape = 'u8[4608]{0}', space=vmem, size = 0x1400, scoped, tag = 'input window, operand 16, single buffered']
    #allocation23 [shape = 'u8[4096]{0}', space=vmem, size = 0x1000, scoped, tag = 'input window, operand 17, single buffered']
    #allocation24 [shape = 's32[1]{0}', space=sflag, size = 0x4, scoped, tag = 'scoped memory for trans_low_forward.1']
    #allocation25 [shape = 'u8[2048]{0}', space=vmem, size = 0x800, scoped, tag = 'input window, operand 18, single buffered']
    %26 = vsyncpa [#allocation4], 0
    %27 = vsyncpa [#allocation6], 0
    %28 = vsyncpa [#allocation9], 0
    %29 = vsyncpa [#allocation12], 0
    %30 = vsyncpa [#allocation15], 0
    %31 = vsyncpa [#allocation18], 0
    %32 = vsyncpa [#allocation21], 0
    %33 = vsyncpa [#allocation24], 0
    loop: start=0, step=1, limit=4
    $region2: #{trans_low_forward.1} parent=1 // loop_pre_header
      _
    $region3: #{trans_low_forward.1} parent=1 // loop_header
      %s35 = sphi 0, %s39
      %p36 = scmp.ge.s32.totalorder %s35, 4
      %s45 = sphi 0, %s47
      %s48 = sphi 0, %s45
      %s49 = sphi 0, %s48
      %s65 = sphi 0, %s49
      %s69 = sphi 0, %s69
      %s71 = sphi 0, %s69
      %s72 = sphi 0, %s71
      %s86 = sphi 0, %s72
      %s90 = sphi 0, %s90
      %s92 = sphi 0, %s90
      %s93 = sphi 0, %s92
      %s107 = sphi 0, %s93
      %s111 = sphi 0, %s111
      %s113 = sphi 0, %s111
      %s114 = sphi 0, %s113
      %s128 = sphi 0, %s114
      %s132 = sphi 0, %s132
      %s134 = sphi 0, %s132
      %s135 = sphi 0, %s134
      %s149 = sphi 0, %s135
      %s153 = sphi 0, %s153
      %s155 = sphi 0, %s153
      %s156 = sphi 0, %s155
      %s170 = sphi 0, %s156
      %s174 = sphi 0, %s174
      %s176 = sphi 0, %s174
      %s177 = sphi 0, %s176
      %s191 = sphi 0, %s177
      %s195 = sphi 0, %s195
      %s197 = sphi 0, %s195
      %s198 = sphi 0, %s197
      %s212 = sphi 0, %s198
      %s216 = sphi 0, %s216
      %s218 = sphi 0, %s216
      %s219 = sphi 0, %s218
      %s233 = sphi 0, %s219
      %s237 = sphi 0, %s237
      %s239 = sphi 0, %s237
      %s240 = sphi 0, %s239
      %s254 = sphi 0, %s240
      %s258 = sphi 0, %s258
      %s260 = sphi 0, %s258
      %s261 = sphi 0, %s260
      %s275 = sphi 0, %s261
      %s279 = sphi 0, %s279
      %s281 = sphi 0, %s279
      %s282 = sphi 0, %s281
      %s296 = sphi 0, %s282
      %s300 = sphi 0, %s300
      %s302 = sphi 0, %s300
      %s303 = sphi 0, %s302
      %s317 = sphi 0, %s303
      %s321 = sphi 0, %s321
      %s323 = sphi 0, %s321
      %s324 = sphi 0, %s323
      %s338 = sphi 0, %s324
      %s342 = sphi 0, %s342
      %s344 = sphi 0, %s342
      %s345 = sphi 0, %s344
      %s359 = sphi 0, %s345
      %s363 = sphi 0, %s363
      %s365 = sphi 0, %s363
      %s366 = sphi 0, %s365
      %s380 = sphi 0, %s366
      %s384 = sphi 0, %s384
      %s386 = sphi 0, %s384
      %s387 = sphi 0, %s386
      %s401 = sphi 0, %s387
      %s405 = sphi 0, %s405
      %s407 = sphi 0, %s405
      %s408 = sphi 0, %s407
      %s422 = sphi 0, %s408
      %s426 = sphi 0, %s426
      %s428 = sphi 0, %s426
      %s429 = sphi 0, %s428
      %s443 = sphi 0, %s429
      %s449 = sphi 0, %s451
      %s452 = sphi 0, %s449
      %s453 = sphi 0, %s452
      %s469 = sphi 0, %s453
      %s475 = sphi 0, %s477
      %s478 = sphi 0, %s475
      %s479 = sphi 0, %s478
      %s495 = sphi 0, %s479
    $region4: #{trans_low_forward.1} parent=1 // loop_header_branch
      %38 = sbr.rel (%p36) target = $region8
    $region5: #{trans_low_forward.1} parent=1 // loop_body
      %s40 = ssub.s32 %s35, 1
      %s41 = ssub.s32 %s35, 2
      %s42 = sadd.s32 %s35, 1
      %s43 = ssub.s32 %s35, %s42
      %p44 = scmp.eq.s32.totalorder %s43, 0
      %s46 = sadd.s32 %s45, 1
      %s47 = scalar_select %p44, %s45, %s46
      %p50 = pneg %p44
      %p51 = scmp.eq.s32.totalorder %s35, 1
      %p52 = por %p50, %p51
      %p53 = scmp.ne.s32.totalorder %s45, %s48
      %p54 = scmp.eq.s32.totalorder %s35, 0
      %p55 = por %p53, %p54
      %p56 = scmp.ne.s32.totalorder %s45, %s48
      %p57 = scmp.eq.s32.totalorder %s40, 1
      %p58 = por %p56, %p57
      %p59 = scmp.ne.s32.totalorder %s48, %s49
      %p60 = scmp.eq.s32.totalorder %s40, 0
      %p61 = por %p59, %p60
      %p62 = scmp.ne.s32.totalorder %s48, %s49
      %p63 = scmp.eq.s32.totalorder %s41, 1
      %p64 = por %p62, %p63
      %p66 = scmp.ne.s32.totalorder %s49, %s65
      %p67 = scmp.eq.s32.totalorder %s41, 0
      %p68 = por %p66, %p67
      %s70 = sadd.s32 %s69, 1
      %p73 = scmp.eq.s32.totalorder %s35, 1
      %p74 = scmp.ne.s32.totalorder %s69, %s71
      %p75 = scmp.eq.s32.totalorder %s35, 0
      %p76 = por %p74, %p75
      %p77 = scmp.ne.s32.totalorder %s69, %s71
      %p78 = scmp.eq.s32.totalorder %s40, 1
      %p79 = por %p77, %p78
      %p80 = scmp.ne.s32.totalorder %s71, %s72
      %p81 = scmp.eq.s32.totalorder %s40, 0
      %p82 = por %p80, %p81
      %p83 = scmp.ne.s32.totalorder %s71, %s72
      %p84 = scmp.eq.s32.totalorder %s41, 1
      %p85 = por %p83, %p84
      %p87 = scmp.ne.s32.totalorder %s72, %s86
      %p88 = scmp.eq.s32.totalorder %s41, 0
      %p89 = por %p87, %p88
      %s91 = sadd.s32 %s90, 1
      %p94 = scmp.eq.s32.totalorder %s35, 1
      %p95 = scmp.ne.s32.totalorder %s90, %s92
      %p96 = scmp.eq.s32.totalorder %s35, 0
      %p97 = por %p95, %p96
      %p98 = scmp.ne.s32.totalorder %s90, %s92
      %p99 = scmp.eq.s32.totalorder %s40, 1
      %p100 = por %p98, %p99
      %p101 = scmp.ne.s32.totalorder %s92, %s93
      %p102 = scmp.eq.s32.totalorder %s40, 0
      %p103 = por %p101, %p102
      %p104 = scmp.ne.s32.totalorder %s92, %s93
      %p105 = scmp.eq.s32.totalorder %s41, 1
      %p106 = por %p104, %p105
      %p108 = scmp.ne.s32.totalorder %s93, %s107
      %p109 = scmp.eq.s32.totalorder %s41, 0
      %p110 = por %p108, %p109
      %s112 = sadd.s32 %s111, 1
      %p115 = scmp.eq.s32.totalorder %s35, 1
      %p116 = scmp.ne.s32.totalorder %s111, %s113
      %p117 = scmp.eq.s32.totalorder %s35, 0
      %p118 = por %p116, %p117
      %p119 = scmp.ne.s32.totalorder %s111, %s113
      %p120 = scmp.eq.s32.totalorder %s40, 1
      %p121 = por %p119, %p120
      %p122 = scmp.ne.s32.totalorder %s113, %s114
      %p123 = scmp.eq.s32.totalorder %s40, 0
      %p124 = por %p122, %p123
      %p125 = scmp.ne.s32.totalorder %s113, %s114
      %p126 = scmp.eq.s32.totalorder %s41, 1
      %p127 = por %p125, %p126
      %p129 = scmp.ne.s32.totalorder %s114, %s128
      %p130 = scmp.eq.s32.totalorder %s41, 0
      %p131 = por %p129, %p130
      %s133 = sadd.s32 %s132, 1
      %p136 = scmp.eq.s32.totalorder %s35, 1
      %p137 = scmp.ne.s32.totalorder %s132, %s134
      %p138 = scmp.eq.s32.totalorder %s35, 0
      %p139 = por %p137, %p138
      %p140 = scmp.ne.s32.totalorder %s132, %s134
      %p141 = scmp.eq.s32.totalorder %s40, 1
      %p142 = por %p140, %p141
      %p143 = scmp.ne.s32.totalorder %s134, %s135
      %p144 = scmp.eq.s32.totalorder %s40, 0
      %p145 = por %p143, %p144
      %p146 = scmp.ne.s32.totalorder %s134, %s135
      %p147 = scmp.eq.s32.totalorder %s41, 1
      %p148 = por %p146, %p147
      %p150 = scmp.ne.s32.totalorder %s135, %s149
      %p151 = scmp.eq.s32.totalorder %s41, 0
      %p152 = por %p150, %p151
      %s154 = sadd.s32 %s153, 1
      %p157 = scmp.eq.s32.totalorder %s35, 1
      %p158 = scmp.ne.s32.totalorder %s153, %s155
      %p159 = scmp.eq.s32.totalorder %s35, 0
      %p160 = por %p158, %p159
      %p161 = scmp.ne.s32.totalorder %s153, %s155
      %p162 = scmp.eq.s32.totalorder %s40, 1
      %p163 = por %p161, %p162
      %p164 = scmp.ne.s32.totalorder %s155, %s156
      %p165 = scmp.eq.s32.totalorder %s40, 0
      %p166 = por %p164, %p165
      %p167 = scmp.ne.s32.totalorder %s155, %s156
      %p168 = scmp.eq.s32.totalorder %s41, 1
      %p169 = por %p167, %p168
      %p171 = scmp.ne.s32.totalorder %s156, %s170
      %p172 = scmp.eq.s32.totalorder %s41, 0
      %p173 = por %p171, %p172
      %s175 = sadd.s32 %s174, 1
      %p178 = scmp.eq.s32.totalorder %s35, 1
      %p179 = scmp.ne.s32.totalorder %s174, %s176
      %p180 = scmp.eq.s32.totalorder %s35, 0
      %p181 = por %p179, %p180
      %p182 = scmp.ne.s32.totalorder %s174, %s176
      %p183 = scmp.eq.s32.totalorder %s40, 1
      %p184 = por %p182, %p183
      %p185 = scmp.ne.s32.totalorder %s176, %s177
      %p186 = scmp.eq.s32.totalorder %s40, 0
      %p187 = por %p185, %p186
      %p188 = scmp.ne.s32.totalorder %s176, %s177
      %p189 = scmp.eq.s32.totalorder %s41, 1
      %p190 = por %p188, %p189
      %p192 = scmp.ne.s32.totalorder %s177, %s191
      %p193 = scmp.eq.s32.totalorder %s41, 0
      %p194 = por %p192, %p193
      %s196 = sadd.s32 %s195, 1
      %p199 = scmp.eq.s32.totalorder %s35, 1
      %p200 = scmp.ne.s32.totalorder %s195, %s197
      %p201 = scmp.eq.s32.totalorder %s35, 0
      %p202 = por %p200, %p201
      %p203 = scmp.ne.s32.totalorder %s195, %s197
      %p204 = scmp.eq.s32.totalorder %s40, 1
      %p205 = por %p203, %p204
      %p206 = scmp.ne.s32.totalorder %s197, %s198
      %p207 = scmp.eq.s32.totalorder %s40, 0
      %p208 = por %p206, %p207
      %p209 = scmp.ne.s32.totalorder %s197, %s198
      %p210 = scmp.eq.s32.totalorder %s41, 1
      %p211 = por %p209, %p210
      %p213 = scmp.ne.s32.totalorder %s198, %s212
      %p214 = scmp.eq.s32.totalorder %s41, 0
      %p215 = por %p213, %p214
      %s217 = sadd.s32 %s216, 1
      %p220 = scmp.eq.s32.totalorder %s35, 1
      %p221 = scmp.ne.s32.totalorder %s216, %s218
      %p222 = scmp.eq.s32.totalorder %s35, 0
      %p223 = por %p221, %p222
      %p224 = scmp.ne.s32.totalorder %s216, %s218
      %p225 = scmp.eq.s32.totalorder %s40, 1
      %p226 = por %p224, %p225
      %p227 = scmp.ne.s32.totalorder %s218, %s219
      %p228 = scmp.eq.s32.totalorder %s40, 0
      %p229 = por %p227, %p228
      %p230 = scmp.ne.s32.totalorder %s218, %s219
      %p231 = scmp.eq.s32.totalorder %s41, 1
      %p232 = por %p230, %p231
      %p234 = scmp.ne.s32.totalorder %s219, %s233
      %p235 = scmp.eq.s32.totalorder %s41, 0
      %p236 = por %p234, %p235
      %s238 = sadd.s32 %s237, 1
      %p241 = scmp.eq.s32.totalorder %s35, 1
      %p242 = scmp.ne.s32.totalorder %s237, %s239
      %p243 = scmp.eq.s32.totalorder %s35, 0
      %p244 = por %p242, %p243
      %p245 = scmp.ne.s32.totalorder %s237, %s239
      %p246 = scmp.eq.s32.totalorder %s40, 1
      %p247 = por %p245, %p246
      %p248 = scmp.ne.s32.totalorder %s239, %s240
      %p249 = scmp.eq.s32.totalorder %s40, 0
      %p250 = por %p248, %p249
      %p251 = scmp.ne.s32.totalorder %s239, %s240
      %p252 = scmp.eq.s32.totalorder %s41, 1
      %p253 = por %p251, %p252
      %p255 = scmp.ne.s32.totalorder %s240, %s254
      %p256 = scmp.eq.s32.totalorder %s41, 0
      %p257 = por %p255, %p256
      %s259 = sadd.s32 %s258, 1
      %p262 = scmp.eq.s32.totalorder %s35, 1
      %p263 = scmp.ne.s32.totalorder %s258, %s260
      %p264 = scmp.eq.s32.totalorder %s35, 0
      %p265 = por %p263, %p264
      %p266 = scmp.ne.s32.totalorder %s258, %s260
      %p267 = scmp.eq.s32.totalorder %s40, 1
      %p268 = por %p266, %p267
      %p269 = scmp.ne.s32.totalorder %s260, %s261
      %p270 = scmp.eq.s32.totalorder %s40, 0
      %p271 = por %p269, %p270
      %p272 = scmp.ne.s32.totalorder %s260, %s261
      %p273 = scmp.eq.s32.totalorder %s41, 1
      %p274 = por %p272, %p273
      %p276 = scmp.ne.s32.totalorder %s261, %s275
      %p277 = scmp.eq.s32.totalorder %s41, 0
      %p278 = por %p276, %p277
      %s280 = sadd.s32 %s279, 1
      %p283 = scmp.eq.s32.totalorder %s35, 1
      %p284 = scmp.ne.s32.totalorder %s279, %s281
      %p285 = scmp.eq.s32.totalorder %s35, 0
      %p286 = por %p284, %p285
      %p287 = scmp.ne.s32.totalorder %s279, %s281
      %p288 = scmp.eq.s32.totalorder %s40, 1
      %p289 = por %p287, %p288
      %p290 = scmp.ne.s32.totalorder %s281, %s282
      %p291 = scmp.eq.s32.totalorder %s40, 0
      %p292 = por %p290, %p291
      %p293 = scmp.ne.s32.totalorder %s281, %s282
      %p294 = scmp.eq.s32.totalorder %s41, 1
      %p295 = por %p293, %p294
      %p297 = scmp.ne.s32.totalorder %s282, %s296
      %p298 = scmp.eq.s32.totalorder %s41, 0
      %p299 = por %p297, %p298
      %s301 = sadd.s32 %s300, 1
      %p304 = scmp.eq.s32.totalorder %s35, 1
      %p305 = scmp.ne.s32.totalorder %s300, %s302
      %p306 = scmp.eq.s32.totalorder %s35, 0
      %p307 = por %p305, %p306
      %p308 = scmp.ne.s32.totalorder %s300, %s302
      %p309 = scmp.eq.s32.totalorder %s40, 1
      %p310 = por %p308, %p309
      %p311 = scmp.ne.s32.totalorder %s302, %s303
      %p312 = scmp.eq.s32.totalorder %s40, 0
      %p313 = por %p311, %p312
      %p314 = scmp.ne.s32.totalorder %s302, %s303
      %p315 = scmp.eq.s32.totalorder %s41, 1
      %p316 = por %p314, %p315
      %p318 = scmp.ne.s32.totalorder %s303, %s317
      %p319 = scmp.eq.s32.totalorder %s41, 0
      %p320 = por %p318, %p319
      %s322 = sadd.s32 %s321, 1
      %p325 = scmp.eq.s32.totalorder %s35, 1
      %p326 = scmp.ne.s32.totalorder %s321, %s323
      %p327 = scmp.eq.s32.totalorder %s35, 0
      %p328 = por %p326, %p327
      %p329 = scmp.ne.s32.totalorder %s321, %s323
      %p330 = scmp.eq.s32.totalorder %s40, 1
      %p331 = por %p329, %p330
      %p332 = scmp.ne.s32.totalorder %s323, %s324
      %p333 = scmp.eq.s32.totalorder %s40, 0
      %p334 = por %p332, %p333
      %p335 = scmp.ne.s32.totalorder %s323, %s324
      %p336 = scmp.eq.s32.totalorder %s41, 1
      %p337 = por %p335, %p336
      %p339 = scmp.ne.s32.totalorder %s324, %s338
      %p340 = scmp.eq.s32.totalorder %s41, 0
      %p341 = por %p339, %p340
      %s343 = sadd.s32 %s342, 1
      %p346 = scmp.eq.s32.totalorder %s35, 1
      %p347 = scmp.ne.s32.totalorder %s342, %s344
      %p348 = scmp.eq.s32.totalorder %s35, 0
      %p349 = por %p347, %p348
      %p350 = scmp.ne.s32.totalorder %s342, %s344
      %p351 = scmp.eq.s32.totalorder %s40, 1
      %p352 = por %p350, %p351
      %p353 = scmp.ne.s32.totalorder %s344, %s345
      %p354 = scmp.eq.s32.totalorder %s40, 0
      %p355 = por %p353, %p354
      %p356 = scmp.ne.s32.totalorder %s344, %s345
      %p357 = scmp.eq.s32.totalorder %s41, 1
      %p358 = por %p356, %p357
      %p360 = scmp.ne.s32.totalorder %s345, %s359
      %p361 = scmp.eq.s32.totalorder %s41, 0
      %p362 = por %p360, %p361
      %s364 = sadd.s32 %s363, 1
      %p367 = scmp.eq.s32.totalorder %s35, 1
      %p368 = scmp.ne.s32.totalorder %s363, %s365
      %p369 = scmp.eq.s32.totalorder %s35, 0
      %p370 = por %p368, %p369
      %p371 = scmp.ne.s32.totalorder %s363, %s365
      %p372 = scmp.eq.s32.totalorder %s40, 1
      %p373 = por %p371, %p372
      %p374 = scmp.ne.s32.totalorder %s365, %s366
      %p375 = scmp.eq.s32.totalorder %s40, 0
      %p376 = por %p374, %p375
      %p377 = scmp.ne.s32.totalorder %s365, %s366
      %p378 = scmp.eq.s32.totalorder %s41, 1
      %p379 = por %p377, %p378
      %p381 = scmp.ne.s32.totalorder %s366, %s380
      %p382 = scmp.eq.s32.totalorder %s41, 0
      %p383 = por %p381, %p382
      %s385 = sadd.s32 %s384, 1
      %p388 = scmp.eq.s32.totalorder %s35, 1
      %p389 = scmp.ne.s32.totalorder %s384, %s386
      %p390 = scmp.eq.s32.totalorder %s35, 0
      %p391 = por %p389, %p390
      %p392 = scmp.ne.s32.totalorder %s384, %s386
      %p393 = scmp.eq.s32.totalorder %s40, 1
      %p394 = por %p392, %p393
      %p395 = scmp.ne.s32.totalorder %s386, %s387
      %p396 = scmp.eq.s32.totalorder %s40, 0
      %p397 = por %p395, %p396
      %p398 = scmp.ne.s32.totalorder %s386, %s387
      %p399 = scmp.eq.s32.totalorder %s41, 1
      %p400 = por %p398, %p399
      %p402 = scmp.ne.s32.totalorder %s387, %s401
      %p403 = scmp.eq.s32.totalorder %s41, 0
      %p404 = por %p402, %p403
      %s406 = sadd.s32 %s405, 1
      %p409 = scmp.eq.s32.totalorder %s35, 1
      %p410 = scmp.ne.s32.totalorder %s405, %s407
      %p411 = scmp.eq.s32.totalorder %s35, 0
      %p412 = por %p410, %p411
      %p413 = scmp.ne.s32.totalorder %s405, %s407
      %p414 = scmp.eq.s32.totalorder %s40, 1
      %p415 = por %p413, %p414
      %p416 = scmp.ne.s32.totalorder %s407, %s408
      %p417 = scmp.eq.s32.totalorder %s40, 0
      %p418 = por %p416, %p417
      %p419 = scmp.ne.s32.totalorder %s407, %s408
      %p420 = scmp.eq.s32.totalorder %s41, 1
      %p421 = por %p419, %p420
      %p423 = scmp.ne.s32.totalorder %s408, %s422
      %p424 = scmp.eq.s32.totalorder %s41, 0
      %p425 = por %p423, %p424
      %s427 = sadd.s32 %s426, 1
      %p430 = scmp.eq.s32.totalorder %s35, 1
      %p431 = scmp.ne.s32.totalorder %s426, %s428
      %p432 = scmp.eq.s32.totalorder %s35, 0
      %p433 = por %p431, %p432
      %p434 = scmp.ne.s32.totalorder %s426, %s428
      %p435 = scmp.eq.s32.totalorder %s40, 1
      %p436 = por %p434, %p435
      %p437 = scmp.ne.s32.totalorder %s428, %s429
      %p438 = scmp.eq.s32.totalorder %s40, 0
      %p439 = por %p437, %p438
      %p440 = scmp.ne.s32.totalorder %s428, %s429
      %p441 = scmp.eq.s32.totalorder %s41, 1
      %p442 = por %p440, %p441
      %p444 = scmp.ne.s32.totalorder %s429, %s443
      %p445 = scmp.eq.s32.totalorder %s41, 0
      %p446 = por %p444, %p445
      %s447 = ssub.s32 %s35, %s42
      %p448 = scmp.eq.s32.totalorder %s447, 0
      %s450 = sadd.s32 %s449, 1
      %s451 = scalar_select %p448, %s449, %s450
      %p454 = pneg %p448
      %p455 = scmp.eq.s32.totalorder %s35, 1
      %p456 = por %p454, %p455
      %p457 = scmp.ne.s32.totalorder %s449, %s452
      %p458 = scmp.eq.s32.totalorder %s35, 0
      %p459 = por %p457, %p458
      %p460 = scmp.ne.s32.totalorder %s449, %s452
      %p461 = scmp.eq.s32.totalorder %s40, 1
      %p462 = por %p460, %p461
      %p463 = scmp.ne.s32.totalorder %s452, %s453
      %p464 = scmp.eq.s32.totalorder %s40, 0
      %p465 = por %p463, %p464
      %p466 = scmp.ne.s32.totalorder %s452, %s453
      %p467 = scmp.eq.s32.totalorder %s41, 1
      %p468 = por %p466, %p467
      %p470 = scmp.ne.s32.totalorder %s453, %s469
      %p471 = scmp.eq.s32.totalorder %s41, 0
      %p472 = por %p470, %p471
      %s473 = ssub.s32 %s35, %s42
      %p474 = scmp.eq.s32.totalorder %s473, 0
      %s476 = sadd.s32 %s475, 1
      %s477 = scalar_select %p474, %s475, %s476
      %p480 = pneg %p474
      %p481 = scmp.eq.s32.totalorder %s35, 1
      %p482 = por %p480, %p481
      %p483 = scmp.ne.s32.totalorder %s475, %s478
      %p484 = scmp.eq.s32.totalorder %s35, 0
      %p485 = por %p483, %p484
      %p486 = scmp.ne.s32.totalorder %s475, %s478
      %p487 = scmp.eq.s32.totalorder %s40, 1
      %p488 = por %p486, %p487
      %p489 = scmp.ne.s32.totalorder %s478, %s479
      %p490 = scmp.eq.s32.totalorder %s40, 0
      %p491 = por %p489, %p490
      %p492 = scmp.ne.s32.totalorder %s478, %s479
      %p493 = scmp.eq.s32.totalorder %s41, 1
      %p494 = por %p492, %p493
      %p496 = scmp.ne.s32.totalorder %s479, %s495
      %p497 = scmp.eq.s32.totalorder %s41, 0
      %p498 = por %p496, %p497
      %p499 = scmp.le.s32.totalorder 1, %s35
      %p500 = scmp.lt.s32.totalorder %s35, 3
      %p501 = pnand %p499, %p500
      %p502 = pneg %p501
      // Predicated region
      $region9: #{trans_low_forward.1} parent=5 // pred_check
        _
      $region10: #{trans_low_forward.1} parent=5 // pred_check_branch
        %504 = sbr.rel (%p501) target = $region12
      $region11: #{trans_low_forward.1} parent=5 // pred_region
        %s505 = ssub.s32 %s35, 1
        // Predicated region
        $region13: #{trans_low_forward.1} parent=11 // pred_check
          %p506 = pneg %p82
        $region14: #{trans_low_forward.1} parent=11 // pred_check_branch
          %508 = sbr.rel (%p506) target = $region16
        $region15: #{trans_low_forward.1} parent=11 // pred_region
          %510 = vsyncadd [#allocation4], 0
          %s511 = sshll.u32 %s1, 4
          %s512 = int_to_ptr.hbm [resolvable:$true] %s511
          %s513 = sshll.u32 [#allocation3], 4
          %s514 = int_to_ptr.vmem [resolvable:$true] %s513
          %519 = dma.hbm_to_vmem [thread:$0]  %s512, 288, %s514, [#allocation4], 32, 32, 2
        $region16: #{trans_low_forward.1} parent=11 // pred_fallthru
          _
        // Predicated region
        $region17: #{trans_low_forward.1} parent=11 // pred_check
          %p520 = pneg %p103
        $region18: #{trans_low_forward.1} parent=11 // pred_check_branch
          %522 = sbr.rel (%p520) target = $region20
        $region19: #{trans_low_forward.1} parent=11 // pred_region
          _
        $region20: #{trans_low_forward.1} parent=11 // pred_fallthru
          _
        // Predicated region
        $region21: #{trans_low_forward.1} parent=11 // pred_check
          %p523 = pneg %p124
        $region22: #{trans_low_forward.1} parent=11 // pred_check_branch
          %525 = sbr.rel (%p523) target = $region24
        $region23: #{trans_low_forward.1} parent=11 // pred_region
          %527 = vsyncadd [#allocation6], 0
          %s528 = sshll.u32 %s3, 4
          %s529 = int_to_ptr.hbm [resolvable:$true] %s528
          %s530 = sshll.u32 [#allocation5], 4
          %s531 = int_to_ptr.vmem [resolvable:$true] %s530
          %536 = dma.hbm_to_vmem [thread:$0]  %s529, 256, %s531, [#allocation6], 128, 128, 8
        $region24: #{trans_low_forward.1} parent=11 // pred_fallthru
          _
        // Predicated region
        $region25: #{trans_low_forward.1} parent=11 // pred_check
          %p537 = pneg %p145
        $region26: #{trans_low_forward.1} parent=11 // pred_check_branch
          %539 = sbr.rel (%p537) target = $region28
        $region27: #{trans_low_forward.1} parent=11 // pred_region
          %541 = vsyncadd [#allocation6], 0
          %s542 = sshll.u32 %s4, 4
          %s543 = int_to_ptr.hbm [resolvable:$true] %s542
          %s544 = sshll.u32 [#allocation7], 4
          %s545 = int_to_ptr.vmem [resolvable:$true] %s544
          %550 = dma.hbm_to_vmem [thread:$0]  %s543, 2048, %s545, [#allocation6], 256, 256, 16
        $region28: #{trans_low_forward.1} parent=11 // pred_fallthru
          _
        // Predicated region
        $region29: #{trans_low_forward.1} parent=11 // pred_check
          %p551 = pneg %p166
        $region30: #{trans_low_forward.1} parent=11 // pred_check_branch
          %553 = sbr.rel (%p551) target = $region32
        $region31: #{trans_low_forward.1} parent=11 // pred_region
          %555 = vsyncadd [#allocation9], 0
          %s556 = sshll.u32 %s5, 4
          %s557 = int_to_ptr.hbm [resolvable:$true] %s556
          %s558 = sshll.u32 [#allocation8], 4
          %s559 = int_to_ptr.vmem [resolvable:$true] %s558
          %564 = dma.hbm_to_vmem [thread:$0]  %s557, 1024, %s559, [#allocation9], 128, 128, 8
        $region32: #{trans_low_forward.1} parent=11 // pred_fallthru
          _
        // Predicated region
        $region33: #{trans_low_forward.1} parent=11 // pred_check
          %p565 = pneg %p187
        $region34: #{trans_low_forward.1} parent=11 // pred_check_branch
          %567 = sbr.rel (%p565) target = $region36
        $region35: #{trans_low_forward.1} parent=11 // pred_region
          %569 = vsyncadd [#allocation9], 0
          %s570 = sshll.u32 %s6, 4
          %s571 = int_to_ptr.hbm [resolvable:$true] %s570
          %s572 = sshll.u32 [#allocation10], 4
          %s573 = int_to_ptr.vmem [resolvable:$true] %s572
          %578 = dma.hbm_to_vmem [thread:$0]  %s571, 256, %s573, [#allocation9], 128, 128, 8
        $region36: #{trans_low_forward.1} parent=11 // pred_fallthru
          _
        // Predicated region
        $region37: #{trans_low_forward.1} parent=11 // pred_check
          %p579 = pneg %p208
        $region38: #{trans_low_forward.1} parent=11 // pred_check_branch
          %581 = sbr.rel (%p579) target = $region40
        $region39: #{trans_low_forward.1} parent=11 // pred_region
          %583 = vsyncadd [#allocation12], 0
          %s584 = sshll.u32 %s7, 4
          %s585 = int_to_ptr.hbm [resolvable:$true] %s584
          %s586 = sshll.u32 [#allocation11], 4
          %s587 = int_to_ptr.vmem [resolvable:$true] %s586
          %592 = dma.hbm_to_vmem [thread:$0]  %s585, 256, %s587, [#allocation12], 128, 128, 8
        $region40: #{trans_low_forward.1} parent=11 // pred_fallthru
          _
        // Predicated region
        $region41: #{trans_low_forward.1} parent=11 // pred_check
          %p593 = pneg %p229
        $region42: #{trans_low_forward.1} parent=11 // pred_check_branch
          %595 = sbr.rel (%p593) target = $region44
        $region43: #{trans_low_forward.1} parent=11 // pred_region
          _
        $region44: #{trans_low_forward.1} parent=11 // pred_fallthru
          _
        // Predicated region
        $region45: #{trans_low_forward.1} parent=11 // pred_check
          %p596 = pneg %p250
        $region46: #{trans_low_forward.1} parent=11 // pred_check_branch
          %598 = sbr.rel (%p596) target = $region48
        $region47: #{trans_low_forward.1} parent=11 // pred_region
          %600 = vsyncadd [#allocation12], 0
          %s601 = sshll.u32 %s9, 4
          %s602 = int_to_ptr.hbm [resolvable:$true] %s601
          %s603 = sshll.u32 [#allocation13], 4
          %s604 = int_to_ptr.vmem [resolvable:$true] %s603
          %609 = dma.hbm_to_vmem [thread:$0]  %s602, 256, %s604, [#allocation12], 128, 128, 8
        $region48: #{trans_low_forward.1} parent=11 // pred_fallthru
          _
        // Predicated region
        $region49: #{trans_low_forward.1} parent=11 // pred_check
          %p610 = pneg %p271
        $region50: #{trans_low_forward.1} parent=11 // pred_check_branch
          %612 = sbr.rel (%p610) target = $region52
        $region51: #{trans_low_forward.1} parent=11 // pred_region
          _
        $region52: #{trans_low_forward.1} parent=11 // pred_fallthru
          _
        // Predicated region
        $region53: #{trans_low_forward.1} parent=11 // pred_check
          %p613 = pneg %p292
        $region54: #{trans_low_forward.1} parent=11 // pred_check_branch
          %615 = sbr.rel (%p613) target = $region56
        $region55: #{trans_low_forward.1} parent=11 // pred_region
          %617 = vsyncadd [#allocation15], 0
          %s619 = sshll.u32 %s11, 4
          %s620 = int_to_ptr.hbm [resolvable:$true] %s619
          %s621 = sshll.u32 [#allocation14], 4
          %s622 = int_to_ptr.vmem [resolvable:$true] %s621
          %624 = dma.hbm_to_vmem [thread:$0]  %s620, 64, %s622, [#allocation15]
        $region56: #{trans_low_forward.1} parent=11 // pred_fallthru
          _
        // Predicated region
        $region57: #{trans_low_forward.1} parent=11 // pred_check
          %p625 = pneg %p313
        $region58: #{trans_low_forward.1} parent=11 // pred_check_branch
          %627 = sbr.rel (%p625) target = $region60
        $region59: #{trans_low_forward.1} parent=11 // pred_region
          %629 = vsyncadd [#allocation15], 0
          %s630 = sshll.u32 %s12, 4
          %s631 = int_to_ptr.hbm [resolvable:$true] %s630
          %s632 = sshll.u32 [#allocation16], 4
          %s633 = int_to_ptr.vmem [resolvable:$true] %s632
          %638 = dma.hbm_to_vmem [thread:$0]  %s631, 2304, %s633, [#allocation15], 128, 128, 8
        $region60: #{trans_low_forward.1} parent=11 // pred_fallthru
          _
        // Predicated region
        $region61: #{trans_low_forward.1} parent=11 // pred_check
          %p639 = pneg %p334
        $region62: #{trans_low_forward.1} parent=11 // pred_check_branch
          %641 = sbr.rel (%p639) target = $region64
        $region63: #{trans_low_forward.1} parent=11 // pred_region
          %643 = vsyncadd [#allocation18], 0
          %s644 = sshll.u32 %s13, 4
          %s645 = int_to_ptr.hbm [resolvable:$true] %s644
          %s646 = sshll.u32 [#allocation17], 4
          %s647 = int_to_ptr.vmem [resolvable:$true] %s646
          %652 = dma.hbm_to_vmem [thread:$0]  %s645, 2304, %s647, [#allocation18], 128, 128, 8
        $region64: #{trans_low_forward.1} parent=11 // pred_fallthru
          _
        // Predicated region
        $region65: #{trans_low_forward.1} parent=11 // pred_check
          %p653 = pneg %p355
        $region66: #{trans_low_forward.1} parent=11 // pred_check_branch
          %655 = sbr.rel (%p653) target = $region68
        $region67: #{trans_low_forward.1} parent=11 // pred_region
          %657 = vsyncadd [#allocation18], 0
          %s658 = sshll.u32 %s14, 4
          %s659 = int_to_ptr.hbm [resolvable:$true] %s658
          %s660 = sshll.u32 [#allocation19], 4
          %s661 = int_to_ptr.vmem [resolvable:$true] %s660
          %666 = dma.hbm_to_vmem [thread:$0]  %s659, 256, %s661, [#allocation18], 128, 128, 8
        $region68: #{trans_low_forward.1} parent=11 // pred_fallthru
          _
        // Predicated region
        $region69: #{trans_low_forward.1} parent=11 // pred_check
          %p667 = pneg %p376
        $region70: #{trans_low_forward.1} parent=11 // pred_check_branch
          %669 = sbr.rel (%p667) target = $region72
        $region71: #{trans_low_forward.1} parent=11 // pred_region
          %671 = vsyncadd [#allocation21], 0
          %s672 = sshll.u32 %s15, 4
          %s673 = int_to_ptr.hbm [resolvable:$true] %s672
          %s674 = sshll.u32 [#allocation20], 4
          %s675 = int_to_ptr.vmem [resolvable:$true] %s674
          %680 = dma.hbm_to_vmem [thread:$0]  %s673, 144, %s675, [#allocation21], 16, 16, 1
        $region72: #{trans_low_forward.1} parent=11 // pred_fallthru
          _
        // Predicated region
        $region73: #{trans_low_forward.1} parent=11 // pred_check
          %p681 = pneg %p397
        $region74: #{trans_low_forward.1} parent=11 // pred_check_branch
          %683 = sbr.rel (%p681) target = $region76
        $region75: #{trans_low_forward.1} parent=11 // pred_region
          %685 = vsyncadd [#allocation21], 0
          %s686 = sshll.u32 %s16, 4
          %s687 = int_to_ptr.hbm [resolvable:$true] %s686
          %s688 = sshll.u32 [#allocation22], 4
          %s689 = int_to_ptr.vmem [resolvable:$true] %s688
          %694 = dma.hbm_to_vmem [thread:$0]  %s687, 144, %s689, [#allocation21], 16, 16, 1
        $region76: #{trans_low_forward.1} parent=11 // pred_fallthru
          _
        // Predicated region
        $region77: #{trans_low_forward.1} parent=11 // pred_check
          %p695 = pneg %p418
        $region78: #{trans_low_forward.1} parent=11 // pred_check_branch
          %697 = sbr.rel (%p695) target = $region80
        $region79: #{trans_low_forward.1} parent=11 // pred_region
          %699 = vsyncadd [#allocation24], 0
          %s701 = sshll.u32 %s17, 4
          %s702 = int_to_ptr.hbm [resolvable:$true] %s701
          %s703 = sshll.u32 [#allocation23], 4
          %s704 = int_to_ptr.vmem [resolvable:$true] %s703
          %706 = dma.hbm_to_vmem [thread:$0]  %s702, 128, %s704, [#allocation24]
        $region80: #{trans_low_forward.1} parent=11 // pred_fallthru
          _
        // Predicated region
        $region81: #{trans_low_forward.1} parent=11 // pred_check
          %p707 = pneg %p439
        $region82: #{trans_low_forward.1} parent=11 // pred_check_branch
          %709 = sbr.rel (%p707) target = $region84
        $region83: #{trans_low_forward.1} parent=11 // pred_region
          %711 = vsyncadd [#allocation24], 0
          %s713 = sshll.u32 %s18, 4
          %s714 = int_to_ptr.hbm [resolvable:$true] %s713
          %s715 = sshll.u32 [#allocation25], 4
          %s716 = int_to_ptr.vmem [resolvable:$true] %s715
          %718 = dma.hbm_to_vmem [thread:$0]  %s714, 64, %s716, [#allocation24]
        $region84: #{trans_low_forward.1} parent=11 // pred_fallthru
          _
      $region12: #{trans_low_forward.1} parent=5 // pred_fallthru
        _
      %p719 = scmp.lt.s32.totalorder %s35, 2
      // Predicated region
      $region85: #{trans_low_forward.1} parent=5 // pred_check
        %p720 = pneg %p719
      $region86: #{trans_low_forward.1} parent=5 // pred_check_branch
        %722 = sbr.rel (%p720) target = $region88
      $region87: #{trans_low_forward.1} parent=5 // pred_region
        // Predicated region
        $region89: #{trans_low_forward.1} parent=87 // pred_check
          %p723 = pneg %p55
        $region90: #{trans_low_forward.1} parent=87 // pred_check_branch
          %725 = sbr.rel (%p723) target = $region92
        $region91: #{trans_low_forward.1} parent=87 // pred_region
          %s726 = smul.u32 2, %s35
          %p727 = scmp.lt.s32.totalorder %s726, 3
          %s728 = scalar_select %p727, %s726, 3
          %s729 = smul.addr %s728, 4
          %s730 = scalar_lea.vmem %s0, %s729
          %s731 = smul.u32 2, %s35
        $region92: #{trans_low_forward.1} parent=87 // pred_fallthru
          _
      $region88: #{trans_low_forward.1} parent=5 // pred_fallthru
        _
      %p732 = scmp.le.s32.totalorder 1, %s35
      %p733 = scmp.lt.s32.totalorder %s35, 3
      %p734 = pnand %p732, %p733
      %p735 = pneg %p734
      // Predicated region
      $region93: #{trans_low_forward.1} parent=5 // pred_check
        _
      $region94: #{trans_low_forward.1} parent=5 // pred_check_branch
        %737 = sbr.rel (%p734) target = $region96
      $region95: #{trans_low_forward.1} parent=5 // pred_region
        %s738 = ssub.s32 %s35, 1
        // Predicated region
        $region97: #{trans_low_forward.1} parent=95 // pred_check
          %p739 = pneg %p82
        $region98: #{trans_low_forward.1} parent=95 // pred_check_branch
          %741 = sbr.rel (%p739) target = $region100
        $region99: #{trans_low_forward.1} parent=95 // pred_region
          %743 = dma.done [#allocation4], 288
        $region100: #{trans_low_forward.1} parent=95 // pred_fallthru
          _
        // Predicated region
        $region101: #{trans_low_forward.1} parent=95 // pred_check
          %p744 = pneg %p124
        $region102: #{trans_low_forward.1} parent=95 // pred_check_branch
          %746 = sbr.rel (%p744) target = $region104
        $region103: #{trans_low_forward.1} parent=95 // pred_region
          %748 = dma.done [#allocation6], 256
        $region104: #{trans_low_forward.1} parent=95 // pred_fallthru
          _
        // Predicated region
        $region105: #{trans_low_forward.1} parent=95 // pred_check
          %p749 = pneg %p145
        $region106: #{trans_low_forward.1} parent=95 // pred_check_branch
          %751 = sbr.rel (%p749) target = $region108
        $region107: #{trans_low_forward.1} parent=95 // pred_region
          %753 = dma.done [#allocation6], 2048
        $region108: #{trans_low_forward.1} parent=95 // pred_fallthru
          _
        // Predicated region
        $region109: #{trans_low_forward.1} parent=95 // pred_check
          %p754 = pneg %p166
        $region110: #{trans_low_forward.1} parent=95 // pred_check_branch
          %756 = sbr.rel (%p754) target = $region112
        $region111: #{trans_low_forward.1} parent=95 // pred_region
          %758 = dma.done [#allocation9], 1024
        $region112: #{trans_low_forward.1} parent=95 // pred_fallthru
          _
        // Predicated region
        $region113: #{trans_low_forward.1} parent=95 // pred_check
          %p759 = pneg %p187
        $region114: #{trans_low_forward.1} parent=95 // pred_check_branch
          %761 = sbr.rel (%p759) target = $region116
        $region115: #{trans_low_forward.1} parent=95 // pred_region
          %763 = dma.done [#allocation9], 256
        $region116: #{trans_low_forward.1} parent=95 // pred_fallthru
          _
        // Predicated region
        $region117: #{trans_low_forward.1} parent=95 // pred_check
          %p764 = pneg %p208
        $region118: #{trans_low_forward.1} parent=95 // pred_check_branch
          %766 = sbr.rel (%p764) target = $region120
        $region119: #{trans_low_forward.1} parent=95 // pred_region
          %768 = dma.done [#allocation12], 256
        $region120: #{trans_low_forward.1} parent=95 // pred_fallthru
          _
        // Predicated region
        $region121: #{trans_low_forward.1} parent=95 // pred_check
          %p769 = pneg %p250
        $region122: #{trans_low_forward.1} parent=95 // pred_check_branch
          %771 = sbr.rel (%p769) target = $region124
        $region123: #{trans_low_forward.1} parent=95 // pred_region
          %773 = dma.done [#allocation12], 256
        $region124: #{trans_low_forward.1} parent=95 // pred_fallthru
          _
        // Predicated region
        $region125: #{trans_low_forward.1} parent=95 // pred_check
          %p774 = pneg %p292
        $region126: #{trans_low_forward.1} parent=95 // pred_check_branch
          %776 = sbr.rel (%p774) target = $region128
        $region127: #{trans_low_forward.1} parent=95 // pred_region
          %778 = dma.done [#allocation15], 64
        $region128: #{trans_low_forward.1} parent=95 // pred_fallthru
          _
        // Predicated region
        $region129: #{trans_low_forward.1} parent=95 // pred_check
          %p779 = pneg %p313
        $region130: #{trans_low_forward.1} parent=95 // pred_check_branch
          %781 = sbr.rel (%p779) target = $region132
        $region131: #{trans_low_forward.1} parent=95 // pred_region
          %783 = dma.done [#allocation15], 2304
        $region132: #{trans_low_forward.1} parent=95 // pred_fallthru
          _
        // Predicated region
        $region133: #{trans_low_forward.1} parent=95 // pred_check
          %p784 = pneg %p334
        $region134: #{trans_low_forward.1} parent=95 // pred_check_branch
          %786 = sbr.rel (%p784) target = $region136
        $region135: #{trans_low_forward.1} parent=95 // pred_region
          %788 = dma.done [#allocation18], 2304
        $region136: #{trans_low_forward.1} parent=95 // pred_fallthru
          _
        // Predicated region
        $region137: #{trans_low_forward.1} parent=95 // pred_check
          %p789 = pneg %p355
        $region138: #{trans_low_forward.1} parent=95 // pred_check_branch
          %791 = sbr.rel (%p789) target = $region140
        $region139: #{trans_low_forward.1} parent=95 // pred_region
          %793 = dma.done [#allocation18], 256
        $region140: #{trans_low_forward.1} parent=95 // pred_fallthru
          _
        // Predicated region
        $region141: #{trans_low_forward.1} parent=95 // pred_check
          %p794 = pneg %p376
        $region142: #{trans_low_forward.1} parent=95 // pred_check_branch
          %796 = sbr.rel (%p794) target = $region144
        $region143: #{trans_low_forward.1} parent=95 // pred_region
          %798 = dma.done [#allocation21], 144
        $region144: #{trans_low_forward.1} parent=95 // pred_fallthru
          _
        // Predicated region
        $region145: #{trans_low_forward.1} parent=95 // pred_check
          %p799 = pneg %p397
        $region146: #{trans_low_forward.1} parent=95 // pred_check_branch
          %801 = sbr.rel (%p799) target = $region148
        $region147: #{trans_low_forward.1} parent=95 // pred_region
          %803 = dma.done [#allocation21], 144
        $region148: #{trans_low_forward.1} parent=95 // pred_fallthru
          _
        // Predicated region
        $region149: #{trans_low_forward.1} parent=95 // pred_check
          %p804 = pneg %p418
        $region150: #{trans_low_forward.1} parent=95 // pred_check_branch
          %806 = sbr.rel (%p804) target = $region152
        $region151: #{trans_low_forward.1} parent=95 // pred_region
          %808 = dma.done [#allocation24], 128
        $region152: #{trans_low_forward.1} parent=95 // pred_fallthru
          _
        // Predicated region
        $region153: #{trans_low_forward.1} parent=95 // pred_check
          %p809 = pneg %p439
        $region154: #{trans_low_forward.1} parent=95 // pred_check_branch
          %811 = sbr.rel (%p809) target = $region156
        $region155: #{trans_low_forward.1} parent=95 // pred_region
          %813 = dma.done [#allocation24], 64
        $region156: #{trans_low_forward.1} parent=95 // pred_fallthru
          _
        %s814 = smul.u32 2, %s40
        %p815 = scmp.lt.s32.totalorder %s814, 3
        %s816 = scalar_select %p815, %s814, 3
        %s817 = smul.addr %s816, 4
        %s818 = scalar_lea.vmem %s0, %s817
        %p819 = pneg %p61
        %p820 = pneg %p58
        %p821 = pneg %p82
        %p822 = pneg %p79
        %p823 = pneg %p103
        %p824 = pneg %p100
        %p825 = pneg %p124
        %p826 = pneg %p121
        %p827 = pneg %p145
        %p828 = pneg %p142
        %p829 = pneg %p166
        %p830 = pneg %p163
        %p831 = pneg %p187
        %p832 = pneg %p184
        %p833 = pneg %p208
        %p834 = pneg %p205
        %p835 = pneg %p229
        %p836 = pneg %p226
        %p837 = pneg %p250
        %p838 = pneg %p247
        %p839 = pneg %p271
        %p840 = pneg %p268
        %p841 = pneg %p292
        %p842 = pneg %p289
        %p843 = pneg %p313
        %p844 = pneg %p310
        %p845 = pneg %p334
        %p846 = pneg %p331
        %p847 = pneg %p355
        %p848 = pneg %p352
        %p849 = pneg %p376
        %p850 = pneg %p373
        %p851 = pneg %p397
        %p852 = pneg %p394
        %p853 = pneg %p418
        %p854 = pneg %p415
        %p855 = pneg %p439
        %p856 = pneg %p436
        %p857 = pneg %p465
        %p858 = pneg %p462
        %s859 = smul.u32 2, %s40
        %p860 = scmp.lt.s32.totalorder %s859, 3
        %s861 = scalar_select %p860, %s859, 3
        %s862 = smul.addr %s861, 4
        %s863 = scalar_lea.vmem %s19, %s862
        %p864 = pneg %p491
        %p865 = pneg %p488
        %s866 = smul.u32 2, %s40
        %p867 = scmp.lt.s32.totalorder %s866, 3
        %s868 = scalar_select %p867, %s866, 3
        %s869 = smul.addr %s868, 4
        %s870 = scalar_lea.vmem %s20, %s869
        %s871 = smul.u32 2, %s40
        %p872 = scmp.lt.s32.totalorder %s871, 3
        %s873 = scalar_select %p872, %s871, 3
        %s874 = smul.addr %s873, 4
        %s875 = scalar_lea.vmem %s0, %s874
        %s876 = smul.u32 2, %s40
        %s877 = smul.u32 2, %s40
        %p878 = scmp.lt.s32.totalorder %s877, 3
        %s879 = scalar_select %p878, %s877, 3
        %s880 = smul.addr %s879, 4
        %s881 = scalar_lea.vmem %s19, %s880
        %s882 = smul.u32 2, %s40
        %s883 = smul.u32 2, %s40
        %p884 = scmp.lt.s32.totalorder %s883, 3
        %s885 = scalar_select %p884, %s883, 3
        %s886 = smul.addr %s885, 4
        %s887 = scalar_lea.vmem %s20, %s886
        %s888 = smul.u32 2, %s40
        %v889 = vld [vmem:[%s875] sm:$0x77]
        %v890 = vld [vmem:[%s2] sm:$0xff]
        %v891 = vld [vmem:[%s2 + $0x8] sm:$0xff]
        %893 = vst [vmem:[#allocation1] ss:$2 sm:$0xff] %v889
        %v894 = vld.sshfl [vmem:[#allocation1] sm:$0xff pattern:$0x75316420]
        %v895 = vld.sshfl [vmem:[#allocation1 + $0x8] sm:$0xff pattern:$0x75316420]
        %898 = vrot.lane.b32.xlu0 %v894, 17
        %v899 = vpop.permute.xlu0 %898
        %900 = vrot.lane.b32.xlu0 %v895, 17
        %v901 = vpop.permute.xlu0 %900
        %v902 = vlaneseq
        %v903 = vand.u32 %v902, 127
        %vm904 = vcmp.lt.s32.totalorder %v903, 17
        %v905 = vsel %vm904, %v899, %v901
        %v906 = vsel %vm904, %v901, %v899
        %v907 = vld [vmem:[#allocation3] sm:$0x3]
        %v909 = vperm.slane %v907, 0
        %v910 = vperm.slane %v907, 1
        %v913 = vmul.f32 %v906, %v909
        %v914 = vmul.f32 %v905, %v910
        %s915 = scalar_lea.vmem %s2, 16
        %v916 = vld [vmem:[%s915] sm:$0xff]
        %v917 = vld [vmem:[%s915 + $0x8] sm:$0xff]
        %918 = vst [vmem:[#allocation1] ss:$2 sm:$0xff] %v889
        %v919 = vld.sshfl [vmem:[#allocation1] sm:$0xff pattern:$0x75316420]
        %v920 = vld.sshfl [vmem:[#allocation1 + $0x8] sm:$0xff pattern:$0x75316420]
        %923 = vrot.lane.b32.xlu0 %v919, 16
        %v924 = vpop.permute.xlu0 %923
        %925 = vrot.lane.b32.xlu0 %v920, 16
        %v926 = vpop.permute.xlu0 %925
        %vm927 = vcmp.lt.s32.totalorder %v903, 16
        %v928 = vsel %vm927, %v924, %v926
        %v929 = vsel %vm927, %v926, %v924
        %s930 = scalar_lea.vmem [#allocation3], 2
        %v931 = vld [vmem:[%s930] sm:$0x3]
        %v933 = vperm.slane %v931, 0
        %v934 = vperm.slane %v931, 1
        %v937 = vmul.f32 %v929, %v933
        %v938 = vmul.f32 %v928, %v934
        %vm939 = vcmask 23552
        %v941 = vsel %vm939, %v916, 0
        %v944 = vsel %vm939, %v917, 0
        %vm946 = vcmask 1042432
        %v948 = vsel %vm946, %v937, 0
        %v951 = vsel %vm946, %v938, 0
        %953 = vmatpush.msra.mxu0 0.0
        %954 = vmatpush.msra.mxu0 0.0
        %955 = vmatpush.msra.mxu0 0.0
        %956 = vmatpush.msra.mxu0 0.0
        %957 = vmatpush.msra.mxu0 0.0
        %958 = vmatpush.msra.mxu0 0.0
        %959 = vmatpush.msra.mxu0 0.0
        %960 = vmatpush.msra.mxu0 0.0
        %961 = vmatpush.msra.mxu0 0.0
        %962 = vmatpush.msra.mxu0 0.0
        %963 = vmatpush.msra.mxu0 0.0
        %964 = vmatpush.msra.mxu0 0.0
        %965 = vmatpush.msra.mxu0 0.0
        %966 = vmatpush.msra.mxu0 0.0
        %967 = vmatpush.msra.mxu0 0.0
        %968 = vmatpush.msra.mxu0 %v948
        %969 = vmatmul.f32.gmra.mxu0 %v941
        %v970 = vpop.f32.mrf.mxu0
        %v971 = vadd.f32 0.0, %v970
        %972 = vmatmul.f32.gmra.mxu0 %v944
        %v973 = vpop.f32.mrf.mxu0
        %v974 = vadd.f32 0.0, %v973
        %975 = vdwg.mxu0
        %976 = vmatpush.msra.mxu0 0.0
        %977 = vmatpush.msra.mxu0 0.0
        %978 = vmatpush.msra.mxu0 0.0
        %979 = vmatpush.msra.mxu0 0.0
        %980 = vmatpush.msra.mxu0 0.0
        %981 = vmatpush.msra.mxu0 0.0
        %982 = vmatpush.msra.mxu0 0.0
        %983 = vmatpush.msra.mxu0 0.0
        %984 = vmatpush.msra.mxu0 0.0
        %985 = vmatpush.msra.mxu0 0.0
        %986 = vmatpush.msra.mxu0 0.0
        %987 = vmatpush.msra.mxu0 0.0
        %988 = vmatpush.msra.mxu0 0.0
        %989 = vmatpush.msra.mxu0 0.0
        %990 = vmatpush.msra.mxu0 0.0
        %991 = vmatpush.msra.mxu0 %v951
        %992 = vmatmul.f32.gmra.mxu0 %v941
        %v993 = vpop.f32.mrf.mxu0
        %v994 = vadd.f32 0.0, %v993
        %995 = vmatmul.f32.gmra.mxu0 %v944
        %v996 = vpop.f32.mrf.mxu0
        %v997 = vadd.f32 0.0, %v996
        %998 = vdwg.mxu0
        %v1000 = vsel %vm939, %v890, 0
        %v1003 = vsel %vm939, %v891, 0
        %v1006 = vsel %vm946, %v913, 0
        %v1009 = vsel %vm946, %v914, 0
        %1011 = vmatpush.msra.mxu0 0.0
        %1012 = vmatpush.msra.mxu0 0.0
        %1013 = vmatpush.msra.mxu0 0.0
        %1014 = vmatpush.msra.mxu0 0.0
        %1015 = vmatpush.msra.mxu0 0.0
        %1016 = vmatpush.msra.mxu0 0.0
        %1017 = vmatpush.msra.mxu0 0.0
        %1018 = vmatpush.msra.mxu0 0.0
        %1019 = vmatpush.msra.mxu0 0.0
        %1020 = vmatpush.msra.mxu0 0.0
        %1021 = vmatpush.msra.mxu0 0.0
        %1022 = vmatpush.msra.mxu0 0.0
        %1023 = vmatpush.msra.mxu0 0.0
        %1024 = vmatpush.msra.mxu0 0.0
        %1025 = vmatpush.msra.mxu0 0.0
        %1026 = vmatpush.msra.mxu0 %v1006
        %1027 = vmatmul.f32.gmra.mxu0 %v1000
        %v1028 = vpop.f32.mrf.mxu0
        %v1029 = vadd.f32 %v971, %v1028
        %1030 = vmatmul.f32.gmra.mxu0 %v1003
        %v1031 = vpop.f32.mrf.mxu0
        %v1032 = vadd.f32 %v974, %v1031
        %1033 = vdwg.mxu0
        %1034 = vmatpush.msra.mxu0 0.0
        %1035 = vmatpush.msra.mxu0 0.0
        %1036 = vmatpush.msra.mxu0 0.0
        %1037 = vmatpush.msra.mxu0 0.0
        %1038 = vmatpush.msra.mxu0 0.0
        %1039 = vmatpush.msra.mxu0 0.0
        %1040 = vmatpush.msra.mxu0 0.0
        %1041 = vmatpush.msra.mxu0 0.0
        %1042 = vmatpush.msra.mxu0 0.0
        %1043 = vmatpush.msra.mxu0 0.0
        %1044 = vmatpush.msra.mxu0 0.0
        %1045 = vmatpush.msra.mxu0 0.0
        %1046 = vmatpush.msra.mxu0 0.0
        %1047 = vmatpush.msra.mxu0 0.0
        %1048 = vmatpush.msra.mxu0 0.0
        %1049 = vmatpush.msra.mxu0 %v1009
        %1050 = vmatmul.f32.gmra.mxu0 %v1000
        %v1051 = vpop.f32.mrf.mxu0
        %v1052 = vadd.f32 %v994, %v1051
        %1053 = vmatmul.f32.gmra.mxu0 %v1003
        %v1054 = vpop.f32.mrf.mxu0
        %v1055 = vadd.f32 %v997, %v1054
        %1056 = vdwg.mxu0
        %s1057 = scalar_lea.vmem %s2, 32
        %v1058 = vld [vmem:[%s1057] sm:$0xff]
        %v1059 = vld [vmem:[%s1057 + $0x8] sm:$0xff]
        %1060 = vst [vmem:[#allocation1] ss:$2 sm:$0xff] %v889
        %v1061 = vld.sshfl [vmem:[#allocation1] sm:$0xff pattern:$0x75316420]
        %v1062 = vld.sshfl [vmem:[#allocation1 + $0x8] sm:$0xff pattern:$0x75316420]
        %1065 = vrot.lane.b32.xlu0 %v1061, 15
        %v1066 = vpop.permute.xlu0 %1065
        %1067 = vrot.lane.b32.xlu0 %v1062, 15
        %v1068 = vpop.permute.xlu0 %1067
        %vm1069 = vcmp.lt.s32.totalorder %v903, 15
        %v1070 = vsel %vm1069, %v1066, %v1068
        %v1071 = vsel %vm1069, %v1068, %v1066
        %s1072 = scalar_lea.vmem [#allocation3], 4
        %v1073 = vld [vmem:[%s1072] sm:$0x3]
        %v1075 = vperm.slane %v1073, 0
        %v1076 = vperm.slane %v1073, 1
        %v1079 = vmul.f32 %v1071, %v1075
        %v1080 = vmul.f32 %v1070, %v1076
        %v1082 = vsel %vm939, %v1058, 0
        %v1085 = vsel %vm939, %v1059, 0
        %v1088 = vsel %vm946, %v1079, 0
        %v1091 = vsel %vm946, %v1080, 0
        %1093 = vmatpush.msra.mxu0 0.0
        %1094 = vmatpush.msra.mxu0 0.0
        %1095 = vmatpush.msra.mxu0 0.0
        %1096 = vmatpush.msra.mxu0 0.0
        %1097 = vmatpush.msra.mxu0 0.0
        %1098 = vmatpush.msra.mxu0 0.0
        %1099 = vmatpush.msra.mxu0 0.0
        %1100 = vmatpush.msra.mxu0 0.0
        %1101 = vmatpush.msra.mxu0 0.0
        %1102 = vmatpush.msra.mxu0 0.0
        %1103 = vmatpush.msra.mxu0 0.0
        %1104 = vmatpush.msra.mxu0 0.0
        %1105 = vmatpush.msra.mxu0 0.0
        %1106 = vmatpush.msra.mxu0 0.0
        %1107 = vmatpush.msra.mxu0 0.0
        %1108 = vmatpush.msra.mxu0 %v1088
        %1109 = vmatmul.f32.gmra.mxu0 %v1082
        %v1110 = vpop.f32.mrf.mxu0
        %v1111 = vadd.f32 0.0, %v1110
        %1112 = vmatmul.f32.gmra.mxu0 %v1085
        %v1113 = vpop.f32.mrf.mxu0
        %v1114 = vadd.f32 0.0, %v1113
        %1115 = vdwg.mxu0
        %1116 = vmatpush.msra.mxu0 0.0
        %1117 = vmatpush.msra.mxu0 0.0
        %1118 = vmatpush.msra.mxu0 0.0
        %1119 = vmatpush.msra.mxu0 0.0
        %1120 = vmatpush.msra.mxu0 0.0
        %1121 = vmatpush.msra.mxu0 0.0
        %1122 = vmatpush.msra.mxu0 0.0
        %1123 = vmatpush.msra.mxu0 0.0
        %1124 = vmatpush.msra.mxu0 0.0
        %1125 = vmatpush.msra.mxu0 0.0
        %1126 = vmatpush.msra.mxu0 0.0
        %1127 = vmatpush.msra.mxu0 0.0
        %1128 = vmatpush.msra.mxu0 0.0
        %1129 = vmatpush.msra.mxu0 0.0
        %1130 = vmatpush.msra.mxu0 0.0
        %1131 = vmatpush.msra.mxu0 %v1091
        %1132 = vmatmul.f32.gmra.mxu0 %v1082
        %v1133 = vpop.f32.mrf.mxu0
        %v1134 = vadd.f32 0.0, %v1133
        %1135 = vmatmul.f32.gmra.mxu0 %v1085
        %v1136 = vpop.f32.mrf.mxu0
        %v1137 = vadd.f32 0.0, %v1136
        %1138 = vdwg.mxu0
        %v1139 = vadd.f32 %v1029, %v1111
        %v1140 = vadd.f32 %v1052, %v1134
        %v1141 = vadd.f32 %v1032, %v1114
        %v1142 = vadd.f32 %v1055, %v1137
        %s1143 = scalar_lea.vmem %s2, 48
        %v1144 = vld [vmem:[%s1143] sm:$0xff]
        %v1145 = vld [vmem:[%s1143 + $0x8] sm:$0xff]
        %1146 = vst [vmem:[#allocation1] ss:$2 sm:$0xff] %v889
        %v1147 = vld.sshfl [vmem:[#allocation1] sm:$0xff pattern:$0x75316420]
        %v1148 = vld.sshfl [vmem:[#allocation1 + $0x8] sm:$0xff pattern:$0x75316420]
        %1151 = vrot.lane.b32.xlu0 %v1147, 1
        %v1152 = vpop.permute.xlu0 %1151
        %1153 = vrot.lane.b32.xlu0 %v1148, 1
        %v1154 = vpop.permute.xlu0 %1153
        %vm1155 = vcmp.lt.s32.totalorder %v903, 1
        %v1156 = vsel %vm1155, %v1152, %v1154
        %v1157 = vsel %vm1155, %v1154, %v1152
        %s1158 = scalar_lea.vmem [#allocation3], 6
        %v1159 = vld [vmem:[%s1158] sm:$0x3]
        %v1161 = vperm.slane %v1159, 0
        %v1162 = vperm.slane %v1159, 1
        %v1165 = vmul.f32 %v1157, %v1161
        %v1166 = vmul.f32 %v1156, %v1162
        %v1168 = vsel %vm939, %v1144, 0
        %v1171 = vsel %vm939, %v1145, 0
        %v1174 = vsel %vm946, %v1165, 0
        %v1177 = vsel %vm946, %v1166, 0
        %1179 = vmatpush.msra.mxu0 0.0
        %1180 = vmatpush.msra.mxu0 0.0
        %1181 = vmatpush.msra.mxu0 0.0
        %1182 = vmatpush.msra.mxu0 0.0
        %1183 = vmatpush.msra.mxu0 0.0
        %1184 = vmatpush.msra.mxu0 0.0
        %1185 = vmatpush.msra.mxu0 0.0
        %1186 = vmatpush.msra.mxu0 0.0
        %1187 = vmatpush.msra.mxu0 0.0
        %1188 = vmatpush.msra.mxu0 0.0
        %1189 = vmatpush.msra.mxu0 0.0
        %1190 = vmatpush.msra.mxu0 0.0
        %1191 = vmatpush.msra.mxu0 0.0
        %1192 = vmatpush.msra.mxu0 0.0
        %1193 = vmatpush.msra.mxu0 0.0
        %1194 = vmatpush.msra.mxu0 %v1174
        %1195 = vmatmul.f32.gmra.mxu0 %v1168
        %v1196 = vpop.f32.mrf.mxu0
        %v1197 = vadd.f32 0.0, %v1196
        %1198 = vmatmul.f32.gmra.mxu0 %v1171
        %v1199 = vpop.f32.mrf.mxu0
        %v1200 = vadd.f32 0.0, %v1199
        %1201 = vdwg.mxu0
        %1202 = vmatpush.msra.mxu0 0.0
        %1203 = vmatpush.msra.mxu0 0.0
        %1204 = vmatpush.msra.mxu0 0.0
        %1205 = vmatpush.msra.mxu0 0.0
        %1206 = vmatpush.msra.mxu0 0.0
        %1207 = vmatpush.msra.mxu0 0.0
        %1208 = vmatpush.msra.mxu0 0.0
        %1209 = vmatpush.msra.mxu0 0.0
        %1210 = vmatpush.msra.mxu0 0.0
        %1211 = vmatpush.msra.mxu0 0.0
        %1212 = vmatpush.msra.mxu0 0.0
        %1213 = vmatpush.msra.mxu0 0.0
        %1214 = vmatpush.msra.mxu0 0.0
        %1215 = vmatpush.msra.mxu0 0.0
        %1216 = vmatpush.msra.mxu0 0.0
        %1217 = vmatpush.msra.mxu0 %v1177
        %1218 = vmatmul.f32.gmra.mxu0 %v1168
        %v1219 = vpop.f32.mrf.mxu0
        %v1220 = vadd.f32 0.0, %v1219
        %1221 = vmatmul.f32.gmra.mxu0 %v1171
        %v1222 = vpop.f32.mrf.mxu0
        %v1223 = vadd.f32 0.0, %v1222
        %1224 = vdwg.mxu0
        %v1225 = vadd.f32 %v1139, %v1197
        %v1226 = vadd.f32 %v1140, %v1220
        %v1227 = vadd.f32 %v1141, %v1200
        %v1228 = vadd.f32 %v1142, %v1223
        %s1229 = scalar_lea.vmem %s2, 64
        %v1230 = vld [vmem:[%s1229] sm:$0xff]
        %v1231 = vld [vmem:[%s1229 + $0x8] sm:$0xff]
        %1232 = vst [vmem:[#allocation1] ss:$2 sm:$0xff] %v889
        %v1233 = vld.sshfl [vmem:[#allocation1] sm:$0xff pattern:$0x75316420]
        %v1234 = vld.sshfl [vmem:[#allocation1 + $0x8] sm:$0xff pattern:$0x75316420]
        %v1236 = vsel %vm939, %v1230, 0
        %v1239 = vsel %vm939, %v1231, 0
        %v1241 = vsel %vm946, %v1233, 0
        %v1243 = vsel %vm946, %v1234, 0
        %1245 = vmatpush.msra.mxu0 0.0
        %1246 = vmatpush.msra.mxu0 0.0
        %1247 = vmatpush.msra.mxu0 0.0
        %1248 = vmatpush.msra.mxu0 0.0
        %1249 = vmatpush.msra.mxu0 0.0
        %1250 = vmatpush.msra.mxu0 0.0
        %1251 = vmatpush.msra.mxu0 0.0
        %1252 = vmatpush.msra.mxu0 0.0
        %1253 = vmatpush.msra.mxu0 0.0
        %1254 = vmatpush.msra.mxu0 0.0
        %1255 = vmatpush.msra.mxu0 0.0
        %1256 = vmatpush.msra.mxu0 0.0
        %1257 = vmatpush.msra.mxu0 0.0
        %1258 = vmatpush.msra.mxu0 0.0
        %1259 = vmatpush.msra.mxu0 0.0
        %1260 = vmatpush.msra.mxu0 %v1241
        %1261 = vmatmul.f32.gmra.mxu0 %v1236
        %v1262 = vpop.f32.mrf.mxu0
        %v1263 = vadd.f32 0.0, %v1262
        %1264 = vmatmul.f32.gmra.mxu0 %v1239
        %v1265 = vpop.f32.mrf.mxu0
        %v1266 = vadd.f32 0.0, %v1265
        %1267 = vdwg.mxu0
        %1268 = vmatpush.msra.mxu0 0.0
        %1269 = vmatpush.msra.mxu0 0.0
        %1270 = vmatpush.msra.mxu0 0.0
        %1271 = vmatpush.msra.mxu0 0.0
        %1272 = vmatpush.msra.mxu0 0.0
        %1273 = vmatpush.msra.mxu0 0.0
        %1274 = vmatpush.msra.mxu0 0.0
        %1275 = vmatpush.msra.mxu0 0.0
        %1276 = vmatpush.msra.mxu0 0.0
        %1277 = vmatpush.msra.mxu0 0.0
        %1278 = vmatpush.msra.mxu0 0.0
        %1279 = vmatpush.msra.mxu0 0.0
        %1280 = vmatpush.msra.mxu0 0.0
        %1281 = vmatpush.msra.mxu0 0.0
        %1282 = vmatpush.msra.mxu0 0.0
        %1283 = vmatpush.msra.mxu0 %v1243
        %1284 = vmatmul.f32.gmra.mxu0 %v1236
        %v1285 = vpop.f32.mrf.mxu0
        %v1286 = vadd.f32 0.0, %v1285
        %1287 = vmatmul.f32.gmra.mxu0 %v1239
        %v1288 = vpop.f32.mrf.mxu0
        %v1289 = vadd.f32 0.0, %v1288
        %1290 = vdwg.mxu0
        %v1291 = vadd.f32 %v1225, %v1263
        %v1292 = vadd.f32 %v1226, %v1286
        %v1293 = vadd.f32 %v1227, %v1266
        %v1294 = vadd.f32 %v1228, %v1289
        %s1295 = scalar_lea.vmem %s2, 80
        %v1296 = vld [vmem:[%s1295] sm:$0xff]
        %v1297 = vld [vmem:[%s1295 + $0x8] sm:$0xff]
        %1298 = vst [vmem:[#allocation1] ss:$2 sm:$0xff] %v889
        %v1299 = vld.sshfl [vmem:[#allocation1] sm:$0xff pattern:$0x75316420]
        %v1300 = vld.sshfl [vmem:[#allocation1 + $0x8] sm:$0xff pattern:$0x75316420]
        %1303 = vrot.lane.b32.xlu0 %v1299, 127
        %v1304 = vpop.permute.xlu0 %1303
        %1305 = vrot.lane.b32.xlu0 %v1300, 127
        %v1306 = vpop.permute.xlu0 %1305
        %vm1307 = vcmp.lt.s32.totalorder %v903, 127
        %v1308 = vsel %vm1307, %v1304, %v1306
        %v1309 = vsel %vm1307, %v1306, %v1304
        %s1310 = scalar_lea.vmem [#allocation3], 10
        %v1311 = vld [vmem:[%s1310] sm:$0x3]
        %v1313 = vperm.slane %v1311, 0
        %v1314 = vperm.slane %v1311, 1
        %v1317 = vmul.f32 %v1308, %v1313
        %v1318 = vmul.f32 %v1309, %v1314
        %v1320 = vsel %vm939, %v1296, 0
        %v1323 = vsel %vm939, %v1297, 0
        %v1326 = vsel %vm946, %v1317, 0
        %v1329 = vsel %vm946, %v1318, 0
        %1331 = vmatpush.msra.mxu0 0.0
        %1332 = vmatpush.msra.mxu0 0.0
        %1333 = vmatpush.msra.mxu0 0.0
        %1334 = vmatpush.msra.mxu0 0.0
        %1335 = vmatpush.msra.mxu0 0.0
        %1336 = vmatpush.msra.mxu0 0.0
        %1337 = vmatpush.msra.mxu0 0.0
        %1338 = vmatpush.msra.mxu0 0.0
        %1339 = vmatpush.msra.mxu0 0.0
        %1340 = vmatpush.msra.mxu0 0.0
        %1341 = vmatpush.msra.mxu0 0.0
        %1342 = vmatpush.msra.mxu0 0.0
        %1343 = vmatpush.msra.mxu0 0.0
        %1344 = vmatpush.msra.mxu0 0.0
        %1345 = vmatpush.msra.mxu0 0.0
        %1346 = vmatpush.msra.mxu0 %v1326
        %1347 = vmatmul.f32.gmra.mxu0 %v1320
        %v1348 = vpop.f32.mrf.mxu0
        %v1349 = vadd.f32 0.0, %v1348
        %1350 = vmatmul.f32.gmra.mxu0 %v1323
        %v1351 = vpop.f32.mrf.mxu0
        %v1352 = vadd.f32 0.0, %v1351
        %1353 = vdwg.mxu0
        %1354 = vmatpush.msra.mxu0 0.0
        %1355 = vmatpush.msra.mxu0 0.0
        %1356 = vmatpush.msra.mxu0 0.0
        %1357 = vmatpush.msra.mxu0 0.0
        %1358 = vmatpush.msra.mxu0 0.0
        %1359 = vmatpush.msra.mxu0 0.0
        %1360 = vmatpush.msra.mxu0 0.0
        %1361 = vmatpush.msra.mxu0 0.0
        %1362 = vmatpush.msra.mxu0 0.0
        %1363 = vmatpush.msra.mxu0 0.0
        %1364 = vmatpush.msra.mxu0 0.0
        %1365 = vmatpush.msra.mxu0 0.0
        %1366 = vmatpush.msra.mxu0 0.0
        %1367 = vmatpush.msra.mxu0 0.0
        %1368 = vmatpush.msra.mxu0 0.0
        %1369 = vmatpush.msra.mxu0 %v1329
        %1370 = vmatmul.f32.gmra.mxu0 %v1320
        %v1371 = vpop.f32.mrf.mxu0
        %v1372 = vadd.f32 0.0, %v1371
        %1373 = vmatmul.f32.gmra.mxu0 %v1323
        %v1374 = vpop.f32.mrf.mxu0
        %v1375 = vadd.f32 0.0, %v1374
        %1376 = vdwg.mxu0
        %v1377 = vadd.f32 %v1291, %v1349
        %v1378 = vadd.f32 %v1292, %v1372
        %v1379 = vadd.f32 %v1293, %v1352
        %v1380 = vadd.f32 %v1294, %v1375
        %s1381 = scalar_lea.vmem %s2, 96
        %v1382 = vld [vmem:[%s1381] sm:$0xff]
        %v1383 = vld [vmem:[%s1381 + $0x8] sm:$0xff]
        %1384 = vst [vmem:[#allocation1] ss:$2 sm:$0xff] %v889
        %v1385 = vld.sshfl [vmem:[#allocation1] sm:$0xff pattern:$0x75316420]
        %v1386 = vld.sshfl [vmem:[#allocation1 + $0x8] sm:$0xff pattern:$0x75316420]
        %1389 = vrot.lane.b32.xlu0 %v1385, 113
        %v1390 = vpop.permute.xlu0 %1389
        %1391 = vrot.lane.b32.xlu0 %v1386, 113
        %v1392 = vpop.permute.xlu0 %1391
        %vm1393 = vcmp.lt.s32.totalorder %v903, 113
        %v1394 = vsel %vm1393, %v1390, %v1392
        %v1395 = vsel %vm1393, %v1392, %v1390
        %s1396 = scalar_lea.vmem [#allocation3], 12
        %v1397 = vld [vmem:[%s1396] sm:$0x3]
        %v1399 = vperm.slane %v1397, 0
        %v1400 = vperm.slane %v1397, 1
        %v1403 = vmul.f32 %v1394, %v1399
        %v1404 = vmul.f32 %v1395, %v1400
        %v1406 = vsel %vm939, %v1382, 0
        %v1409 = vsel %vm939, %v1383, 0
        %v1412 = vsel %vm946, %v1403, 0
        %v1415 = vsel %vm946, %v1404, 0
        %1417 = vmatpush.msra.mxu0 0.0
        %1418 = vmatpush.msra.mxu0 0.0
        %1419 = vmatpush.msra.mxu0 0.0
        %1420 = vmatpush.msra.mxu0 0.0
        %1421 = vmatpush.msra.mxu0 0.0
        %1422 = vmatpush.msra.mxu0 0.0
        %1423 = vmatpush.msra.mxu0 0.0
        %1424 = vmatpush.msra.mxu0 0.0
        %1425 = vmatpush.msra.mxu0 0.0
        %1426 = vmatpush.msra.mxu0 0.0
        %1427 = vmatpush.msra.mxu0 0.0
        %1428 = vmatpush.msra.mxu0 0.0
        %1429 = vmatpush.msra.mxu0 0.0
        %1430 = vmatpush.msra.mxu0 0.0
        %1431 = vmatpush.msra.mxu0 0.0
        %1432 = vmatpush.msra.mxu0 %v1412
        %1433 = vmatmul.f32.gmra.mxu0 %v1406
        %v1434 = vpop.f32.mrf.mxu0
        %v1435 = vadd.f32 0.0, %v1434
        %1436 = vmatmul.f32.gmra.mxu0 %v1409
        %v1437 = vpop.f32.mrf.mxu0
        %v1438 = vadd.f32 0.0, %v1437
        %1439 = vdwg.mxu0
        %1440 = vmatpush.msra.mxu0 0.0
        %1441 = vmatpush.msra.mxu0 0.0
        %1442 = vmatpush.msra.mxu0 0.0
        %1443 = vmatpush.msra.mxu0 0.0
        %1444 = vmatpush.msra.mxu0 0.0
        %1445 = vmatpush.msra.mxu0 0.0
        %1446 = vmatpush.msra.mxu0 0.0
        %1447 = vmatpush.msra.mxu0 0.0
        %1448 = vmatpush.msra.mxu0 0.0
        %1449 = vmatpush.msra.mxu0 0.0
        %1450 = vmatpush.msra.mxu0 0.0
        %1451 = vmatpush.msra.mxu0 0.0
        %1452 = vmatpush.msra.mxu0 0.0
        %1453 = vmatpush.msra.mxu0 0.0
        %1454 = vmatpush.msra.mxu0 0.0
        %1455 = vmatpush.msra.mxu0 %v1415
        %1456 = vmatmul.f32.gmra.mxu0 %v1406
        %v1457 = vpop.f32.mrf.mxu0
        %v1458 = vadd.f32 0.0, %v1457
        %1459 = vmatmul.f32.gmra.mxu0 %v1409
        %v1460 = vpop.f32.mrf.mxu0
        %v1461 = vadd.f32 0.0, %v1460
        %1462 = vdwg.mxu0
        %v1463 = vadd.f32 %v1377, %v1435
        %v1464 = vadd.f32 %v1378, %v1458
        %v1465 = vadd.f32 %v1379, %v1438
        %v1466 = vadd.f32 %v1380, %v1461
        %s1467 = scalar_lea.vmem %s2, 112
        %v1468 = vld [vmem:[%s1467] sm:$0xff]
        %v1469 = vld [vmem:[%s1467 + $0x8] sm:$0xff]
        %1470 = vst [vmem:[#allocation1] ss:$2 sm:$0xff] %v889
        %v1471 = vld.sshfl [vmem:[#allocation1] sm:$0xff pattern:$0x75316420]
        %v1472 = vld.sshfl [vmem:[#allocation1 + $0x8] sm:$0xff pattern:$0x75316420]
        %1475 = vrot.lane.b32.xlu0 %v1471, 112
        %v1476 = vpop.permute.xlu0 %1475
        %1477 = vrot.lane.b32.xlu0 %v1472, 112
        %v1478 = vpop.permute.xlu0 %1477
        %vm1479 = vcmp.lt.s32.totalorder %v903, 112
        %v1480 = vsel %vm1479, %v1476, %v1478
        %v1481 = vsel %vm1479, %v1478, %v1476
        %s1482 = scalar_lea.vmem [#allocation3], 14
        %v1483 = vld [vmem:[%s1482] sm:$0x3]
        %v1485 = vperm.slane %v1483, 0
        %v1486 = vperm.slane %v1483, 1
        %v1489 = vmul.f32 %v1480, %v1485
        %v1490 = vmul.f32 %v1481, %v1486
        %v1492 = vsel %vm939, %v1468, 0
        %v1495 = vsel %vm939, %v1469, 0
        %v1498 = vsel %vm946, %v1489, 0
        %v1501 = vsel %vm946, %v1490, 0
        %1503 = vmatpush.msra.mxu0 0.0
        %1504 = vmatpush.msra.mxu0 0.0
        %1505 = vmatpush.msra.mxu0 0.0
        %1506 = vmatpush.msra.mxu0 0.0
        %1507 = vmatpush.msra.mxu0 0.0
        %1508 = vmatpush.msra.mxu0 0.0
        %1509 = vmatpush.msra.mxu0 0.0
        %1510 = vmatpush.msra.mxu0 0.0
        %1511 = vmatpush.msra.mxu0 0.0
        %1512 = vmatpush.msra.mxu0 0.0
        %1513 = vmatpush.msra.mxu0 0.0
        %1514 = vmatpush.msra.mxu0 0.0
        %1515 = vmatpush.msra.mxu0 0.0
        %1516 = vmatpush.msra.mxu0 0.0
        %1517 = vmatpush.msra.mxu0 0.0
        %1518 = vmatpush.msra.mxu0 %v1498
        %1519 = vmatmul.f32.gmra.mxu0 %v1492
        %v1520 = vpop.f32.mrf.mxu0
        %v1521 = vadd.f32 0.0, %v1520
        %1522 = vmatmul.f32.gmra.mxu0 %v1495
        %v1523 = vpop.f32.mrf.mxu0
        %v1524 = vadd.f32 0.0, %v1523
        %1525 = vdwg.mxu0
        %1526 = vmatpush.msra.mxu0 0.0
        %1527 = vmatpush.msra.mxu0 0.0
        %1528 = vmatpush.msra.mxu0 0.0
        %1529 = vmatpush.msra.mxu0 0.0
        %1530 = vmatpush.msra.mxu0 0.0
        %1531 = vmatpush.msra.mxu0 0.0
        %1532 = vmatpush.msra.mxu0 0.0
        %1533 = vmatpush.msra.mxu0 0.0
        %1534 = vmatpush.msra.mxu0 0.0
        %1535 = vmatpush.msra.mxu0 0.0
        %1536 = vmatpush.msra.mxu0 0.0
        %1537 = vmatpush.msra.mxu0 0.0
        %1538 = vmatpush.msra.mxu0 0.0
        %1539 = vmatpush.msra.mxu0 0.0
        %1540 = vmatpush.msra.mxu0 0.0
        %1541 = vmatpush.msra.mxu0 %v1501
        %1542 = vmatmul.f32.gmra.mxu0 %v1492
        %v1543 = vpop.f32.mrf.mxu0
        %v1544 = vadd.f32 0.0, %v1543
        %1545 = vmatmul.f32.gmra.mxu0 %v1495
        %v1546 = vpop.f32.mrf.mxu0
        %v1547 = vadd.f32 0.0, %v1546
        %1548 = vdwg.mxu0
        %v1549 = vadd.f32 %v1463, %v1521
        %v1550 = vadd.f32 %v1464, %v1544
        %v1551 = vadd.f32 %v1465, %v1524
        %v1552 = vadd.f32 %v1466, %v1547
        %s1553 = scalar_lea.vmem %s2, 128
        %v1554 = vld [vmem:[%s1553] sm:$0xff]
        %v1555 = vld [vmem:[%s1553 + $0x8] sm:$0xff]
        %1556 = vst [vmem:[#allocation1] ss:$2 sm:$0xff] %v889
        %v1557 = vld.sshfl [vmem:[#allocation1] sm:$0xff pattern:$0x75316420]
        %v1558 = vld.sshfl [vmem:[#allocation1 + $0x8] sm:$0xff pattern:$0x75316420]
        %1561 = vrot.lane.b32.xlu0 %v1557, 111
        %v1562 = vpop.permute.xlu0 %1561
        %1563 = vrot.lane.b32.xlu0 %v1558, 111
        %v1564 = vpop.permute.xlu0 %1563
        %vm1565 = vcmp.lt.s32.totalorder %v903, 111
        %v1566 = vsel %vm1565, %v1562, %v1564
        %v1567 = vsel %vm1565, %v1564, %v1562
        %s1568 = scalar_lea.vmem [#allocation3], 16
        %v1569 = vld [vmem:[%s1568] sm:$0x3]
        %v1571 = vperm.slane %v1569, 0
        %v1572 = vperm.slane %v1569, 1
        %v1575 = vmul.f32 %v1566, %v1571
        %v1576 = vmul.f32 %v1567, %v1572
        %v1578 = vsel %vm939, %v1554, 0
        %v1581 = vsel %vm939, %v1555, 0
        %v1584 = vsel %vm946, %v1575, 0
        %v1587 = vsel %vm946, %v1576, 0
        %1589 = vmatpush.msra.mxu0 0.0
        %1590 = vmatpush.msra.mxu0 0.0
        %1591 = vmatpush.msra.mxu0 0.0
        %1592 = vmatpush.msra.mxu0 0.0
        %1593 = vmatpush.msra.mxu0 0.0
        %1594 = vmatpush.msra.mxu0 0.0
        %1595 = vmatpush.msra.mxu0 0.0
        %1596 = vmatpush.msra.mxu0 0.0
        %1597 = vmatpush.msra.mxu0 0.0
        %1598 = vmatpush.msra.mxu0 0.0
        %1599 = vmatpush.msra.mxu0 0.0
        %1600 = vmatpush.msra.mxu0 0.0
        %1601 = vmatpush.msra.mxu0 0.0
        %1602 = vmatpush.msra.mxu0 0.0
        %1603 = vmatpush.msra.mxu0 0.0
        %1604 = vmatpush.msra.mxu0 %v1584
        %1605 = vmatmul.f32.gmra.mxu0 %v1578
        %v1606 = vpop.f32.mrf.mxu0
        %v1607 = vadd.f32 0.0, %v1606
        %1608 = vmatmul.f32.gmra.mxu0 %v1581
        %v1609 = vpop.f32.mrf.mxu0
        %v1610 = vadd.f32 0.0, %v1609
        %1611 = vdwg.mxu0
        %1612 = vmatpush.msra.mxu0 0.0
        %1613 = vmatpush.msra.mxu0 0.0
        %1614 = vmatpush.msra.mxu0 0.0
        %1615 = vmatpush.msra.mxu0 0.0
        %1616 = vmatpush.msra.mxu0 0.0
        %1617 = vmatpush.msra.mxu0 0.0
        %1618 = vmatpush.msra.mxu0 0.0
        %1619 = vmatpush.msra.mxu0 0.0
        %1620 = vmatpush.msra.mxu0 0.0
        %1621 = vmatpush.msra.mxu0 0.0
        %1622 = vmatpush.msra.mxu0 0.0
        %1623 = vmatpush.msra.mxu0 0.0
        %1624 = vmatpush.msra.mxu0 0.0
        %1625 = vmatpush.msra.mxu0 0.0
        %1626 = vmatpush.msra.mxu0 0.0
        %1627 = vmatpush.msra.mxu0 %v1587
        %1628 = vmatmul.f32.gmra.mxu0 %v1578
        %v1629 = vpop.f32.mrf.mxu0
        %v1630 = vadd.f32 0.0, %v1629
        %1631 = vmatmul.f32.gmra.mxu0 %v1581
        %v1632 = vpop.f32.mrf.mxu0
        %v1633 = vadd.f32 0.0, %v1632
        %1634 = vdwg.mxu0
        %v1635 = vadd.f32 %v1549, %v1607
        %v1636 = vadd.f32 %v1550, %v1630
        %v1637 = vadd.f32 %v1551, %v1610
        %v1638 = vadd.f32 %v1552, %v1633
        %v1639 = vld [vmem:[#allocation5] sm:$0xff]
        %v1640 = vld [vmem:[#allocation5 + $0x8] sm:$0xff]
        %1642 = vset.pattern.permute.xlu0 0
        %1643 = vperm.xlu0 %1642, %v1639
        %v1644 = vpop.permute.xlu0 %1643
        %1647 = vset.pattern.permute.xlu0 0
        %1648 = vperm.xlu0 %1647, %v1640
        %v1649 = vpop.permute.xlu0 %1648
        %v1651 = vadd.f32 %v1635, %v1644
        %v1652 = vadd.f32 %v1636, %v1644
        %v1653 = vadd.f32 %v1637, %v1649
        %v1654 = vadd.f32 %v1638, %v1649
        %vm1655 = vcmp.ge.f32.partialorder %v1651, 0.0
        %vm1656 = vcmp.ge.f32.partialorder %v1652, 0.0
        %vm1657 = vcmp.ge.f32.partialorder %v1653, 0.0
        %vm1658 = vcmp.ge.f32.partialorder %v1654, 0.0
        %v1659 = vmul.f32 %v1651, 0.01
        %v1660 = vmul.f32 %v1652, 0.01
        %v1661 = vmul.f32 %v1653, 0.01
        %v1662 = vmul.f32 %v1654, 0.01
        %v1663 = vsel %vm1655, %v1651, %v1659
        %v1664 = vsel %vm1656, %v1652, %v1660
        %v1665 = vsel %vm1657, %v1653, %v1661
        %v1666 = vsel %vm1658, %v1654, %v1662
        %1667 = vrot.lane.b32.xlu0 %v1663, 17
        %v1668 = vpop.permute.xlu0 %1667
        %1669 = vrot.lane.b32.xlu0 %v1665, 17
        %v1670 = vpop.permute.xlu0 %1669
        %1671 = vrot.lane.b32.xlu0 %v1664, 17
        %v1672 = vpop.permute.xlu0 %1671
        %1673 = vrot.lane.b32.xlu0 %v1666, 17
        %v1674 = vpop.permute.xlu0 %1673
        %v1675 = vsel %vm904, %v1668, %v1672
        %v1676 = vsel %vm904, %v1670, %v1674
        %v1677 = vsel %vm904, %v1672, %v1668
        %v1678 = vsel %vm904, %v1674, %v1670
        %v1679 = vmul.f32 %v1677, %v909
        %v1680 = vmul.f32 %v1675, %v910
        %v1681 = vmul.f32 %v1678, %v909
        %v1682 = vmul.f32 %v1676, %v910
        %1683 = vst [vmem:[#allocation2] sm:$0xff] %v1679
        %1684 = vst [vmem:[#allocation2 + $0x8] sm:$0xff] %v1680
        %1685 = vst [vmem:[#allocation2 + $0x10] sm:$0xff] %v1681
        %1686 = vst [vmem:[#allocation2 + $0x18] sm:$0xff] %v1682
        %1687 = vrot.lane.b32.xlu0 %v1663, 16
        %v1688 = vpop.permute.xlu0 %1687
        %1689 = vrot.lane.b32.xlu0 %v1665, 16
        %v1690 = vpop.permute.xlu0 %1689
        %1691 = vrot.lane.b32.xlu0 %v1664, 16
        %v1692 = vpop.permute.xlu0 %1691
        %1693 = vrot.lane.b32.xlu0 %v1666, 16
        %v1694 = vpop.permute.xlu0 %1693
        %v1695 = vsel %vm927, %v1688, %v1692
        %v1696 = vsel %vm927, %v1690, %v1694
        %v1697 = vsel %vm927, %v1692, %v1688
        %v1698 = vsel %vm927, %v1694, %v1690
        %v1699 = vld [vmem:[%s930] sm:$0x3]
        %v1701 = vperm.slane %v1699, 0
        %v1702 = vperm.slane %v1699, 1
        %v1705 = vmul.f32 %v1697, %v1701
        %v1706 = vmul.f32 %v1695, %v1702
        %v1707 = vmul.f32 %v1698, %v1701
        %v1708 = vmul.f32 %v1696, %v1702
        %1709 = vst [vmem:[#allocation2 + $0x20] sm:$0xff] %v1705
        %1710 = vst [vmem:[#allocation2 + $0x28] sm:$0xff] %v1706
        %1711 = vst [vmem:[#allocation2 + $0x30] sm:$0xff] %v1707
        %1712 = vst [vmem:[#allocation2 + $0x38] sm:$0xff] %v1708
        %1713 = vrot.lane.b32.xlu0 %v1663, 15
        %v1714 = vpop.permute.xlu0 %1713
        %1715 = vrot.lane.b32.xlu0 %v1665, 15
        %v1716 = vpop.permute.xlu0 %1715
        %1717 = vrot.lane.b32.xlu0 %v1664, 15
        %v1718 = vpop.permute.xlu0 %1717
        %1719 = vrot.lane.b32.xlu0 %v1666, 15
        %v1720 = vpop.permute.xlu0 %1719
        %v1721 = vsel %vm1069, %v1714, %v1718
        %v1722 = vsel %vm1069, %v1716, %v1720
        %v1723 = vsel %vm1069, %v1718, %v1714
        %v1724 = vsel %vm1069, %v1720, %v1716
        %v1725 = vld [vmem:[%s1072] sm:$0x3]
        %v1727 = vperm.slane %v1725, 0
        %v1728 = vperm.slane %v1725, 1
        %v1731 = vmul.f32 %v1723, %v1727
        %v1732 = vmul.f32 %v1721, %v1728
        %v1733 = vmul.f32 %v1724, %v1727
        %v1734 = vmul.f32 %v1722, %v1728
        %1735 = vst [vmem:[#allocation2 + $0x40] sm:$0xff] %v1731
        %1736 = vst [vmem:[#allocation2 + $0x48] sm:$0xff] %v1732
        %1737 = vst [vmem:[#allocation2 + $0x50] sm:$0xff] %v1733
        %1738 = vst [vmem:[#allocation2 + $0x58] sm:$0xff] %v1734
        %1739 = vrot.lane.b32.xlu0 %v1663, 1
        %v1740 = vpop.permute.xlu0 %1739
        %1741 = vrot.lane.b32.xlu0 %v1665, 1
        %v1742 = vpop.permute.xlu0 %1741
        %1743 = vrot.lane.b32.xlu0 %v1664, 1
        %v1744 = vpop.permute.xlu0 %1743
        %1745 = vrot.lane.b32.xlu0 %v1666, 1
        %v1746 = vpop.permute.xlu0 %1745
        %v1747 = vsel %vm1155, %v1740, %v1744
        %v1748 = vsel %vm1155, %v1742, %v1746
        %v1749 = vsel %vm1155, %v1744, %v1740
        %v1750 = vsel %vm1155, %v1746, %v1742
        %v1751 = vld [vmem:[%s1158] sm:$0x3]
        %v1753 = vperm.slane %v1751, 0
        %v1754 = vperm.slane %v1751, 1
        %v1757 = vmul.f32 %v1749, %v1753
        %v1758 = vmul.f32 %v1747, %v1754
        %v1759 = vmul.f32 %v1750, %v1753
        %v1760 = vmul.f32 %v1748, %v1754
        %1761 = vst [vmem:[#allocation2 + $0x60] sm:$0xff] %v1757
        %1762 = vst [vmem:[#allocation2 + $0x68] sm:$0xff] %v1758
        %1763 = vst [vmem:[#allocation2 + $0x70] sm:$0xff] %v1759
        %1764 = vst [vmem:[#allocation2 + $0x78] sm:$0xff] %v1760
        %1765 = vst [vmem:[#allocation2 + $0x80] sm:$0xff] %v1663
        %1766 = vst [vmem:[#allocation2 + $0x88] sm:$0xff] %v1664
        %1767 = vst [vmem:[#allocation2 + $0x90] sm:$0xff] %v1665
        %1768 = vst [vmem:[#allocation2 + $0x98] sm:$0xff] %v1666
        %1769 = vrot.lane.b32.xlu0 %v1663, 127
        %v1770 = vpop.permute.xlu0 %1769
        %1771 = vrot.lane.b32.xlu0 %v1665, 127
        %v1772 = vpop.permute.xlu0 %1771
        %1773 = vrot.lane.b32.xlu0 %v1664, 127
        %v1774 = vpop.permute.xlu0 %1773
        %1775 = vrot.lane.b32.xlu0 %v1666, 127
        %v1776 = vpop.permute.xlu0 %1775
        %v1777 = vsel %vm1307, %v1770, %v1774
        %v1778 = vsel %vm1307, %v1772, %v1776
        %v1779 = vsel %vm1307, %v1774, %v1770
        %v1780 = vsel %vm1307, %v1776, %v1772
        %v1781 = vld [vmem:[%s1310] sm:$0x3]
        %v1783 = vperm.slane %v1781, 0
        %v1784 = vperm.slane %v1781, 1
        %v1787 = vmul.f32 %v1777, %v1783
        %v1788 = vmul.f32 %v1779, %v1784
        %v1789 = vmul.f32 %v1778, %v1783
        %v1790 = vmul.f32 %v1780, %v1784
        %1791 = vst [vmem:[#allocation2 + $0xa0] sm:$0xff] %v1787
        %1792 = vst [vmem:[#allocation2 + $0xa8] sm:$0xff] %v1788
        %1793 = vst [vmem:[#allocation2 + $0xb0] sm:$0xff] %v1789
        %1794 = vst [vmem:[#allocation2 + $0xb8] sm:$0xff] %v1790
        %1795 = vrot.lane.b32.xlu0 %v1663, 113
        %v1796 = vpop.permute.xlu0 %1795
        %1797 = vrot.lane.b32.xlu0 %v1665, 113
        %v1798 = vpop.permute.xlu0 %1797
        %1799 = vrot.lane.b32.xlu0 %v1664, 113
        %v1800 = vpop.permute.xlu0 %1799
        %1801 = vrot.lane.b32.xlu0 %v1666, 113
        %v1802 = vpop.permute.xlu0 %1801
        %v1803 = vsel %vm1393, %v1796, %v1800
        %v1804 = vsel %vm1393, %v1798, %v1802
        %v1805 = vsel %vm1393, %v1800, %v1796
        %v1806 = vsel %vm1393, %v1802, %v1798
        %v1807 = vld [vmem:[%s1396] sm:$0x3]
        %v1809 = vperm.slane %v1807, 0
        %v1810 = vperm.slane %v1807, 1
        %v1813 = vmul.f32 %v1803, %v1809
        %v1814 = vmul.f32 %v1805, %v1810
        %v1815 = vmul.f32 %v1804, %v1809
        %v1816 = vmul.f32 %v1806, %v1810
        %1817 = vst [vmem:[#allocation2 + $0xc0] sm:$0xff] %v1813
        %1818 = vst [vmem:[#allocation2 + $0xc8] sm:$0xff] %v1814
        %1819 = vst [vmem:[#allocation2 + $0xd0] sm:$0xff] %v1815
        %1820 = vst [vmem:[#allocation2 + $0xd8] sm:$0xff] %v1816
        %1821 = vrot.lane.b32.xlu0 %v1663, 112
        %v1822 = vpop.permute.xlu0 %1821
        %1823 = vrot.lane.b32.xlu0 %v1665, 112
        %v1824 = vpop.permute.xlu0 %1823
        %1825 = vrot.lane.b32.xlu0 %v1664, 112
        %v1826 = vpop.permute.xlu0 %1825
        %1827 = vrot.lane.b32.xlu0 %v1666, 112
        %v1828 = vpop.permute.xlu0 %1827
        %v1829 = vsel %vm1479, %v1822, %v1826
        %v1830 = vsel %vm1479, %v1824, %v1828
        %v1831 = vsel %vm1479, %v1826, %v1822
        %v1832 = vsel %vm1479, %v1828, %v1824
        %v1833 = vld [vmem:[%s1482] sm:$0x3]
        %v1835 = vperm.slane %v1833, 0
        %v1836 = vperm.slane %v1833, 1
        %v1839 = vmul.f32 %v1829, %v1835
        %v1840 = vmul.f32 %v1831, %v1836
        %v1841 = vmul.f32 %v1830, %v1835
        %v1842 = vmul.f32 %v1832, %v1836
        %1843 = vst [vmem:[#allocation2 + $0xe0] sm:$0xff] %v1839
        %1844 = vst [vmem:[#allocation2 + $0xe8] sm:$0xff] %v1840
        %1845 = vst [vmem:[#allocation2 + $0xf0] sm:$0xff] %v1841
        %1846 = vst [vmem:[#allocation2 + $0xf8] sm:$0xff] %v1842
        %1847 = vrot.lane.b32.xlu0 %v1663, 111
        %v1848 = vpop.permute.xlu0 %1847
        %1849 = vrot.lane.b32.xlu0 %v1665, 111
        %v1850 = vpop.permute.xlu0 %1849
        %1851 = vrot.lane.b32.xlu0 %v1664, 111
        %v1852 = vpop.permute.xlu0 %1851
        %1853 = vrot.lane.b32.xlu0 %v1666, 111
        %v1854 = vpop.permute.xlu0 %1853
        %v1855 = vsel %vm1565, %v1848, %v1852
        %v1856 = vsel %vm1565, %v1850, %v1854
        %v1857 = vsel %vm1565, %v1852, %v1848
        %v1858 = vsel %vm1565, %v1854, %v1850
        %v1859 = vld [vmem:[%s1568] sm:$0x3]
        %v1861 = vperm.slane %v1859, 0
        %v1862 = vperm.slane %v1859, 1
        %v1865 = vmul.f32 %v1855, %v1861
        %v1866 = vmul.f32 %v1857, %v1862
        %v1867 = vmul.f32 %v1856, %v1861
        %v1868 = vmul.f32 %v1858, %v1862
        %1869 = vst [vmem:[#allocation2 + $0x100] sm:$0xff] %v1865
        %1870 = vst [vmem:[#allocation2 + $0x108] sm:$0xff] %v1866
        %1871 = vst [vmem:[#allocation2 + $0x110] sm:$0xff] %v1867
        %1872 = vst [vmem:[#allocation2 + $0x118] sm:$0xff] %v1868
        %v1873 = vld [vmem:[#allocation7] sm:$0xff]
        %v1874 = vld [vmem:[#allocation7 + $0x8] sm:$0xff]
        %v1875 = vld [vmem:[#allocation7 + $0x10] sm:$0xff]
        %v1876 = vld [vmem:[#allocation7 + $0x18] sm:$0xff]
        %v1877 = vld [vmem:[#allocation7 + $0x20] sm:$0xff]
        %v1878 = vld [vmem:[#allocation7 + $0x28] sm:$0xff]
        %v1879 = vld [vmem:[#allocation7 + $0x30] sm:$0xff]
        %v1880 = vld [vmem:[#allocation7 + $0x38] sm:$0xff]
        %v1881 = vld [vmem:[#allocation7 + $0x40] sm:$0xff]
        %v1882 = vld [vmem:[#allocation7 + $0x48] sm:$0xff]
        %v1883 = vld [vmem:[#allocation7 + $0x50] sm:$0xff]
        %v1884 = vld [vmem:[#allocation7 + $0x58] sm:$0xff]
        %v1885 = vld [vmem:[#allocation7 + $0x60] sm:$0xff]
        %v1886 = vld [vmem:[#allocation7 + $0x68] sm:$0xff]
        %v1887 = vld [vmem:[#allocation7 + $0x70] sm:$0xff]
        %v1888 = vld [vmem:[#allocation7 + $0x78] sm:$0xff]
        %v1889 = vld [vmem:[#allocation2] sm:$0xff]
        %v1890 = vld [vmem:[#allocation2 + $0x8] sm:$0xff]
        %v1891 = vld [vmem:[#allocation2 + $0x10] sm:$0xff]
        %v1892 = vld [vmem:[#allocation2 + $0x18] sm:$0xff]
        %v1893 = vld [vmem:[#allocation2 + $0x20] sm:$0xff]
        %v1894 = vld [vmem:[#allocation2 + $0x28] sm:$0xff]
        %v1895 = vld [vmem:[#allocation2 + $0x30] sm:$0xff]
        %v1896 = vld [vmem:[#allocation2 + $0x38] sm:$0xff]
        %v1897 = vld [vmem:[#allocation2 + $0x40] sm:$0xff]
        %v1898 = vld [vmem:[#allocation2 + $0x48] sm:$0xff]
        %v1899 = vld [vmem:[#allocation2 + $0x50] sm:$0xff]
        %v1900 = vld [vmem:[#allocation2 + $0x58] sm:$0xff]
        %v1901 = vld [vmem:[#allocation2 + $0x60] sm:$0xff]
        %v1902 = vld [vmem:[#allocation2 + $0x68] sm:$0xff]
        %v1903 = vld [vmem:[#allocation2 + $0x70] sm:$0xff]
        %v1904 = vld [vmem:[#allocation2 + $0x78] sm:$0xff]
        %v1905 = vld [vmem:[#allocation2 + $0x80] sm:$0xff]
        %v1906 = vld [vmem:[#allocation2 + $0x88] sm:$0xff]
        %v1907 = vld [vmem:[#allocation2 + $0x90] sm:$0xff]
        %v1908 = vld [vmem:[#allocation2 + $0x98] sm:$0xff]
        %v1909 = vld [vmem:[#allocation2 + $0xa0] sm:$0xff]
        %v1910 = vld [vmem:[#allocation2 + $0xa8] sm:$0xff]
        %v1911 = vld [vmem:[#allocation2 + $0xb0] sm:$0xff]
        %v1912 = vld [vmem:[#allocation2 + $0xb8] sm:$0xff]
        %v1913 = vld [vmem:[#allocation2 + $0xc0] sm:$0xff]
        %v1914 = vld [vmem:[#allocation2 + $0xc8] sm:$0xff]
        %v1915 = vld [vmem:[#allocation2 + $0xd0] sm:$0xff]
        %v1916 = vld [vmem:[#allocation2 + $0xd8] sm:$0xff]
        %v1917 = vld [vmem:[#allocation2 + $0xe0] sm:$0xff]
        %v1918 = vld [vmem:[#allocation2 + $0xe8] sm:$0xff]
        %v1919 = vld [vmem:[#allocation2 + $0xf0] sm:$0xff]
        %v1920 = vld [vmem:[#allocation2 + $0xf8] sm:$0xff]
        %v1921 = vld [vmem:[#allocation2 + $0x100] sm:$0xff]
        %v1922 = vld [vmem:[#allocation2 + $0x108] sm:$0xff]
        %v1923 = vld [vmem:[#allocation2 + $0x110] sm:$0xff]
        %v1924 = vld [vmem:[#allocation2 + $0x118] sm:$0xff]
        %v1925 = vld [vmem:[#allocation8] sm:$0xff]
        %v1926 = vld [vmem:[#allocation8 + $0x8] sm:$0xff]
        %v1927 = vld [vmem:[#allocation8 + $0x10] sm:$0xff]
        %v1928 = vld [vmem:[#allocation8 + $0x18] sm:$0xff]
        %v1929 = vld [vmem:[#allocation8 + $0x20] sm:$0xff]
        %v1930 = vld [vmem:[#allocation8 + $0x28] sm:$0xff]
        %v1931 = vld [vmem:[#allocation8 + $0x30] sm:$0xff]
        %v1932 = vld [vmem:[#allocation8 + $0x38] sm:$0xff]
        %1934 = vset.pattern.permute.xlu0 0
        %1935 = vperm.xlu0 %1934, %v1925
        %v1936 = vpop.permute.xlu0 %1935
        %1939 = vset.pattern.permute.xlu0 0
        %1940 = vperm.xlu0 %1939, %v1926
        %v1941 = vpop.permute.xlu0 %1940
        %1944 = vset.pattern.permute.xlu0 0
        %1945 = vperm.xlu0 %1944, %v1927
        %v1946 = vpop.permute.xlu0 %1945
        %1949 = vset.pattern.permute.xlu0 0
        %1950 = vperm.xlu0 %1949, %v1928
        %v1951 = vpop.permute.xlu0 %1950
        %1954 = vset.pattern.permute.xlu0 0
        %1955 = vperm.xlu0 %1954, %v1929
        %v1956 = vpop.permute.xlu0 %1955
        %1959 = vset.pattern.permute.xlu0 0
        %1960 = vperm.xlu0 %1959, %v1930
        %v1961 = vpop.permute.xlu0 %1960
        %1964 = vset.pattern.permute.xlu0 0
        %1965 = vperm.xlu0 %1964, %v1931
        %v1966 = vpop.permute.xlu0 %1965
        %1969 = vset.pattern.permute.xlu0 0
        %1970 = vperm.xlu0 %1969, %v1932
        %v1971 = vpop.permute.xlu0 %1970
        %vm1973 = vcmask 130048
        %v1975 = vsel %vm1973, %v1874, 0
        %v1978 = vsel %vm1973, %v1876, 0
        %v1981 = vsel %vm1973, %v1878, 0
        %v1984 = vsel %vm1973, %v1880, 0
        %v1987 = vsel %vm1973, %v1882, 0
        %v1990 = vsel %vm1973, %v1884, 0
        %v1993 = vsel %vm1973, %v1886, 0
        %v1996 = vsel %vm1973, %v1888, 0
        %1998 = vmatpush.msra.mxu0 %v1919
        %1999 = vmatpush.msra.mxu0 %v1917
        %2000 = vmatpush.msra.mxu0 %v1915
        %2001 = vmatpush.msra.mxu0 %v1913
        %2002 = vmatpush.msra.mxu0 %v1911
        %2003 = vmatpush.msra.mxu0 %v1909
        %2004 = vmatpush.msra.mxu0 %v1907
        %2005 = vmatpush.msra.mxu0 %v1905
        %2006 = vmatpush.msra.mxu0 %v1903
        %2007 = vmatpush.msra.mxu0 %v1901
        %2008 = vmatpush.msra.mxu0 %v1899
        %2009 = vmatpush.msra.mxu0 %v1897
        %2010 = vmatpush.msra.mxu0 %v1895
        %2011 = vmatpush.msra.mxu0 %v1893
        %2012 = vmatpush.msra.mxu0 %v1891
        %2013 = vmatpush.msra.mxu0 %v1889
        %2014 = vmatmul.f32.gmra.mxu0 %v1873
        %v2015 = vpop.f32.mrf.mxu0
        %v2016 = vadd.f32 %v1936, %v2015
        %2017 = vmatmul.f32.gmra.mxu0 %v1875
        %v2018 = vpop.f32.mrf.mxu0
        %v2019 = vadd.f32 %v1941, %v2018
        %2020 = vmatmul.f32.gmra.mxu0 %v1877
        %v2021 = vpop.f32.mrf.mxu0
        %v2022 = vadd.f32 %v1946, %v2021
        %2023 = vmatmul.f32.gmra.mxu0 %v1879
        %v2024 = vpop.f32.mrf.mxu0
        %v2025 = vadd.f32 %v1951, %v2024
        %2026 = vmatmul.f32.gmra.mxu0 %v1881
        %v2027 = vpop.f32.mrf.mxu0
        %v2028 = vadd.f32 %v1956, %v2027
        %2029 = vmatmul.f32.gmra.mxu0 %v1883
        %v2030 = vpop.f32.mrf.mxu0
        %v2031 = vadd.f32 %v1961, %v2030
        %2032 = vmatmul.f32.gmra.mxu0 %v1885
        %v2033 = vpop.f32.mrf.mxu0
        %v2034 = vadd.f32 %v1966, %v2033
        %2035 = vmatmul.f32.gmra.mxu0 %v1887
        %v2036 = vpop.f32.mrf.mxu0
        %v2037 = vadd.f32 %v1971, %v2036
        %2038 = vdwg.mxu0
        %2039 = vmatpush.msra.mxu0 0.0
        %2040 = vmatpush.msra.mxu0 0.0
        %2041 = vmatpush.msra.mxu0 0.0
        %2042 = vmatpush.msra.mxu0 0.0
        %2043 = vmatpush.msra.mxu0 0.0
        %2044 = vmatpush.msra.mxu0 0.0
        %2045 = vmatpush.msra.mxu0 0.0
        %2046 = vmatpush.msra.mxu0 0.0
        %2047 = vmatpush.msra.mxu0 0.0
        %2048 = vmatpush.msra.mxu0 0.0
        %2049 = vmatpush.msra.mxu0 0.0
        %2050 = vmatpush.msra.mxu0 0.0
        %2051 = vmatpush.msra.mxu0 0.0
        %2052 = vmatpush.msra.mxu0 0.0
        %2053 = vmatpush.msra.mxu0 %v1923
        %2054 = vmatpush.msra.mxu0 %v1921
        %2055 = vmatmul.f32.gmra.mxu0 %v1975
        %v2056 = vpop.f32.mrf.mxu0
        %v2057 = vadd.f32 %v2016, %v2056
        %2058 = vmatmul.f32.gmra.mxu0 %v1978
        %v2059 = vpop.f32.mrf.mxu0
        %v2060 = vadd.f32 %v2019, %v2059
        %2061 = vmatmul.f32.gmra.mxu0 %v1981
        %v2062 = vpop.f32.mrf.mxu0
        %v2063 = vadd.f32 %v2022, %v2062
        %2064 = vmatmul.f32.gmra.mxu0 %v1984
        %v2065 = vpop.f32.mrf.mxu0
        %v2066 = vadd.f32 %v2025, %v2065
        %2067 = vmatmul.f32.gmra.mxu0 %v1987
        %v2068 = vpop.f32.mrf.mxu0
        %v2069 = vadd.f32 %v2028, %v2068
        %2070 = vmatmul.f32.gmra.mxu0 %v1990
        %v2071 = vpop.f32.mrf.mxu0
        %v2072 = vadd.f32 %v2031, %v2071
        %2073 = vmatmul.f32.gmra.mxu0 %v1993
        %v2074 = vpop.f32.mrf.mxu0
        %v2075 = vadd.f32 %v2034, %v2074
        %2076 = vmatmul.f32.gmra.mxu0 %v1996
        %v2077 = vpop.f32.mrf.mxu0
        %v2078 = vadd.f32 %v2037, %v2077
        %2079 = vdwg.mxu0
        %2080 = vmatpush.msra.mxu0 %v1920
        %2081 = vmatpush.msra.mxu0 %v1918
        %2082 = vmatpush.msra.mxu0 %v1916
        %2083 = vmatpush.msra.mxu0 %v1914
        %2084 = vmatpush.msra.mxu0 %v1912
        %2085 = vmatpush.msra.mxu0 %v1910
        %2086 = vmatpush.msra.mxu0 %v1908
        %2087 = vmatpush.msra.mxu0 %v1906
        %2088 = vmatpush.msra.mxu0 %v1904
        %2089 = vmatpush.msra.mxu0 %v1902
        %2090 = vmatpush.msra.mxu0 %v1900
        %2091 = vmatpush.msra.mxu0 %v1898
        %2092 = vmatpush.msra.mxu0 %v1896
        %2093 = vmatpush.msra.mxu0 %v1894
        %2094 = vmatpush.msra.mxu0 %v1892
        %2095 = vmatpush.msra.mxu0 %v1890
        %2096 = vmatmul.f32.gmra.mxu0 %v1873
        %v2097 = vpop.f32.mrf.mxu0
        %v2098 = vadd.f32 %v1936, %v2097
        %2099 = vmatmul.f32.gmra.mxu0 %v1875
        %v2100 = vpop.f32.mrf.mxu0
        %v2101 = vadd.f32 %v1941, %v2100
        %2102 = vmatmul.f32.gmra.mxu0 %v1877
        %v2103 = vpop.f32.mrf.mxu0
        %v2104 = vadd.f32 %v1946, %v2103
        %2105 = vmatmul.f32.gmra.mxu0 %v1879
        %v2106 = vpop.f32.mrf.mxu0
        %v2107 = vadd.f32 %v1951, %v2106
        %2108 = vmatmul.f32.gmra.mxu0 %v1881
        %v2109 = vpop.f32.mrf.mxu0
        %v2110 = vadd.f32 %v1956, %v2109
        %2111 = vmatmul.f32.gmra.mxu0 %v1883
        %v2112 = vpop.f32.mrf.mxu0
        %v2113 = vadd.f32 %v1961, %v2112
        %2114 = vmatmul.f32.gmra.mxu0 %v1885
        %v2115 = vpop.f32.mrf.mxu0
        %v2116 = vadd.f32 %v1966, %v2115
        %2117 = vmatmul.f32.gmra.mxu0 %v1887
        %v2118 = vpop.f32.mrf.mxu0
        %v2119 = vadd.f32 %v1971, %v2118
        %2120 = vdwg.mxu0
        %2121 = vmatpush.msra.mxu0 0.0
        %2122 = vmatpush.msra.mxu0 0.0
        %2123 = vmatpush.msra.mxu0 0.0
        %2124 = vmatpush.msra.mxu0 0.0
        %2125 = vmatpush.msra.mxu0 0.0
        %2126 = vmatpush.msra.mxu0 0.0
        %2127 = vmatpush.msra.mxu0 0.0
        %2128 = vmatpush.msra.mxu0 0.0
        %2129 = vmatpush.msra.mxu0 0.0
        %2130 = vmatpush.msra.mxu0 0.0
        %2131 = vmatpush.msra.mxu0 0.0
        %2132 = vmatpush.msra.mxu0 0.0
        %2133 = vmatpush.msra.mxu0 0.0
        %2134 = vmatpush.msra.mxu0 0.0
        %2135 = vmatpush.msra.mxu0 %v1924
        %2136 = vmatpush.msra.mxu0 %v1922
        %2137 = vmatmul.f32.gmra.mxu0 %v1975
        %v2138 = vpop.f32.mrf.mxu0
        %v2139 = vadd.f32 %v2098, %v2138
        %2140 = vmatmul.f32.gmra.mxu0 %v1978
        %v2141 = vpop.f32.mrf.mxu0
        %v2142 = vadd.f32 %v2101, %v2141
        %2143 = vmatmul.f32.gmra.mxu0 %v1981
        %v2144 = vpop.f32.mrf.mxu0
        %v2145 = vadd.f32 %v2104, %v2144
        %2146 = vmatmul.f32.gmra.mxu0 %v1984
        %v2147 = vpop.f32.mrf.mxu0
        %v2148 = vadd.f32 %v2107, %v2147
        %2149 = vmatmul.f32.gmra.mxu0 %v1987
        %v2150 = vpop.f32.mrf.mxu0
        %v2151 = vadd.f32 %v2110, %v2150
        %2152 = vmatmul.f32.gmra.mxu0 %v1990
        %v2153 = vpop.f32.mrf.mxu0
        %v2154 = vadd.f32 %v2113, %v2153
        %2155 = vmatmul.f32.gmra.mxu0 %v1993
        %v2156 = vpop.f32.mrf.mxu0
        %v2157 = vadd.f32 %v2116, %v2156
        %2158 = vmatmul.f32.gmra.mxu0 %v1996
        %v2159 = vpop.f32.mrf.mxu0
        %v2160 = vadd.f32 %v2119, %v2159
        %2161 = vdwg.mxu0
        %vm2162 = vcmp.ge.f32.partialorder %v2057, 0.0
        %vm2163 = vcmp.ge.f32.partialorder %v2139, 0.0
        %vm2164 = vcmp.ge.f32.partialorder %v2060, 0.0
        %vm2165 = vcmp.ge.f32.partialorder %v2142, 0.0
        %vm2166 = vcmp.ge.f32.partialorder %v2063, 0.0
        %vm2167 = vcmp.ge.f32.partialorder %v2145, 0.0
        %vm2168 = vcmp.ge.f32.partialorder %v2066, 0.0
        %vm2169 = vcmp.ge.f32.partialorder %v2148, 0.0
        %vm2170 = vcmp.ge.f32.partialorder %v2069, 0.0
        %vm2171 = vcmp.ge.f32.partialorder %v2151, 0.0
        %vm2172 = vcmp.ge.f32.partialorder %v2072, 0.0
        %vm2173 = vcmp.ge.f32.partialorder %v2154, 0.0
        %vm2174 = vcmp.ge.f32.partialorder %v2075, 0.0
        %vm2175 = vcmp.ge.f32.partialorder %v2157, 0.0
        %vm2176 = vcmp.ge.f32.partialorder %v2078, 0.0
        %vm2177 = vcmp.ge.f32.partialorder %v2160, 0.0
        %v2178 = vmul.f32 %v2057, 0.01
        %v2179 = vmul.f32 %v2139, 0.01
        %v2180 = vmul.f32 %v2060, 0.01
        %v2181 = vmul.f32 %v2142, 0.01
        %v2182 = vmul.f32 %v2063, 0.01
        %v2183 = vmul.f32 %v2145, 0.01
        %v2184 = vmul.f32 %v2066, 0.01
        %v2185 = vmul.f32 %v2148, 0.01
        %v2186 = vmul.f32 %v2069, 0.01
        %v2187 = vmul.f32 %v2151, 0.01
        %v2188 = vmul.f32 %v2072, 0.01
        %v2189 = vmul.f32 %v2154, 0.01
        %v2190 = vmul.f32 %v2075, 0.01
        %v2191 = vmul.f32 %v2157, 0.01
        %v2192 = vmul.f32 %v2078, 0.01
        %v2193 = vmul.f32 %v2160, 0.01
        %v2194 = vsel %vm2162, %v2057, %v2178
        %v2195 = vsel %vm2163, %v2139, %v2179
        %v2196 = vsel %vm2164, %v2060, %v2180
        %v2197 = vsel %vm2165, %v2142, %v2181
        %v2198 = vsel %vm2166, %v2063, %v2182
        %v2199 = vsel %vm2167, %v2145, %v2183
        %v2200 = vsel %vm2168, %v2066, %v2184
        %v2201 = vsel %vm2169, %v2148, %v2185
        %v2202 = vsel %vm2170, %v2069, %v2186
        %v2203 = vsel %vm2171, %v2151, %v2187
        %v2204 = vsel %vm2172, %v2072, %v2188
        %v2205 = vsel %vm2173, %v2154, %v2189
        %v2206 = vsel %vm2174, %v2075, %v2190
        %v2207 = vsel %vm2175, %v2157, %v2191
        %v2208 = vsel %vm2176, %v2078, %v2192
        %v2209 = vsel %vm2177, %v2160, %v2193
        %v2210 = vld [vmem:[#allocation10] sm:$0xff]
        %v2211 = vld [vmem:[#allocation10 + $0x8] sm:$0xff]
        %v2212 = vld [vmem:[#allocation11] sm:$0xff]
        %v2213 = vld [vmem:[#allocation11 + $0x8] sm:$0xff]
        %2215 = vset.pattern.permute.xlu0 0
        %2216 = vperm.xlu0 %2215, %v2212
        %v2217 = vpop.permute.xlu0 %2216
        %2220 = vset.pattern.permute.xlu0 0
        %2221 = vperm.xlu0 %2220, %v2213
        %v2222 = vpop.permute.xlu0 %2221
        %vm2224 = vcmask 523264
        %v2226 = vsel %vm2224, %v2210, 0
        %v2229 = vsel %vm2224, %v2211, 0
        %2231 = vmatpush.msra.mxu0 0.0
        %2232 = vmatpush.msra.mxu0 0.0
        %2233 = vmatpush.msra.mxu0 0.0
        %2234 = vmatpush.msra.mxu0 0.0
        %2235 = vmatpush.msra.mxu0 0.0
        %2236 = vmatpush.msra.mxu0 0.0
        %2237 = vmatpush.msra.mxu0 0.0
        %2238 = vmatpush.msra.mxu0 0.0
        %2239 = vmatpush.msra.mxu0 %v2208
        %2240 = vmatpush.msra.mxu0 %v2206
        %2241 = vmatpush.msra.mxu0 %v2204
        %2242 = vmatpush.msra.mxu0 %v2202
        %2243 = vmatpush.msra.mxu0 %v2200
        %2244 = vmatpush.msra.mxu0 %v2198
        %2245 = vmatpush.msra.mxu0 %v2196
        %2246 = vmatpush.msra.mxu0 %v2194
        %2247 = vmatmul.f32.gmra.mxu0 %v2226
        %v2248 = vpop.f32.mrf.mxu0
        %v2249 = vadd.f32 %v2217, %v2248
        %2250 = vmatmul.f32.gmra.mxu0 %v2229
        %v2251 = vpop.f32.mrf.mxu0
        %v2252 = vadd.f32 %v2222, %v2251
        %2253 = vdwg.mxu0
        %2254 = vmatpush.msra.mxu0 0.0
        %2255 = vmatpush.msra.mxu0 0.0
        %2256 = vmatpush.msra.mxu0 0.0
        %2257 = vmatpush.msra.mxu0 0.0
        %2258 = vmatpush.msra.mxu0 0.0
        %2259 = vmatpush.msra.mxu0 0.0
        %2260 = vmatpush.msra.mxu0 0.0
        %2261 = vmatpush.msra.mxu0 0.0
        %2262 = vmatpush.msra.mxu0 %v2209
        %2263 = vmatpush.msra.mxu0 %v2207
        %2264 = vmatpush.msra.mxu0 %v2205
        %2265 = vmatpush.msra.mxu0 %v2203
        %2266 = vmatpush.msra.mxu0 %v2201
        %2267 = vmatpush.msra.mxu0 %v2199
        %2268 = vmatpush.msra.mxu0 %v2197
        %2269 = vmatpush.msra.mxu0 %v2195
        %2270 = vmatmul.f32.gmra.mxu0 %v2226
        %v2271 = vpop.f32.mrf.mxu0
        %v2272 = vadd.f32 %v2217, %v2271
        %2273 = vmatmul.f32.gmra.mxu0 %v2229
        %v2274 = vpop.f32.mrf.mxu0
        %v2275 = vadd.f32 %v2222, %v2274
        %2276 = vdwg.mxu0
        %2277 = vrot.lane.b32.xlu0 %v2249, 17
        %v2278 = vpop.permute.xlu0 %2277
        %2279 = vrot.lane.b32.xlu0 %v2252, 17
        %v2280 = vpop.permute.xlu0 %2279
        %2281 = vrot.lane.b32.xlu0 %v2272, 17
        %v2282 = vpop.permute.xlu0 %2281
        %2283 = vrot.lane.b32.xlu0 %v2275, 17
        %v2284 = vpop.permute.xlu0 %2283
        %v2285 = vsel %vm904, %v2278, %v2282
        %v2286 = vsel %vm904, %v2280, %v2284
        %v2287 = vsel %vm904, %v2282, %v2278
        %v2288 = vsel %vm904, %v2284, %v2280
        %v2289 = vld [vmem:[#allocation3] sm:$0x3]
        %v2291 = vperm.slane %v2289, 0
        %v2292 = vperm.slane %v2289, 1
        %v2295 = vmul.f32 %v2287, %v2291
        %v2296 = vmul.f32 %v2285, %v2292
        %v2297 = vmul.f32 %v2288, %v2291
        %v2298 = vmul.f32 %v2286, %v2292
        %2299 = vst [vmem:[#allocation2] sm:$0xff] %v2295
        %2300 = vst [vmem:[#allocation2 + $0x8] sm:$0xff] %v2296
        %2301 = vst [vmem:[#allocation2 + $0x10] sm:$0xff] %v2297
        %2302 = vst [vmem:[#allocation2 + $0x18] sm:$0xff] %v2298
        %2303 = vrot.lane.b32.xlu0 %v2249, 16
        %v2304 = vpop.permute.xlu0 %2303
        %2305 = vrot.lane.b32.xlu0 %v2252, 16
        %v2306 = vpop.permute.xlu0 %2305
        %2307 = vrot.lane.b32.xlu0 %v2272, 16
        %v2308 = vpop.permute.xlu0 %2307
        %2309 = vrot.lane.b32.xlu0 %v2275, 16
        %v2310 = vpop.permute.xlu0 %2309
        %v2311 = vsel %vm927, %v2304, %v2308
        %v2312 = vsel %vm927, %v2306, %v2310
        %v2313 = vsel %vm927, %v2308, %v2304
        %v2314 = vsel %vm927, %v2310, %v2306
        %v2315 = vld [vmem:[%s930] sm:$0x3]
        %v2317 = vperm.slane %v2315, 0
        %v2318 = vperm.slane %v2315, 1
        %v2321 = vmul.f32 %v2313, %v2317
        %v2322 = vmul.f32 %v2311, %v2318
        %v2323 = vmul.f32 %v2314, %v2317
        %v2324 = vmul.f32 %v2312, %v2318
        %2325 = vst [vmem:[#allocation2 + $0x20] sm:$0xff] %v2321
        %2326 = vst [vmem:[#allocation2 + $0x28] sm:$0xff] %v2322
        %2327 = vst [vmem:[#allocation2 + $0x30] sm:$0xff] %v2323
        %2328 = vst [vmem:[#allocation2 + $0x38] sm:$0xff] %v2324
        %2329 = vrot.lane.b32.xlu0 %v2249, 15
        %v2330 = vpop.permute.xlu0 %2329
        %2331 = vrot.lane.b32.xlu0 %v2252, 15
        %v2332 = vpop.permute.xlu0 %2331
        %2333 = vrot.lane.b32.xlu0 %v2272, 15
        %v2334 = vpop.permute.xlu0 %2333
        %2335 = vrot.lane.b32.xlu0 %v2275, 15
        %v2336 = vpop.permute.xlu0 %2335
        %v2337 = vsel %vm1069, %v2330, %v2334
        %v2338 = vsel %vm1069, %v2332, %v2336
        %v2339 = vsel %vm1069, %v2334, %v2330
        %v2340 = vsel %vm1069, %v2336, %v2332
        %v2341 = vld [vmem:[%s1072] sm:$0x3]
        %v2343 = vperm.slane %v2341, 0
        %v2344 = vperm.slane %v2341, 1
        %v2347 = vmul.f32 %v2339, %v2343
        %v2348 = vmul.f32 %v2337, %v2344
        %v2349 = vmul.f32 %v2340, %v2343
        %v2350 = vmul.f32 %v2338, %v2344
        %2351 = vst [vmem:[#allocation2 + $0x40] sm:$0xff] %v2347
        %2352 = vst [vmem:[#allocation2 + $0x48] sm:$0xff] %v2348
        %2353 = vst [vmem:[#allocation2 + $0x50] sm:$0xff] %v2349
        %2354 = vst [vmem:[#allocation2 + $0x58] sm:$0xff] %v2350
        %2355 = vrot.lane.b32.xlu0 %v2249, 1
        %v2356 = vpop.permute.xlu0 %2355
        %2357 = vrot.lane.b32.xlu0 %v2252, 1
        %v2358 = vpop.permute.xlu0 %2357
        %2359 = vrot.lane.b32.xlu0 %v2272, 1
        %v2360 = vpop.permute.xlu0 %2359
        %2361 = vrot.lane.b32.xlu0 %v2275, 1
        %v2362 = vpop.permute.xlu0 %2361
        %v2363 = vsel %vm1155, %v2356, %v2360
        %v2364 = vsel %vm1155, %v2358, %v2362
        %v2365 = vsel %vm1155, %v2360, %v2356
        %v2366 = vsel %vm1155, %v2362, %v2358
        %v2367 = vld [vmem:[%s1158] sm:$0x3]
        %v2369 = vperm.slane %v2367, 0
        %v2370 = vperm.slane %v2367, 1
        %v2373 = vmul.f32 %v2365, %v2369
        %v2374 = vmul.f32 %v2363, %v2370
        %v2375 = vmul.f32 %v2366, %v2369
        %v2376 = vmul.f32 %v2364, %v2370
        %2377 = vst [vmem:[#allocation2 + $0x60] sm:$0xff] %v2373
        %2378 = vst [vmem:[#allocation2 + $0x68] sm:$0xff] %v2374
        %2379 = vst [vmem:[#allocation2 + $0x70] sm:$0xff] %v2375
        %2380 = vst [vmem:[#allocation2 + $0x78] sm:$0xff] %v2376
        %2381 = vst [vmem:[#allocation2 + $0x80] sm:$0xff] %v2249
        %2382 = vst [vmem:[#allocation2 + $0x88] sm:$0xff] %v2272
        %2383 = vst [vmem:[#allocation2 + $0x90] sm:$0xff] %v2252
        %2384 = vst [vmem:[#allocation2 + $0x98] sm:$0xff] %v2275
        %2385 = vrot.lane.b32.xlu0 %v2249, 127
        %v2386 = vpop.permute.xlu0 %2385
        %2387 = vrot.lane.b32.xlu0 %v2252, 127
        %v2388 = vpop.permute.xlu0 %2387
        %2389 = vrot.lane.b32.xlu0 %v2272, 127
        %v2390 = vpop.permute.xlu0 %2389
        %2391 = vrot.lane.b32.xlu0 %v2275, 127
        %v2392 = vpop.permute.xlu0 %2391
        %v2393 = vsel %vm1307, %v2386, %v2390
        %v2394 = vsel %vm1307, %v2388, %v2392
        %v2395 = vsel %vm1307, %v2390, %v2386
        %v2396 = vsel %vm1307, %v2392, %v2388
        %v2397 = vld [vmem:[%s1310] sm:$0x3]
        %v2399 = vperm.slane %v2397, 0
        %v2400 = vperm.slane %v2397, 1
        %v2403 = vmul.f32 %v2393, %v2399
        %v2404 = vmul.f32 %v2395, %v2400
        %v2405 = vmul.f32 %v2394, %v2399
        %v2406 = vmul.f32 %v2396, %v2400
        %2407 = vst [vmem:[#allocation2 + $0xa0] sm:$0xff] %v2403
        %2408 = vst [vmem:[#allocation2 + $0xa8] sm:$0xff] %v2404
        %2409 = vst [vmem:[#allocation2 + $0xb0] sm:$0xff] %v2405
        %2410 = vst [vmem:[#allocation2 + $0xb8] sm:$0xff] %v2406
        %2411 = vrot.lane.b32.xlu0 %v2249, 113
        %v2412 = vpop.permute.xlu0 %2411
        %2413 = vrot.lane.b32.xlu0 %v2252, 113
        %v2414 = vpop.permute.xlu0 %2413
        %2415 = vrot.lane.b32.xlu0 %v2272, 113
        %v2416 = vpop.permute.xlu0 %2415
        %2417 = vrot.lane.b32.xlu0 %v2275, 113
        %v2418 = vpop.permute.xlu0 %2417
        %v2419 = vsel %vm1393, %v2412, %v2416
        %v2420 = vsel %vm1393, %v2414, %v2418
        %v2421 = vsel %vm1393, %v2416, %v2412
        %v2422 = vsel %vm1393, %v2418, %v2414
        %v2423 = vld [vmem:[%s1396] sm:$0x3]
        %v2425 = vperm.slane %v2423, 0
        %v2426 = vperm.slane %v2423, 1
        %v2429 = vmul.f32 %v2419, %v2425
        %v2430 = vmul.f32 %v2421, %v2426
        %v2431 = vmul.f32 %v2420, %v2425
        %v2432 = vmul.f32 %v2422, %v2426
        %2433 = vst [vmem:[#allocation2 + $0xc0] sm:$0xff] %v2429
        %2434 = vst [vmem:[#allocation2 + $0xc8] sm:$0xff] %v2430
        %2435 = vst [vmem:[#allocation2 + $0xd0] sm:$0xff] %v2431
        %2436 = vst [vmem:[#allocation2 + $0xd8] sm:$0xff] %v2432
        %2437 = vrot.lane.b32.xlu0 %v2249, 112
        %v2438 = vpop.permute.xlu0 %2437
        %2439 = vrot.lane.b32.xlu0 %v2252, 112
        %v2440 = vpop.permute.xlu0 %2439
        %2441 = vrot.lane.b32.xlu0 %v2272, 112
        %v2442 = vpop.permute.xlu0 %2441
        %2443 = vrot.lane.b32.xlu0 %v2275, 112
        %v2444 = vpop.permute.xlu0 %2443
        %v2445 = vsel %vm1479, %v2438, %v2442
        %v2446 = vsel %vm1479, %v2440, %v2444
        %v2447 = vsel %vm1479, %v2442, %v2438
        %v2448 = vsel %vm1479, %v2444, %v2440
        %v2449 = vld [vmem:[%s1482] sm:$0x3]
        %v2451 = vperm.slane %v2449, 0
        %v2452 = vperm.slane %v2449, 1
        %v2455 = vmul.f32 %v2445, %v2451
        %v2456 = vmul.f32 %v2447, %v2452
        %v2457 = vmul.f32 %v2446, %v2451
        %v2458 = vmul.f32 %v2448, %v2452
        %2459 = vst [vmem:[#allocation2 + $0xe0] sm:$0xff] %v2455
        %2460 = vst [vmem:[#allocation2 + $0xe8] sm:$0xff] %v2456
        %2461 = vst [vmem:[#allocation2 + $0xf0] sm:$0xff] %v2457
        %2462 = vst [vmem:[#allocation2 + $0xf8] sm:$0xff] %v2458
        %2463 = vrot.lane.b32.xlu0 %v2249, 111
        %v2464 = vpop.permute.xlu0 %2463
        %2465 = vrot.lane.b32.xlu0 %v2252, 111
        %v2466 = vpop.permute.xlu0 %2465
        %2467 = vrot.lane.b32.xlu0 %v2272, 111
        %v2468 = vpop.permute.xlu0 %2467
        %2469 = vrot.lane.b32.xlu0 %v2275, 111
        %v2470 = vpop.permute.xlu0 %2469
        %v2471 = vsel %vm1565, %v2464, %v2468
        %v2472 = vsel %vm1565, %v2466, %v2470
        %v2473 = vsel %vm1565, %v2468, %v2464
        %v2474 = vsel %vm1565, %v2470, %v2466
        %v2475 = vld [vmem:[%s1568] sm:$0x3]
        %v2477 = vperm.slane %v2475, 0
        %v2478 = vperm.slane %v2475, 1
        %v2481 = vmul.f32 %v2471, %v2477
        %v2482 = vmul.f32 %v2473, %v2478
        %v2483 = vmul.f32 %v2472, %v2477
        %v2484 = vmul.f32 %v2474, %v2478
        %2485 = vst [vmem:[#allocation2 + $0x100] sm:$0xff] %v2481
        %2486 = vst [vmem:[#allocation2 + $0x108] sm:$0xff] %v2482
        %2487 = vst [vmem:[#allocation2 + $0x110] sm:$0xff] %v2483
        %2488 = vst [vmem:[#allocation2 + $0x118] sm:$0xff] %v2484
        %v2489 = vld [vmem:[%s8] sm:$0xff]
        %v2490 = vld [vmem:[%s8 + $0x8] sm:$0xff]
        %v2491 = vld [vmem:[%s8 + $0x10] sm:$0xff]
        %v2492 = vld [vmem:[%s8 + $0x18] sm:$0xff]
        %v2493 = vld [vmem:[#allocation2] sm:$0xff]
        %v2494 = vld [vmem:[#allocation2 + $0x8] sm:$0xff]
        %v2495 = vld [vmem:[#allocation2 + $0x10] sm:$0xff]
        %v2496 = vld [vmem:[#allocation2 + $0x18] sm:$0xff]
        %v2497 = vld [vmem:[#allocation2 + $0x20] sm:$0xff]
        %v2498 = vld [vmem:[#allocation2 + $0x28] sm:$0xff]
        %v2499 = vld [vmem:[#allocation2 + $0x30] sm:$0xff]
        %v2500 = vld [vmem:[#allocation2 + $0x38] sm:$0xff]
        %v2501 = vld [vmem:[#allocation2 + $0x40] sm:$0xff]
        %v2502 = vld [vmem:[#allocation2 + $0x48] sm:$0xff]
        %v2503 = vld [vmem:[#allocation2 + $0x50] sm:$0xff]
        %v2504 = vld [vmem:[#allocation2 + $0x58] sm:$0xff]
        %v2505 = vld [vmem:[#allocation2 + $0x60] sm:$0xff]
        %v2506 = vld [vmem:[#allocation2 + $0x68] sm:$0xff]
        %v2507 = vld [vmem:[#allocation2 + $0x70] sm:$0xff]
        %v2508 = vld [vmem:[#allocation2 + $0x78] sm:$0xff]
        %v2509 = vld [vmem:[#allocation2 + $0x80] sm:$0xff]
        %v2510 = vld [vmem:[#allocation2 + $0x88] sm:$0xff]
        %v2511 = vld [vmem:[#allocation2 + $0x90] sm:$0xff]
        %v2512 = vld [vmem:[#allocation2 + $0x98] sm:$0xff]
        %v2513 = vld [vmem:[#allocation2 + $0xa0] sm:$0xff]
        %v2514 = vld [vmem:[#allocation2 + $0xa8] sm:$0xff]
        %v2515 = vld [vmem:[#allocation2 + $0xb0] sm:$0xff]
        %v2516 = vld [vmem:[#allocation2 + $0xb8] sm:$0xff]
        %v2517 = vld [vmem:[#allocation2 + $0xc0] sm:$0xff]
        %v2518 = vld [vmem:[#allocation2 + $0xc8] sm:$0xff]
        %v2519 = vld [vmem:[#allocation2 + $0xd0] sm:$0xff]
        %v2520 = vld [vmem:[#allocation2 + $0xd8] sm:$0xff]
        %v2521 = vld [vmem:[#allocation2 + $0xe0] sm:$0xff]
        %v2522 = vld [vmem:[#allocation2 + $0xe8] sm:$0xff]
        %v2523 = vld [vmem:[#allocation2 + $0xf0] sm:$0xff]
        %v2524 = vld [vmem:[#allocation2 + $0xf8] sm:$0xff]
        %v2525 = vld [vmem:[#allocation2 + $0x100] sm:$0xff]
        %v2526 = vld [vmem:[#allocation2 + $0x108] sm:$0xff]
        %v2527 = vld [vmem:[#allocation2 + $0x110] sm:$0xff]
        %v2528 = vld [vmem:[#allocation2 + $0x118] sm:$0xff]
        %v2529 = vld [vmem:[#allocation13] sm:$0xff]
        %v2530 = vld [vmem:[#allocation13 + $0x8] sm:$0xff]
        %2532 = vset.pattern.permute.xlu0 0
        %2533 = vperm.xlu0 %2532, %v2529
        %v2534 = vpop.permute.xlu0 %2533
        %2537 = vset.pattern.permute.xlu0 0
        %2538 = vperm.xlu0 %2537, %v2530
        %v2539 = vpop.permute.xlu0 %2538
        %v2542 = vsel %vm1973, %v2490, 0
        %v2545 = vsel %vm1973, %v2492, 0
        %2547 = vmatpush.msra.mxu0 %v2523
        %2548 = vmatpush.msra.mxu0 %v2521
        %2549 = vmatpush.msra.mxu0 %v2519
        %2550 = vmatpush.msra.mxu0 %v2517
        %2551 = vmatpush.msra.mxu0 %v2515
        %2552 = vmatpush.msra.mxu0 %v2513
        %2553 = vmatpush.msra.mxu0 %v2511
        %2554 = vmatpush.msra.mxu0 %v2509
        %2555 = vmatpush.msra.mxu0 %v2507
        %2556 = vmatpush.msra.mxu0 %v2505
        %2557 = vmatpush.msra.mxu0 %v2503
        %2558 = vmatpush.msra.mxu0 %v2501
        %2559 = vmatpush.msra.mxu0 %v2499
        %2560 = vmatpush.msra.mxu0 %v2497
        %2561 = vmatpush.msra.mxu0 %v2495
        %2562 = vmatpush.msra.mxu0 %v2493
        %2563 = vmatmul.f32.gmra.mxu0 %v2489
        %v2564 = vpop.f32.mrf.mxu0
        %v2565 = vadd.f32 %v2534, %v2564
        %2566 = vmatmul.f32.gmra.mxu0 %v2491
        %v2567 = vpop.f32.mrf.mxu0
        %v2568 = vadd.f32 %v2539, %v2567
        %2569 = vdwg.mxu0
        %2570 = vmatpush.msra.mxu0 0.0
        %2571 = vmatpush.msra.mxu0 0.0
        %2572 = vmatpush.msra.mxu0 0.0
        %2573 = vmatpush.msra.mxu0 0.0
        %2574 = vmatpush.msra.mxu0 0.0
        %2575 = vmatpush.msra.mxu0 0.0
        %2576 = vmatpush.msra.mxu0 0.0
        %2577 = vmatpush.msra.mxu0 0.0
        %2578 = vmatpush.msra.mxu0 0.0
        %2579 = vmatpush.msra.mxu0 0.0
        %2580 = vmatpush.msra.mxu0 0.0
        %2581 = vmatpush.msra.mxu0 0.0
        %2582 = vmatpush.msra.mxu0 0.0
        %2583 = vmatpush.msra.mxu0 0.0
        %2584 = vmatpush.msra.mxu0 %v2527
        %2585 = vmatpush.msra.mxu0 %v2525
        %2586 = vmatmul.f32.gmra.mxu0 %v2542
        %v2587 = vpop.f32.mrf.mxu0
        %v2588 = vadd.f32 %v2565, %v2587
        %2589 = vmatmul.f32.gmra.mxu0 %v2545
        %v2590 = vpop.f32.mrf.mxu0
        %v2591 = vadd.f32 %v2568, %v2590
        %2592 = vdwg.mxu0
        %2593 = vmatpush.msra.mxu0 %v2524
        %2594 = vmatpush.msra.mxu0 %v2522
        %2595 = vmatpush.msra.mxu0 %v2520
        %2596 = vmatpush.msra.mxu0 %v2518
        %2597 = vmatpush.msra.mxu0 %v2516
        %2598 = vmatpush.msra.mxu0 %v2514
        %2599 = vmatpush.msra.mxu0 %v2512
        %2600 = vmatpush.msra.mxu0 %v2510
        %2601 = vmatpush.msra.mxu0 %v2508
        %2602 = vmatpush.msra.mxu0 %v2506
        %2603 = vmatpush.msra.mxu0 %v2504
        %2604 = vmatpush.msra.mxu0 %v2502
        %2605 = vmatpush.msra.mxu0 %v2500
        %2606 = vmatpush.msra.mxu0 %v2498
        %2607 = vmatpush.msra.mxu0 %v2496
        %2608 = vmatpush.msra.mxu0 %v2494
        %2609 = vmatmul.f32.gmra.mxu0 %v2489
        %v2610 = vpop.f32.mrf.mxu0
        %v2611 = vadd.f32 %v2534, %v2610
        %2612 = vmatmul.f32.gmra.mxu0 %v2491
        %v2613 = vpop.f32.mrf.mxu0
        %v2614 = vadd.f32 %v2539, %v2613
        %2615 = vdwg.mxu0
        %2616 = vmatpush.msra.mxu0 0.0
        %2617 = vmatpush.msra.mxu0 0.0
        %2618 = vmatpush.msra.mxu0 0.0
        %2619 = vmatpush.msra.mxu0 0.0
        %2620 = vmatpush.msra.mxu0 0.0
        %2621 = vmatpush.msra.mxu0 0.0
        %2622 = vmatpush.msra.mxu0 0.0
        %2623 = vmatpush.msra.mxu0 0.0
        %2624 = vmatpush.msra.mxu0 0.0
        %2625 = vmatpush.msra.mxu0 0.0
        %2626 = vmatpush.msra.mxu0 0.0
        %2627 = vmatpush.msra.mxu0 0.0
        %2628 = vmatpush.msra.mxu0 0.0
        %2629 = vmatpush.msra.mxu0 0.0
        %2630 = vmatpush.msra.mxu0 %v2528
        %2631 = vmatpush.msra.mxu0 %v2526
        %2632 = vmatmul.f32.gmra.mxu0 %v2542
        %v2633 = vpop.f32.mrf.mxu0
        %v2634 = vadd.f32 %v2611, %v2633
        %2635 = vmatmul.f32.gmra.mxu0 %v2545
        %v2636 = vpop.f32.mrf.mxu0
        %v2637 = vadd.f32 %v2614, %v2636
        %2638 = vdwg.mxu0
        %vm2639 = vcmp.ge.f32.partialorder %v2588, 0.0
        %vm2640 = vcmp.ge.f32.partialorder %v2634, 0.0
        %vm2641 = vcmp.ge.f32.partialorder %v2591, 0.0
        %vm2642 = vcmp.ge.f32.partialorder %v2637, 0.0
        %v2643 = vmul.f32 %v2588, 0.01
        %v2644 = vmul.f32 %v2634, 0.01
        %v2645 = vmul.f32 %v2591, 0.01
        %v2646 = vmul.f32 %v2637, 0.01
        %v2647 = vsel %vm2639, %v2588, %v2643
        %v2648 = vsel %vm2640, %v2634, %v2644
        %v2649 = vsel %vm2641, %v2591, %v2645
        %v2650 = vsel %vm2642, %v2637, %v2646
        %2651 = vrot.lane.b32.xlu0 %v2647, 17
        %v2652 = vpop.permute.xlu0 %2651
        %2653 = vrot.lane.b32.xlu0 %v2649, 17
        %v2654 = vpop.permute.xlu0 %2653
        %2655 = vrot.lane.b32.xlu0 %v2648, 17
        %v2656 = vpop.permute.xlu0 %2655
        %2657 = vrot.lane.b32.xlu0 %v2650, 17
        %v2658 = vpop.permute.xlu0 %2657
        %v2659 = vsel %vm904, %v2652, %v2656
        %v2660 = vsel %vm904, %v2654, %v2658
        %v2661 = vsel %vm904, %v2656, %v2652
        %v2662 = vsel %vm904, %v2658, %v2654
        %v2663 = vld [vmem:[#allocation3] sm:$0x3]
        %v2665 = vperm.slane %v2663, 0
        %v2666 = vperm.slane %v2663, 1
        %v2669 = vmul.f32 %v2661, %v2665
        %v2670 = vmul.f32 %v2659, %v2666
        %v2671 = vmul.f32 %v2662, %v2665
        %v2672 = vmul.f32 %v2660, %v2666
        %2673 = vst [vmem:[#allocation2] sm:$0xff] %v2669
        %2674 = vst [vmem:[#allocation2 + $0x8] sm:$0xff] %v2670
        %2675 = vst [vmem:[#allocation2 + $0x10] sm:$0xff] %v2671
        %2676 = vst [vmem:[#allocation2 + $0x18] sm:$0xff] %v2672
        %2677 = vrot.lane.b32.xlu0 %v2647, 16
        %v2678 = vpop.permute.xlu0 %2677
        %2679 = vrot.lane.b32.xlu0 %v2649, 16
        %v2680 = vpop.permute.xlu0 %2679
        %2681 = vrot.lane.b32.xlu0 %v2648, 16
        %v2682 = vpop.permute.xlu0 %2681
        %2683 = vrot.lane.b32.xlu0 %v2650, 16
        %v2684 = vpop.permute.xlu0 %2683
        %v2685 = vsel %vm927, %v2678, %v2682
        %v2686 = vsel %vm927, %v2680, %v2684
        %v2687 = vsel %vm927, %v2682, %v2678
        %v2688 = vsel %vm927, %v2684, %v2680
        %v2689 = vld [vmem:[%s930] sm:$0x3]
        %v2691 = vperm.slane %v2689, 0
        %v2692 = vperm.slane %v2689, 1
        %v2695 = vmul.f32 %v2687, %v2691
        %v2696 = vmul.f32 %v2685, %v2692
        %v2697 = vmul.f32 %v2688, %v2691
        %v2698 = vmul.f32 %v2686, %v2692
        %2699 = vst [vmem:[#allocation2 + $0x20] sm:$0xff] %v2695
        %2700 = vst [vmem:[#allocation2 + $0x28] sm:$0xff] %v2696
        %2701 = vst [vmem:[#allocation2 + $0x30] sm:$0xff] %v2697
        %2702 = vst [vmem:[#allocation2 + $0x38] sm:$0xff] %v2698
        %2703 = vrot.lane.b32.xlu0 %v2647, 15
        %v2704 = vpop.permute.xlu0 %2703
        %2705 = vrot.lane.b32.xlu0 %v2649, 15
        %v2706 = vpop.permute.xlu0 %2705
        %2707 = vrot.lane.b32.xlu0 %v2648, 15
        %v2708 = vpop.permute.xlu0 %2707
        %2709 = vrot.lane.b32.xlu0 %v2650, 15
        %v2710 = vpop.permute.xlu0 %2709
        %v2711 = vsel %vm1069, %v2704, %v2708
        %v2712 = vsel %vm1069, %v2706, %v2710
        %v2713 = vsel %vm1069, %v2708, %v2704
        %v2714 = vsel %vm1069, %v2710, %v2706
        %v2715 = vld [vmem:[%s1072] sm:$0x3]
        %v2717 = vperm.slane %v2715, 0
        %v2718 = vperm.slane %v2715, 1
        %v2721 = vmul.f32 %v2713, %v2717
        %v2722 = vmul.f32 %v2711, %v2718
        %v2723 = vmul.f32 %v2714, %v2717
        %v2724 = vmul.f32 %v2712, %v2718
        %2725 = vst [vmem:[#allocation2 + $0x40] sm:$0xff] %v2721
        %2726 = vst [vmem:[#allocation2 + $0x48] sm:$0xff] %v2722
        %2727 = vst [vmem:[#allocation2 + $0x50] sm:$0xff] %v2723
        %2728 = vst [vmem:[#allocation2 + $0x58] sm:$0xff] %v2724
        %2729 = vrot.lane.b32.xlu0 %v2647, 1
        %v2730 = vpop.permute.xlu0 %2729
        %2731 = vrot.lane.b32.xlu0 %v2649, 1
        %v2732 = vpop.permute.xlu0 %2731
        %2733 = vrot.lane.b32.xlu0 %v2648, 1
        %v2734 = vpop.permute.xlu0 %2733
        %2735 = vrot.lane.b32.xlu0 %v2650, 1
        %v2736 = vpop.permute.xlu0 %2735
        %v2737 = vsel %vm1155, %v2730, %v2734
        %v2738 = vsel %vm1155, %v2732, %v2736
        %v2739 = vsel %vm1155, %v2734, %v2730
        %v2740 = vsel %vm1155, %v2736, %v2732
        %v2741 = vld [vmem:[%s1158] sm:$0x3]
        %v2743 = vperm.slane %v2741, 0
        %v2744 = vperm.slane %v2741, 1
        %v2747 = vmul.f32 %v2739, %v2743
        %v2748 = vmul.f32 %v2737, %v2744
        %v2749 = vmul.f32 %v2740, %v2743
        %v2750 = vmul.f32 %v2738, %v2744
        %2751 = vst [vmem:[#allocation2 + $0x60] sm:$0xff] %v2747
        %2752 = vst [vmem:[#allocation2 + $0x68] sm:$0xff] %v2748
        %2753 = vst [vmem:[#allocation2 + $0x70] sm:$0xff] %v2749
        %2754 = vst [vmem:[#allocation2 + $0x78] sm:$0xff] %v2750
        %2755 = vst [vmem:[#allocation2 + $0x80] sm:$0xff] %v2647
        %2756 = vst [vmem:[#allocation2 + $0x88] sm:$0xff] %v2648
        %2757 = vst [vmem:[#allocation2 + $0x90] sm:$0xff] %v2649
        %2758 = vst [vmem:[#allocation2 + $0x98] sm:$0xff] %v2650
        %2759 = vrot.lane.b32.xlu0 %v2647, 127
        %v2760 = vpop.permute.xlu0 %2759
        %2761 = vrot.lane.b32.xlu0 %v2649, 127
        %v2762 = vpop.permute.xlu0 %2761
        %2763 = vrot.lane.b32.xlu0 %v2648, 127
        %v2764 = vpop.permute.xlu0 %2763
        %2765 = vrot.lane.b32.xlu0 %v2650, 127
        %v2766 = vpop.permute.xlu0 %2765
        %v2767 = vsel %vm1307, %v2760, %v2764
        %v2768 = vsel %vm1307, %v2762, %v2766
        %v2769 = vsel %vm1307, %v2764, %v2760
        %v2770 = vsel %vm1307, %v2766, %v2762
        %v2771 = vld [vmem:[%s1310] sm:$0x3]
        %v2773 = vperm.slane %v2771, 0
        %v2774 = vperm.slane %v2771, 1
        %v2777 = vmul.f32 %v2767, %v2773
        %v2778 = vmul.f32 %v2769, %v2774
        %v2779 = vmul.f32 %v2768, %v2773
        %v2780 = vmul.f32 %v2770, %v2774
        %2781 = vst [vmem:[#allocation2 + $0xa0] sm:$0xff] %v2777
        %2782 = vst [vmem:[#allocation2 + $0xa8] sm:$0xff] %v2778
        %2783 = vst [vmem:[#allocation2 + $0xb0] sm:$0xff] %v2779
        %2784 = vst [vmem:[#allocation2 + $0xb8] sm:$0xff] %v2780
        %2785 = vrot.lane.b32.xlu0 %v2647, 113
        %v2786 = vpop.permute.xlu0 %2785
        %2787 = vrot.lane.b32.xlu0 %v2649, 113
        %v2788 = vpop.permute.xlu0 %2787
        %2789 = vrot.lane.b32.xlu0 %v2648, 113
        %v2790 = vpop.permute.xlu0 %2789
        %2791 = vrot.lane.b32.xlu0 %v2650, 113
        %v2792 = vpop.permute.xlu0 %2791
        %v2793 = vsel %vm1393, %v2786, %v2790
        %v2794 = vsel %vm1393, %v2788, %v2792
        %v2795 = vsel %vm1393, %v2790, %v2786
        %v2796 = vsel %vm1393, %v2792, %v2788
        %v2797 = vld [vmem:[%s1396] sm:$0x3]
        %v2799 = vperm.slane %v2797, 0
        %v2800 = vperm.slane %v2797, 1
        %v2803 = vmul.f32 %v2793, %v2799
        %v2804 = vmul.f32 %v2795, %v2800
        %v2805 = vmul.f32 %v2794, %v2799
        %v2806 = vmul.f32 %v2796, %v2800
        %2807 = vst [vmem:[#allocation2 + $0xc0] sm:$0xff] %v2803
        %2808 = vst [vmem:[#allocation2 + $0xc8] sm:$0xff] %v2804
        %2809 = vst [vmem:[#allocation2 + $0xd0] sm:$0xff] %v2805
        %2810 = vst [vmem:[#allocation2 + $0xd8] sm:$0xff] %v2806
        %2811 = vrot.lane.b32.xlu0 %v2647, 112
        %v2812 = vpop.permute.xlu0 %2811
        %2813 = vrot.lane.b32.xlu0 %v2649, 112
        %v2814 = vpop.permute.xlu0 %2813
        %2815 = vrot.lane.b32.xlu0 %v2648, 112
        %v2816 = vpop.permute.xlu0 %2815
        %2817 = vrot.lane.b32.xlu0 %v2650, 112
        %v2818 = vpop.permute.xlu0 %2817
        %v2819 = vsel %vm1479, %v2812, %v2816
        %v2820 = vsel %vm1479, %v2814, %v2818
        %v2821 = vsel %vm1479, %v2816, %v2812
        %v2822 = vsel %vm1479, %v2818, %v2814
        %v2823 = vld [vmem:[%s1482] sm:$0x3]
        %v2825 = vperm.slane %v2823, 0
        %v2826 = vperm.slane %v2823, 1
        %v2829 = vmul.f32 %v2819, %v2825
        %v2830 = vmul.f32 %v2821, %v2826
        %v2831 = vmul.f32 %v2820, %v2825
        %v2832 = vmul.f32 %v2822, %v2826
        %2833 = vst [vmem:[#allocation2 + $0xe0] sm:$0xff] %v2829
        %2834 = vst [vmem:[#allocation2 + $0xe8] sm:$0xff] %v2830
        %2835 = vst [vmem:[#allocation2 + $0xf0] sm:$0xff] %v2831
        %2836 = vst [vmem:[#allocation2 + $0xf8] sm:$0xff] %v2832
        %2837 = vrot.lane.b32.xlu0 %v2647, 111
        %v2838 = vpop.permute.xlu0 %2837
        %2839 = vrot.lane.b32.xlu0 %v2649, 111
        %v2840 = vpop.permute.xlu0 %2839
        %2841 = vrot.lane.b32.xlu0 %v2648, 111
        %v2842 = vpop.permute.xlu0 %2841
        %2843 = vrot.lane.b32.xlu0 %v2650, 111
        %v2844 = vpop.permute.xlu0 %2843
        %v2845 = vsel %vm1565, %v2838, %v2842
        %v2846 = vsel %vm1565, %v2840, %v2844
        %v2847 = vsel %vm1565, %v2842, %v2838
        %v2848 = vsel %vm1565, %v2844, %v2840
        %v2849 = vld [vmem:[%s1568] sm:$0x3]
        %v2851 = vperm.slane %v2849, 0
        %v2852 = vperm.slane %v2849, 1
        %v2855 = vmul.f32 %v2845, %v2851
        %v2856 = vmul.f32 %v2847, %v2852
        %v2857 = vmul.f32 %v2846, %v2851
        %v2858 = vmul.f32 %v2848, %v2852
        %2859 = vst [vmem:[#allocation2 + $0x100] sm:$0xff] %v2855
        %2860 = vst [vmem:[#allocation2 + $0x108] sm:$0xff] %v2856
        %2861 = vst [vmem:[#allocation2 + $0x110] sm:$0xff] %v2857
        %2862 = vst [vmem:[#allocation2 + $0x118] sm:$0xff] %v2858
        %v2863 = vld [vmem:[%s10] sm:$0x77]
        %v2864 = vld [vmem:[#allocation2] sm:$0xff]
        %v2865 = vld [vmem:[#allocation2 + $0x8] sm:$0xff]
        %v2866 = vld [vmem:[#allocation2 + $0x10] sm:$0xff]
        %v2867 = vld [vmem:[#allocation2 + $0x18] sm:$0xff]
        %v2868 = vld [vmem:[#allocation2 + $0x20] sm:$0xff]
        %v2869 = vld [vmem:[#allocation2 + $0x28] sm:$0xff]
        %v2870 = vld [vmem:[#allocation2 + $0x30] sm:$0xff]
        %v2871 = vld [vmem:[#allocation2 + $0x38] sm:$0xff]
        %v2872 = vld [vmem:[#allocation2 + $0x40] sm:$0xff]
        %v2873 = vld [vmem:[#allocation2 + $0x48] sm:$0xff]
        %v2874 = vld [vmem:[#allocation2 + $0x50] sm:$0xff]
        %v2875 = vld [vmem:[#allocation2 + $0x58] sm:$0xff]
        %v2876 = vld [vmem:[#allocation2 + $0x60] sm:$0xff]
        %v2877 = vld [vmem:[#allocation2 + $0x68] sm:$0xff]
        %v2878 = vld [vmem:[#allocation2 + $0x70] sm:$0xff]
        %v2879 = vld [vmem:[#allocation2 + $0x78] sm:$0xff]
        %v2880 = vld [vmem:[#allocation2 + $0x80] sm:$0xff]
        %v2881 = vld [vmem:[#allocation2 + $0x88] sm:$0xff]
        %v2882 = vld [vmem:[#allocation2 + $0x90] sm:$0xff]
        %v2883 = vld [vmem:[#allocation2 + $0x98] sm:$0xff]
        %v2884 = vld [vmem:[#allocation2 + $0xa0] sm:$0xff]
        %v2885 = vld [vmem:[#allocation2 + $0xa8] sm:$0xff]
        %v2886 = vld [vmem:[#allocation2 + $0xb0] sm:$0xff]
        %v2887 = vld [vmem:[#allocation2 + $0xb8] sm:$0xff]
        %v2888 = vld [vmem:[#allocation2 + $0xc0] sm:$0xff]
        %v2889 = vld [vmem:[#allocation2 + $0xc8] sm:$0xff]
        %v2890 = vld [vmem:[#allocation2 + $0xd0] sm:$0xff]
        %v2891 = vld [vmem:[#allocation2 + $0xd8] sm:$0xff]
        %v2892 = vld [vmem:[#allocation2 + $0xe0] sm:$0xff]
        %v2893 = vld [vmem:[#allocation2 + $0xe8] sm:$0xff]
        %v2894 = vld [vmem:[#allocation2 + $0xf0] sm:$0xff]
        %v2895 = vld [vmem:[#allocation2 + $0xf8] sm:$0xff]
        %v2896 = vld [vmem:[#allocation2 + $0x100] sm:$0xff]
        %v2897 = vld [vmem:[#allocation2 + $0x108] sm:$0xff]
        %v2898 = vld [vmem:[#allocation2 + $0x110] sm:$0xff]
        %v2899 = vld [vmem:[#allocation2 + $0x118] sm:$0xff]
        %v2900 = vld [vmem:[#allocation14] sm:$0x7]
        %2902 = vset.pattern.permute.xlu0 0
        %2903 = vperm.xlu0 %2902, %v2900
        %v2904 = vpop.permute.xlu0 %2903
        %2907 = vst [vmem:[#allocation1] ss:$2 sm:$0xff] %v2863
        %v2908 = vld.sshfl [vmem:[#allocation1] sm:$0xff pattern:$0x75316420]
        %v2909 = vld.sshfl [vmem:[#allocation1 + $0x8] sm:$0xff pattern:$0x75316420]
        %v2911 = vsel %vm1973, %v2909, 0
        %2913 = vmatpush.msra.mxu0 %v2894
        %2914 = vmatpush.msra.mxu0 %v2892
        %2915 = vmatpush.msra.mxu0 %v2890
        %2916 = vmatpush.msra.mxu0 %v2888
        %2917 = vmatpush.msra.mxu0 %v2886
        %2918 = vmatpush.msra.mxu0 %v2884
        %2919 = vmatpush.msra.mxu0 %v2882
        %2920 = vmatpush.msra.mxu0 %v2880
        %2921 = vmatpush.msra.mxu0 %v2878
        %2922 = vmatpush.msra.mxu0 %v2876
        %2923 = vmatpush.msra.mxu0 %v2874
        %2924 = vmatpush.msra.mxu0 %v2872
        %2925 = vmatpush.msra.mxu0 %v2870
        %2926 = vmatpush.msra.mxu0 %v2868
        %2927 = vmatpush.msra.mxu0 %v2866
        %2928 = vmatpush.msra.mxu0 %v2864
        %2929 = vmatmul.f32.gmra.mxu0 %v2908
        %v2930 = vpop.f32.mrf.mxu0
        %v2931 = vadd.f32 %v2904, %v2930
        %2932 = vdwg.mxu0
        %2933 = vmatpush.msra.mxu0 0.0
        %2934 = vmatpush.msra.mxu0 0.0
        %2935 = vmatpush.msra.mxu0 0.0
        %2936 = vmatpush.msra.mxu0 0.0
        %2937 = vmatpush.msra.mxu0 0.0
        %2938 = vmatpush.msra.mxu0 0.0
        %2939 = vmatpush.msra.mxu0 0.0
        %2940 = vmatpush.msra.mxu0 0.0
        %2941 = vmatpush.msra.mxu0 0.0
        %2942 = vmatpush.msra.mxu0 0.0
        %2943 = vmatpush.msra.mxu0 0.0
        %2944 = vmatpush.msra.mxu0 0.0
        %2945 = vmatpush.msra.mxu0 0.0
        %2946 = vmatpush.msra.mxu0 0.0
        %2947 = vmatpush.msra.mxu0 %v2898
        %2948 = vmatpush.msra.mxu0 %v2896
        %2949 = vmatmul.f32.gmra.mxu0 %v2911
        %v2950 = vpop.f32.mrf.mxu0
        %v2951 = vadd.f32 %v2931, %v2950
        %2952 = vdwg.mxu0
        %2953 = vmatpush.msra.mxu0 %v2895
        %2954 = vmatpush.msra.mxu0 %v2893
        %2955 = vmatpush.msra.mxu0 %v2891
        %2956 = vmatpush.msra.mxu0 %v2889
        %2957 = vmatpush.msra.mxu0 %v2887
        %2958 = vmatpush.msra.mxu0 %v2885
        %2959 = vmatpush.msra.mxu0 %v2883
        %2960 = vmatpush.msra.mxu0 %v2881
        %2961 = vmatpush.msra.mxu0 %v2879
        %2962 = vmatpush.msra.mxu0 %v2877
        %2963 = vmatpush.msra.mxu0 %v2875
        %2964 = vmatpush.msra.mxu0 %v2873
        %2965 = vmatpush.msra.mxu0 %v2871
        %2966 = vmatpush.msra.mxu0 %v2869
        %2967 = vmatpush.msra.mxu0 %v2867
        %2968 = vmatpush.msra.mxu0 %v2865
        %2969 = vmatmul.f32.gmra.mxu0 %v2908
        %v2970 = vpop.f32.mrf.mxu0
        %v2971 = vadd.f32 %v2904, %v2970
        %2972 = vdwg.mxu0
        %2973 = vmatpush.msra.mxu0 0.0
        %2974 = vmatpush.msra.mxu0 0.0
        %2975 = vmatpush.msra.mxu0 0.0
        %2976 = vmatpush.msra.mxu0 0.0
        %2977 = vmatpush.msra.mxu0 0.0
        %2978 = vmatpush.msra.mxu0 0.0
        %2979 = vmatpush.msra.mxu0 0.0
        %2980 = vmatpush.msra.mxu0 0.0
        %2981 = vmatpush.msra.mxu0 0.0
        %2982 = vmatpush.msra.mxu0 0.0
        %2983 = vmatpush.msra.mxu0 0.0
        %2984 = vmatpush.msra.mxu0 0.0
        %2985 = vmatpush.msra.mxu0 0.0
        %2986 = vmatpush.msra.mxu0 0.0
        %2987 = vmatpush.msra.mxu0 %v2899
        %2988 = vmatpush.msra.mxu0 %v2897
        %2989 = vmatmul.f32.gmra.mxu0 %v2911
        %v2990 = vpop.f32.mrf.mxu0
        %v2991 = vadd.f32 %v2971, %v2990
        %2992 = vdwg.mxu0
        %v2995 = vrot.slane %v2991, 4
        %vm2996 = vcmask 1043456
        %v2997 = vsel %vm2996, %v2951, %v2995
        %v2999 = vadd.f32 %v889, %v2997
        %v3000 = vmax.f32 %v2999, 0.0
        %3001 = vst [vmem:[%s881] sm:$0x77] %v3000
        %v3002 = vld [vmem:[#allocation16] sm:$0xff]
        %v3003 = vld [vmem:[#allocation16 + $0x8] sm:$0xff]
        %v3004 = vld [vmem:[#allocation3] sm:$0x3]
        %v3006 = vperm.slane %v3004, 0
        %v3007 = vperm.slane %v3004, 1
        %v3010 = vmul.f32 %v906, %v3006
        %v3011 = vmul.f32 %v905, %v3007
        %s3012 = scalar_lea.vmem [#allocation16], 16
        %v3013 = vld [vmem:[%s3012] sm:$0xff]
        %v3014 = vld [vmem:[%s3012 + $0x8] sm:$0xff]
        %v3015 = vld [vmem:[%s930] sm:$0x3]
        %v3017 = vperm.slane %v3015, 0
        %v3018 = vperm.slane %v3015, 1
        %v3021 = vmul.f32 %v929, %v3017
        %v3022 = vmul.f32 %v928, %v3018
        %v3024 = vsel %vm939, %v3013, 0
        %v3027 = vsel %vm939, %v3014, 0
        %v3030 = vsel %vm946, %v3021, 0
        %v3033 = vsel %vm946, %v3022, 0
        %3035 = vmatpush.msra.mxu0 0.0
        %3036 = vmatpush.msra.mxu0 0.0
        %3037 = vmatpush.msra.mxu0 0.0
        %3038 = vmatpush.msra.mxu0 0.0
        %3039 = vmatpush.msra.mxu0 0.0
        %3040 = vmatpush.msra.mxu0 0.0
        %3041 = vmatpush.msra.mxu0 0.0
        %3042 = vmatpush.msra.mxu0 0.0
        %3043 = vmatpush.msra.mxu0 0.0
        %3044 = vmatpush.msra.mxu0 0.0
        %3045 = vmatpush.msra.mxu0 0.0
        %3046 = vmatpush.msra.mxu0 0.0
        %3047 = vmatpush.msra.mxu0 0.0
        %3048 = vmatpush.msra.mxu0 0.0
        %3049 = vmatpush.msra.mxu0 0.0
        %3050 = vmatpush.msra.mxu0 %v3030
        %3051 = vmatmul.f32.gmra.mxu0 %v3024
        %v3052 = vpop.f32.mrf.mxu0
        %v3053 = vadd.f32 0.0, %v3052
        %3054 = vmatmul.f32.gmra.mxu0 %v3027
        %v3055 = vpop.f32.mrf.mxu0
        %v3056 = vadd.f32 0.0, %v3055
        %3057 = vdwg.mxu0
        %3058 = vmatpush.msra.mxu0 0.0
        %3059 = vmatpush.msra.mxu0 0.0
        %3060 = vmatpush.msra.mxu0 0.0
        %3061 = vmatpush.msra.mxu0 0.0
        %3062 = vmatpush.msra.mxu0 0.0
        %3063 = vmatpush.msra.mxu0 0.0
        %3064 = vmatpush.msra.mxu0 0.0
        %3065 = vmatpush.msra.mxu0 0.0
        %3066 = vmatpush.msra.mxu0 0.0
        %3067 = vmatpush.msra.mxu0 0.0
        %3068 = vmatpush.msra.mxu0 0.0
        %3069 = vmatpush.msra.mxu0 0.0
        %3070 = vmatpush.msra.mxu0 0.0
        %3071 = vmatpush.msra.mxu0 0.0
        %3072 = vmatpush.msra.mxu0 0.0
        %3073 = vmatpush.msra.mxu0 %v3033
        %3074 = vmatmul.f32.gmra.mxu0 %v3024
        %v3075 = vpop.f32.mrf.mxu0
        %v3076 = vadd.f32 0.0, %v3075
        %3077 = vmatmul.f32.gmra.mxu0 %v3027
        %v3078 = vpop.f32.mrf.mxu0
        %v3079 = vadd.f32 0.0, %v3078
        %3080 = vdwg.mxu0
        %v3082 = vsel %vm939, %v3002, 0
        %v3085 = vsel %vm939, %v3003, 0
        %v3088 = vsel %vm946, %v3010, 0
        %v3091 = vsel %vm946, %v3011, 0
        %3093 = vmatpush.msra.mxu0 0.0
        %3094 = vmatpush.msra.mxu0 0.0
        %3095 = vmatpush.msra.mxu0 0.0
        %3096 = vmatpush.msra.mxu0 0.0
        %3097 = vmatpush.msra.mxu0 0.0
        %3098 = vmatpush.msra.mxu0 0.0
        %3099 = vmatpush.msra.mxu0 0.0
        %3100 = vmatpush.msra.mxu0 0.0
        %3101 = vmatpush.msra.mxu0 0.0
        %3102 = vmatpush.msra.mxu0 0.0
        %3103 = vmatpush.msra.mxu0 0.0
        %3104 = vmatpush.msra.mxu0 0.0
        %3105 = vmatpush.msra.mxu0 0.0
        %3106 = vmatpush.msra.mxu0 0.0
        %3107 = vmatpush.msra.mxu0 0.0
        %3108 = vmatpush.msra.mxu0 %v3088
        %3109 = vmatmul.f32.gmra.mxu0 %v3082
        %v3110 = vpop.f32.mrf.mxu0
        %v3111 = vadd.f32 %v3053, %v3110
        %3112 = vmatmul.f32.gmra.mxu0 %v3085
        %v3113 = vpop.f32.mrf.mxu0
        %v3114 = vadd.f32 %v3056, %v3113
        %3115 = vdwg.mxu0
        %3116 = vmatpush.msra.mxu0 0.0
        %3117 = vmatpush.msra.mxu0 0.0
        %3118 = vmatpush.msra.mxu0 0.0
        %3119 = vmatpush.msra.mxu0 0.0
        %3120 = vmatpush.msra.mxu0 0.0
        %3121 = vmatpush.msra.mxu0 0.0
        %3122 = vmatpush.msra.mxu0 0.0
        %3123 = vmatpush.msra.mxu0 0.0
        %3124 = vmatpush.msra.mxu0 0.0
        %3125 = vmatpush.msra.mxu0 0.0
        %3126 = vmatpush.msra.mxu0 0.0
        %3127 = vmatpush.msra.mxu0 0.0
        %3128 = vmatpush.msra.mxu0 0.0
        %3129 = vmatpush.msra.mxu0 0.0
        %3130 = vmatpush.msra.mxu0 0.0
        %3131 = vmatpush.msra.mxu0 %v3091
        %3132 = vmatmul.f32.gmra.mxu0 %v3082
        %v3133 = vpop.f32.mrf.mxu0
        %v3134 = vadd.f32 %v3076, %v3133
        %3135 = vmatmul.f32.gmra.mxu0 %v3085
        %v3136 = vpop.f32.mrf.mxu0
        %v3137 = vadd.f32 %v3079, %v3136
        %3138 = vdwg.mxu0
        %s3139 = scalar_lea.vmem [#allocation16], 32
        %v3140 = vld [vmem:[%s3139] sm:$0xff]
        %v3141 = vld [vmem:[%s3139 + $0x8] sm:$0xff]
        %v3142 = vld [vmem:[%s1072] sm:$0x3]
        %v3144 = vperm.slane %v3142, 0
        %v3145 = vperm.slane %v3142, 1
        %v3148 = vmul.f32 %v1071, %v3144
        %v3149 = vmul.f32 %v1070, %v3145
        %v3151 = vsel %vm939, %v3140, 0
        %v3154 = vsel %vm939, %v3141, 0
        %v3157 = vsel %vm946, %v3148, 0
        %v3160 = vsel %vm946, %v3149, 0
        %3162 = vmatpush.msra.mxu0 0.0
        %3163 = vmatpush.msra.mxu0 0.0
        %3164 = vmatpush.msra.mxu0 0.0
        %3165 = vmatpush.msra.mxu0 0.0
        %3166 = vmatpush.msra.mxu0 0.0
        %3167 = vmatpush.msra.mxu0 0.0
        %3168 = vmatpush.msra.mxu0 0.0
        %3169 = vmatpush.msra.mxu0 0.0
        %3170 = vmatpush.msra.mxu0 0.0
        %3171 = vmatpush.msra.mxu0 0.0
        %3172 = vmatpush.msra.mxu0 0.0
        %3173 = vmatpush.msra.mxu0 0.0
        %3174 = vmatpush.msra.mxu0 0.0
        %3175 = vmatpush.msra.mxu0 0.0
        %3176 = vmatpush.msra.mxu0 0.0
        %3177 = vmatpush.msra.mxu0 %v3157
        %3178 = vmatmul.f32.gmra.mxu0 %v3151
        %v3179 = vpop.f32.mrf.mxu0
        %v3180 = vadd.f32 0.0, %v3179
        %3181 = vmatmul.f32.gmra.mxu0 %v3154
        %v3182 = vpop.f32.mrf.mxu0
        %v3183 = vadd.f32 0.0, %v3182
        %3184 = vdwg.mxu0
        %3185 = vmatpush.msra.mxu0 0.0
        %3186 = vmatpush.msra.mxu0 0.0
        %3187 = vmatpush.msra.mxu0 0.0
        %3188 = vmatpush.msra.mxu0 0.0
        %3189 = vmatpush.msra.mxu0 0.0
        %3190 = vmatpush.msra.mxu0 0.0
        %3191 = vmatpush.msra.mxu0 0.0
        %3192 = vmatpush.msra.mxu0 0.0
        %3193 = vmatpush.msra.mxu0 0.0
        %3194 = vmatpush.msra.mxu0 0.0
        %3195 = vmatpush.msra.mxu0 0.0
        %3196 = vmatpush.msra.mxu0 0.0
        %3197 = vmatpush.msra.mxu0 0.0
        %3198 = vmatpush.msra.mxu0 0.0
        %3199 = vmatpush.msra.mxu0 0.0
        %3200 = vmatpush.msra.mxu0 %v3160
        %3201 = vmatmul.f32.gmra.mxu0 %v3151
        %v3202 = vpop.f32.mrf.mxu0
        %v3203 = vadd.f32 0.0, %v3202
        %3204 = vmatmul.f32.gmra.mxu0 %v3154
        %v3205 = vpop.f32.mrf.mxu0
        %v3206 = vadd.f32 0.0, %v3205
        %3207 = vdwg.mxu0
        %v3208 = vadd.f32 %v3111, %v3180
        %v3209 = vadd.f32 %v3134, %v3203
        %v3210 = vadd.f32 %v3114, %v3183
        %v3211 = vadd.f32 %v3137, %v3206
        %s3212 = scalar_lea.vmem [#allocation16], 48
        %v3213 = vld [vmem:[%s3212] sm:$0xff]
        %v3214 = vld [vmem:[%s3212 + $0x8] sm:$0xff]
        %v3215 = vld [vmem:[%s1158] sm:$0x3]
        %v3217 = vperm.slane %v3215, 0
        %v3218 = vperm.slane %v3215, 1
        %v3221 = vmul.f32 %v1157, %v3217
        %v3222 = vmul.f32 %v1156, %v3218
        %v3224 = vsel %vm939, %v3213, 0
        %v3227 = vsel %vm939, %v3214, 0
        %v3230 = vsel %vm946, %v3221, 0
        %v3233 = vsel %vm946, %v3222, 0
        %3235 = vmatpush.msra.mxu0 0.0
        %3236 = vmatpush.msra.mxu0 0.0
        %3237 = vmatpush.msra.mxu0 0.0
        %3238 = vmatpush.msra.mxu0 0.0
        %3239 = vmatpush.msra.mxu0 0.0
        %3240 = vmatpush.msra.mxu0 0.0
        %3241 = vmatpush.msra.mxu0 0.0
        %3242 = vmatpush.msra.mxu0 0.0
        %3243 = vmatpush.msra.mxu0 0.0
        %3244 = vmatpush.msra.mxu0 0.0
        %3245 = vmatpush.msra.mxu0 0.0
        %3246 = vmatpush.msra.mxu0 0.0
        %3247 = vmatpush.msra.mxu0 0.0
        %3248 = vmatpush.msra.mxu0 0.0
        %3249 = vmatpush.msra.mxu0 0.0
        %3250 = vmatpush.msra.mxu0 %v3230
        %3251 = vmatmul.f32.gmra.mxu0 %v3224
        %v3252 = vpop.f32.mrf.mxu0
        %v3253 = vadd.f32 0.0, %v3252
        %3254 = vmatmul.f32.gmra.mxu0 %v3227
        %v3255 = vpop.f32.mrf.mxu0
        %v3256 = vadd.f32 0.0, %v3255
        %3257 = vdwg.mxu0
        %3258 = vmatpush.msra.mxu0 0.0
        %3259 = vmatpush.msra.mxu0 0.0
        %3260 = vmatpush.msra.mxu0 0.0
        %3261 = vmatpush.msra.mxu0 0.0
        %3262 = vmatpush.msra.mxu0 0.0
        %3263 = vmatpush.msra.mxu0 0.0
        %3264 = vmatpush.msra.mxu0 0.0
        %3265 = vmatpush.msra.mxu0 0.0
        %3266 = vmatpush.msra.mxu0 0.0
        %3267 = vmatpush.msra.mxu0 0.0
        %3268 = vmatpush.msra.mxu0 0.0
        %3269 = vmatpush.msra.mxu0 0.0
        %3270 = vmatpush.msra.mxu0 0.0
        %3271 = vmatpush.msra.mxu0 0.0
        %3272 = vmatpush.msra.mxu0 0.0
        %3273 = vmatpush.msra.mxu0 %v3233
        %3274 = vmatmul.f32.gmra.mxu0 %v3224
        %v3275 = vpop.f32.mrf.mxu0
        %v3276 = vadd.f32 0.0, %v3275
        %3277 = vmatmul.f32.gmra.mxu0 %v3227
        %v3278 = vpop.f32.mrf.mxu0
        %v3279 = vadd.f32 0.0, %v3278
        %3280 = vdwg.mxu0
        %v3281 = vadd.f32 %v3208, %v3253
        %v3282 = vadd.f32 %v3209, %v3276
        %v3283 = vadd.f32 %v3210, %v3256
        %v3284 = vadd.f32 %v3211, %v3279
        %s3285 = scalar_lea.vmem [#allocation16], 64
        %v3286 = vld [vmem:[%s3285] sm:$0xff]
        %v3287 = vld [vmem:[%s3285 + $0x8] sm:$0xff]
        %3288 = vst [vmem:[#allocation1] ss:$2 sm:$0xff] %v889
        %v3289 = vld.sshfl [vmem:[#allocation1] sm:$0xff pattern:$0x75316420]
        %v3290 = vld.sshfl [vmem:[#allocation1 + $0x8] sm:$0xff pattern:$0x75316420]
        %v3292 = vsel %vm939, %v3286, 0
        %v3295 = vsel %vm939, %v3287, 0
        %v3297 = vsel %vm946, %v3289, 0
        %v3299 = vsel %vm946, %v3290, 0
        %3301 = vmatpush.msra.mxu0 0.0
        %3302 = vmatpush.msra.mxu0 0.0
        %3303 = vmatpush.msra.mxu0 0.0
        %3304 = vmatpush.msra.mxu0 0.0
        %3305 = vmatpush.msra.mxu0 0.0
        %3306 = vmatpush.msra.mxu0 0.0
        %3307 = vmatpush.msra.mxu0 0.0
        %3308 = vmatpush.msra.mxu0 0.0
        %3309 = vmatpush.msra.mxu0 0.0
        %3310 = vmatpush.msra.mxu0 0.0
        %3311 = vmatpush.msra.mxu0 0.0
        %3312 = vmatpush.msra.mxu0 0.0
        %3313 = vmatpush.msra.mxu0 0.0
        %3314 = vmatpush.msra.mxu0 0.0
        %3315 = vmatpush.msra.mxu0 0.0
        %3316 = vmatpush.msra.mxu0 %v3297
        %3317 = vmatmul.f32.gmra.mxu0 %v3292
        %v3318 = vpop.f32.mrf.mxu0
        %v3319 = vadd.f32 0.0, %v3318
        %3320 = vmatmul.f32.gmra.mxu0 %v3295
        %v3321 = vpop.f32.mrf.mxu0
        %v3322 = vadd.f32 0.0, %v3321
        %3323 = vdwg.mxu0
        %3324 = vmatpush.msra.mxu0 0.0
        %3325 = vmatpush.msra.mxu0 0.0
        %3326 = vmatpush.msra.mxu0 0.0
        %3327 = vmatpush.msra.mxu0 0.0
        %3328 = vmatpush.msra.mxu0 0.0
        %3329 = vmatpush.msra.mxu0 0.0
        %3330 = vmatpush.msra.mxu0 0.0
        %3331 = vmatpush.msra.mxu0 0.0
        %3332 = vmatpush.msra.mxu0 0.0
        %3333 = vmatpush.msra.mxu0 0.0
        %3334 = vmatpush.msra.mxu0 0.0
        %3335 = vmatpush.msra.mxu0 0.0
        %3336 = vmatpush.msra.mxu0 0.0
        %3337 = vmatpush.msra.mxu0 0.0
        %3338 = vmatpush.msra.mxu0 0.0
        %3339 = vmatpush.msra.mxu0 %v3299
        %3340 = vmatmul.f32.gmra.mxu0 %v3292
        %v3341 = vpop.f32.mrf.mxu0
        %v3342 = vadd.f32 0.0, %v3341
        %3343 = vmatmul.f32.gmra.mxu0 %v3295
        %v3344 = vpop.f32.mrf.mxu0
        %v3345 = vadd.f32 0.0, %v3344
        %3346 = vdwg.mxu0
        %v3347 = vadd.f32 %v3281, %v3319
        %v3348 = vadd.f32 %v3282, %v3342
        %v3349 = vadd.f32 %v3283, %v3322
        %v3350 = vadd.f32 %v3284, %v3345
        %s3351 = scalar_lea.vmem [#allocation16], 80
        %v3352 = vld [vmem:[%s3351] sm:$0xff]
        %v3353 = vld [vmem:[%s3351 + $0x8] sm:$0xff]
        %v3354 = vld [vmem:[%s1310] sm:$0x3]
        %v3356 = vperm.slane %v3354, 0
        %v3357 = vperm.slane %v3354, 1
        %v3360 = vmul.f32 %v1308, %v3356
        %v3361 = vmul.f32 %v1309, %v3357
        %v3363 = vsel %vm939, %v3352, 0
        %v3366 = vsel %vm939, %v3353, 0
        %v3369 = vsel %vm946, %v3360, 0
        %v3372 = vsel %vm946, %v3361, 0
        %3374 = vmatpush.msra.mxu0 0.0
        %3375 = vmatpush.msra.mxu0 0.0
        %3376 = vmatpush.msra.mxu0 0.0
        %3377 = vmatpush.msra.mxu0 0.0
        %3378 = vmatpush.msra.mxu0 0.0
        %3379 = vmatpush.msra.mxu0 0.0
        %3380 = vmatpush.msra.mxu0 0.0
        %3381 = vmatpush.msra.mxu0 0.0
        %3382 = vmatpush.msra.mxu0 0.0
        %3383 = vmatpush.msra.mxu0 0.0
        %3384 = vmatpush.msra.mxu0 0.0
        %3385 = vmatpush.msra.mxu0 0.0
        %3386 = vmatpush.msra.mxu0 0.0
        %3387 = vmatpush.msra.mxu0 0.0
        %3388 = vmatpush.msra.mxu0 0.0
        %3389 = vmatpush.msra.mxu0 %v3369
        %3390 = vmatmul.f32.gmra.mxu0 %v3363
        %v3391 = vpop.f32.mrf.mxu0
        %v3392 = vadd.f32 0.0, %v3391
        %3393 = vmatmul.f32.gmra.mxu0 %v3366
        %v3394 = vpop.f32.mrf.mxu0
        %v3395 = vadd.f32 0.0, %v3394
        %3396 = vdwg.mxu0
        %3397 = vmatpush.msra.mxu0 0.0
        %3398 = vmatpush.msra.mxu0 0.0
        %3399 = vmatpush.msra.mxu0 0.0
        %3400 = vmatpush.msra.mxu0 0.0
        %3401 = vmatpush.msra.mxu0 0.0
        %3402 = vmatpush.msra.mxu0 0.0
        %3403 = vmatpush.msra.mxu0 0.0
        %3404 = vmatpush.msra.mxu0 0.0
        %3405 = vmatpush.msra.mxu0 0.0
        %3406 = vmatpush.msra.mxu0 0.0
        %3407 = vmatpush.msra.mxu0 0.0
        %3408 = vmatpush.msra.mxu0 0.0
        %3409 = vmatpush.msra.mxu0 0.0
        %3410 = vmatpush.msra.mxu0 0.0
        %3411 = vmatpush.msra.mxu0 0.0
        %3412 = vmatpush.msra.mxu0 %v3372
        %3413 = vmatmul.f32.gmra.mxu0 %v3363
        %v3414 = vpop.f32.mrf.mxu0
        %v3415 = vadd.f32 0.0, %v3414
        %3416 = vmatmul.f32.gmra.mxu0 %v3366
        %v3417 = vpop.f32.mrf.mxu0
        %v3418 = vadd.f32 0.0, %v3417
        %3419 = vdwg.mxu0
        %v3420 = vadd.f32 %v3347, %v3392
        %v3421 = vadd.f32 %v3348, %v3415
        %v3422 = vadd.f32 %v3349, %v3395
        %v3423 = vadd.f32 %v3350, %v3418
        %s3424 = scalar_lea.vmem [#allocation16], 96
        %v3425 = vld [vmem:[%s3424] sm:$0xff]
        %v3426 = vld [vmem:[%s3424 + $0x8] sm:$0xff]
        %v3427 = vld [vmem:[%s1396] sm:$0x3]
        %v3429 = vperm.slane %v3427, 0
        %v3430 = vperm.slane %v3427, 1
        %v3433 = vmul.f32 %v1394, %v3429
        %v3434 = vmul.f32 %v1395, %v3430
        %v3436 = vsel %vm939, %v3425, 0
        %v3439 = vsel %vm939, %v3426, 0
        %v3442 = vsel %vm946, %v3433, 0
        %v3445 = vsel %vm946, %v3434, 0
        %3447 = vmatpush.msra.mxu0 0.0
        %3448 = vmatpush.msra.mxu0 0.0
        %3449 = vmatpush.msra.mxu0 0.0
        %3450 = vmatpush.msra.mxu0 0.0
        %3451 = vmatpush.msra.mxu0 0.0
        %3452 = vmatpush.msra.mxu0 0.0
        %3453 = vmatpush.msra.mxu0 0.0
        %3454 = vmatpush.msra.mxu0 0.0
        %3455 = vmatpush.msra.mxu0 0.0
        %3456 = vmatpush.msra.mxu0 0.0
        %3457 = vmatpush.msra.mxu0 0.0
        %3458 = vmatpush.msra.mxu0 0.0
        %3459 = vmatpush.msra.mxu0 0.0
        %3460 = vmatpush.msra.mxu0 0.0
        %3461 = vmatpush.msra.mxu0 0.0
        %3462 = vmatpush.msra.mxu0 %v3442
        %3463 = vmatmul.f32.gmra.mxu0 %v3436
        %v3464 = vpop.f32.mrf.mxu0
        %v3465 = vadd.f32 0.0, %v3464
        %3466 = vmatmul.f32.gmra.mxu0 %v3439
        %v3467 = vpop.f32.mrf.mxu0
        %v3468 = vadd.f32 0.0, %v3467
        %3469 = vdwg.mxu0
        %3470 = vmatpush.msra.mxu0 0.0
        %3471 = vmatpush.msra.mxu0 0.0
        %3472 = vmatpush.msra.mxu0 0.0
        %3473 = vmatpush.msra.mxu0 0.0
        %3474 = vmatpush.msra.mxu0 0.0
        %3475 = vmatpush.msra.mxu0 0.0
        %3476 = vmatpush.msra.mxu0 0.0
        %3477 = vmatpush.msra.mxu0 0.0
        %3478 = vmatpush.msra.mxu0 0.0
        %3479 = vmatpush.msra.mxu0 0.0
        %3480 = vmatpush.msra.mxu0 0.0
        %3481 = vmatpush.msra.mxu0 0.0
        %3482 = vmatpush.msra.mxu0 0.0
        %3483 = vmatpush.msra.mxu0 0.0
        %3484 = vmatpush.msra.mxu0 0.0
        %3485 = vmatpush.msra.mxu0 %v3445
        %3486 = vmatmul.f32.gmra.mxu0 %v3436
        %v3487 = vpop.f32.mrf.mxu0
        %v3488 = vadd.f32 0.0, %v3487
        %3489 = vmatmul.f32.gmra.mxu0 %v3439
        %v3490 = vpop.f32.mrf.mxu0
        %v3491 = vadd.f32 0.0, %v3490
        %3492 = vdwg.mxu0
        %v3493 = vadd.f32 %v3420, %v3465
        %v3494 = vadd.f32 %v3421, %v3488
        %v3495 = vadd.f32 %v3422, %v3468
        %v3496 = vadd.f32 %v3423, %v3491
        %s3497 = scalar_lea.vmem [#allocation16], 112
        %v3498 = vld [vmem:[%s3497] sm:$0xff]
        %v3499 = vld [vmem:[%s3497 + $0x8] sm:$0xff]
        %v3500 = vld [vmem:[%s1482] sm:$0x3]
        %v3502 = vperm.slane %v3500, 0
        %v3503 = vperm.slane %v3500, 1
        %v3506 = vmul.f32 %v1480, %v3502
        %v3507 = vmul.f32 %v1481, %v3503
        %v3509 = vsel %vm939, %v3498, 0
        %v3512 = vsel %vm939, %v3499, 0
        %v3515 = vsel %vm946, %v3506, 0
        %v3518 = vsel %vm946, %v3507, 0
        %3520 = vmatpush.msra.mxu0 0.0
        %3521 = vmatpush.msra.mxu0 0.0
        %3522 = vmatpush.msra.mxu0 0.0
        %3523 = vmatpush.msra.mxu0 0.0
        %3524 = vmatpush.msra.mxu0 0.0
        %3525 = vmatpush.msra.mxu0 0.0
        %3526 = vmatpush.msra.mxu0 0.0
        %3527 = vmatpush.msra.mxu0 0.0
        %3528 = vmatpush.msra.mxu0 0.0
        %3529 = vmatpush.msra.mxu0 0.0
        %3530 = vmatpush.msra.mxu0 0.0
        %3531 = vmatpush.msra.mxu0 0.0
        %3532 = vmatpush.msra.mxu0 0.0
        %3533 = vmatpush.msra.mxu0 0.0
        %3534 = vmatpush.msra.mxu0 0.0
        %3535 = vmatpush.msra.mxu0 %v3515
        %3536 = vmatmul.f32.gmra.mxu0 %v3509
        %v3537 = vpop.f32.mrf.mxu0
        %v3538 = vadd.f32 0.0, %v3537
        %3539 = vmatmul.f32.gmra.mxu0 %v3512
        %v3540 = vpop.f32.mrf.mxu0
        %v3541 = vadd.f32 0.0, %v3540
        %3542 = vdwg.mxu0
        %3543 = vmatpush.msra.mxu0 0.0
        %3544 = vmatpush.msra.mxu0 0.0
        %3545 = vmatpush.msra.mxu0 0.0
        %3546 = vmatpush.msra.mxu0 0.0
        %3547 = vmatpush.msra.mxu0 0.0
        %3548 = vmatpush.msra.mxu0 0.0
        %3549 = vmatpush.msra.mxu0 0.0
        %3550 = vmatpush.msra.mxu0 0.0
        %3551 = vmatpush.msra.mxu0 0.0
        %3552 = vmatpush.msra.mxu0 0.0
        %3553 = vmatpush.msra.mxu0 0.0
        %3554 = vmatpush.msra.mxu0 0.0
        %3555 = vmatpush.msra.mxu0 0.0
        %3556 = vmatpush.msra.mxu0 0.0
        %3557 = vmatpush.msra.mxu0 0.0
        %3558 = vmatpush.msra.mxu0 %v3518
        %3559 = vmatmul.f32.gmra.mxu0 %v3509
        %v3560 = vpop.f32.mrf.mxu0
        %v3561 = vadd.f32 0.0, %v3560
        %3562 = vmatmul.f32.gmra.mxu0 %v3512
        %v3563 = vpop.f32.mrf.mxu0
        %v3564 = vadd.f32 0.0, %v3563
        %3565 = vdwg.mxu0
        %v3566 = vadd.f32 %v3493, %v3538
        %v3567 = vadd.f32 %v3494, %v3561
        %v3568 = vadd.f32 %v3495, %v3541
        %v3569 = vadd.f32 %v3496, %v3564
        %s3570 = scalar_lea.vmem [#allocation16], 128
        %v3571 = vld [vmem:[%s3570] sm:$0xff]
        %v3572 = vld [vmem:[%s3570 + $0x8] sm:$0xff]
        %v3573 = vld [vmem:[%s1568] sm:$0x3]
        %v3575 = vperm.slane %v3573, 0
        %v3576 = vperm.slane %v3573, 1
        %v3579 = vmul.f32 %v1566, %v3575
        %v3580 = vmul.f32 %v1567, %v3576
        %v3582 = vsel %vm939, %v3571, 0
        %v3585 = vsel %vm939, %v3572, 0
        %v3588 = vsel %vm946, %v3579, 0
        %v3591 = vsel %vm946, %v3580, 0
        %3593 = vmatpush.msra.mxu0 0.0
        %3594 = vmatpush.msra.mxu0 0.0
        %3595 = vmatpush.msra.mxu0 0.0
        %3596 = vmatpush.msra.mxu0 0.0
        %3597 = vmatpush.msra.mxu0 0.0
        %3598 = vmatpush.msra.mxu0 0.0
        %3599 = vmatpush.msra.mxu0 0.0
        %3600 = vmatpush.msra.mxu0 0.0
        %3601 = vmatpush.msra.mxu0 0.0
        %3602 = vmatpush.msra.mxu0 0.0
        %3603 = vmatpush.msra.mxu0 0.0
        %3604 = vmatpush.msra.mxu0 0.0
        %3605 = vmatpush.msra.mxu0 0.0
        %3606 = vmatpush.msra.mxu0 0.0
        %3607 = vmatpush.msra.mxu0 0.0
        %3608 = vmatpush.msra.mxu0 %v3588
        %3609 = vmatmul.f32.gmra.mxu0 %v3582
        %v3610 = vpop.f32.mrf.mxu0
        %v3611 = vadd.f32 0.0, %v3610
        %3612 = vmatmul.f32.gmra.mxu0 %v3585
        %v3613 = vpop.f32.mrf.mxu0
        %v3614 = vadd.f32 0.0, %v3613
        %3615 = vdwg.mxu0
        %3616 = vmatpush.msra.mxu0 0.0
        %3617 = vmatpush.msra.mxu0 0.0
        %3618 = vmatpush.msra.mxu0 0.0
        %3619 = vmatpush.msra.mxu0 0.0
        %3620 = vmatpush.msra.mxu0 0.0
        %3621 = vmatpush.msra.mxu0 0.0
        %3622 = vmatpush.msra.mxu0 0.0
        %3623 = vmatpush.msra.mxu0 0.0
        %3624 = vmatpush.msra.mxu0 0.0
        %3625 = vmatpush.msra.mxu0 0.0
        %3626 = vmatpush.msra.mxu0 0.0
        %3627 = vmatpush.msra.mxu0 0.0
        %3628 = vmatpush.msra.mxu0 0.0
        %3629 = vmatpush.msra.mxu0 0.0
        %3630 = vmatpush.msra.mxu0 0.0
        %3631 = vmatpush.msra.mxu0 %v3591
        %3632 = vmatmul.f32.gmra.mxu0 %v3582
        %v3633 = vpop.f32.mrf.mxu0
        %v3634 = vadd.f32 0.0, %v3633
        %3635 = vmatmul.f32.gmra.mxu0 %v3585
        %v3636 = vpop.f32.mrf.mxu0
        %v3637 = vadd.f32 0.0, %v3636
        %3638 = vdwg.mxu0
        %v3639 = vadd.f32 %v3566, %v3611
        %v3640 = vadd.f32 %v3567, %v3634
        %v3641 = vadd.f32 %v3568, %v3614
        %v3642 = vadd.f32 %v3569, %v3637
        %v3643 = vld [vmem:[#allocation17] sm:$0xff]
        %v3644 = vld [vmem:[#allocation17 + $0x8] sm:$0xff]
        %3646 = vst [vmem:[#allocation1] ss:$2 sm:$0xff] %v3000
        %v3647 = vld.sshfl [vmem:[#allocation1] sm:$0xff pattern:$0x75316420]
        %v3648 = vld.sshfl [vmem:[#allocation1 + $0x8] sm:$0xff pattern:$0x75316420]
        %3651 = vrot.lane.b32.xlu0 %v3647, 17
        %v3652 = vpop.permute.xlu0 %3651
        %3653 = vrot.lane.b32.xlu0 %v3648, 17
        %v3654 = vpop.permute.xlu0 %3653
        %v3655 = vsel %vm904, %v3652, %v3654
        %v3656 = vsel %vm904, %v3654, %v3652
        %v3657 = vmul.f32 %v3656, %v3006
        %v3658 = vmul.f32 %v3655, %v3007
        %s3659 = scalar_lea.vmem [#allocation17], 16
        %v3660 = vld [vmem:[%s3659] sm:$0xff]
        %v3661 = vld [vmem:[%s3659 + $0x8] sm:$0xff]
        %3662 = vst [vmem:[#allocation1] ss:$2 sm:$0xff] %v3000
        %v3663 = vld.sshfl [vmem:[#allocation1] sm:$0xff pattern:$0x75316420]
        %v3664 = vld.sshfl [vmem:[#allocation1 + $0x8] sm:$0xff pattern:$0x75316420]
        %3667 = vrot.lane.b32.xlu0 %v3663, 16
        %v3668 = vpop.permute.xlu0 %3667
        %3669 = vrot.lane.b32.xlu0 %v3664, 16
        %v3670 = vpop.permute.xlu0 %3669
        %v3671 = vsel %vm927, %v3668, %v3670
        %v3672 = vsel %vm927, %v3670, %v3668
        %v3673 = vmul.f32 %v3672, %v3017
        %v3674 = vmul.f32 %v3671, %v3018
        %v3676 = vsel %vm939, %v3660, 0
        %v3679 = vsel %vm939, %v3661, 0
        %v3682 = vsel %vm946, %v3673, 0
        %v3685 = vsel %vm946, %v3674, 0
        %3687 = vmatpush.msra.mxu0 0.0
        %3688 = vmatpush.msra.mxu0 0.0
        %3689 = vmatpush.msra.mxu0 0.0
        %3690 = vmatpush.msra.mxu0 0.0
        %3691 = vmatpush.msra.mxu0 0.0
        %3692 = vmatpush.msra.mxu0 0.0
        %3693 = vmatpush.msra.mxu0 0.0
        %3694 = vmatpush.msra.mxu0 0.0
        %3695 = vmatpush.msra.mxu0 0.0
        %3696 = vmatpush.msra.mxu0 0.0
        %3697 = vmatpush.msra.mxu0 0.0
        %3698 = vmatpush.msra.mxu0 0.0
        %3699 = vmatpush.msra.mxu0 0.0
        %3700 = vmatpush.msra.mxu0 0.0
        %3701 = vmatpush.msra.mxu0 0.0
        %3702 = vmatpush.msra.mxu0 %v3682
        %3703 = vmatmul.f32.gmra.mxu0 %v3676
        %v3704 = vpop.f32.mrf.mxu0
        %v3705 = vadd.f32 0.0, %v3704
        %3706 = vmatmul.f32.gmra.mxu0 %v3679
        %v3707 = vpop.f32.mrf.mxu0
        %v3708 = vadd.f32 0.0, %v3707
        %3709 = vdwg.mxu0
        %3710 = vmatpush.msra.mxu0 0.0
        %3711 = vmatpush.msra.mxu0 0.0
        %3712 = vmatpush.msra.mxu0 0.0
        %3713 = vmatpush.msra.mxu0 0.0
        %3714 = vmatpush.msra.mxu0 0.0
        %3715 = vmatpush.msra.mxu0 0.0
        %3716 = vmatpush.msra.mxu0 0.0
        %3717 = vmatpush.msra.mxu0 0.0
        %3718 = vmatpush.msra.mxu0 0.0
        %3719 = vmatpush.msra.mxu0 0.0
        %3720 = vmatpush.msra.mxu0 0.0
        %3721 = vmatpush.msra.mxu0 0.0
        %3722 = vmatpush.msra.mxu0 0.0
        %3723 = vmatpush.msra.mxu0 0.0
        %3724 = vmatpush.msra.mxu0 0.0
        %3725 = vmatpush.msra.mxu0 %v3685
        %3726 = vmatmul.f32.gmra.mxu0 %v3676
        %v3727 = vpop.f32.mrf.mxu0
        %v3728 = vadd.f32 0.0, %v3727
        %3729 = vmatmul.f32.gmra.mxu0 %v3679
        %v3730 = vpop.f32.mrf.mxu0
        %v3731 = vadd.f32 0.0, %v3730
        %3732 = vdwg.mxu0
        %v3734 = vsel %vm939, %v3643, 0
        %v3737 = vsel %vm939, %v3644, 0
        %v3740 = vsel %vm946, %v3657, 0
        %v3743 = vsel %vm946, %v3658, 0
        %3745 = vmatpush.msra.mxu0 0.0
        %3746 = vmatpush.msra.mxu0 0.0
        %3747 = vmatpush.msra.mxu0 0.0
        %3748 = vmatpush.msra.mxu0 0.0
        %3749 = vmatpush.msra.mxu0 0.0
        %3750 = vmatpush.msra.mxu0 0.0
        %3751 = vmatpush.msra.mxu0 0.0
        %3752 = vmatpush.msra.mxu0 0.0
        %3753 = vmatpush.msra.mxu0 0.0
        %3754 = vmatpush.msra.mxu0 0.0
        %3755 = vmatpush.msra.mxu0 0.0
        %3756 = vmatpush.msra.mxu0 0.0
        %3757 = vmatpush.msra.mxu0 0.0
        %3758 = vmatpush.msra.mxu0 0.0
        %3759 = vmatpush.msra.mxu0 0.0
        %3760 = vmatpush.msra.mxu0 %v3740
        %3761 = vmatmul.f32.gmra.mxu0 %v3734
        %v3762 = vpop.f32.mrf.mxu0
        %v3763 = vadd.f32 %v3705, %v3762
        %3764 = vmatmul.f32.gmra.mxu0 %v3737
        %v3765 = vpop.f32.mrf.mxu0
        %v3766 = vadd.f32 %v3708, %v3765
        %3767 = vdwg.mxu0
        %3768 = vmatpush.msra.mxu0 0.0
        %3769 = vmatpush.msra.mxu0 0.0
        %3770 = vmatpush.msra.mxu0 0.0
        %3771 = vmatpush.msra.mxu0 0.0
        %3772 = vmatpush.msra.mxu0 0.0
        %3773 = vmatpush.msra.mxu0 0.0
        %3774 = vmatpush.msra.mxu0 0.0
        %3775 = vmatpush.msra.mxu0 0.0
        %3776 = vmatpush.msra.mxu0 0.0
        %3777 = vmatpush.msra.mxu0 0.0
        %3778 = vmatpush.msra.mxu0 0.0
        %3779 = vmatpush.msra.mxu0 0.0
        %3780 = vmatpush.msra.mxu0 0.0
        %3781 = vmatpush.msra.mxu0 0.0
        %3782 = vmatpush.msra.mxu0 0.0
        %3783 = vmatpush.msra.mxu0 %v3743
        %3784 = vmatmul.f32.gmra.mxu0 %v3734
        %v3785 = vpop.f32.mrf.mxu0
        %v3786 = vadd.f32 %v3728, %v3785
        %3787 = vmatmul.f32.gmra.mxu0 %v3737
        %v3788 = vpop.f32.mrf.mxu0
        %v3789 = vadd.f32 %v3731, %v3788
        %3790 = vdwg.mxu0
        %s3791 = scalar_lea.vmem [#allocation17], 32
        %v3792 = vld [vmem:[%s3791] sm:$0xff]
        %v3793 = vld [vmem:[%s3791 + $0x8] sm:$0xff]
        %3794 = vst [vmem:[#allocation1] ss:$2 sm:$0xff] %v3000
        %v3795 = vld.sshfl [vmem:[#allocation1] sm:$0xff pattern:$0x75316420]
        %v3796 = vld.sshfl [vmem:[#allocation1 + $0x8] sm:$0xff pattern:$0x75316420]
        %3799 = vrot.lane.b32.xlu0 %v3795, 15
        %v3800 = vpop.permute.xlu0 %3799
        %3801 = vrot.lane.b32.xlu0 %v3796, 15
        %v3802 = vpop.permute.xlu0 %3801
        %v3803 = vsel %vm1069, %v3800, %v3802
        %v3804 = vsel %vm1069, %v3802, %v3800
        %v3805 = vmul.f32 %v3804, %v3144
        %v3806 = vmul.f32 %v3803, %v3145
        %v3808 = vsel %vm939, %v3792, 0
        %v3811 = vsel %vm939, %v3793, 0
        %v3814 = vsel %vm946, %v3805, 0
        %v3817 = vsel %vm946, %v3806, 0
        %3819 = vmatpush.msra.mxu0 0.0
        %3820 = vmatpush.msra.mxu0 0.0
        %3821 = vmatpush.msra.mxu0 0.0
        %3822 = vmatpush.msra.mxu0 0.0
        %3823 = vmatpush.msra.mxu0 0.0
        %3824 = vmatpush.msra.mxu0 0.0
        %3825 = vmatpush.msra.mxu0 0.0
        %3826 = vmatpush.msra.mxu0 0.0
        %3827 = vmatpush.msra.mxu0 0.0
        %3828 = vmatpush.msra.mxu0 0.0
        %3829 = vmatpush.msra.mxu0 0.0
        %3830 = vmatpush.msra.mxu0 0.0
        %3831 = vmatpush.msra.mxu0 0.0
        %3832 = vmatpush.msra.mxu0 0.0
        %3833 = vmatpush.msra.mxu0 0.0
        %3834 = vmatpush.msra.mxu0 %v3814
        %3835 = vmatmul.f32.gmra.mxu0 %v3808
        %v3836 = vpop.f32.mrf.mxu0
        %v3837 = vadd.f32 0.0, %v3836
        %3838 = vmatmul.f32.gmra.mxu0 %v3811
        %v3839 = vpop.f32.mrf.mxu0
        %v3840 = vadd.f32 0.0, %v3839
        %3841 = vdwg.mxu0
        %3842 = vmatpush.msra.mxu0 0.0
        %3843 = vmatpush.msra.mxu0 0.0
        %3844 = vmatpush.msra.mxu0 0.0
        %3845 = vmatpush.msra.mxu0 0.0
        %3846 = vmatpush.msra.mxu0 0.0
        %3847 = vmatpush.msra.mxu0 0.0
        %3848 = vmatpush.msra.mxu0 0.0
        %3849 = vmatpush.msra.mxu0 0.0
        %3850 = vmatpush.msra.mxu0 0.0
        %3851 = vmatpush.msra.mxu0 0.0
        %3852 = vmatpush.msra.mxu0 0.0
        %3853 = vmatpush.msra.mxu0 0.0
        %3854 = vmatpush.msra.mxu0 0.0
        %3855 = vmatpush.msra.mxu0 0.0
        %3856 = vmatpush.msra.mxu0 0.0
        %3857 = vmatpush.msra.mxu0 %v3817
        %3858 = vmatmul.f32.gmra.mxu0 %v3808
        %v3859 = vpop.f32.mrf.mxu0
        %v3860 = vadd.f32 0.0, %v3859
        %3861 = vmatmul.f32.gmra.mxu0 %v3811
        %v3862 = vpop.f32.mrf.mxu0
        %v3863 = vadd.f32 0.0, %v3862
        %3864 = vdwg.mxu0
        %v3865 = vadd.f32 %v3763, %v3837
        %v3866 = vadd.f32 %v3786, %v3860
        %v3867 = vadd.f32 %v3766, %v3840
        %v3868 = vadd.f32 %v3789, %v3863
        %s3869 = scalar_lea.vmem [#allocation17], 48
        %v3870 = vld [vmem:[%s3869] sm:$0xff]
        %v3871 = vld [vmem:[%s3869 + $0x8] sm:$0xff]
        %3872 = vst [vmem:[#allocation1] ss:$2 sm:$0xff] %v3000
        %v3873 = vld.sshfl [vmem:[#allocation1] sm:$0xff pattern:$0x75316420]
        %v3874 = vld.sshfl [vmem:[#allocation1 + $0x8] sm:$0xff pattern:$0x75316420]
        %3877 = vrot.lane.b32.xlu0 %v3873, 1
        %v3878 = vpop.permute.xlu0 %3877
        %3879 = vrot.lane.b32.xlu0 %v3874, 1
        %v3880 = vpop.permute.xlu0 %3879
        %v3881 = vsel %vm1155, %v3878, %v3880
        %v3882 = vsel %vm1155, %v3880, %v3878
        %v3883 = vmul.f32 %v3882, %v3217
        %v3884 = vmul.f32 %v3881, %v3218
        %v3886 = vsel %vm939, %v3870, 0
        %v3889 = vsel %vm939, %v3871, 0
        %v3892 = vsel %vm946, %v3883, 0
        %v3895 = vsel %vm946, %v3884, 0
        %3897 = vmatpush.msra.mxu0 0.0
        %3898 = vmatpush.msra.mxu0 0.0
        %3899 = vmatpush.msra.mxu0 0.0
        %3900 = vmatpush.msra.mxu0 0.0
        %3901 = vmatpush.msra.mxu0 0.0
        %3902 = vmatpush.msra.mxu0 0.0
        %3903 = vmatpush.msra.mxu0 0.0
        %3904 = vmatpush.msra.mxu0 0.0
        %3905 = vmatpush.msra.mxu0 0.0
        %3906 = vmatpush.msra.mxu0 0.0
        %3907 = vmatpush.msra.mxu0 0.0
        %3908 = vmatpush.msra.mxu0 0.0
        %3909 = vmatpush.msra.mxu0 0.0
        %3910 = vmatpush.msra.mxu0 0.0
        %3911 = vmatpush.msra.mxu0 0.0
        %3912 = vmatpush.msra.mxu0 %v3892
        %3913 = vmatmul.f32.gmra.mxu0 %v3886
        %v3914 = vpop.f32.mrf.mxu0
        %v3915 = vadd.f32 0.0, %v3914
        %3916 = vmatmul.f32.gmra.mxu0 %v3889
        %v3917 = vpop.f32.mrf.mxu0
        %v3918 = vadd.f32 0.0, %v3917
        %3919 = vdwg.mxu0
        %3920 = vmatpush.msra.mxu0 0.0
        %3921 = vmatpush.msra.mxu0 0.0
        %3922 = vmatpush.msra.mxu0 0.0
        %3923 = vmatpush.msra.mxu0 0.0
        %3924 = vmatpush.msra.mxu0 0.0
        %3925 = vmatpush.msra.mxu0 0.0
        %3926 = vmatpush.msra.mxu0 0.0
        %3927 = vmatpush.msra.mxu0 0.0
        %3928 = vmatpush.msra.mxu0 0.0
        %3929 = vmatpush.msra.mxu0 0.0
        %3930 = vmatpush.msra.mxu0 0.0
        %3931 = vmatpush.msra.mxu0 0.0
        %3932 = vmatpush.msra.mxu0 0.0
        %3933 = vmatpush.msra.mxu0 0.0
        %3934 = vmatpush.msra.mxu0 0.0
        %3935 = vmatpush.msra.mxu0 %v3895
        %3936 = vmatmul.f32.gmra.mxu0 %v3886
        %v3937 = vpop.f32.mrf.mxu0
        %v3938 = vadd.f32 0.0, %v3937
        %3939 = vmatmul.f32.gmra.mxu0 %v3889
        %v3940 = vpop.f32.mrf.mxu0
        %v3941 = vadd.f32 0.0, %v3940
        %3942 = vdwg.mxu0
        %v3943 = vadd.f32 %v3865, %v3915
        %v3944 = vadd.f32 %v3866, %v3938
        %v3945 = vadd.f32 %v3867, %v3918
        %v3946 = vadd.f32 %v3868, %v3941
        %s3947 = scalar_lea.vmem [#allocation17], 64
        %v3948 = vld [vmem:[%s3947] sm:$0xff]
        %v3949 = vld [vmem:[%s3947 + $0x8] sm:$0xff]
        %3950 = vst [vmem:[#allocation1] ss:$2 sm:$0xff] %v3000
        %v3951 = vld.sshfl [vmem:[#allocation1] sm:$0xff pattern:$0x75316420]
        %v3952 = vld.sshfl [vmem:[#allocation1 + $0x8] sm:$0xff pattern:$0x75316420]
        %v3954 = vsel %vm939, %v3948, 0
        %v3957 = vsel %vm939, %v3949, 0
        %v3959 = vsel %vm946, %v3951, 0
        %v3961 = vsel %vm946, %v3952, 0
        %3963 = vmatpush.msra.mxu0 0.0
        %3964 = vmatpush.msra.mxu0 0.0
        %3965 = vmatpush.msra.mxu0 0.0
        %3966 = vmatpush.msra.mxu0 0.0
        %3967 = vmatpush.msra.mxu0 0.0
        %3968 = vmatpush.msra.mxu0 0.0
        %3969 = vmatpush.msra.mxu0 0.0
        %3970 = vmatpush.msra.mxu0 0.0
        %3971 = vmatpush.msra.mxu0 0.0
        %3972 = vmatpush.msra.mxu0 0.0
        %3973 = vmatpush.msra.mxu0 0.0
        %3974 = vmatpush.msra.mxu0 0.0
        %3975 = vmatpush.msra.mxu0 0.0
        %3976 = vmatpush.msra.mxu0 0.0
        %3977 = vmatpush.msra.mxu0 0.0
        %3978 = vmatpush.msra.mxu0 %v3959
        %3979 = vmatmul.f32.gmra.mxu0 %v3954
        %v3980 = vpop.f32.mrf.mxu0
        %v3981 = vadd.f32 0.0, %v3980
        %3982 = vmatmul.f32.gmra.mxu0 %v3957
        %v3983 = vpop.f32.mrf.mxu0
        %v3984 = vadd.f32 0.0, %v3983
        %3985 = vdwg.mxu0
        %3986 = vmatpush.msra.mxu0 0.0
        %3987 = vmatpush.msra.mxu0 0.0
        %3988 = vmatpush.msra.mxu0 0.0
        %3989 = vmatpush.msra.mxu0 0.0
        %3990 = vmatpush.msra.mxu0 0.0
        %3991 = vmatpush.msra.mxu0 0.0
        %3992 = vmatpush.msra.mxu0 0.0
        %3993 = vmatpush.msra.mxu0 0.0
        %3994 = vmatpush.msra.mxu0 0.0
        %3995 = vmatpush.msra.mxu0 0.0
        %3996 = vmatpush.msra.mxu0 0.0
        %3997 = vmatpush.msra.mxu0 0.0
        %3998 = vmatpush.msra.mxu0 0.0
        %3999 = vmatpush.msra.mxu0 0.0
        %4000 = vmatpush.msra.mxu0 0.0
        %4001 = vmatpush.msra.mxu0 %v3961
        %4002 = vmatmul.f32.gmra.mxu0 %v3954
        %v4003 = vpop.f32.mrf.mxu0
        %v4004 = vadd.f32 0.0, %v4003
        %4005 = vmatmul.f32.gmra.mxu0 %v3957
        %v4006 = vpop.f32.mrf.mxu0
        %v4007 = vadd.f32 0.0, %v4006
        %4008 = vdwg.mxu0
        %v4009 = vadd.f32 %v3943, %v3981
        %v4010 = vadd.f32 %v3944, %v4004
        %v4011 = vadd.f32 %v3945, %v3984
        %v4012 = vadd.f32 %v3946, %v4007
        %s4013 = scalar_lea.vmem [#allocation17], 80
        %v4014 = vld [vmem:[%s4013] sm:$0xff]
        %v4015 = vld [vmem:[%s4013 + $0x8] sm:$0xff]
        %4016 = vst [vmem:[#allocation1] ss:$2 sm:$0xff] %v3000
        %v4017 = vld.sshfl [vmem:[#allocation1] sm:$0xff pattern:$0x75316420]
        %v4018 = vld.sshfl [vmem:[#allocation1 + $0x8] sm:$0xff pattern:$0x75316420]
        %4021 = vrot.lane.b32.xlu0 %v4017, 127
        %v4022 = vpop.permute.xlu0 %4021
        %4023 = vrot.lane.b32.xlu0 %v4018, 127
        %v4024 = vpop.permute.xlu0 %4023
        %v4025 = vsel %vm1307, %v4022, %v4024
        %v4026 = vsel %vm1307, %v4024, %v4022
        %v4027 = vmul.f32 %v4025, %v3356
        %v4028 = vmul.f32 %v4026, %v3357
        %v4030 = vsel %vm939, %v4014, 0
        %v4033 = vsel %vm939, %v4015, 0
        %v4036 = vsel %vm946, %v4027, 0
        %v4039 = vsel %vm946, %v4028, 0
        %4041 = vmatpush.msra.mxu0 0.0
        %4042 = vmatpush.msra.mxu0 0.0
        %4043 = vmatpush.msra.mxu0 0.0
        %4044 = vmatpush.msra.mxu0 0.0
        %4045 = vmatpush.msra.mxu0 0.0
        %4046 = vmatpush.msra.mxu0 0.0
        %4047 = vmatpush.msra.mxu0 0.0
        %4048 = vmatpush.msra.mxu0 0.0
        %4049 = vmatpush.msra.mxu0 0.0
        %4050 = vmatpush.msra.mxu0 0.0
        %4051 = vmatpush.msra.mxu0 0.0
        %4052 = vmatpush.msra.mxu0 0.0
        %4053 = vmatpush.msra.mxu0 0.0
        %4054 = vmatpush.msra.mxu0 0.0
        %4055 = vmatpush.msra.mxu0 0.0
        %4056 = vmatpush.msra.mxu0 %v4036
        %4057 = vmatmul.f32.gmra.mxu0 %v4030
        %v4058 = vpop.f32.mrf.mxu0
        %v4059 = vadd.f32 0.0, %v4058
        %4060 = vmatmul.f32.gmra.mxu0 %v4033
        %v4061 = vpop.f32.mrf.mxu0
        %v4062 = vadd.f32 0.0, %v4061
        %4063 = vdwg.mxu0
        %4064 = vmatpush.msra.mxu0 0.0
        %4065 = vmatpush.msra.mxu0 0.0
        %4066 = vmatpush.msra.mxu0 0.0
        %4067 = vmatpush.msra.mxu0 0.0
        %4068 = vmatpush.msra.mxu0 0.0
        %4069 = vmatpush.msra.mxu0 0.0
        %4070 = vmatpush.msra.mxu0 0.0
        %4071 = vmatpush.msra.mxu0 0.0
        %4072 = vmatpush.msra.mxu0 0.0
        %4073 = vmatpush.msra.mxu0 0.0
        %4074 = vmatpush.msra.mxu0 0.0
        %4075 = vmatpush.msra.mxu0 0.0
        %4076 = vmatpush.msra.mxu0 0.0
        %4077 = vmatpush.msra.mxu0 0.0
        %4078 = vmatpush.msra.mxu0 0.0
        %4079 = vmatpush.msra.mxu0 %v4039
        %4080 = vmatmul.f32.gmra.mxu0 %v4030
        %v4081 = vpop.f32.mrf.mxu0
        %v4082 = vadd.f32 0.0, %v4081
        %4083 = vmatmul.f32.gmra.mxu0 %v4033
        %v4084 = vpop.f32.mrf.mxu0
        %v4085 = vadd.f32 0.0, %v4084
        %4086 = vdwg.mxu0
        %v4087 = vadd.f32 %v4009, %v4059
        %v4088 = vadd.f32 %v4010, %v4082
        %v4089 = vadd.f32 %v4011, %v4062
        %v4090 = vadd.f32 %v4012, %v4085
        %s4091 = scalar_lea.vmem [#allocation17], 96
        %v4092 = vld [vmem:[%s4091] sm:$0xff]
        %v4093 = vld [vmem:[%s4091 + $0x8] sm:$0xff]
        %4094 = vst [vmem:[#allocation1] ss:$2 sm:$0xff] %v3000
        %v4095 = vld.sshfl [vmem:[#allocation1] sm:$0xff pattern:$0x75316420]
        %v4096 = vld.sshfl [vmem:[#allocation1 + $0x8] sm:$0xff pattern:$0x75316420]
        %4099 = vrot.lane.b32.xlu0 %v4095, 113
        %v4100 = vpop.permute.xlu0 %4099
        %4101 = vrot.lane.b32.xlu0 %v4096, 113
        %v4102 = vpop.permute.xlu0 %4101
        %v4103 = vsel %vm1393, %v4100, %v4102
        %v4104 = vsel %vm1393, %v4102, %v4100
        %v4105 = vmul.f32 %v4103, %v3429
        %v4106 = vmul.f32 %v4104, %v3430
        %v4108 = vsel %vm939, %v4092, 0
        %v4111 = vsel %vm939, %v4093, 0
        %v4114 = vsel %vm946, %v4105, 0
        %v4117 = vsel %vm946, %v4106, 0
        %4119 = vmatpush.msra.mxu0 0.0
        %4120 = vmatpush.msra.mxu0 0.0
        %4121 = vmatpush.msra.mxu0 0.0
        %4122 = vmatpush.msra.mxu0 0.0
        %4123 = vmatpush.msra.mxu0 0.0
        %4124 = vmatpush.msra.mxu0 0.0
        %4125 = vmatpush.msra.mxu0 0.0
        %4126 = vmatpush.msra.mxu0 0.0
        %4127 = vmatpush.msra.mxu0 0.0
        %4128 = vmatpush.msra.mxu0 0.0
        %4129 = vmatpush.msra.mxu0 0.0
        %4130 = vmatpush.msra.mxu0 0.0
        %4131 = vmatpush.msra.mxu0 0.0
        %4132 = vmatpush.msra.mxu0 0.0
        %4133 = vmatpush.msra.mxu0 0.0
        %4134 = vmatpush.msra.mxu0 %v4114
        %4135 = vmatmul.f32.gmra.mxu0 %v4108
        %v4136 = vpop.f32.mrf.mxu0
        %v4137 = vadd.f32 0.0, %v4136
        %4138 = vmatmul.f32.gmra.mxu0 %v4111
        %v4139 = vpop.f32.mrf.mxu0
        %v4140 = vadd.f32 0.0, %v4139
        %4141 = vdwg.mxu0
        %4142 = vmatpush.msra.mxu0 0.0
        %4143 = vmatpush.msra.mxu0 0.0
        %4144 = vmatpush.msra.mxu0 0.0
        %4145 = vmatpush.msra.mxu0 0.0
        %4146 = vmatpush.msra.mxu0 0.0
        %4147 = vmatpush.msra.mxu0 0.0
        %4148 = vmatpush.msra.mxu0 0.0
        %4149 = vmatpush.msra.mxu0 0.0
        %4150 = vmatpush.msra.mxu0 0.0
        %4151 = vmatpush.msra.mxu0 0.0
        %4152 = vmatpush.msra.mxu0 0.0
        %4153 = vmatpush.msra.mxu0 0.0
        %4154 = vmatpush.msra.mxu0 0.0
        %4155 = vmatpush.msra.mxu0 0.0
        %4156 = vmatpush.msra.mxu0 0.0
        %4157 = vmatpush.msra.mxu0 %v4117
        %4158 = vmatmul.f32.gmra.mxu0 %v4108
        %v4159 = vpop.f32.mrf.mxu0
        %v4160 = vadd.f32 0.0, %v4159
        %4161 = vmatmul.f32.gmra.mxu0 %v4111
        %v4162 = vpop.f32.mrf.mxu0
        %v4163 = vadd.f32 0.0, %v4162
        %4164 = vdwg.mxu0
        %v4165 = vadd.f32 %v4087, %v4137
        %v4166 = vadd.f32 %v4088, %v4160
        %v4167 = vadd.f32 %v4089, %v4140
        %v4168 = vadd.f32 %v4090, %v4163
        %s4169 = scalar_lea.vmem [#allocation17], 112
        %v4170 = vld [vmem:[%s4169] sm:$0xff]
        %v4171 = vld [vmem:[%s4169 + $0x8] sm:$0xff]
        %4172 = vst [vmem:[#allocation1] ss:$2 sm:$0xff] %v3000
        %v4173 = vld.sshfl [vmem:[#allocation1] sm:$0xff pattern:$0x75316420]
        %v4174 = vld.sshfl [vmem:[#allocation1 + $0x8] sm:$0xff pattern:$0x75316420]
        %4177 = vrot.lane.b32.xlu0 %v4173, 112
        %v4178 = vpop.permute.xlu0 %4177
        %4179 = vrot.lane.b32.xlu0 %v4174, 112
        %v4180 = vpop.permute.xlu0 %4179
        %v4181 = vsel %vm1479, %v4178, %v4180
        %v4182 = vsel %vm1479, %v4180, %v4178
        %v4183 = vmul.f32 %v4181, %v3502
        %v4184 = vmul.f32 %v4182, %v3503
        %v4186 = vsel %vm939, %v4170, 0
        %v4189 = vsel %vm939, %v4171, 0
        %v4192 = vsel %vm946, %v4183, 0
        %v4195 = vsel %vm946, %v4184, 0
        %4197 = vmatpush.msra.mxu0 0.0
        %4198 = vmatpush.msra.mxu0 0.0
        %4199 = vmatpush.msra.mxu0 0.0
        %4200 = vmatpush.msra.mxu0 0.0
        %4201 = vmatpush.msra.mxu0 0.0
        %4202 = vmatpush.msra.mxu0 0.0
        %4203 = vmatpush.msra.mxu0 0.0
        %4204 = vmatpush.msra.mxu0 0.0
        %4205 = vmatpush.msra.mxu0 0.0
        %4206 = vmatpush.msra.mxu0 0.0
        %4207 = vmatpush.msra.mxu0 0.0
        %4208 = vmatpush.msra.mxu0 0.0
        %4209 = vmatpush.msra.mxu0 0.0
        %4210 = vmatpush.msra.mxu0 0.0
        %4211 = vmatpush.msra.mxu0 0.0
        %4212 = vmatpush.msra.mxu0 %v4192
        %4213 = vmatmul.f32.gmra.mxu0 %v4186
        %v4214 = vpop.f32.mrf.mxu0
        %v4215 = vadd.f32 0.0, %v4214
        %4216 = vmatmul.f32.gmra.mxu0 %v4189
        %v4217 = vpop.f32.mrf.mxu0
        %v4218 = vadd.f32 0.0, %v4217
        %4219 = vdwg.mxu0
        %4220 = vmatpush.msra.mxu0 0.0
        %4221 = vmatpush.msra.mxu0 0.0
        %4222 = vmatpush.msra.mxu0 0.0
        %4223 = vmatpush.msra.mxu0 0.0
        %4224 = vmatpush.msra.mxu0 0.0
        %4225 = vmatpush.msra.mxu0 0.0
        %4226 = vmatpush.msra.mxu0 0.0
        %4227 = vmatpush.msra.mxu0 0.0
        %4228 = vmatpush.msra.mxu0 0.0
        %4229 = vmatpush.msra.mxu0 0.0
        %4230 = vmatpush.msra.mxu0 0.0
        %4231 = vmatpush.msra.mxu0 0.0
        %4232 = vmatpush.msra.mxu0 0.0
        %4233 = vmatpush.msra.mxu0 0.0
        %4234 = vmatpush.msra.mxu0 0.0
        %4235 = vmatpush.msra.mxu0 %v4195
        %4236 = vmatmul.f32.gmra.mxu0 %v4186
        %v4237 = vpop.f32.mrf.mxu0
        %v4238 = vadd.f32 0.0, %v4237
        %4239 = vmatmul.f32.gmra.mxu0 %v4189
        %v4240 = vpop.f32.mrf.mxu0
        %v4241 = vadd.f32 0.0, %v4240
        %4242 = vdwg.mxu0
        %v4243 = vadd.f32 %v4165, %v4215
        %v4244 = vadd.f32 %v4166, %v4238
        %v4245 = vadd.f32 %v4167, %v4218
        %v4246 = vadd.f32 %v4168, %v4241
        %s4247 = scalar_lea.vmem [#allocation17], 128
        %v4248 = vld [vmem:[%s4247] sm:$0xff]
        %v4249 = vld [vmem:[%s4247 + $0x8] sm:$0xff]
        %4250 = vst [vmem:[#allocation1] ss:$2 sm:$0xff] %v3000
        %v4251 = vld.sshfl [vmem:[#allocation1] sm:$0xff pattern:$0x75316420]
        %v4252 = vld.sshfl [vmem:[#allocation1 + $0x8] sm:$0xff pattern:$0x75316420]
        %4255 = vrot.lane.b32.xlu0 %v4251, 111
        %v4256 = vpop.permute.xlu0 %4255
        %4257 = vrot.lane.b32.xlu0 %v4252, 111
        %v4258 = vpop.permute.xlu0 %4257
        %v4259 = vsel %vm1565, %v4256, %v4258
        %v4260 = vsel %vm1565, %v4258, %v4256
        %v4261 = vmul.f32 %v4259, %v3575
        %v4262 = vmul.f32 %v4260, %v3576
        %v4264 = vsel %vm939, %v4248, 0
        %v4267 = vsel %vm939, %v4249, 0
        %v4270 = vsel %vm946, %v4261, 0
        %v4273 = vsel %vm946, %v4262, 0
        %4275 = vmatpush.msra.mxu0 0.0
        %4276 = vmatpush.msra.mxu0 0.0
        %4277 = vmatpush.msra.mxu0 0.0
        %4278 = vmatpush.msra.mxu0 0.0
        %4279 = vmatpush.msra.mxu0 0.0
        %4280 = vmatpush.msra.mxu0 0.0
        %4281 = vmatpush.msra.mxu0 0.0
        %4282 = vmatpush.msra.mxu0 0.0
        %4283 = vmatpush.msra.mxu0 0.0
        %4284 = vmatpush.msra.mxu0 0.0
        %4285 = vmatpush.msra.mxu0 0.0
        %4286 = vmatpush.msra.mxu0 0.0
        %4287 = vmatpush.msra.mxu0 0.0
        %4288 = vmatpush.msra.mxu0 0.0
        %4289 = vmatpush.msra.mxu0 0.0
        %4290 = vmatpush.msra.mxu0 %v4270
        %4291 = vmatmul.f32.gmra.mxu0 %v4264
        %v4292 = vpop.f32.mrf.mxu0
        %v4293 = vadd.f32 0.0, %v4292
        %4294 = vmatmul.f32.gmra.mxu0 %v4267
        %v4295 = vpop.f32.mrf.mxu0
        %v4296 = vadd.f32 0.0, %v4295
        %4297 = vdwg.mxu0
        %4298 = vmatpush.msra.mxu0 0.0
        %4299 = vmatpush.msra.mxu0 0.0
        %4300 = vmatpush.msra.mxu0 0.0
        %4301 = vmatpush.msra.mxu0 0.0
        %4302 = vmatpush.msra.mxu0 0.0
        %4303 = vmatpush.msra.mxu0 0.0
        %4304 = vmatpush.msra.mxu0 0.0
        %4305 = vmatpush.msra.mxu0 0.0
        %4306 = vmatpush.msra.mxu0 0.0
        %4307 = vmatpush.msra.mxu0 0.0
        %4308 = vmatpush.msra.mxu0 0.0
        %4309 = vmatpush.msra.mxu0 0.0
        %4310 = vmatpush.msra.mxu0 0.0
        %4311 = vmatpush.msra.mxu0 0.0
        %4312 = vmatpush.msra.mxu0 0.0
        %4313 = vmatpush.msra.mxu0 %v4273
        %4314 = vmatmul.f32.gmra.mxu0 %v4264
        %v4315 = vpop.f32.mrf.mxu0
        %v4316 = vadd.f32 0.0, %v4315
        %4317 = vmatmul.f32.gmra.mxu0 %v4267
        %v4318 = vpop.f32.mrf.mxu0
        %v4319 = vadd.f32 0.0, %v4318
        %4320 = vdwg.mxu0
        %v4321 = vadd.f32 %v4243, %v4293
        %v4322 = vadd.f32 %v4244, %v4316
        %v4323 = vadd.f32 %v4245, %v4296
        %v4324 = vadd.f32 %v4246, %v4319
        %v4325 = vadd.f32 %v3639, %v4321
        %v4326 = vadd.f32 %v3640, %v4322
        %v4327 = vadd.f32 %v3641, %v4323
        %v4328 = vadd.f32 %v3642, %v4324
        %v4329 = vld [vmem:[#allocation19] sm:$0xff]
        %v4330 = vld [vmem:[#allocation19 + $0x8] sm:$0xff]
        %4332 = vset.pattern.permute.xlu0 0
        %4333 = vperm.xlu0 %4332, %v4329
        %v4334 = vpop.permute.xlu0 %4333
        %4337 = vset.pattern.permute.xlu0 0
        %4338 = vperm.xlu0 %4337, %v4330
        %v4339 = vpop.permute.xlu0 %4338
        %v4341 = vadd.f32 %v4325, %v4334
        %v4342 = vadd.f32 %v4326, %v4334
        %v4343 = vadd.f32 %v4327, %v4339
        %v4344 = vadd.f32 %v4328, %v4339
        %vm4345 = vcmp.ge.f32.partialorder %v4341, 0.0
        %vm4346 = vcmp.ge.f32.partialorder %v4342, 0.0
        %vm4347 = vcmp.ge.f32.partialorder %v4343, 0.0
        %vm4348 = vcmp.ge.f32.partialorder %v4344, 0.0
        %v4349 = vmul.f32 %v4341, 0.01
        %v4350 = vmul.f32 %v4342, 0.01
        %v4351 = vmul.f32 %v4343, 0.01
        %v4352 = vmul.f32 %v4344, 0.01
        %v4353 = vsel %vm4345, %v4341, %v4349
        %v4354 = vsel %vm4346, %v4342, %v4350
        %v4355 = vsel %vm4347, %v4343, %v4351
        %v4356 = vsel %vm4348, %v4344, %v4352
        %v4357 = vadd.f32 %v4353, %v4355
        %v4358 = vrot.slane %v4357, 4
        %v4359 = vadd.f32 %v4357, %v4358
        %v4360 = vrot.slane %v4359, 2
        %v4361 = vadd.f32 %v4359, %v4360
        %v4362 = vrot.slane %v4361, 1
        %v4363 = vadd.f32 %v4361, %v4362
        %v4364 = vadd.f32 %v4354, %v4356
        %v4365 = vrot.slane %v4364, 4
        %v4366 = vadd.f32 %v4364, %v4365
        %v4367 = vrot.slane %v4366, 2
        %v4368 = vadd.f32 %v4366, %v4367
        %v4369 = vrot.slane %v4368, 1
        %v4370 = vadd.f32 %v4368, %v4369
        %v4371 = vrcp.pop 16.0
        %v4372 = vmul.f32 16.0, %v4371
        %v4373 = vsub.f32 1.0, %v4372
        %v4374 = vmul.f32 %v4371, %v4373
        %v4375 = vadd.f32 %v4371, %v4374
        %vm4376 = vweird.f32 %v4371
        %v4377 = vsel %vm4376, %v4371, %v4375
        %v4378 = vmul.f32 %v4363, %v4377
        %v4379 = vmul.f32 %v4370, %v4377
        %v4380 = vmax.f32 %v4353, %v4355
        %v4381 = vrot.slane %v4380, 4
        %v4382 = vmax.f32 %v4380, %v4381
        %v4383 = vrot.slane %v4382, 2
        %v4384 = vmax.f32 %v4382, %v4383
        %v4385 = vrot.slane %v4384, 1
        %v4386 = vmax.f32 %v4384, %v4385
        %v4387 = vmax.f32 %v4354, %v4356
        %v4388 = vrot.slane %v4387, 4
        %v4389 = vmax.f32 %v4387, %v4388
        %v4390 = vrot.slane %v4389, 2
        %v4391 = vmax.f32 %v4389, %v4390
        %v4392 = vrot.slane %v4391, 1
        %v4393 = vmax.f32 %v4391, %v4392
        %v4394 = vld [vmem:[#allocation20] sm:$0x1]
        %4395 = vrot.lane.b32.xlu0 %v4378, 17
        %v4396 = vpop.permute.xlu0 %4395
        %4397 = vrot.lane.b32.xlu0 %v4379, 17
        %v4398 = vpop.permute.xlu0 %4397
        %v4399 = vsel %vm904, %v4396, %v4398
        %v4400 = vsel %vm904, %v4398, %v4396
        %v4401 = vmul.f32 %v4400, %v3006
        %v4402 = vmul.f32 %v4399, %v3007
        %4404 = vset.pattern.permute.xlu0 0
        %4405 = vperm.xlu0 %4404, %v4394
        %v4406 = vpop.permute.xlu0 %4405
        %v4408 = vperm.slane %v4406, 0
        %v4409 = vmul.f32 %v4408, %v4401
        %v4410 = vmul.f32 %v4408, %v4402
        %v4411 = vld [vmem:[#allocation22] sm:$0x1]
        %4412 = vrot.lane.b32.xlu0 %v4386, 17
        %v4413 = vpop.permute.xlu0 %4412
        %4414 = vrot.lane.b32.xlu0 %v4393, 17
        %v4415 = vpop.permute.xlu0 %4414
        %v4416 = vsel %vm904, %v4413, %v4415
        %v4417 = vsel %vm904, %v4415, %v4413
        %v4418 = vmul.f32 %v4417, %v3006
        %v4419 = vmul.f32 %v4416, %v3007
        %4421 = vset.pattern.permute.xlu0 0
        %4422 = vperm.xlu0 %4421, %v4411
        %v4423 = vpop.permute.xlu0 %4422
        %v4425 = vperm.slane %v4423, 0
        %v4426 = vmul.f32 %v4425, %v4418
        %v4427 = vmul.f32 %v4425, %v4419
        %v4428 = vadd.f32 %v4409, %v4426
        %v4429 = vadd.f32 %v4410, %v4427
        %s4430 = scalar_lea.vmem [#allocation20], 1
        %v4431 = vld [vmem:[%s4430] sm:$0x1]
        %4432 = vrot.lane.b32.xlu0 %v4378, 16
        %v4433 = vpop.permute.xlu0 %4432
        %4434 = vrot.lane.b32.xlu0 %v4379, 16
        %v4435 = vpop.permute.xlu0 %4434
        %v4436 = vsel %vm927, %v4433, %v4435
        %v4437 = vsel %vm927, %v4435, %v4433
        %v4438 = vmul.f32 %v4437, %v3017
        %v4439 = vmul.f32 %v4436, %v3018
        %4441 = vset.pattern.permute.xlu0 0
        %4442 = vperm.xlu0 %4441, %v4431
        %v4443 = vpop.permute.xlu0 %4442
        %v4445 = vperm.slane %v4443, 0
        %v4446 = vmul.f32 %v4445, %v4438
        %v4447 = vmul.f32 %v4445, %v4439
        %s4448 = scalar_lea.vmem [#allocation22], 1
        %v4449 = vld [vmem:[%s4448] sm:$0x1]
        %4450 = vrot.lane.b32.xlu0 %v4386, 16
        %v4451 = vpop.permute.xlu0 %4450
        %4452 = vrot.lane.b32.xlu0 %v4393, 16
        %v4453 = vpop.permute.xlu0 %4452
        %v4454 = vsel %vm927, %v4451, %v4453
        %v4455 = vsel %vm927, %v4453, %v4451
        %v4456 = vmul.f32 %v4455, %v3017
        %v4457 = vmul.f32 %v4454, %v3018
        %4459 = vset.pattern.permute.xlu0 0
        %4460 = vperm.xlu0 %4459, %v4449
        %v4461 = vpop.permute.xlu0 %4460
        %v4463 = vperm.slane %v4461, 0
        %v4464 = vmul.f32 %v4463, %v4456
        %v4465 = vmul.f32 %v4463, %v4457
        %v4466 = vadd.f32 %v4446, %v4464
        %v4467 = vadd.f32 %v4447, %v4465
        %v4468 = vadd.f32 %v4428, %v4466
        %v4469 = vadd.f32 %v4429, %v4467
        %s4470 = scalar_lea.vmem [#allocation20], 2
        %v4471 = vld [vmem:[%s4470] sm:$0x1]
        %4472 = vrot.lane.b32.xlu0 %v4378, 15
        %v4473 = vpop.permute.xlu0 %4472
        %4474 = vrot.lane.b32.xlu0 %v4379, 15
        %v4475 = vpop.permute.xlu0 %4474
        %v4476 = vsel %vm1069, %v4473, %v4475
        %v4477 = vsel %vm1069, %v4475, %v4473
        %v4478 = vmul.f32 %v4477, %v3144
        %v4479 = vmul.f32 %v4476, %v3145
        %4481 = vset.pattern.permute.xlu0 0
        %4482 = vperm.xlu0 %4481, %v4471
        %v4483 = vpop.permute.xlu0 %4482
        %v4485 = vperm.slane %v4483, 0
        %v4486 = vmul.f32 %v4485, %v4478
        %v4487 = vmul.f32 %v4485, %v4479
        %s4488 = scalar_lea.vmem [#allocation22], 2
        %v4489 = vld [vmem:[%s4488] sm:$0x1]
        %4490 = vrot.lane.b32.xlu0 %v4386, 15
        %v4491 = vpop.permute.xlu0 %4490
        %4492 = vrot.lane.b32.xlu0 %v4393, 15
        %v4493 = vpop.permute.xlu0 %4492
        %v4494 = vsel %vm1069, %v4491, %v4493
        %v4495 = vsel %vm1069, %v4493, %v4491
        %v4496 = vmul.f32 %v4495, %v3144
        %v4497 = vmul.f32 %v4494, %v3145
        %4499 = vset.pattern.permute.xlu0 0
        %4500 = vperm.xlu0 %4499, %v4489
        %v4501 = vpop.permute.xlu0 %4500
        %v4503 = vperm.slane %v4501, 0
        %v4504 = vmul.f32 %v4503, %v4496
        %v4505 = vmul.f32 %v4503, %v4497
        %v4506 = vadd.f32 %v4486, %v4504
        %v4507 = vadd.f32 %v4487, %v4505
        %v4508 = vadd.f32 %v4468, %v4506
        %v4509 = vadd.f32 %v4469, %v4507
        %s4510 = scalar_lea.vmem [#allocation20], 3
        %v4511 = vld [vmem:[%s4510] sm:$0x1]
        %4512 = vrot.lane.b32.xlu0 %v4378, 1
        %v4513 = vpop.permute.xlu0 %4512
        %4514 = vrot.lane.b32.xlu0 %v4379, 1
        %v4515 = vpop.permute.xlu0 %4514
        %v4516 = vsel %vm1155, %v4513, %v4515
        %v4517 = vsel %vm1155, %v4515, %v4513
        %v4518 = vmul.f32 %v4517, %v3217
        %v4519 = vmul.f32 %v4516, %v3218
        %4521 = vset.pattern.permute.xlu0 0
        %4522 = vperm.xlu0 %4521, %v4511
        %v4523 = vpop.permute.xlu0 %4522
        %v4525 = vperm.slane %v4523, 0
        %v4526 = vmul.f32 %v4525, %v4518
        %v4527 = vmul.f32 %v4525, %v4519
        %s4528 = scalar_lea.vmem [#allocation22], 3
        %v4529 = vld [vmem:[%s4528] sm:$0x1]
        %4530 = vrot.lane.b32.xlu0 %v4386, 1
        %v4531 = vpop.permute.xlu0 %4530
        %4532 = vrot.lane.b32.xlu0 %v4393, 1
        %v4533 = vpop.permute.xlu0 %4532
        %v4534 = vsel %vm1155, %v4531, %v4533
        %v4535 = vsel %vm1155, %v4533, %v4531
        %v4536 = vmul.f32 %v4535, %v3217
        %v4537 = vmul.f32 %v4534, %v3218
        %4539 = vset.pattern.permute.xlu0 0
        %4540 = vperm.xlu0 %4539, %v4529
        %v4541 = vpop.permute.xlu0 %4540
        %v4543 = vperm.slane %v4541, 0
        %v4544 = vmul.f32 %v4543, %v4536
        %v4545 = vmul.f32 %v4543, %v4537
        %v4546 = vadd.f32 %v4526, %v4544
        %v4547 = vadd.f32 %v4527, %v4545
        %v4548 = vadd.f32 %v4508, %v4546
        %v4549 = vadd.f32 %v4509, %v4547
        %s4550 = scalar_lea.vmem [#allocation20], 4
        %v4551 = vld [vmem:[%s4550] sm:$0x1]
        %4553 = vset.pattern.permute.xlu0 0
        %4554 = vperm.xlu0 %4553, %v4551
        %v4555 = vpop.permute.xlu0 %4554
        %v4557 = vperm.slane %v4555, 0
        %v4558 = vmul.f32 %v4557, %v4378
        %v4559 = vmul.f32 %v4557, %v4379
        %s4560 = scalar_lea.vmem [#allocation22], 4
        %v4561 = vld [vmem:[%s4560] sm:$0x1]
        %4563 = vset.pattern.permute.xlu0 0
        %4564 = vperm.xlu0 %4563, %v4561
        %v4565 = vpop.permute.xlu0 %4564
        %v4567 = vperm.slane %v4565, 0
        %v4568 = vmul.f32 %v4567, %v4386
        %v4569 = vmul.f32 %v4567, %v4393
        %v4570 = vadd.f32 %v4558, %v4568
        %v4571 = vadd.f32 %v4559, %v4569
        %v4572 = vadd.f32 %v4548, %v4570
        %v4573 = vadd.f32 %v4549, %v4571
        %s4574 = scalar_lea.vmem [#allocation20], 5
        %v4575 = vld [vmem:[%s4574] sm:$0x1]
        %4576 = vrot.lane.b32.xlu0 %v4378, 127
        %v4577 = vpop.permute.xlu0 %4576
        %4578 = vrot.lane.b32.xlu0 %v4379, 127
        %v4579 = vpop.permute.xlu0 %4578
        %v4580 = vsel %vm1307, %v4577, %v4579
        %v4581 = vsel %vm1307, %v4579, %v4577
        %v4582 = vmul.f32 %v4580, %v3356
        %v4583 = vmul.f32 %v4581, %v3357
        %4585 = vset.pattern.permute.xlu0 0
        %4586 = vperm.xlu0 %4585, %v4575
        %v4587 = vpop.permute.xlu0 %4586
        %v4589 = vperm.slane %v4587, 0
        %v4590 = vmul.f32 %v4589, %v4582
        %v4591 = vmul.f32 %v4589, %v4583
        %s4592 = scalar_lea.vmem [#allocation22], 5
        %v4593 = vld [vmem:[%s4592] sm:$0x1]
        %4594 = vrot.lane.b32.xlu0 %v4386, 127
        %v4595 = vpop.permute.xlu0 %4594
        %4596 = vrot.lane.b32.xlu0 %v4393, 127
        %v4597 = vpop.permute.xlu0 %4596
        %v4598 = vsel %vm1307, %v4595, %v4597
        %v4599 = vsel %vm1307, %v4597, %v4595
        %v4600 = vmul.f32 %v4598, %v3356
        %v4601 = vmul.f32 %v4599, %v3357
        %4603 = vset.pattern.permute.xlu0 0
        %4604 = vperm.xlu0 %4603, %v4593
        %v4605 = vpop.permute.xlu0 %4604
        %v4607 = vperm.slane %v4605, 0
        %v4608 = vmul.f32 %v4607, %v4600
        %v4609 = vmul.f32 %v4607, %v4601
        %v4610 = vadd.f32 %v4590, %v4608
        %v4611 = vadd.f32 %v4591, %v4609
        %v4612 = vadd.f32 %v4572, %v4610
        %v4613 = vadd.f32 %v4573, %v4611
        %s4614 = scalar_lea.vmem [#allocation20], 6
        %v4615 = vld [vmem:[%s4614] sm:$0x1]
        %4616 = vrot.lane.b32.xlu0 %v4378, 113
        %v4617 = vpop.permute.xlu0 %4616
        %4618 = vrot.lane.b32.xlu0 %v4379, 113
        %v4619 = vpop.permute.xlu0 %4618
        %v4620 = vsel %vm1393, %v4617, %v4619
        %v4621 = vsel %vm1393, %v4619, %v4617
        %v4622 = vmul.f32 %v4620, %v3429
        %v4623 = vmul.f32 %v4621, %v3430
        %4625 = vset.pattern.permute.xlu0 0
        %4626 = vperm.xlu0 %4625, %v4615
        %v4627 = vpop.permute.xlu0 %4626
        %v4629 = vperm.slane %v4627, 0
        %v4630 = vmul.f32 %v4629, %v4622
        %v4631 = vmul.f32 %v4629, %v4623
        %s4632 = scalar_lea.vmem [#allocation22], 6
        %v4633 = vld [vmem:[%s4632] sm:$0x1]
        %4634 = vrot.lane.b32.xlu0 %v4386, 113
        %v4635 = vpop.permute.xlu0 %4634
        %4636 = vrot.lane.b32.xlu0 %v4393, 113
        %v4637 = vpop.permute.xlu0 %4636
        %v4638 = vsel %vm1393, %v4635, %v4637
        %v4639 = vsel %vm1393, %v4637, %v4635
        %v4640 = vmul.f32 %v4638, %v3429
        %v4641 = vmul.f32 %v4639, %v3430
        %4643 = vset.pattern.permute.xlu0 0
        %4644 = vperm.xlu0 %4643, %v4633
        %v4645 = vpop.permute.xlu0 %4644
        %v4647 = vperm.slane %v4645, 0
        %v4648 = vmul.f32 %v4647, %v4640
        %v4649 = vmul.f32 %v4647, %v4641
        %v4650 = vadd.f32 %v4630, %v4648
        %v4651 = vadd.f32 %v4631, %v4649
        %v4652 = vadd.f32 %v4612, %v4650
        %v4653 = vadd.f32 %v4613, %v4651
        %s4654 = scalar_lea.vmem [#allocation20], 7
        %v4655 = vld [vmem:[%s4654] sm:$0x1]
        %4656 = vrot.lane.b32.xlu0 %v4378, 112
        %v4657 = vpop.permute.xlu0 %4656
        %4658 = vrot.lane.b32.xlu0 %v4379, 112
        %v4659 = vpop.permute.xlu0 %4658
        %v4660 = vsel %vm1479, %v4657, %v4659
        %v4661 = vsel %vm1479, %v4659, %v4657
        %v4662 = vmul.f32 %v4660, %v3502
        %v4663 = vmul.f32 %v4661, %v3503
        %4665 = vset.pattern.permute.xlu0 0
        %4666 = vperm.xlu0 %4665, %v4655
        %v4667 = vpop.permute.xlu0 %4666
        %v4669 = vperm.slane %v4667, 0
        %v4670 = vmul.f32 %v4669, %v4662
        %v4671 = vmul.f32 %v4669, %v4663
        %s4672 = scalar_lea.vmem [#allocation22], 7
        %v4673 = vld [vmem:[%s4672] sm:$0x1]
        %4674 = vrot.lane.b32.xlu0 %v4386, 112
        %v4675 = vpop.permute.xlu0 %4674
        %4676 = vrot.lane.b32.xlu0 %v4393, 112
        %v4677 = vpop.permute.xlu0 %4676
        %v4678 = vsel %vm1479, %v4675, %v4677
        %v4679 = vsel %vm1479, %v4677, %v4675
        %v4680 = vmul.f32 %v4678, %v3502
        %v4681 = vmul.f32 %v4679, %v3503
        %4683 = vset.pattern.permute.xlu0 0
        %4684 = vperm.xlu0 %4683, %v4673
        %v4685 = vpop.permute.xlu0 %4684
        %v4687 = vperm.slane %v4685, 0
        %v4688 = vmul.f32 %v4687, %v4680
        %v4689 = vmul.f32 %v4687, %v4681
        %v4690 = vadd.f32 %v4670, %v4688
        %v4691 = vadd.f32 %v4671, %v4689
        %v4692 = vadd.f32 %v4652, %v4690
        %v4693 = vadd.f32 %v4653, %v4691
        %s4694 = scalar_lea.vmem [#allocation20], 8
        %v4695 = vld [vmem:[%s4694] sm:$0x1]
        %4696 = vrot.lane.b32.xlu0 %v4378, 111
        %v4697 = vpop.permute.xlu0 %4696
        %4698 = vrot.lane.b32.xlu0 %v4379, 111
        %v4699 = vpop.permute.xlu0 %4698
        %v4700 = vsel %vm1565, %v4697, %v4699
        %v4701 = vsel %vm1565, %v4699, %v4697
        %v4702 = vmul.f32 %v4700, %v3575
        %v4703 = vmul.f32 %v4701, %v3576
        %4705 = vset.pattern.permute.xlu0 0
        %4706 = vperm.xlu0 %4705, %v4695
        %v4707 = vpop.permute.xlu0 %4706
        %v4709 = vperm.slane %v4707, 0
        %v4710 = vmul.f32 %v4709, %v4702
        %v4711 = vmul.f32 %v4709, %v4703
        %s4712 = scalar_lea.vmem [#allocation22], 8
        %v4713 = vld [vmem:[%s4712] sm:$0x1]
        %4714 = vrot.lane.b32.xlu0 %v4386, 111
        %v4715 = vpop.permute.xlu0 %4714
        %4716 = vrot.lane.b32.xlu0 %v4393, 111
        %v4717 = vpop.permute.xlu0 %4716
        %v4718 = vsel %vm1565, %v4715, %v4717
        %v4719 = vsel %vm1565, %v4717, %v4715
        %v4720 = vmul.f32 %v4718, %v3575
        %v4721 = vmul.f32 %v4719, %v3576
        %4723 = vset.pattern.permute.xlu0 0
        %4724 = vperm.xlu0 %4723, %v4713
        %v4725 = vpop.permute.xlu0 %4724
        %v4727 = vperm.slane %v4725, 0
        %v4728 = vmul.f32 %v4727, %v4720
        %v4729 = vmul.f32 %v4727, %v4721
        %v4730 = vadd.f32 %v4710, %v4728
        %v4731 = vadd.f32 %v4711, %v4729
        %v4732 = vadd.f32 %v4692, %v4730
        %v4733 = vadd.f32 %v4693, %v4731
        %v4734 = vsub.f32 0.0, %v4732
        %v4735 = vsub.f32 0.0, %v4733
        %v4736 = vmul.f32 %v4734, 1.442695
        %v4737 = vpow.pop %v4736
        %v4738 = vmul.f32 %v4735, 1.442695
        %v4739 = vpow.pop %v4738
        %v4740 = vadd.f32 %v4737, 1.0
        %v4741 = vadd.f32 %v4739, 1.0
        %v4742 = vrcp.pop %v4740
        %v4743 = vmul.f32 %v4740, %v4742
        %v4744 = vsub.f32 1.0, %v4743
        %v4745 = vmul.f32 %v4742, %v4744
        %v4746 = vadd.f32 %v4742, %v4745
        %vm4747 = vweird.f32 %v4740
        %vm4748 = vweird.f32 %v4742
        %vm4749 = vmor %vm4747, %vm4748
        %v4750 = vsel %vm4749, %v4742, %v4746
        %v4751 = vand.u32 2147483647, %v4740
        %vm4752 = vcmp.eq.f32.partialorder %v4751, 8.507059e+37
        %v4753 = vand.u32 %v4740, 2147483648
        %v4754 = vor.u32 1.1754944e-38, %v4753
        %v4755 = vsel %vm4752, %v4754, %v4750
        %v4756 = vmul.f32 1.0, %v4755
        %v4757 = vrcp.pop %v4741
        %v4758 = vmul.f32 %v4741, %v4757
        %v4759 = vsub.f32 1.0, %v4758
        %v4760 = vmul.f32 %v4757, %v4759
        %v4761 = vadd.f32 %v4757, %v4760
        %vm4762 = vweird.f32 %v4741
        %vm4763 = vweird.f32 %v4757
        %vm4764 = vmor %vm4762, %vm4763
        %v4765 = vsel %vm4764, %v4757, %v4761
        %v4766 = vand.u32 2147483647, %v4741
        %vm4767 = vcmp.eq.f32.partialorder %v4766, 8.507059e+37
        %v4768 = vand.u32 %v4741, 2147483648
        %v4769 = vor.u32 1.1754944e-38, %v4768
        %v4770 = vsel %vm4767, %v4769, %v4765
        %v4771 = vmul.f32 1.0, %v4770
        %v4772 = vperm.slane %v4756, 0
        %v4773 = vperm.slane %v4771, 0
        %v4774 = vmul.f32 %v4772, %v4353
        %v4775 = vmul.f32 %v4773, %v4354
        %v4776 = vmul.f32 %v4772, %v4355
        %v4777 = vmul.f32 %v4773, %v4356
        %4778 = vrot.lane.b32.xlu0 %v4774, 17
        %v4779 = vpop.permute.xlu0 %4778
        %4780 = vrot.lane.b32.xlu0 %v4776, 17
        %v4781 = vpop.permute.xlu0 %4780
        %4782 = vrot.lane.b32.xlu0 %v4775, 17
        %v4783 = vpop.permute.xlu0 %4782
        %4784 = vrot.lane.b32.xlu0 %v4777, 17
        %v4785 = vpop.permute.xlu0 %4784
        %v4786 = vsel %vm904, %v4779, %v4783
        %v4787 = vsel %vm904, %v4781, %v4785
        %v4788 = vsel %vm904, %v4783, %v4779
        %v4789 = vsel %vm904, %v4785, %v4781
        %v4790 = vmul.f32 %v4788, %v3006
        %v4791 = vmul.f32 %v4786, %v3007
        %v4792 = vmul.f32 %v4789, %v3006
        %v4793 = vmul.f32 %v4787, %v3007
        %4794 = vst [vmem:[#allocation2] sm:$0xff] %v4790
        %4795 = vst [vmem:[#allocation2 + $0x8] sm:$0xff] %v4791
        %4796 = vst [vmem:[#allocation2 + $0x10] sm:$0xff] %v4792
        %4797 = vst [vmem:[#allocation2 + $0x18] sm:$0xff] %v4793
        %4798 = vrot.lane.b32.xlu0 %v4774, 16
        %v4799 = vpop.permute.xlu0 %4798
        %4800 = vrot.lane.b32.xlu0 %v4776, 16
        %v4801 = vpop.permute.xlu0 %4800
        %4802 = vrot.lane.b32.xlu0 %v4775, 16
        %v4803 = vpop.permute.xlu0 %4802
        %4804 = vrot.lane.b32.xlu0 %v4777, 16
        %v4805 = vpop.permute.xlu0 %4804
        %v4806 = vsel %vm927, %v4799, %v4803
        %v4807 = vsel %vm927, %v4801, %v4805
        %v4808 = vsel %vm927, %v4803, %v4799
        %v4809 = vsel %vm927, %v4805, %v4801
        %v4810 = vld [vmem:[%s930] sm:$0x3]
        %v4812 = vperm.slane %v4810, 0
        %v4813 = vperm.slane %v4810, 1
        %v4816 = vmul.f32 %v4808, %v4812
        %v4817 = vmul.f32 %v4806, %v4813
        %v4818 = vmul.f32 %v4809, %v4812
        %v4819 = vmul.f32 %v4807, %v4813
        %4820 = vst [vmem:[#allocation2 + $0x20] sm:$0xff] %v4816
        %4821 = vst [vmem:[#allocation2 + $0x28] sm:$0xff] %v4817
        %4822 = vst [vmem:[#allocation2 + $0x30] sm:$0xff] %v4818
        %4823 = vst [vmem:[#allocation2 + $0x38] sm:$0xff] %v4819
        %4824 = vrot.lane.b32.xlu0 %v4774, 15
        %v4825 = vpop.permute.xlu0 %4824
        %4826 = vrot.lane.b32.xlu0 %v4776, 15
        %v4827 = vpop.permute.xlu0 %4826
        %4828 = vrot.lane.b32.xlu0 %v4775, 15
        %v4829 = vpop.permute.xlu0 %4828
        %4830 = vrot.lane.b32.xlu0 %v4777, 15
        %v4831 = vpop.permute.xlu0 %4830
        %v4832 = vsel %vm1069, %v4825, %v4829
        %v4833 = vsel %vm1069, %v4827, %v4831
        %v4834 = vsel %vm1069, %v4829, %v4825
        %v4835 = vsel %vm1069, %v4831, %v4827
        %v4836 = vld [vmem:[%s1072] sm:$0x3]
        %v4838 = vperm.slane %v4836, 0
        %v4839 = vperm.slane %v4836, 1
        %v4842 = vmul.f32 %v4834, %v4838
        %v4843 = vmul.f32 %v4832, %v4839
        %v4844 = vmul.f32 %v4835, %v4838
        %v4845 = vmul.f32 %v4833, %v4839
        %4846 = vst [vmem:[#allocation2 + $0x40] sm:$0xff] %v4842
        %4847 = vst [vmem:[#allocation2 + $0x48] sm:$0xff] %v4843
        %4848 = vst [vmem:[#allocation2 + $0x50] sm:$0xff] %v4844
        %4849 = vst [vmem:[#allocation2 + $0x58] sm:$0xff] %v4845
        %4850 = vrot.lane.b32.xlu0 %v4774, 1
        %v4851 = vpop.permute.xlu0 %4850
        %4852 = vrot.lane.b32.xlu0 %v4776, 1
        %v4853 = vpop.permute.xlu0 %4852
        %4854 = vrot.lane.b32.xlu0 %v4775, 1
        %v4855 = vpop.permute.xlu0 %4854
        %4856 = vrot.lane.b32.xlu0 %v4777, 1
        %v4857 = vpop.permute.xlu0 %4856
        %v4858 = vsel %vm1155, %v4851, %v4855
        %v4859 = vsel %vm1155, %v4853, %v4857
        %v4860 = vsel %vm1155, %v4855, %v4851
        %v4861 = vsel %vm1155, %v4857, %v4853
        %v4862 = vld [vmem:[%s1158] sm:$0x3]
        %v4864 = vperm.slane %v4862, 0
        %v4865 = vperm.slane %v4862, 1
        %v4868 = vmul.f32 %v4860, %v4864
        %v4869 = vmul.f32 %v4858, %v4865
        %v4870 = vmul.f32 %v4861, %v4864
        %v4871 = vmul.f32 %v4859, %v4865
        %4872 = vst [vmem:[#allocation2 + $0x60] sm:$0xff] %v4868
        %4873 = vst [vmem:[#allocation2 + $0x68] sm:$0xff] %v4869
        %4874 = vst [vmem:[#allocation2 + $0x70] sm:$0xff] %v4870
        %4875 = vst [vmem:[#allocation2 + $0x78] sm:$0xff] %v4871
        %4876 = vst [vmem:[#allocation2 + $0x80] sm:$0xff] %v4774
        %4877 = vst [vmem:[#allocation2 + $0x88] sm:$0xff] %v4775
        %4878 = vst [vmem:[#allocation2 + $0x90] sm:$0xff] %v4776
        %4879 = vst [vmem:[#allocation2 + $0x98] sm:$0xff] %v4777
        %4880 = vrot.lane.b32.xlu0 %v4774, 127
        %v4881 = vpop.permute.xlu0 %4880
        %4882 = vrot.lane.b32.xlu0 %v4776, 127
        %v4883 = vpop.permute.xlu0 %4882
        %4884 = vrot.lane.b32.xlu0 %v4775, 127
        %v4885 = vpop.permute.xlu0 %4884
        %4886 = vrot.lane.b32.xlu0 %v4777, 127
        %v4887 = vpop.permute.xlu0 %4886
        %v4888 = vsel %vm1307, %v4881, %v4885
        %v4889 = vsel %vm1307, %v4883, %v4887
        %v4890 = vsel %vm1307, %v4885, %v4881
        %v4891 = vsel %vm1307, %v4887, %v4883
        %v4892 = vld [vmem:[%s1310] sm:$0x3]
        %v4894 = vperm.slane %v4892, 0
        %v4895 = vperm.slane %v4892, 1
        %v4898 = vmul.f32 %v4888, %v4894
        %v4899 = vmul.f32 %v4890, %v4895
        %v4900 = vmul.f32 %v4889, %v4894
        %v4901 = vmul.f32 %v4891, %v4895
        %4902 = vst [vmem:[#allocation2 + $0xa0] sm:$0xff] %v4898
        %4903 = vst [vmem:[#allocation2 + $0xa8] sm:$0xff] %v4899
        %4904 = vst [vmem:[#allocation2 + $0xb0] sm:$0xff] %v4900
        %4905 = vst [vmem:[#allocation2 + $0xb8] sm:$0xff] %v4901
        %4906 = vrot.lane.b32.xlu0 %v4774, 113
        %v4907 = vpop.permute.xlu0 %4906
        %4908 = vrot.lane.b32.xlu0 %v4776, 113
        %v4909 = vpop.permute.xlu0 %4908
        %4910 = vrot.lane.b32.xlu0 %v4775, 113
        %v4911 = vpop.permute.xlu0 %4910
        %4912 = vrot.lane.b32.xlu0 %v4777, 113
        %v4913 = vpop.permute.xlu0 %4912
        %v4914 = vsel %vm1393, %v4907, %v4911
        %v4915 = vsel %vm1393, %v4909, %v4913
        %v4916 = vsel %vm1393, %v4911, %v4907
        %v4917 = vsel %vm1393, %v4913, %v4909
        %v4918 = vld [vmem:[%s1396] sm:$0x3]
        %v4920 = vperm.slane %v4918, 0
        %v4921 = vperm.slane %v4918, 1
        %v4924 = vmul.f32 %v4914, %v4920
        %v4925 = vmul.f32 %v4916, %v4921
        %v4926 = vmul.f32 %v4915, %v4920
        %v4927 = vmul.f32 %v4917, %v4921
        %4928 = vst [vmem:[#allocation2 + $0xc0] sm:$0xff] %v4924
        %4929 = vst [vmem:[#allocation2 + $0xc8] sm:$0xff] %v4925
        %4930 = vst [vmem:[#allocation2 + $0xd0] sm:$0xff] %v4926
        %4931 = vst [vmem:[#allocation2 + $0xd8] sm:$0xff] %v4927
        %4932 = vrot.lane.b32.xlu0 %v4774, 112
        %v4933 = vpop.permute.xlu0 %4932
        %4934 = vrot.lane.b32.xlu0 %v4776, 112
        %v4935 = vpop.permute.xlu0 %4934
        %4936 = vrot.lane.b32.xlu0 %v4775, 112
        %v4937 = vpop.permute.xlu0 %4936
        %4938 = vrot.lane.b32.xlu0 %v4777, 112
        %v4939 = vpop.permute.xlu0 %4938
        %v4940 = vsel %vm1479, %v4933, %v4937
        %v4941 = vsel %vm1479, %v4935, %v4939
        %v4942 = vsel %vm1479, %v4937, %v4933
        %v4943 = vsel %vm1479, %v4939, %v4935
        %v4944 = vld [vmem:[%s1482] sm:$0x3]
        %v4946 = vperm.slane %v4944, 0
        %v4947 = vperm.slane %v4944, 1
        %v4950 = vmul.f32 %v4940, %v4946
        %v4951 = vmul.f32 %v4942, %v4947
        %v4952 = vmul.f32 %v4941, %v4946
        %v4953 = vmul.f32 %v4943, %v4947
        %4954 = vst [vmem:[#allocation2 + $0xe0] sm:$0xff] %v4950
        %4955 = vst [vmem:[#allocation2 + $0xe8] sm:$0xff] %v4951
        %4956 = vst [vmem:[#allocation2 + $0xf0] sm:$0xff] %v4952
        %4957 = vst [vmem:[#allocation2 + $0xf8] sm:$0xff] %v4953
        %4958 = vrot.lane.b32.xlu0 %v4774, 111
        %v4959 = vpop.permute.xlu0 %4958
        %4960 = vrot.lane.b32.xlu0 %v4776, 111
        %v4961 = vpop.permute.xlu0 %4960
        %4962 = vrot.lane.b32.xlu0 %v4775, 111
        %v4963 = vpop.permute.xlu0 %4962
        %4964 = vrot.lane.b32.xlu0 %v4777, 111
        %v4965 = vpop.permute.xlu0 %4964
        %v4966 = vsel %vm1565, %v4959, %v4963
        %v4967 = vsel %vm1565, %v4961, %v4965
        %v4968 = vsel %vm1565, %v4963, %v4959
        %v4969 = vsel %vm1565, %v4965, %v4961
        %v4970 = vld [vmem:[%s1568] sm:$0x3]
        %v4972 = vperm.slane %v4970, 0
        %v4973 = vperm.slane %v4970, 1
        %v4976 = vmul.f32 %v4966, %v4972
        %v4977 = vmul.f32 %v4968, %v4973
        %v4978 = vmul.f32 %v4967, %v4972
        %v4979 = vmul.f32 %v4969, %v4973
        %4980 = vst [vmem:[#allocation2 + $0x100] sm:$0xff] %v4976
        %4981 = vst [vmem:[#allocation2 + $0x108] sm:$0xff] %v4977
        %4982 = vst [vmem:[#allocation2 + $0x110] sm:$0xff] %v4978
        %4983 = vst [vmem:[#allocation2 + $0x118] sm:$0xff] %v4979
        %v4984 = vld [vmem:[#allocation23] sm:$0x77]
        %v4985 = vld [vmem:[#allocation2] sm:$0xff]
        %v4986 = vld [vmem:[#allocation2 + $0x8] sm:$0xff]
        %v4987 = vld [vmem:[#allocation2 + $0x10] sm:$0xff]
        %v4988 = vld [vmem:[#allocation2 + $0x18] sm:$0xff]
        %v4989 = vld [vmem:[#allocation2 + $0x20] sm:$0xff]
        %v4990 = vld [vmem:[#allocation2 + $0x28] sm:$0xff]
        %v4991 = vld [vmem:[#allocation2 + $0x30] sm:$0xff]
        %v4992 = vld [vmem:[#allocation2 + $0x38] sm:$0xff]
        %v4993 = vld [vmem:[#allocation2 + $0x40] sm:$0xff]
        %v4994 = vld [vmem:[#allocation2 + $0x48] sm:$0xff]
        %v4995 = vld [vmem:[#allocation2 + $0x50] sm:$0xff]
        %v4996 = vld [vmem:[#allocation2 + $0x58] sm:$0xff]
        %v4997 = vld [vmem:[#allocation2 + $0x60] sm:$0xff]
        %v4998 = vld [vmem:[#allocation2 + $0x68] sm:$0xff]
        %v4999 = vld [vmem:[#allocation2 + $0x70] sm:$0xff]
        %v5000 = vld [vmem:[#allocation2 + $0x78] sm:$0xff]
        %v5001 = vld [vmem:[#allocation2 + $0x80] sm:$0xff]
        %v5002 = vld [vmem:[#allocation2 + $0x88] sm:$0xff]
        %v5003 = vld [vmem:[#allocation2 + $0x90] sm:$0xff]
        %v5004 = vld [vmem:[#allocation2 + $0x98] sm:$0xff]
        %v5005 = vld [vmem:[#allocation2 + $0xa0] sm:$0xff]
        %v5006 = vld [vmem:[#allocation2 + $0xa8] sm:$0xff]
        %v5007 = vld [vmem:[#allocation2 + $0xb0] sm:$0xff]
        %v5008 = vld [vmem:[#allocation2 + $0xb8] sm:$0xff]
        %v5009 = vld [vmem:[#allocation2 + $0xc0] sm:$0xff]
        %v5010 = vld [vmem:[#allocation2 + $0xc8] sm:$0xff]
        %v5011 = vld [vmem:[#allocation2 + $0xd0] sm:$0xff]
        %v5012 = vld [vmem:[#allocation2 + $0xd8] sm:$0xff]
        %v5013 = vld [vmem:[#allocation2 + $0xe0] sm:$0xff]
        %v5014 = vld [vmem:[#allocation2 + $0xe8] sm:$0xff]
        %v5015 = vld [vmem:[#allocation2 + $0xf0] sm:$0xff]
        %v5016 = vld [vmem:[#allocation2 + $0xf8] sm:$0xff]
        %v5017 = vld [vmem:[#allocation2 + $0x100] sm:$0xff]
        %v5018 = vld [vmem:[#allocation2 + $0x108] sm:$0xff]
        %v5019 = vld [vmem:[#allocation2 + $0x110] sm:$0xff]
        %v5020 = vld [vmem:[#allocation2 + $0x118] sm:$0xff]
        %v5021 = vld [vmem:[#allocation25] sm:$0x7]
        %5023 = vset.pattern.permute.xlu0 0
        %5024 = vperm.xlu0 %5023, %v5021
        %v5025 = vpop.permute.xlu0 %5024
        %5028 = vst [vmem:[#allocation1] ss:$2 sm:$0xff] %v4984
        %v5029 = vld.sshfl [vmem:[#allocation1] sm:$0xff pattern:$0x75316420]
        %v5030 = vld.sshfl [vmem:[#allocation1 + $0x8] sm:$0xff pattern:$0x75316420]
        %v5032 = vsel %vm1973, %v5030, 0
        %5034 = vmatpush.msra.mxu0 %v5015
        %5035 = vmatpush.msra.mxu0 %v5013
        %5036 = vmatpush.msra.mxu0 %v5011
        %5037 = vmatpush.msra.mxu0 %v5009
        %5038 = vmatpush.msra.mxu0 %v5007
        %5039 = vmatpush.msra.mxu0 %v5005
        %5040 = vmatpush.msra.mxu0 %v5003
        %5041 = vmatpush.msra.mxu0 %v5001
        %5042 = vmatpush.msra.mxu0 %v4999
        %5043 = vmatpush.msra.mxu0 %v4997
        %5044 = vmatpush.msra.mxu0 %v4995
        %5045 = vmatpush.msra.mxu0 %v4993
        %5046 = vmatpush.msra.mxu0 %v4991
        %5047 = vmatpush.msra.mxu0 %v4989
        %5048 = vmatpush.msra.mxu0 %v4987
        %5049 = vmatpush.msra.mxu0 %v4985
        %5050 = vmatmul.f32.gmra.mxu0 %v5029
        %v5051 = vpop.f32.mrf.mxu0
        %v5052 = vadd.f32 %v5025, %v5051
        %5053 = vdwg.mxu0
        %5054 = vmatpush.msra.mxu0 0.0
        %5055 = vmatpush.msra.mxu0 0.0
        %5056 = vmatpush.msra.mxu0 0.0
        %5057 = vmatpush.msra.mxu0 0.0
        %5058 = vmatpush.msra.mxu0 0.0
        %5059 = vmatpush.msra.mxu0 0.0
        %5060 = vmatpush.msra.mxu0 0.0
        %5061 = vmatpush.msra.mxu0 0.0
        %5062 = vmatpush.msra.mxu0 0.0
        %5063 = vmatpush.msra.mxu0 0.0
        %5064 = vmatpush.msra.mxu0 0.0
        %5065 = vmatpush.msra.mxu0 0.0
        %5066 = vmatpush.msra.mxu0 0.0
        %5067 = vmatpush.msra.mxu0 0.0
        %5068 = vmatpush.msra.mxu0 %v5019
        %5069 = vmatpush.msra.mxu0 %v5017
        %5070 = vmatmul.f32.gmra.mxu0 %v5032
        %v5071 = vpop.f32.mrf.mxu0
        %v5072 = vadd.f32 %v5052, %v5071
        %5073 = vdwg.mxu0
        %5074 = vmatpush.msra.mxu0 %v5016
        %5075 = vmatpush.msra.mxu0 %v5014
        %5076 = vmatpush.msra.mxu0 %v5012
        %5077 = vmatpush.msra.mxu0 %v5010
        %5078 = vmatpush.msra.mxu0 %v5008
        %5079 = vmatpush.msra.mxu0 %v5006
        %5080 = vmatpush.msra.mxu0 %v5004
        %5081 = vmatpush.msra.mxu0 %v5002
        %5082 = vmatpush.msra.mxu0 %v5000
        %5083 = vmatpush.msra.mxu0 %v4998
        %5084 = vmatpush.msra.mxu0 %v4996
        %5085 = vmatpush.msra.mxu0 %v4994
        %5086 = vmatpush.msra.mxu0 %v4992
        %5087 = vmatpush.msra.mxu0 %v4990
        %5088 = vmatpush.msra.mxu0 %v4988
        %5089 = vmatpush.msra.mxu0 %v4986
        %5090 = vmatmul.f32.gmra.mxu0 %v5029
        %v5091 = vpop.f32.mrf.mxu0
        %v5092 = vadd.f32 %v5025, %v5091
        %5093 = vdwg.mxu0
        %5094 = vmatpush.msra.mxu0 0.0
        %5095 = vmatpush.msra.mxu0 0.0
        %5096 = vmatpush.msra.mxu0 0.0
        %5097 = vmatpush.msra.mxu0 0.0
        %5098 = vmatpush.msra.mxu0 0.0
        %5099 = vmatpush.msra.mxu0 0.0
        %5100 = vmatpush.msra.mxu0 0.0
        %5101 = vmatpush.msra.mxu0 0.0
        %5102 = vmatpush.msra.mxu0 0.0
        %5103 = vmatpush.msra.mxu0 0.0
        %5104 = vmatpush.msra.mxu0 0.0
        %5105 = vmatpush.msra.mxu0 0.0
        %5106 = vmatpush.msra.mxu0 0.0
        %5107 = vmatpush.msra.mxu0 0.0
        %5108 = vmatpush.msra.mxu0 %v5020
        %5109 = vmatpush.msra.mxu0 %v5018
        %5110 = vmatmul.f32.gmra.mxu0 %v5032
        %v5111 = vpop.f32.mrf.mxu0
        %v5112 = vadd.f32 %v5092, %v5111
        %5113 = vdwg.mxu0
        %v5116 = vrot.slane %v5112, 4
        %v5117 = vsel %vm2996, %v5072, %v5116
        %5119 = vst [vmem:[%s887] sm:$0x77] %v5117
        %s5120 = smul.u32 2, %s40
        %p5121 = scmp.lt.s32.totalorder %s5120, 3
        %s5122 = scalar_select %p5121, %s5120, 3
        %s5123 = smul.addr %s5122, 4
        %s5124 = scalar_lea.vmem %s19, %s5123
        %s5125 = smul.u32 2, %s40
        %p5126 = scmp.lt.s32.totalorder %s5125, 3
        %s5127 = scalar_select %p5126, %s5125, 3
        %s5128 = smul.addr %s5127, 4
        %s5129 = scalar_lea.vmem %s20, %s5128
        // Predicated region
        $region157: #{trans_low_forward.1} parent=95 // pred_check
          %p5130 = pneg %p462
        $region158: #{trans_low_forward.1} parent=95 // pred_check_branch
          %5132 = sbr.rel (%p5130) target = $region160
        $region159: #{trans_low_forward.1} parent=95 // pred_region
          %s5133 = smul.u32 2, %s40
        $region160: #{trans_low_forward.1} parent=95 // pred_fallthru
          _
        // Predicated region
        $region161: #{trans_low_forward.1} parent=95 // pred_check
          %p5134 = pneg %p488
        $region162: #{trans_low_forward.1} parent=95 // pred_check_branch
          %5136 = sbr.rel (%p5134) target = $region164
        $region163: #{trans_low_forward.1} parent=95 // pred_region
          %s5137 = smul.u32 2, %s40
        $region164: #{trans_low_forward.1} parent=95 // pred_fallthru
          _
      $region96: #{trans_low_forward.1} parent=5 // pred_fallthru
        _
      %p5138 = scmp.le.s32.totalorder 2, %s35
      // Predicated region
      $region165: #{trans_low_forward.1} parent=5 // pred_check
        %p5139 = pneg %p5138
      $region166: #{trans_low_forward.1} parent=5 // pred_check_branch
        %5141 = sbr.rel (%p5139) target = $region168
      $region167: #{trans_low_forward.1} parent=5 // pred_region
        %s5142 = ssub.s32 %s35, 2
        // Predicated region
        $region169: #{trans_low_forward.1} parent=167 // pred_check
          %p5143 = pneg %p468
        $region170: #{trans_low_forward.1} parent=167 // pred_check_branch
          %5145 = sbr.rel (%p5143) target = $region172
        $region171: #{trans_low_forward.1} parent=167 // pred_region
          %s5146 = smul.u32 2, %s41
          %p5147 = scmp.lt.s32.totalorder %s5146, 3
          %s5148 = scalar_select %p5147, %s5146, 3
          %s5149 = smul.addr %s5148, 4
          %s5150 = scalar_lea.vmem %s19, %s5149
        $region172: #{trans_low_forward.1} parent=167 // pred_fallthru
          _
        // Predicated region
        $region173: #{trans_low_forward.1} parent=167 // pred_check
          %p5151 = pneg %p494
        $region174: #{trans_low_forward.1} parent=167 // pred_check_branch
          %5153 = sbr.rel (%p5151) target = $region176
        $region175: #{trans_low_forward.1} parent=167 // pred_region
          %s5154 = smul.u32 2, %s41
          %p5155 = scmp.lt.s32.totalorder %s5154, 3
          %s5156 = scalar_select %p5155, %s5154, 3
          %s5157 = smul.addr %s5156, 4
          %s5158 = scalar_lea.vmem %s20, %s5157
        $region176: #{trans_low_forward.1} parent=167 // pred_fallthru
          _
      $region168: #{trans_low_forward.1} parent=5 // pred_fallthru
        _
    $region6: #{trans_low_forward.1} parent=1 // loop_footer
      %s39 = sadd.s32 1, %s35
    $region7: #{trans_low_forward.1} parent=1 // loop_footer_branch
      %34 = sbr.rel target = $region3
    $region8: #{trans_low_forward.1} parent=1 // loop_exit
      _
    %5159 = vsyncpa [#allocation4], 1
    %s5160 = scalar_lea.sflag [#allocation4], 1
    %5161 = vsyncpa %s5160, 1
    %5162 = vsyncpa [#allocation6], 1
    %5163 = vsyncpa [#allocation9], 1
    %5164 = vsyncpa [#allocation12], 1
    %5165 = vsyncpa [#allocation15], 1
    %5166 = vsyncpa [#allocation18], 1
    %5167 = vsyncpa [#allocation21], 1
    %5168 = vsyncpa [#allocation24], 1

</llo_original>
